<compile_context>
chip_gen: v5e
topology: v5e:2x2
jax: 0.10.0
libtpu: 0.0.40
codegen_flags: <defaults>
</compile_context>

<pallas_src>
import functools

import numpy as np
import jax
import jax.numpy as jnp
from jax import lax
from jax.experimental import pallas as pl
from jax.experimental.pallas import tpu as pltpu

LAYERS = 12
FILTERS = 32      # F
IN_CH = 17        # true input channels (GeeseNet observation planes)
IN_CH_PAD = 32    # lane-aligned padded input channels  [R2]
EPS = 1e-5


# ----------------------------------------------------------------------------
# In-kernel helpers (pure jnp/lax on values; traced inside the Pallas kernel).
# ----------------------------------------------------------------------------
def _roll_concat(x3, s, axis=1):
    """Static torus roll via two slices + one concat (fallback path)."""
    n = x3.shape[axis]
    s = s % n
    if s == 0:
        return x3
    hi = lax.slice_in_dim(x3, n - s, n, axis=axis)
    lo = lax.slice_in_dim(x3, 0, n - s, axis=axis)
    return jnp.concatenate([hi, lo], axis=axis)


def _sub_roll(x3, s, use_roll):
    """Roll a rank-3 (outer, sublane, lane) tensor along axis=1 (sublane dim).

    use_roll=True -> pltpu.roll (single in-vreg XLU rotate)  [R1]
    use_roll=False -> two-slice concat (always-supported fallback).
    """
    n = x3.shape[1]
    s = s % n
    if s == 0:
        return x3
    if use_roll:
        return pltpu.roll(x3, s, axis=1)
    return _roll_concat(x3, s, axis=1)


def _torus_conv(h4, w3, use_roll):
    """3x3 torus conv, separable-gather formulation.  w3: (3, Ci, 3*F) where
    w3[dy, ci, dx*F + f] == w[dy, dx, ci, f].  Returns (B*H*W, F) f32."""
    B, H, W, Ci = h4.shape
    F = w3.shape[-1] // 3
    M = B * H * W

    # H-rolls as sublane rolls on the (B, H*W, Ci) view (W == 8 sublanes, so the
    # reshape is a layout no-op and an H-shift of 1 row == a sublane shift of W).
    h3 = h4.reshape(B, H * W, Ci)
    hm = _sub_roll(h3, W, use_roll)     # roll(h, +1, axis=H)   -> dy = 0 taps
    hp = _sub_roll(h3, -W, use_roll)    # roll(h, -1, axis=H)   -> dy = 2 taps

    # One K=Ci matmul per dy, each producing all 3 dx columns (N = 3*F).
    z = (jnp.dot(hm.reshape(M, Ci), w3[0], preferred_element_type=jnp.float32)
         + jnp.dot(h3.reshape(M, Ci), w3[1], preferred_element_type=jnp.float32)
         + jnp.dot(hp.reshape(M, Ci), w3[2], preferred_element_type=jnp.float32))

    # W-rolls on the reduced (F-lane) output, not on the input taps.
    z3 = z.reshape(B * H, W, 3 * F)                       # W == 8 sublanes
    y = (_sub_roll(z3[..., 0:F], 1, use_roll)             # dx = 0
         + z3[..., F:2 * F]                               # dx = 1
         + _sub_roll(z3[..., 2 * F:3 * F], -1, use_roll))  # dx = 2
    return y.reshape(M, F)


def _bn_train(y, gamma, beta, ones_row):
    """Training-mode BatchNorm over the (M, F) conv output.

    Conv bias is omitted upstream: mean(y + b) = mean(y) + b, so it cancels
    exactly.  Moments are computed on the MXU (ones(1,M) matmuls) instead of
    XLU reductions [R3]; var is clamped at 0; normalize is one FMA.
    """
    M, F = y.shape
    inv_m = 1.0 / M
    mean = jnp.dot(ones_row, y, preferred_element_type=jnp.float32) * inv_m        # (1,F)
    ey2 = jnp.dot(ones_row, y * y, preferred_element_type=jnp.float32) * inv_m     # (1,F)
    var = jnp.maximum(ey2 - mean * mean, 0.0)
    s = gamma * lax.rsqrt(var + EPS)
    return y * s + (beta - mean * s)


def _geese_kernel(x_ref, w0_ref, g0_ref, be0_ref,
                  wb_ref, gb_ref, beb_ref, whh_ref, wha_ref,
                  p_ref, v_ref, *, use_roll):
    x = x_ref[...]                                   # (B, H, W, 32) padded NHWC
    B, H, W, _ = x.shape
    F = FILTERS
    M = B * H * W
    ones_row = jnp.ones((1, M), jnp.float32)         # hoisted; shared by every BN

    # Stem: torus conv + BN + relu.
    y0 = _torus_conv(x, w0_ref[...], use_roll)
    h = jnp.maximum(_bn_train(y0, g0_ref[...], be0_ref[...], ones_row),
                    0.0).reshape(B, H, W, F)

    # 12 residual torus-conv blocks, fully unrolled with static indices [R4].
    for l in range(LAYERS):
        y = _torus_conv(h, wb_ref[l], use_roll)
        y = _bn_train(y, gb_ref[l], beb_ref[l], ones_row)
        h = jnp.maximum(h + y.reshape(B, H, W, F), 0.0)

    # Heads [R5]: h_head = sum_{H,W} h * x[...,0]; h_avg = mean_{H,W} h;
    # policy/value from one (B,5) product of two packed (F,5) matmuls.
    x0 = x[..., 0:1]                                                  # (B,H,W,1)
    h_head = jnp.sum((h * x0).reshape(B, H * W, F), axis=1)           # (B,F)
    h_avg = jnp.sum(h.reshape(B, H * W, F), axis=1) * (1.0 / (H * W))  # (B,F)
    out = (jnp.dot(h_head, whh_ref[...], preferred_element_type=jnp.float32)
           + jnp.dot(h_avg, wha_ref[...], preferred_element_type=jnp.float32))
    p_ref[...] = out[:, 0:4]
    v_ref[...] = jnp.tanh(out[:, 4:5])


# ----------------------------------------------------------------------------
# pltpu.roll capability probe (compile + numeric check) -- picks the shift impl.
# ----------------------------------------------------------------------------
@functools.lru_cache(maxsize=None)
def _roll_supported(shape, shift):
    def k(x_ref, o_ref):
        o_ref[...] = pltpu.roll(x_ref[...], shift, axis=1)
    try:
        x = jnp.arange(int(np.prod(shape)), dtype=jnp.float32).reshape(shape)
        vmem = pl.BlockSpec(memory_space=pltpu.MemorySpace.VMEM)
        y = pl.pallas_call(k, out_shape=jax.ShapeDtypeStruct(shape, jnp.float32),
                           in_specs=[vmem], out_specs=vmem)(x)
        return bool(np.allclose(np.asarray(y),
                                np.asarray(jnp.roll(x, shift, axis=1))))
    except Exception:
        return False


# ----------------------------------------------------------------------------
# Host-side wrapper.
# ----------------------------------------------------------------------------
def prepare_params(params):
    """One-time weight repack, hoisted out of the jitted hot path.

    * Stem conv weight channel-padded 17 -> 32 (lane aligned) [R2].
    * Conv weights repacked to the separable-gather (3, Ci, 3*F) layout [R1].
    * Conv biases are NOT forwarded (cancelled by train-mode BN mean).
    * Head weights packed into two (F, 5) matrices [R5].
    """
    w0 = params["w0"]                                          # (3, 3, 17, 32)
    w0p = jnp.zeros((3, 3, IN_CH_PAD, FILTERS), jnp.float32)
    w0p = w0p.at[:, :, :IN_CH, :].set(w0)
    w0r = jnp.transpose(w0p, (0, 2, 1, 3)).reshape(3, IN_CH_PAD, 3 * FILTERS)
    wb = params["wb"]                                          # (12, 3, 3, 32, 32)
    wbr = jnp.transpose(wb, (0, 1, 3, 2, 4)).reshape(LAYERS, 3, FILTERS, 3 * FILTERS)
    whh = jnp.concatenate([params["wp"], params["wvh"]], axis=1)        # (F, 5)
    wha = jnp.concatenate([jnp.zeros((FILTERS, 4), jnp.float32),
                           params["wva"]], axis=1)                       # (F, 5)
    return {"w0": w0r, "g0": params["g0"], "be0": params["be0"],
            "wb": wbr, "gb": params["gb"], "beb": params["beb"],
            "whh": whh, "wha": wha}


@functools.partial(jax.jit, static_argnames=("use_roll",))
def geese_net_pallas(x_nchw, prepped, *, use_roll=False):
    """x_nchw: (B, 17, H, W) float32 -> {'policy': (B,4), 'value': (B,1)}."""
    x = jnp.transpose(x_nchw, (0, 2, 3, 1)).astype(jnp.float32)      # NCHW -> NHWC
    B, H, W, C = x.shape
    x = jnp.pad(x, ((0, 0), (0, 0), (0, 0), (0, IN_CH_PAD - C)))     # 17 -> 32 lanes
    vmem = pl.BlockSpec(memory_space=pltpu.MemorySpace.VMEM)
    kernel = functools.partial(_geese_kernel, use_roll=use_roll)
    # [R8] No grid: everything is VMEM-resident (<0.6 MB); BN needs full-batch
    # statistics so the whole net stays a single program.
    p, v = pl.pallas_call(
        kernel,
        out_shape=(jax.ShapeDtypeStruct((B, 4), jnp.float32),
                   jax.ShapeDtypeStruct((B, 1), jnp.float32)),
        in_specs=[vmem] * 9,
        out_specs=(vmem, vmem),
    )(x, prepped["w0"], prepped["g0"], prepped["be0"],
      prepped["wb"], prepped["gb"], prepped["beb"],
      prepped["whh"], prepped["wha"])
    return {"policy": p, "value": v}


def init_params(key):
    ks = jax.random.split(key, 12)
    n = lambda k, s, scale=0.1: scale * jax.random.normal(k, s, jnp.float32)
    return {
        "w0": n(ks[0], (3, 3, IN_CH, FILTERS)),
        "b0": n(ks[1], (1, FILTERS)),          # mirrors the module; cancelled by BN
        "g0": 1.0 + n(ks[2], (1, FILTERS)),
        "be0": n(ks[3], (1, FILTERS)),
        "wb": n(ks[4], (LAYERS, 3, 3, FILTERS, FILTERS)),
        "bb": n(ks[5], (LAYERS, 1, FILTERS)),  # mirrors the module; cancelled by BN
        "gb": 1.0 + n(ks[6], (LAYERS, 1, FILTERS)),
        "beb": n(ks[7], (LAYERS, 1, FILTERS)),
        "wp": n(ks[8], (FILTERS, 4)),          # head_p.weight.T
        "wvh": n(ks[9], (FILTERS, 1)),         # head_v.weight[:, :32].T
        "wva": n(ks[10], (FILTERS, 1)),        # head_v.weight[:, 32:].T
    }


def geese_net_ref(x_nchw, params):
    """Pure-JAX reference mirroring the PyTorch forward (incl. conv bias)."""
    x = jnp.transpose(x_nchw, (0, 2, 3, 1)).astype(jnp.float32)

    def conv_bn(h4, w, b, g, be):
        B, H, W, Ci = h4.shape
        Co = w.shape[-1]
        M = B * H * W
        acc = jnp.zeros((M, Co), jnp.float32)
        for dy in range(3):
            for dx in range(3):
                shifted = jnp.roll(h4, (1 - dy, 1 - dx), axis=(1, 2))
                acc = acc + shifted.reshape(M, Ci) @ w[dy, dx]
        y = acc + b
        m = y.mean(0, keepdims=True)
        v_ = ((y - m) ** 2).mean(0, keepdims=True)
        return ((y - m) * lax.rsqrt(v_ + EPS) * g + be).reshape(B, H, W, Co)

    h = jax.nn.relu(conv_bn(x, params["w0"], params["b0"],
                            params["g0"], params["be0"]))
    for l in range(LAYERS):
        h = jax.nn.relu(h + conv_bn(h, params["wb"][l], params["bb"][l],
                                    params["gb"][l], params["beb"][l]))
    x0 = x[..., 0:1]
    h_head = (h * x0).sum(axis=(1, 2))
    h_avg = h.mean(axis=(1, 2))
    p = h_head @ params["wp"]
    v = jnp.tanh(h_head @ params["wvh"] + h_avg @ params["wva"])
    return {"policy": p, "value": v}


if __name__ == "__main__":
    key = jax.random.PRNGKey(0)
    k_param, k_x = jax.random.split(key)

    B, H, W = 2, 4, 8
    params = init_params(k_param)
    x = jax.random.normal(k_x, (B, IN_CH, H, W), jnp.float32)   # NCHW like PyTorch

    prepped = prepare_params(params)

    # Pick the shift implementation once: pltpu.roll if this Mosaic lowers and
    # matches jnp.roll on the exact rank-3 shapes we use, else slice+concat.
    use_roll = (_roll_supported((B, H * W, IN_CH_PAD), W)
                and _roll_supported((B * H, W, FILTERS), 1))

    out = geese_net_pallas(x, prepped, use_roll=use_roll)
    jax.block_until_ready(out)

    ref = geese_net_ref(x, params)
    assert out["policy"].shape == (B, 4) and out["value"].shape == (B, 1)
    assert np.allclose(np.asarray(out["policy"]), np.asarray(ref["policy"]),
                       atol=5e-2, rtol=5e-2)
    assert np.allclose(np.asarray(out["value"]), np.asarray(ref["value"]),
                       atol=5e-2, rtol=5e-2)

    print("KERNEL_OK")
</pallas_src>

<mosaic_0001>
module attributes {stable_mosaic.version = 11 : i64} {
  func.func @k(%arg0: memref<2x32x32xf32, #tpu.memory_space<vmem>>, %arg1: memref<2x32x32xf32, #tpu.memory_space<vmem>>) attributes {dimension_semantics = [], scalar_prefetch = 0 : i64, scratch_operands = 0 : i64, tpu.core_type = #tpu.core_type<tc>} {
    %c0 = arith.constant 0 : index
    %c0_0 = arith.constant 0 : index
    %c0_1 = arith.constant 0 : index
    %0 = vector.load %arg0[%c0, %c0_0, %c0_1] : memref<2x32x32xf32, #tpu.memory_space<vmem>>, vector<2x32x32xf32>
    %c8_i32 = arith.constant 8 : i32
    %1 = tpu.dynamic_rotate %0 by %c8_i32 dim 1 : vector<2x32x32xf32>, i32 -> vector<2x32x32xf32>
    %c0_2 = arith.constant 0 : index
    %c0_3 = arith.constant 0 : index
    %c0_4 = arith.constant 0 : index
    %2 = vector.load %arg1[%c0_2, %c0_3, %c0_4] : memref<2x32x32xf32, #tpu.memory_space<vmem>>, vector<2x32x32xf32>
    tpu.vector_store %arg1[%c0_2, %c0_3, %c0_4], %1 {strides = array<i32>} : memref<2x32x32xf32, #tpu.memory_space<vmem>>, vector<2x32x32xf32>,
    return
  }
}

module attributes {stable_mosaic.version = 11 : i64} {
  func.func @_geese_kernel(%arg0: memref<2x4x8x32xf32, #tpu.memory_space<vmem>>, %arg1: memref<3x32x96xf32, #tpu.memory_space<vmem>>, %arg2: memref<1x32xf32, #tpu.memory_space<vmem>>, %arg3: memref<1x32xf32, #tpu.memory_space<vmem>>, %arg4: memref<12x3x32x96xf32, #tpu.memory_space<vmem>>, %arg5: memref<12x1x32xf32, #tpu.memory_space<vmem>>, %arg6: memref<12x1x32xf32, #tpu.memory_space<vmem>>, %arg7: memref<32x5xf32, #tpu.memory_space<vmem>>, %arg8: memref<32x5xf32, #tpu.memory_space<vmem>>, %arg9: memref<2x4xf32, #tpu.memory_space<vmem>>, %arg10: memref<2x1xf32, #tpu.memory_space<vmem>>) attributes {dimension_semantics = [], scalar_prefetch = 0 : i64, scratch_operands = 0 : i64, tpu.core_type = #tpu.core_type<tc>} {
    %c0 = arith.constant 0 : index
    %c0_0 = arith.constant 0 : index
    %c0_1 = arith.constant 0 : index
    %c0_2 = arith.constant 0 : index
    %0 = vector.load %arg0[%c0, %c0_0, %c0_1, %c0_2] : memref<2x4x8x32xf32, #tpu.memory_space<vmem>>, vector<2x4x8x32xf32>
    %cst = arith.constant 1.000000e+00 : f32
    %1 = vector.broadcast %cst : f32 to vector<1x64xf32>
    %c0_3 = arith.constant 0 : index
    %c0_4 = arith.constant 0 : index
    %c0_5 = arith.constant 0 : index
    %2 = vector.load %arg1[%c0_3, %c0_4, %c0_5] : memref<3x32x96xf32, #tpu.memory_space<vmem>>, vector<3x32x96xf32>
    %3 = vector.shape_cast %0 : vector<2x4x8x32xf32> to vector<2x32x32xf32>
    %4 = vector.extract_strided_slice %3 {offsets = [0, 24, 0], sizes = [2, 8, 32], strides = [1, 1, 1]} : vector<2x32x32xf32> to vector<2x8x32xf32>
    %5 = vector.extract_strided_slice %3 {offsets = [0, 0, 0], sizes = [2, 24, 32], strides = [1, 1, 1]} : vector<2x32x32xf32> to vector<2x24x32xf32>
    %6 = tpu.concatenate %4, %5 in 1 : vector<2x8x32xf32>, vector<2x24x32xf32> -> vector<2x32x32xf32>
    %7 = vector.extract_strided_slice %3 {offsets = [0, 8, 0], sizes = [2, 24, 32], strides = [1, 1, 1]} : vector<2x32x32xf32> to vector<2x24x32xf32>
    %8 = vector.extract_strided_slice %3 {offsets = [0, 0, 0], sizes = [2, 8, 32], strides = [1, 1, 1]} : vector<2x32x32xf32> to vector<2x8x32xf32>
    %9 = tpu.concatenate %7, %8 in 1 : vector<2x24x32xf32>, vector<2x8x32xf32> -> vector<2x32x32xf32>
    %10 = vector.shape_cast %6 : vector<2x32x32xf32> to vector<64x32xf32>
    %11 = vector.extract_strided_slice %2 {offsets = [0, 0, 0], sizes = [1, 32, 96], strides = [1, 1, 1]} : vector<3x32x96xf32> to vector<1x32x96xf32>
    %12 = vector.shape_cast %11 : vector<1x32x96xf32> to vector<32x96xf32>
    %cst_6 = arith.constant dense<0.000000e+00> : vector<64x96xf32>
    %13 = tpu.matmul %10, %12, %cst_6 {dimension_numbers = #tpu.dot_dimension_numbers<[1], [0], [0], [1], [0, 0, 1, 1], [], []>} : vector<64x32xf32>, vector<32x96xf32>, vector<64x96xf32> -> vector<64x96xf32>
    %14 = vector.shape_cast %3 : vector<2x32x32xf32> to vector<64x32xf32>
    %15 = vector.extract_strided_slice %2 {offsets = [1, 0, 0], sizes = [1, 32, 96], strides = [1, 1, 1]} : vector<3x32x96xf32> to vector<1x32x96xf32>
    %16 = vector.shape_cast %15 : vector<1x32x96xf32> to vector<32x96xf32>
    %cst_7 = arith.constant dense<0.000000e+00> : vector<64x96xf32>
    %17 = tpu.matmul %14, %16, %cst_7 {dimension_numbers = #tpu.dot_dimension_numbers<[1], [0], [0], [1], [0, 0, 1, 1], [], []>} : vector<64x32xf32>, vector<32x96xf32>, vector<64x96xf32> -> vector<64x96xf32>
    %18 = arith.addf %13, %17 : vector<64x96xf32>
    %19 = vector.shape_cast %9 : vector<2x32x32xf32> to vector<64x32xf32>
    %20 = vector.extract_strided_slice %2 {offsets = [2, 0, 0], sizes = [1, 32, 96], strides = [1, 1, 1]} : vector<3x32x96xf32> to vector<1x32x96xf32>
    %21 = vector.shape_cast %20 : vector<1x32x96xf32> to vector<32x96xf32>
    %cst_8 = arith.constant dense<0.000000e+00> : vector<64x96xf32>
    %22 = tpu.matmul %19, %21, %cst_8 {dimension_numbers = #tpu.dot_dimension_numbers<[1], [0], [0], [1], [0, 0, 1, 1], [], []>} : vector<64x32xf32>, vector<32x96xf32>, vector<64x96xf32> -> vector<64x96xf32>
    %23 = arith.addf %18, %22 : vector<64x96xf32>
    %24 = vector.shape_cast %23 : vector<64x96xf32> to vector<8x8x96xf32>
    %25 = vector.extract_strided_slice %24 {offsets = [0, 0, 0], sizes = [8, 8, 32], strides = [1, 1, 1]} : vector<8x8x96xf32> to vector<8x8x32xf32>
    %26 = vector.extract_strided_slice %25 {offsets = [0, 7, 0], sizes = [8, 1, 32], strides = [1, 1, 1]} : vector<8x8x32xf32> to vector<8x1x32xf32>
    %27 = vector.extract_strided_slice %25 {offsets = [0, 0, 0], sizes = [8, 7, 32], strides = [1, 1, 1]} : vector<8x8x32xf32> to vector<8x7x32xf32>
    %28 = tpu.concatenate %26, %27 in 1 : vector<8x1x32xf32>, vector<8x7x32xf32> -> vector<8x8x32xf32>
    %29 = vector.extract_strided_slice %24 {offsets = [0, 0, 32], sizes = [8, 8, 32], strides = [1, 1, 1]} : vector<8x8x96xf32> to vector<8x8x32xf32>
    %30 = arith.addf %28, %29 : vector<8x8x32xf32>
    %31 = vector.extract_strided_slice %24 {offsets = [0, 0, 64], sizes = [8, 8, 32], strides = [1, 1, 1]} : vector<8x8x96xf32> to vector<8x8x32xf32>
    %32 = vector.extract_strided_slice %31 {offsets = [0, 1, 0], sizes = [8, 7, 32], strides = [1, 1, 1]} : vector<8x8x32xf32> to vector<8x7x32xf32>
    %33 = vector.extract_strided_slice %31 {offsets = [0, 0, 0], sizes = [8, 1, 32], strides = [1, 1, 1]} : vector<8x8x32xf32> to vector<8x1x32xf32>
    %34 = tpu.concatenate %32, %33 in 1 : vector<8x7x32xf32>, vector<8x1x32xf32> -> vector<8x8x32xf32>
    %35 = arith.addf %30, %34 : vector<8x8x32xf32>
    %36 = vector.shape_cast %35 : vector<8x8x32xf32> to vector<64x32xf32>
    %c0_9 = arith.constant 0 : index
    %c0_10 = arith.constant 0 : index
    %37 = vector.load %arg2[%c0_9, %c0_10] : memref<1x32xf32, #tpu.memory_space<vmem>>, vector<1x32xf32>
    %c0_11 = arith.constant 0 : index
    %c0_12 = arith.constant 0 : index
    %38 = vector.load %arg3[%c0_11, %c0_12] : memref<1x32xf32, #tpu.memory_space<vmem>>, vector<1x32xf32>
    %cst_13 = arith.constant dense<0.000000e+00> : vector<1x32xf32>
    %39 = tpu.matmul %1, %36, %cst_13 {dimension_numbers = #tpu.dot_dimension_numbers<[1], [0], [0], [1], [0, 0, 1, 1], [], []>} : vector<1x64xf32>, vector<64x32xf32>, vector<1x32xf32> -> vector<1x32xf32>
    %cst_14 = arith.constant 1.562500e-02 : f32
    %40 = vector.broadcast %cst_14 : f32 to vector<1x32xf32>
    %41 = arith.mulf %39, %40 : vector<1x32xf32>
    %42 = arith.mulf %36, %36 : vector<64x32xf32>
    %cst_15 = arith.constant dense<0.000000e+00> : vector<1x32xf32>
    %43 = tpu.matmul %1, %42, %cst_15 {dimension_numbers = #tpu.dot_dimension_numbers<[1], [0], [0], [1], [0, 0, 1, 1], [], []>} : vector<1x64xf32>, vector<64x32xf32>, vector<1x32xf32> -> vector<1x32xf32>
    %cst_16 = arith.constant 1.562500e-02 : f32
    %44 = vector.broadcast %cst_16 : f32 to vector<1x32xf32>
    %45 = arith.mulf %43, %44 : vector<1x32xf32>
    %46 = arith.mulf %41, %41 : vector<1x32xf32>
    %47 = arith.subf %45, %46 : vector<1x32xf32>
    %cst_17 = arith.constant 0.000000e+00 : f32
    %48 = vector.broadcast %cst_17 : f32 to vector<1x32xf32>
    %49 = arith.maximumf %47, %48 : vector<1x32xf32>
    %cst_18 = arith.constant 9.99999974E-6 : f32
    %50 = vector.broadcast %cst_18 : f32 to vector<1x32xf32>
    %51 = arith.addf %49, %50 : vector<1x32xf32>
    %52 = math.rsqrt %51 : vector<1x32xf32>
    %53 = arith.mulf %37, %52 : vector<1x32xf32>
    %54 = vector.broadcast %53 : vector<1x32xf32> to vector<64x32xf32>
    %55 = arith.mulf %36, %54 : vector<64x32xf32>
    %56 = arith.mulf %41, %53 : vector<1x32xf32>
    %57 = arith.subf %38, %56 : vector<1x32xf32>
    %58 = vector.broadcast %57 : vector<1x32xf32> to vector<64x32xf32>
    %59 = arith.addf %55, %58 : vector<64x32xf32>
    %cst_19 = arith.constant 0.000000e+00 : f32
    %60 = vector.broadcast %cst_19 : f32 to vector<64x32xf32>
    %61 = arith.maximumf %59, %60 : vector<64x32xf32>
    %62 = vector.shape_cast %61 : vector<64x32xf32> to vector<2x4x8x32xf32>
    %c0_20 = arith.constant 0 : index
    %c0_21 = arith.constant 0 : index
    %c0_22 = arith.constant 0 : index
    %c0_23 = arith.constant 0 : index
    %63 = vector.load %arg4[%c0_20, %c0_21, %c0_22, %c0_23] : memref<12x3x32x96xf32, #tpu.memory_space<vmem>>, vector<1x3x32x96xf32>
    %64 = vector.shape_cast %63 : vector<1x3x32x96xf32> to vector<3x32x96xf32>
    %65 = vector.shape_cast %62 : vector<2x4x8x32xf32> to vector<2x32x32xf32>
    %66 = vector.extract_strided_slice %65 {offsets = [0, 24, 0], sizes = [2, 8, 32], strides = [1, 1, 1]} : vector<2x32x32xf32> to vector<2x8x32xf32>
    %67 = vector.extract_strided_slice %65 {offsets = [0, 0, 0], sizes = [2, 24, 32], strides = [1, 1, 1]} : vector<2x32x32xf32> to vector<2x24x32xf32>
    %68 = tpu.concatenate %66, %67 in 1 : vector<2x8x32xf32>, vector<2x24x32xf32> -> vector<2x32x32xf32>
    %69 = vector.extract_strided_slice %65 {offsets = [0, 8, 0], sizes = [2, 24, 32], strides = [1, 1, 1]} : vector<2x32x32xf32> to vector<2x24x32xf32>
    %70 = vector.extract_strided_slice %65 {offsets = [0, 0, 0], sizes = [2, 8, 32], strides = [1, 1, 1]} : vector<2x32x32xf32> to vector<2x8x32xf32>
    %71 = tpu.concatenate %69, %70 in 1 : vector<2x24x32xf32>, vector<2x8x32xf32> -> vector<2x32x32xf32>
    %72 = vector.shape_cast %68 : vector<2x32x32xf32> to vector<64x32xf32>
    %73 = vector.extract_strided_slice %64 {offsets = [0, 0, 0], sizes = [1, 32, 96], strides = [1, 1, 1]} : vector<3x32x96xf32> to vector<1x32x96xf32>
    %74 = vector.shape_cast %73 : vector<1x32x96xf32> to vector<32x96xf32>
    %cst_24 = arith.constant dense<0.000000e+00> : vector<64x96xf32>
    %75 = tpu.matmul %72, %74, %cst_24 {dimension_numbers = #tpu.dot_dimension_numbers<[1], [0], [0], [1], [0, 0, 1, 1], [], []>} : vector<64x32xf32>, vector<32x96xf32>, vector<64x96xf32> -> vector<64x96xf32>
    %76 = vector.shape_cast %65 : vector<2x32x32xf32> to vector<64x32xf32>
    %77 = vector.extract_strided_slice %64 {offsets = [1, 0, 0], sizes = [1, 32, 96], strides = [1, 1, 1]} : vector<3x32x96xf32> to vector<1x32x96xf32>
    %78 = vector.shape_cast %77 : vector<1x32x96xf32> to vector<32x96xf32>
    %cst_25 = arith.constant dense<0.000000e+00> : vector<64x96xf32>
    %79 = tpu.matmul %76, %78, %cst_25 {dimension_numbers = #tpu.dot_dimension_numbers<[1], [0], [0], [1], [0, 0, 1, 1], [], []>} : vector<64x32xf32>, vector<32x96xf32>, vector<64x96xf32> -> vector<64x96xf32>
    %80 = arith.addf %75, %79 : vector<64x96xf32>
    %81 = vector.shape_cast %71 : vector<2x32x32xf32> to vector<64x32xf32>
    %82 = vector.extract_strided_slice %64 {offsets = [2, 0, 0], sizes = [1, 32, 96], strides = [1, 1, 1]} : vector<3x32x96xf32> to vector<1x32x96xf32>
    %83 = vector.shape_cast %82 : vector<1x32x96xf32> to vector<32x96xf32>
    %cst_26 = arith.constant dense<0.000000e+00> : vector<64x96xf32>
    %84 = tpu.matmul %81, %83, %cst_26 {dimension_numbers = #tpu.dot_dimension_numbers<[1], [0], [0], [1], [0, 0, 1, 1], [], []>} : vector<64x32xf32>, vector<32x96xf32>, vector<64x96xf32> -> vector<64x96xf32>
    %85 = arith.addf %80, %84 : vector<64x96xf32>
    %86 = vector.shape_cast %85 : vector<64x96xf32> to vector<8x8x96xf32>
    %87 = vector.extract_strided_slice %86 {offsets = [0, 0, 0], sizes = [8, 8, 32], strides = [1, 1, 1]} : vector<8x8x96xf32> to vector<8x8x32xf32>
    %88 = vector.extract_strided_slice %87 {offsets = [0, 7, 0], sizes = [8, 1, 32], strides = [1, 1, 1]} : vector<8x8x32xf32> to vector<8x1x32xf32>
    %89 = vector.extract_strided_slice %87 {offsets = [0, 0, 0], sizes = [8, 7, 32], strides = [1, 1, 1]} : vector<8x8x32xf32> to vector<8x7x32xf32>
    %90 = tpu.concatenate %88, %89 in 1 : vector<8x1x32xf32>, vector<8x7x32xf32> -> vector<8x8x32xf32>
    %91 = vector.extract_strided_slice %86 {offsets = [0, 0, 32], sizes = [8, 8, 32], strides = [1, 1, 1]} : vector<8x8x96xf32> to vector<8x8x32xf32>
    %92 = arith.addf %90, %91 : vector<8x8x32xf32>
    %93 = vector.extract_strided_slice %86 {offsets = [0, 0, 64], sizes = [8, 8, 32], strides = [1, 1, 1]} : vector<8x8x96xf32> to vector<8x8x32xf32>
    %94 = vector.extract_strided_slice %93 {offsets = [0, 1, 0], sizes = [8, 7, 32], strides = [1, 1, 1]} : vector<8x8x32xf32> to vector<8x7x32xf32>
    %95 = vector.extract_strided_slice %93 {offsets = [0, 0, 0], sizes = [8, 1, 32], strides = [1, 1, 1]} : vector<8x8x32xf32> to vector<8x1x32xf32>
    %96 = tpu.concatenate %94, %95 in 1 : vector<8x7x32xf32>, vector<8x1x32xf32> -> vector<8x8x32xf32>
    %97 = arith.addf %92, %96 : vector<8x8x32xf32>
    %98 = vector.shape_cast %97 : vector<8x8x32xf32> to vector<64x32xf32>
    %c0_27 = arith.constant 0 : index
    %c0_28 = arith.constant 0 : index
    %c0_29 = arith.constant 0 : index
    %99 = vector.load %arg5[%c0_27, %c0_28, %c0_29] : memref<12x1x32xf32, #tpu.memory_space<vmem>>, vector<1x1x32xf32>
    %100 = vector.shape_cast %99 : vector<1x1x32xf32> to vector<1x32xf32>
    %c0_30 = arith.constant 0 : index
    %c0_31 = arith.constant 0 : index
    %c0_32 = arith.constant 0 : index
    %101 = vector.load %arg6[%c0_30, %c0_31, %c0_32] : memref<12x1x32xf32, #tpu.memory_space<vmem>>, vector<1x1x32xf32>
    %102 = vector.shape_cast %101 : vector<1x1x32xf32> to vector<1x32xf32>
    %cst_33 = arith.constant dense<0.000000e+00> : vector<1x32xf32>
    %103 = tpu.matmul %1, %98, %cst_33 {dimension_numbers = #tpu.dot_dimension_numbers<[1], [0], [0], [1], [0, 0, 1, 1], [], []>} : vector<1x64xf32>, vector<64x32xf32>, vector<1x32xf32> -> vector<1x32xf32>
    %cst_34 = arith.constant 1.562500e-02 : f32
    %104 = vector.broadcast %cst_34 : f32 to vector<1x32xf32>
    %105 = arith.mulf %103, %104 : vector<1x32xf32>
    %106 = arith.mulf %98, %98 : vector<64x32xf32>
    %cst_35 = arith.constant dense<0.000000e+00> : vector<1x32xf32>
    %107 = tpu.matmul %1, %106, %cst_35 {dimension_numbers = #tpu.dot_dimension_numbers<[1], [0], [0], [1], [0, 0, 1, 1], [], []>} : vector<1x64xf32>, vector<64x32xf32>, vector<1x32xf32> -> vector<1x32xf32>
    %cst_36 = arith.constant 1.562500e-02 : f32
    %108 = vector.broadcast %cst_36 : f32 to vector<1x32xf32>
    %109 = arith.mulf %107, %108 : vector<1x32xf32>
    %110 = arith.mulf %105, %105 : vector<1x32xf32>
    %111 = arith.subf %109, %110 : vector<1x32xf32>
    %cst_37 = arith.constant 0.000000e+00 : f32
    %112 = vector.broadcast %cst_37 : f32 to vector<1x32xf32>
    %113 = arith.maximumf %111, %112 : vector<1x32xf32>
    %cst_38 = arith.constant 9.99999974E-6 : f32
    %114 = vector.broadcast %cst_38 : f32 to vector<1x32xf32>
    %115 = arith.addf %113, %114 : vector<1x32xf32>
    %116 = math.rsqrt %115 : vector<1x32xf32>
    %117 = arith.mulf %100, %116 : vector<1x32xf32>
    %118 = vector.broadcast %117 : vector<1x32xf32> to vector<64x32xf32>
    %119 = arith.mulf %98, %118 : vector<64x32xf32>
    %120 = arith.mulf %105, %117 : vector<1x32xf32>
    %121 = arith.subf %102, %120 : vector<1x32xf32>
    %122 = vector.broadcast %121 : vector<1x32xf32> to vector<64x32xf32>
    %123 = arith.addf %119, %122 : vector<64x32xf32>
    %124 = vector.shape_cast %123 : vector<64x32xf32> to vector<2x4x8x32xf32>
    %125 = arith.addf %62, %124 : vector<2x4x8x32xf32>
    %cst_39 = arith.constant 0.000000e+00 : f32
    %126 = vector.broadcast %cst_39 : f32 to vector<2x4x8x32xf32>
    %127 = arith.maximumf %125, %126 : vector<2x4x8x32xf32>
    %c1 = arith.constant 1 : index
    %c0_40 = arith.constant 0 : index
    %c0_41 = arith.constant 0 : index
    %c0_42 = arith.constant 0 : index
    %128 = vector.load %arg4[%c1, %c0_40, %c0_41, %c0_42] : memref<12x3x32x96xf32, #tpu.memory_space<vmem>>, vector<1x3x32x96xf32>
    %129 = vector.shape_cast %128 : vector<1x3x32x96xf32> to vector<3x32x96xf32>
    %130 = vector.shape_cast %127 : vector<2x4x8x32xf32> to vector<2x32x32xf32>
    %131 = vector.extract_strided_slice %130 {offsets = [0, 24, 0], sizes = [2, 8, 32], strides = [1, 1, 1]} : vector<2x32x32xf32> to vector<2x8x32xf32>
    %132 = vector.extract_strided_slice %130 {offsets = [0, 0, 0], sizes = [2, 24, 32], strides = [1, 1, 1]} : vector<2x32x32xf32> to vector<2x24x32xf32>
    %133 = tpu.concatenate %131, %132 in 1 : vector<2x8x32xf32>, vector<2x24x32xf32> -> vector<2x32x32xf32>
    %134 = vector.extract_strided_slice %130 {offsets = [0, 8, 0], sizes = [2, 24, 32], strides = [1, 1, 1]} : vector<2x32x32xf32> to vector<2x24x32xf32>
    %135 = vector.extract_strided_slice %130 {offsets = [0, 0, 0], sizes = [2, 8, 32], strides = [1, 1, 1]} : vector<2x32x32xf32> to vector<2x8x32xf32>
    %136 = tpu.concatenate %134, %135 in 1 : vector<2x24x32xf32>, vector<2x8x32xf32> -> vector<2x32x32xf32>
    %137 = vector.shape_cast %133 : vector<2x32x32xf32> to vector<64x32xf32>
    %138 = vector.extract_strided_slice %129 {offsets = [0, 0, 0], sizes = [1, 32, 96], strides = [1, 1, 1]} : vector<3x32x96xf32> to vector<1x32x96xf32>
    %139 = vector.shape_cast %138 : vector<1x32x96xf32> to vector<32x96xf32>
    %cst_43 = arith.constant dense<0.000000e+00> : vector<64x96xf32>
    %140 = tpu.matmul %137, %139, %cst_43 {dimension_numbers = #tpu.dot_dimension_numbers<[1], [0], [0], [1], [0, 0, 1, 1], [], []>} : vector<64x32xf32>, vector<32x96xf32>, vector<64x96xf32> -> vector<64x96xf32>
    %141 = vector.shape_cast %130 : vector<2x32x32xf32> to vector<64x32xf32>
    %142 = vector.extract_strided_slice %129 {offsets = [1, 0, 0], sizes = [1, 32, 96], strides = [1, 1, 1]} : vector<3x32x96xf32> to vector<1x32x96xf32>
    %143 = vector.shape_cast %142 : vector<1x32x96xf32> to vector<32x96xf32>
    %cst_44 = arith.constant dense<0.000000e+00> : vector<64x96xf32>
    %144 = tpu.matmul %141, %143, %cst_44 {dimension_numbers = #tpu.dot_dimension_numbers<[1], [0], [0], [1], [0, 0, 1, 1], [], []>} : vector<64x32xf32>, vector<32x96xf32>, vector<64x96xf32> -> vector<64x96xf32>
    %145 = arith.addf %140, %144 : vector<64x96xf32>
    %146 = vector.shape_cast %136 : vector<2x32x32xf32> to vector<64x32xf32>
    %147 = vector.extract_strided_slice %129 {offsets = [2, 0, 0], sizes = [1, 32, 96], strides = [1, 1, 1]} : vector<3x32x96xf32> to vector<1x32x96xf32>
    %148 = vector.shape_cast %147 : vector<1x32x96xf32> to vector<32x96xf32>
    %cst_45 = arith.constant dense<0.000000e+00> : vector<64x96xf32>
    %149 = tpu.matmul %146, %148, %cst_45 {dimension_numbers = #tpu.dot_dimension_numbers<[1], [0], [0], [1], [0, 0, 1, 1], [], []>} : vector<64x32xf32>, vector<32x96xf32>, vector<64x96xf32> -> vector<64x96xf32>
    %150 = arith.addf %145, %149 : vector<64x96xf32>
    %151 = vector.shape_cast %150 : vector<64x96xf32> to vector<8x8x96xf32>
    %152 = vector.extract_strided_slice %151 {offsets = [0, 0, 0], sizes = [8, 8, 32], strides = [1, 1, 1]} : vector<8x8x96xf32> to vector<8x8x32xf32>
    %153 = vector.extract_strided_slice %152 {offsets = [0, 7, 0], sizes = [8, 1, 32], strides = [1, 1, 1]} : vector<8x8x32xf32> to vector<8x1x32xf32>
    %154 = vector.extract_strided_slice %152 {offsets = [0, 0, 0], sizes = [8, 7, 32], strides = [1, 1, 1]} : vector<8x8x32xf32> to vector<8x7x32xf32>
    %155 = tpu.concatenate %153, %154 in 1 : vector<8x1x32xf32>, vector<8x7x32xf32> -> vector<8x8x32xf32>
    %156 = vector.extract_strided_slice %151 {offsets = [0, 0, 32], sizes = [8, 8, 32], strides = [1, 1, 1]} : vector<8x8x96xf32> to vector<8x8x32xf32>
    %157 = arith.addf %155, %156 : vector<8x8x32xf32>
    %158 = vector.extract_strided_slice %151 {offsets = [0, 0, 64], sizes = [8, 8, 32], strides = [1, 1, 1]} : vector<8x8x96xf32> to vector<8x8x32xf32>
    %159 = vector.extract_strided_slice %158 {offsets = [0, 1, 0], sizes = [8, 7, 32], strides = [1, 1, 1]} : vector<8x8x32xf32> to vector<8x7x32xf32>
    %160 = vector.extract_strided_slice %158 {offsets = [0, 0, 0], sizes = [8, 1, 32], strides = [1, 1, 1]} : vector<8x8x32xf32> to vector<8x1x32xf32>
    %161 = tpu.concatenate %159, %160 in 1 : vector<8x7x32xf32>, vector<8x1x32xf32> -> vector<8x8x32xf32>
    %162 = arith.addf %157, %161 : vector<8x8x32xf32>
    %163 = vector.shape_cast %162 : vector<8x8x32xf32> to vector<64x32xf32>
    %c1_46 = arith.constant 1 : index
    %c0_47 = arith.constant 0 : index
    %c0_48 = arith.constant 0 : index
    %164 = vector.load %arg5[%c1_46, %c0_47, %c0_48] : memref<12x1x32xf32, #tpu.memory_space<vmem>>, vector<1x1x32xf32>
    %165 = vector.shape_cast %164 : vector<1x1x32xf32> to vector<1x32xf32>
    %c1_49 = arith.constant 1 : index
    %c0_50 = arith.constant 0 : index
    %c0_51 = arith.constant 0 : index
    %166 = vector.load %arg6[%c1_49, %c0_50, %c0_51] : memref<12x1x32xf32, #tpu.memory_space<vmem>>, vector<1x1x32xf32>
    %167 = vector.shape_cast %166 : vector<1x1x32xf32> to vector<1x32xf32>
    %cst_52 = arith.constant dense<0.000000e+00> : vector<1x32xf32>
    %168 = tpu.matmul %1, %163, %cst_52 {dimension_numbers = #tpu.dot_dimension_numbers<[1], [0], [0], [1], [0, 0, 1, 1], [], []>} : vector<1x64xf32>, vector<64x32xf32>, vector<1x32xf32> -> vector<1x32xf32>
    %cst_53 = arith.constant 1.562500e-02 : f32
    %169 = vector.broadcast %cst_53 : f32 to vector<1x32xf32>
    %170 = arith.mulf %168, %169 : vector<1x32xf32>
    %171 = arith.mulf %163, %163 : vector<64x32xf32>
    %cst_54 = arith.constant dense<0.000000e+00> : vector<1x32xf32>
    %172 = tpu.matmul %1, %171, %cst_54 {dimension_numbers = #tpu.dot_dimension_numbers<[1], [0], [0], [1], [0, 0, 1, 1], [], []>} : vector<1x64xf32>, vector<64x32xf32>, vector<1x32xf32> -> vector<1x32xf32>
    %cst_55 = arith.constant 1.562500e-02 : f32
    %173 = vector.broadcast %cst_55 : f32 to vector<1x32xf32>
    %174 = arith.mulf %172, %173 : vector<1x32xf32>
    %175 = arith.mulf %170, %170 : vector<1x32xf32>
    %176 = arith.subf %174, %175 : vector<1x32xf32>
    %cst_56 = arith.constant 0.000000e+00 : f32
    %177 = vector.broadcast %cst_56 : f32 to vector<1x32xf32>
    %178 = arith.maximumf %176, %177 : vector<1x32xf32>
    %cst_57 = arith.constant 9.99999974E-6 : f32
    %179 = vector.broadcast %cst_57 : f32 to vector<1x32xf32>
    %180 = arith.addf %178, %179 : vector<1x32xf32>
    %181 = math.rsqrt %180 : vector<1x32xf32>
    %182 = arith.mulf %165, %181 : vector<1x32xf32>
    %183 = vector.broadcast %182 : vector<1x32xf32> to vector<64x32xf32>
    %184 = arith.mulf %163, %183 : vector<64x32xf32>
    %185 = arith.mulf %170, %182 : vector<1x32xf32>
    %186 = arith.subf %167, %185 : vector<1x32xf32>
    %187 = vector.broadcast %186 : vector<1x32xf32> to vector<64x32xf32>
    %188 = arith.addf %184, %187 : vector<64x32xf32>
    %189 = vector.shape_cast %188 : vector<64x32xf32> to vector<2x4x8x32xf32>
    %190 = arith.addf %127, %189 : vector<2x4x8x32xf32>
    %cst_58 = arith.constant 0.000000e+00 : f32
    %191 = vector.broadcast %cst_58 : f32 to vector<2x4x8x32xf32>
    %192 = arith.maximumf %190, %191 : vector<2x4x8x32xf32>
    %c2 = arith.constant 2 : index
    %c0_59 = arith.constant 0 : index
    %c0_60 = arith.constant 0 : index
    %c0_61 = arith.constant 0 : index
    %193 = vector.load %arg4[%c2, %c0_59, %c0_60, %c0_61] : memref<12x3x32x96xf32, #tpu.memory_space<vmem>>, vector<1x3x32x96xf32>
    %194 = vector.shape_cast %193 : vector<1x3x32x96xf32> to vector<3x32x96xf32>
    %195 = vector.shape_cast %192 : vector<2x4x8x32xf32> to vector<2x32x32xf32>
    %196 = vector.extract_strided_slice %195 {offsets = [0, 24, 0], sizes = [2, 8, 32], strides = [1, 1, 1]} : vector<2x32x32xf32> to vector<2x8x32xf32>
    %197 = vector.extract_strided_slice %195 {offsets = [0, 0, 0], sizes = [2, 24, 32], strides = [1, 1, 1]} : vector<2x32x32xf32> to vector<2x24x32xf32>
    %198 = tpu.concatenate %196, %197 in 1 : vector<2x8x32xf32>, vector<2x24x32xf32> -> vector<2x32x32xf32>
    %199 = vector.extract_strided_slice %195 {offsets = [0, 8, 0], sizes = [2, 24, 32], strides = [1, 1, 1]} : vector<2x32x32xf32> to vector<2x24x32xf32>
    %200 = vector.extract_strided_slice %195 {offsets = [0, 0, 0], sizes = [2, 8, 32], strides = [1, 1, 1]} : vector<2x32x32xf32> to vector<2x8x32xf32>
    %201 = tpu.concatenate %199, %200 in 1 : vector<2x24x32xf32>, vector<2x8x32xf32> -> vector<2x32x32xf32>
    %202 = vector.shape_cast %198 : vector<2x32x32xf32> to vector<64x32xf32>
    %203 = vector.extract_strided_slice %194 {offsets = [0, 0, 0], sizes = [1, 32, 96], strides = [1, 1, 1]} : vector<3x32x96xf32> to vector<1x32x96xf32>
    %204 = vector.shape_cast %203 : vector<1x32x96xf32> to vector<32x96xf32>
    %cst_62 = arith.constant dense<0.000000e+00> : vector<64x96xf32>
    %205 = tpu.matmul %202, %204, %cst_62 {dimension_numbers = #tpu.dot_dimension_numbers<[1], [0], [0], [1], [0, 0, 1, 1], [], []>} : vector<64x32xf32>, vector<32x96xf32>, vector<64x96xf32> -> vector<64x96xf32>
    %206 = vector.shape_cast %195 : vector<2x32x32xf32> to vector<64x32xf32>
    %207 = vector.extract_strided_slice %194 {offsets = [1, 0, 0], sizes = [1, 32, 96], strides = [1, 1, 1]} : vector<3x32x96xf32> to vector<1x32x96xf32>
    %208 = vector.shape_cast %207 : vector<1x32x96xf32> to vector<32x96xf32>
    %cst_63 = arith.constant dense<0.000000e+00> : vector<64x96xf32>
    %209 = tpu.matmul %206, %208, %cst_63 {dimension_numbers = #tpu.dot_dimension_numbers<[1], [0], [0], [1], [0, 0, 1, 1], [], []>} : vector<64x32xf32>, vector<32x96xf32>, vector<64x96xf32> -> vector<64x96xf32>
    %210 = arith.addf %205, %209 : vector<64x96xf32>
    %211 = vector.shape_cast %201 : vector<2x32x32xf32> to vector<64x32xf32>
    %212 = vector.extract_strided_slice %194 {offsets = [2, 0, 0], sizes = [1, 32, 96], strides = [1, 1, 1]} : vector<3x32x96xf32> to vector<1x32x96xf32>
    %213 = vector.shape_cast %212 : vector<1x32x96xf32> to vector<32x96xf32>
    %cst_64 = arith.constant dense<0.000000e+00> : vector<64x96xf32>
    %214 = tpu.matmul %211, %213, %cst_64 {dimension_numbers = #tpu.dot_dimension_numbers<[1], [0], [0], [1], [0, 0, 1, 1], [], []>} : vector<64x32xf32>, vector<32x96xf32>, vector<64x96xf32> -> vector<64x96xf32>
    %215 = arith.addf %210, %214 : vector<64x96xf32>
    %216 = vector.shape_cast %215 : vector<64x96xf32> to vector<8x8x96xf32>
    %217 = vector.extract_strided_slice %216 {offsets = [0, 0, 0], sizes = [8, 8, 32], strides = [1, 1, 1]} : vector<8x8x96xf32> to vector<8x8x32xf32>
    %218 = vector.extract_strided_slice %217 {offsets = [0, 7, 0], sizes = [8, 1, 32], strides = [1, 1, 1]} : vector<8x8x32xf32> to vector<8x1x32xf32>
    %219 = vector.extract_strided_slice %217 {offsets = [0, 0, 0], sizes = [8, 7, 32], strides = [1, 1, 1]} : vector<8x8x32xf32> to vector<8x7x32xf32>
    %220 = tpu.concatenate %218, %219 in 1 : vector<8x1x32xf32>, vector<8x7x32xf32> -> vector<8x8x32xf32>
    %221 = vector.extract_strided_slice %216 {offsets = [0, 0, 32], sizes = [8, 8, 32], strides = [1, 1, 1]} : vector<8x8x96xf32> to vector<8x8x32xf32>
    %222 = arith.addf %220, %221 : vector<8x8x32xf32>
    %223 = vector.extract_strided_slice %216 {offsets = [0, 0, 64], sizes = [8, 8, 32], strides = [1, 1, 1]} : vector<8x8x96xf32> to vector<8x8x32xf32>
    %224 = vector.extract_strided_slice %223 {offsets = [0, 1, 0], sizes = [8, 7, 32], strides = [1, 1, 1]} : vector<8x8x32xf32> to vector<8x7x32xf32>
    %225 = vector.extract_strided_slice %223 {offsets = [0, 0, 0], sizes = [8, 1, 32], strides = [1, 1, 1]} : vector<8x8x32xf32> to vector<8x1x32xf32>
    %226 = tpu.concatenate %224, %225 in 1 : vector<8x7x32xf32>, vector<8x1x32xf32> -> vector<8x8x32xf32>
    %227 = arith.addf %222, %226 : vector<8x8x32xf32>
    %228 = vector.shape_cast %227 : vector<8x8x32xf32> to vector<64x32xf32>
    %c2_65 = arith.constant 2 : index
    %c0_66 = arith.constant 0 : index
    %c0_67 = arith.constant 0 : index
    %229 = vector.load %arg5[%c2_65, %c0_66, %c0_67] : memref<12x1x32xf32, #tpu.memory_space<vmem>>, vector<1x1x32xf32>
    %230 = vector.shape_cast %229 : vector<1x1x32xf32> to vector<1x32xf32>
    %c2_68 = arith.constant 2 : index
    %c0_69 = arith.constant 0 : index
    %c0_70 = arith.constant 0 : index
    %231 = vector.load %arg6[%c2_68, %c0_69, %c0_70] : memref<12x1x32xf32, #tpu.memory_space<vmem>>, vector<1x1x32xf32>
    %232 = vector.shape_cast %231 : vector<1x1x32xf32> to vector<1x32xf32>
    %cst_71 = arith.constant dense<0.000000e+00> : vector<1x32xf32>
    %233 = tpu.matmul %1, %228, %cst_71 {dimension_numbers = #tpu.dot_dimension_numbers<[1], [0], [0], [1], [0, 0, 1, 1], [], []>} : vector<1x64xf32>, vector<64x32xf32>, vector<1x32xf32> -> vector<1x32xf32>
    %cst_72 = arith.constant 1.562500e-02 : f32
    %234 = vector.broadcast %cst_72 : f32 to vector<1x32xf32>
    %235 = arith.mulf %233, %234 : vector<1x32xf32>
    %236 = arith.mulf %228, %228 : vector<64x32xf32>
    %cst_73 = arith.constant dense<0.000000e+00> : vector<1x32xf32>
    %237 = tpu.matmul %1, %236, %cst_73 {dimension_numbers = #tpu.dot_dimension_numbers<[1], [0], [0], [1], [0, 0, 1, 1], [], []>} : vector<1x64xf32>, vector<64x32xf32>, vector<1x32xf32> -> vector<1x32xf32>
    %cst_74 = arith.constant 1.562500e-02 : f32
    %238 = vector.broadcast %cst_74 : f32 to vector<1x32xf32>
    %239 = arith.mulf %237, %238 : vector<1x32xf32>
    %240 = arith.mulf %235, %235 : vector<1x32xf32>
    %241 = arith.subf %239, %240 : vector<1x32xf32>
    %cst_75 = arith.constant 0.000000e+00 : f32
    %242 = vector.broadcast %cst_75 : f32 to vector<1x32xf32>
    %243 = arith.maximumf %241, %242 : vector<1x32xf32>
    %cst_76 = arith.constant 9.99999974E-6 : f32
    %244 = vector.broadcast %cst_76 : f32 to vector<1x32xf32>
    %245 = arith.addf %243, %244 : vector<1x32xf32>
    %246 = math.rsqrt %245 : vector<1x32xf32>
    %247 = arith.mulf %230, %246 : vector<1x32xf32>
    %248 = vector.broadcast %247 : vector<1x32xf32> to vector<64x32xf32>
    %249 = arith.mulf %228, %248 : vector<64x32xf32>
    %250 = arith.mulf %235, %247 : vector<1x32xf32>
    %251 = arith.subf %232, %250 : vector<1x32xf32>
    %252 = vector.broadcast %251 : vector<1x32xf32> to vector<64x32xf32>
    %253 = arith.addf %249, %252 : vector<64x32xf32>
    %254 = vector.shape_cast %253 : vector<64x32xf32> to vector<2x4x8x32xf32>
    %255 = arith.addf %192, %254 : vector<2x4x8x32xf32>
    %cst_77 = arith.constant 0.000000e+00 : f32
    %256 = vector.broadcast %cst_77 : f32 to vector<2x4x8x32xf32>
    %257 = arith.maximumf %255, %256 : vector<2x4x8x32xf32>
    %c3 = arith.constant 3 : index
    %c0_78 = arith.constant 0 : index
    %c0_79 = arith.constant 0 : index
    %c0_80 = arith.constant 0 : index
    %258 = vector.load %arg4[%c3, %c0_78, %c0_79, %c0_80] : memref<12x3x32x96xf32, #tpu.memory_space<vmem>>, vector<1x3x32x96xf32>
    %259 = vector.shape_cast %258 : vector<1x3x32x96xf32> to vector<3x32x96xf32>
    %260 = vector.shape_cast %257 : vector<2x4x8x32xf32> to vector<2x32x32xf32>
    %261 = vector.extract_strided_slice %260 {offsets = [0, 24, 0], sizes = [2, 8, 32], strides = [1, 1, 1]} : vector<2x32x32xf32> to vector<2x8x32xf32>
    %262 = vector.extract_strided_slice %260 {offsets = [0, 0, 0], sizes = [2, 24, 32], strides = [1, 1, 1]} : vector<2x32x32xf32> to vector<2x24x32xf32>
    %263 = tpu.concatenate %261, %262 in 1 : vector<2x8x32xf32>, vector<2x24x32xf32> -> vector<2x32x32xf32>
    %264 = vector.extract_strided_slice %260 {offsets = [0, 8, 0], sizes = [2, 24, 32], strides = [1, 1, 1]} : vector<2x32x32xf32> to vector<2x24x32xf32>
    %265 = vector.extract_strided_slice %260 {offsets = [0, 0, 0], sizes = [2, 8, 32], strides = [1, 1, 1]} : vector<2x32x32xf32> to vector<2x8x32xf32>
    %266 = tpu.concatenate %264, %265 in 1 : vector<2x24x32xf32>, vector<2x8x32xf32> -> vector<2x32x32xf32>
    %267 = vector.shape_cast %263 : vector<2x32x32xf32> to vector<64x32xf32>
    %268 = vector.extract_strided_slice %259 {offsets = [0, 0, 0], sizes = [1, 32, 96], strides = [1, 1, 1]} : vector<3x32x96xf32> to vector<1x32x96xf32>
    %269 = vector.shape_cast %268 : vector<1x32x96xf32> to vector<32x96xf32>
    %cst_81 = arith.constant dense<0.000000e+00> : vector<64x96xf32>
    %270 = tpu.matmul %267, %269, %cst_81 {dimension_numbers = #tpu.dot_dimension_numbers<[1], [0], [0], [1], [0, 0, 1, 1], [], []>} : vector<64x32xf32>, vector<32x96xf32>, vector<64x96xf32> -> vector<64x96xf32>
    %271 = vector.shape_cast %260 : vector<2x32x32xf32> to vector<64x32xf32>
    %272 = vector.extract_strided_slice %259 {offsets = [1, 0, 0], sizes = [1, 32, 96], strides = [1, 1, 1]} : vector<3x32x96xf32> to vector<1x32x96xf32>
    %273 = vector.shape_cast %272 : vector<1x32x96xf32> to vector<32x96xf32>
    %cst_82 = arith.constant dense<0.000000e+00> : vector<64x96xf32>
    %274 = tpu.matmul %271, %273, %cst_82 {dimension_numbers = #tpu.dot_dimension_numbers<[1], [0], [0], [1], [0, 0, 1, 1], [], []>} : vector<64x32xf32>, vector<32x96xf32>, vector<64x96xf32> -> vector<64x96xf32>
    %275 = arith.addf %270, %274 : vector<64x96xf32>
    %276 = vector.shape_cast %266 : vector<2x32x32xf32> to vector<64x32xf32>
    %277 = vector.extract_strided_slice %259 {offsets = [2, 0, 0], sizes = [1, 32, 96], strides = [1, 1, 1]} : vector<3x32x96xf32> to vector<1x32x96xf32>
    %278 = vector.shape_cast %277 : vector<1x32x96xf32> to vector<32x96xf32>
    %cst_83 = arith.constant dense<0.000000e+00> : vector<64x96xf32>
    %279 = tpu.matmul %276, %278, %cst_83 {dimension_numbers = #tpu.dot_dimension_numbers<[1], [0], [0], [1], [0, 0, 1, 1], [], []>} : vector<64x32xf32>, vector<32x96xf32>, vector<64x96xf32> -> vector<64x96xf32>
    %280 = arith.addf %275, %279 : vector<64x96xf32>
    %281 = vector.shape_cast %280 : vector<64x96xf32> to vector<8x8x96xf32>
    %282 = vector.extract_strided_slice %281 {offsets = [0, 0, 0], sizes = [8, 8, 32], strides = [1, 1, 1]} : vector<8x8x96xf32> to vector<8x8x32xf32>
    %283 = vector.extract_strided_slice %282 {offsets = [0, 7, 0], sizes = [8, 1, 32], strides = [1, 1, 1]} : vector<8x8x32xf32> to vector<8x1x32xf32>
    %284 = vector.extract_strided_slice %282 {offsets = [0, 0, 0], sizes = [8, 7, 32], strides = [1, 1, 1]} : vector<8x8x32xf32> to vector<8x7x32xf32>
    %285 = tpu.concatenate %283, %284 in 1 : vector<8x1x32xf32>, vector<8x7x32xf32> -> vector<8x8x32xf32>
    %286 = vector.extract_strided_slice %281 {offsets = [0, 0, 32], sizes = [8, 8, 32], strides = [1, 1, 1]} : vector<8x8x96xf32> to vector<8x8x32xf32>
    %287 = arith.addf %285, %286 : vector<8x8x32xf32>
    %288 = vector.extract_strided_slice %281 {offsets = [0, 0, 64], sizes = [8, 8, 32], strides = [1, 1, 1]} : vector<8x8x96xf32> to vector<8x8x32xf32>
    %289 = vector.extract_strided_slice %288 {offsets = [0, 1, 0], sizes = [8, 7, 32], strides = [1, 1, 1]} : vector<8x8x32xf32> to vector<8x7x32xf32>
    %290 = vector.extract_strided_slice %288 {offsets = [0, 0, 0], sizes = [8, 1, 32], strides = [1, 1, 1]} : vector<8x8x32xf32> to vector<8x1x32xf32>
    %291 = tpu.concatenate %289, %290 in 1 : vector<8x7x32xf32>, vector<8x1x32xf32> -> vector<8x8x32xf32>
    %292 = arith.addf %287, %291 : vector<8x8x32xf32>
    %293 = vector.shape_cast %292 : vector<8x8x32xf32> to vector<64x32xf32>
    %c3_84 = arith.constant 3 : index
    %c0_85 = arith.constant 0 : index
    %c0_86 = arith.constant 0 : index
    %294 = vector.load %arg5[%c3_84, %c0_85, %c0_86] : memref<12x1x32xf32, #tpu.memory_space<vmem>>, vector<1x1x32xf32>
    %295 = vector.shape_cast %294 : vector<1x1x32xf32> to vector<1x32xf32>
    %c3_87 = arith.constant 3 : index
    %c0_88 = arith.constant 0 : index
    %c0_89 = arith.constant 0 : index
    %296 = vector.load %arg6[%c3_87, %c0_88, %c0_89] : memref<12x1x32xf32, #tpu.memory_space<vmem>>, vector<1x1x32xf32>
    %297 = vector.shape_cast %296 : vector<1x1x32xf32> to vector<1x32xf32>
    %cst_90 = arith.constant dense<0.000000e+00> : vector<1x32xf32>
    %298 = tpu.matmul %1, %293, %cst_90 {dimension_numbers = #tpu.dot_dimension_numbers<[1], [0], [0], [1], [0, 0, 1, 1], [], []>} : vector<1x64xf32>, vector<64x32xf32>, vector<1x32xf32> -> vector<1x32xf32>
    %cst_91 = arith.constant 1.562500e-02 : f32
    %299 = vector.broadcast %cst_91 : f32 to vector<1x32xf32>
    %300 = arith.mulf %298, %299 : vector<1x32xf32>
    %301 = arith.mulf %293, %293 : vector<64x32xf32>
    %cst_92 = arith.constant dense<0.000000e+00> : vector<1x32xf32>
    %302 = tpu.matmul %1, %301, %cst_92 {dimension_numbers = #tpu.dot_dimension_numbers<[1], [0], [0], [1], [0, 0, 1, 1], [], []>} : vector<1x64xf32>, vector<64x32xf32>, vector<1x32xf32> -> vector<1x32xf32>
    %cst_93 = arith.constant 1.562500e-02 : f32
    %303 = vector.broadcast %cst_93 : f32 to vector<1x32xf32>
    %304 = arith.mulf %302, %303 : vector<1x32xf32>
    %305 = arith.mulf %300, %300 : vector<1x32xf32>
    %306 = arith.subf %304, %305 : vector<1x32xf32>
    %cst_94 = arith.constant 0.000000e+00 : f32
    %307 = vector.broadcast %cst_94 : f32 to vector<1x32xf32>
    %308 = arith.maximumf %306, %307 : vector<1x32xf32>
    %cst_95 = arith.constant 9.99999974E-6 : f32
    %309 = vector.broadcast %cst_95 : f32 to vector<1x32xf32>
    %310 = arith.addf %308, %309 : vector<1x32xf32>
    %311 = math.rsqrt %310 : vector<1x32xf32>
    %312 = arith.mulf %295, %311 : vector<1x32xf32>
    %313 = vector.broadcast %312 : vector<1x32xf32> to vector<64x32xf32>
    %314 = arith.mulf %293, %313 : vector<64x32xf32>
    %315 = arith.mulf %300, %312 : vector<1x32xf32>
    %316 = arith.subf %297, %315 : vector<1x32xf32>
    %317 = vector.broadcast %316 : vector<1x32xf32> to vector<64x32xf32>
    %318 = arith.addf %314, %317 : vector<64x32xf32>
    %319 = vector.shape_cast %318 : vector<64x32xf32> to vector<2x4x8x32xf32>
    %320 = arith.addf %257, %319 : vector<2x4x8x32xf32>
    %cst_96 = arith.constant 0.000000e+00 : f32
    %321 = vector.broadcast %cst_96 : f32 to vector<2x4x8x32xf32>
    %322 = arith.maximumf %320, %321 : vector<2x4x8x32xf32>
    %c4 = arith.constant 4 : index
    %c0_97 = arith.constant 0 : index
    %c0_98 = arith.constant 0 : index
    %c0_99 = arith.constant 0 : index
    %323 = vector.load %arg4[%c4, %c0_97, %c0_98, %c0_99] : memref<12x3x32x96xf32, #tpu.memory_space<vmem>>, vector<1x3x32x96xf32>
    %324 = vector.shape_cast %323 : vector<1x3x32x96xf32> to vector<3x32x96xf32>
    %325 = vector.shape_cast %322 : vector<2x4x8x32xf32> to vector<2x32x32xf32>
    %326 = vector.extract_strided_slice %325 {offsets = [0, 24, 0], sizes = [2, 8, 32], strides = [1, 1, 1]} : vector<2x32x32xf32> to vector<2x8x32xf32>
    %327 = vector.extract_strided_slice %325 {offsets = [0, 0, 0], sizes = [2, 24, 32], strides = [1, 1, 1]} : vector<2x32x32xf32> to vector<2x24x32xf32>
    %328 = tpu.concatenate %326, %327 in 1 : vector<2x8x32xf32>, vector<2x24x32xf32> -> vector<2x32x32xf32>
    %329 = vector.extract_strided_slice %325 {offsets = [0, 8, 0], sizes = [2, 24, 32], strides = [1, 1, 1]} : vector<2x32x32xf32> to vector<2x24x32xf32>
    %330 = vector.extract_strided_slice %325 {offsets = [0, 0, 0], sizes = [2, 8, 32], strides = [1, 1, 1]} : vector<2x32x32xf32> to vector<2x8x32xf32>
    %331 = tpu.concatenate %329, %330 in 1 : vector<2x24x32xf32>, vector<2x8x32xf32> -> vector<2x32x32xf32>
    %332 = vector.shape_cast %328 : vector<2x32x32xf32> to vector<64x32xf32>
    %333 = vector.extract_strided_slice %324 {offsets = [0, 0, 0], sizes = [1, 32, 96], strides = [1, 1, 1]} : vector<3x32x96xf32> to vector<1x32x96xf32>
    %334 = vector.shape_cast %333 : vector<1x32x96xf32> to vector<32x96xf32>
    %cst_100 = arith.constant dense<0.000000e+00> : vector<64x96xf32>
    %335 = tpu.matmul %332, %334, %cst_100 {dimension_numbers = #tpu.dot_dimension_numbers<[1], [0], [0], [1], [0, 0, 1, 1], [], []>} : vector<64x32xf32>, vector<32x96xf32>, vector<64x96xf32> -> vector<64x96xf32>
    %336 = vector.shape_cast %325 : vector<2x32x32xf32> to vector<64x32xf32>
    %337 = vector.extract_strided_slice %324 {offsets = [1, 0, 0], sizes = [1, 32, 96], strides = [1, 1, 1]} : vector<3x32x96xf32> to vector<1x32x96xf32>
    %338 = vector.shape_cast %337 : vector<1x32x96xf32> to vector<32x96xf32>
    %cst_101 = arith.constant dense<0.000000e+00> : vector<64x96xf32>
    %339 = tpu.matmul %336, %338, %cst_101 {dimension_numbers = #tpu.dot_dimension_numbers<[1], [0], [0], [1], [0, 0, 1, 1], [], []>} : vector<64x32xf32>, vector<32x96xf32>, vector<64x96xf32> -> vector<64x96xf32>
    %340 = arith.addf %335, %339 : vector<64x96xf32>
    %341 = vector.shape_cast %331 : vector<2x32x32xf32> to vector<64x32xf32>
    %342 = vector.extract_strided_slice %324 {offsets = [2, 0, 0], sizes = [1, 32, 96], strides = [1, 1, 1]} : vector<3x32x96xf32> to vector<1x32x96xf32>
    %343 = vector.shape_cast %342 : vector<1x32x96xf32> to vector<32x96xf32>
    %cst_102 = arith.constant dense<0.000000e+00> : vector<64x96xf32>
    %344 = tpu.matmul %341, %343, %cst_102 {dimension_numbers = #tpu.dot_dimension_numbers<[1], [0], [0], [1], [0, 0, 1, 1], [], []>} : vector<64x32xf32>, vector<32x96xf32>, vector<64x96xf32> -> vector<64x96xf32>
    %345 = arith.addf %340, %344 : vector<64x96xf32>
    %346 = vector.shape_cast %345 : vector<64x96xf32> to vector<8x8x96xf32>
    %347 = vector.extract_strided_slice %346 {offsets = [0, 0, 0], sizes = [8, 8, 32], strides = [1, 1, 1]} : vector<8x8x96xf32> to vector<8x8x32xf32>
    %348 = vector.extract_strided_slice %347 {offsets = [0, 7, 0], sizes = [8, 1, 32], strides = [1, 1, 1]} : vector<8x8x32xf32> to vector<8x1x32xf32>
    %349 = vector.extract_strided_slice %347 {offsets = [0, 0, 0], sizes = [8, 7, 32], strides = [1, 1, 1]} : vector<8x8x32xf32> to vector<8x7x32xf32>
    %350 = tpu.concatenate %348, %349 in 1 : vector<8x1x32xf32>, vector<8x7x32xf32> -> vector<8x8x32xf32>
    %351 = vector.extract_strided_slice %346 {offsets = [0, 0, 32], sizes = [8, 8, 32], strides = [1, 1, 1]} : vector<8x8x96xf32> to vector<8x8x32xf32>
    %352 = arith.addf %350, %351 : vector<8x8x32xf32>
    %353 = vector.extract_strided_slice %346 {offsets = [0, 0, 64], sizes = [8, 8, 32], strides = [1, 1, 1]} : vector<8x8x96xf32> to vector<8x8x32xf32>
    %354 = vector.extract_strided_slice %353 {offsets = [0, 1, 0], sizes = [8, 7, 32], strides = [1, 1, 1]} : vector<8x8x32xf32> to vector<8x7x32xf32>
    %355 = vector.extract_strided_slice %353 {offsets = [0, 0, 0], sizes = [8, 1, 32], strides = [1, 1, 1]} : vector<8x8x32xf32> to vector<8x1x32xf32>
    %356 = tpu.concatenate %354, %355 in 1 : vector<8x7x32xf32>, vector<8x1x32xf32> -> vector<8x8x32xf32>
    %357 = arith.addf %352, %356 : vector<8x8x32xf32>
    %358 = vector.shape_cast %357 : vector<8x8x32xf32> to vector<64x32xf32>
    %c4_103 = arith.constant 4 : index
    %c0_104 = arith.constant 0 : index
    %c0_105 = arith.constant 0 : index
    %359 = vector.load %arg5[%c4_103, %c0_104, %c0_105] : memref<12x1x32xf32, #tpu.memory_space<vmem>>, vector<1x1x32xf32>
    %360 = vector.shape_cast %359 : vector<1x1x32xf32> to vector<1x32xf32>
    %c4_106 = arith.constant 4 : index
    %c0_107 = arith.constant 0 : index
    %c0_108 = arith.constant 0 : index
    %361 = vector.load %arg6[%c4_106, %c0_107, %c0_108] : memref<12x1x32xf32, #tpu.memory_space<vmem>>, vector<1x1x32xf32>
    %362 = vector.shape_cast %361 : vector<1x1x32xf32> to vector<1x32xf32>
    %cst_109 = arith.constant dense<0.000000e+00> : vector<1x32xf32>
    %363 = tpu.matmul %1, %358, %cst_109 {dimension_numbers = #tpu.dot_dimension_numbers<[1], [0], [0], [1], [0, 0, 1, 1], [], []>} : vector<1x64xf32>, vector<64x32xf32>, vector<1x32xf32> -> vector<1x32xf32>
    %cst_110 = arith.constant 1.562500e-02 : f32
    %364 = vector.broadcast %cst_110 : f32 to vector<1x32xf32>
    %365 = arith.mulf %363, %364 : vector<1x32xf32>
    %366 = arith.mulf %358, %358 : vector<64x32xf32>
    %cst_111 = arith.constant dense<0.000000e+00> : vector<1x32xf32>
    %367 = tpu.matmul %1, %366, %cst_111 {dimension_numbers = #tpu.dot_dimension_numbers<[1], [0], [0], [1], [0, 0, 1, 1], [], []>} : vector<1x64xf32>, vector<64x32xf32>, vector<1x32xf32> -> vector<1x32xf32>
    %cst_112 = arith.constant 1.562500e-02 : f32
    %368 = vector.broadcast %cst_112 : f32 to vector<1x32xf32>
    %369 = arith.mulf %367, %368 : vector<1x32xf32>
    %370 = arith.mulf %365, %365 : vector<1x32xf32>
    %371 = arith.subf %369, %370 : vector<1x32xf32>
    %cst_113 = arith.constant 0.000000e+00 : f32
    %372 = vector.broadcast %cst_113 : f32 to vector<1x32xf32>
    %373 = arith.maximumf %371, %372 : vector<1x32xf32>
    %cst_114 = arith.constant 9.99999974E-6 : f32
    %374 = vector.broadcast %cst_114 : f32 to vector<1x32xf32>
    %375 = arith.addf %373, %374 : vector<1x32xf32>
    %376 = math.rsqrt %375 : vector<1x32xf32>
    %377 = arith.mulf %360, %376 : vector<1x32xf32>
    %378 = vector.broadcast %377 : vector<1x32xf32> to vector<64x32xf32>
    %379 = arith.mulf %358, %378 : vector<64x32xf32>
    %380 = arith.mulf %365, %377 : vector<1x32xf32>
    %381 = arith.subf %362, %380 : vector<1x32xf32>
    %382 = vector.broadcast %381 : vector<1x32xf32> to vector<64x32xf32>
    %383 = arith.addf %379, %382 : vector<64x32xf32>
    %384 = vector.shape_cast %383 : vector<64x32xf32> to vector<2x4x8x32xf32>
    %385 = arith.addf %322, %384 : vector<2x4x8x32xf32>
    %cst_115 = arith.constant 0.000000e+00 : f32
    %386 = vector.broadcast %cst_115 : f32 to vector<2x4x8x32xf32>
    %387 = arith.maximumf %385, %386 : vector<2x4x8x32xf32>
    %c5 = arith.constant 5 : index
    %c0_116 = arith.constant 0 : index
    %c0_117 = arith.constant 0 : index
    %c0_118 = arith.constant 0 : index
    %388 = vector.load %arg4[%c5, %c0_116, %c0_117, %c0_118] : memref<12x3x32x96xf32, #tpu.memory_space<vmem>>, vector<1x3x32x96xf32>
    %389 = vector.shape_cast %388 : vector<1x3x32x96xf32> to vector<3x32x96xf32>
    %390 = vector.shape_cast %387 : vector<2x4x8x32xf32> to vector<2x32x32xf32>
    %391 = vector.extract_strided_slice %390 {offsets = [0, 24, 0], sizes = [2, 8, 32], strides = [1, 1, 1]} : vector<2x32x32xf32> to vector<2x8x32xf32>
    %392 = vector.extract_strided_slice %390 {offsets = [0, 0, 0], sizes = [2, 24, 32], strides = [1, 1, 1]} : vector<2x32x32xf32> to vector<2x24x32xf32>
    %393 = tpu.concatenate %391, %392 in 1 : vector<2x8x32xf32>, vector<2x24x32xf32> -> vector<2x32x32xf32>
    %394 = vector.extract_strided_slice %390 {offsets = [0, 8, 0], sizes = [2, 24, 32], strides = [1, 1, 1]} : vector<2x32x32xf32> to vector<2x24x32xf32>
    %395 = vector.extract_strided_slice %390 {offsets = [0, 0, 0], sizes = [2, 8, 32], strides = [1, 1, 1]} : vector<2x32x32xf32> to vector<2x8x32xf32>
    %396 = tpu.concatenate %394, %395 in 1 : vector<2x24x32xf32>, vector<2x8x32xf32> -> vector<2x32x32xf32>
    %397 = vector.shape_cast %393 : vector<2x32x32xf32> to vector<64x32xf32>
    %398 = vector.extract_strided_slice %389 {offsets = [0, 0, 0], sizes = [1, 32, 96], strides = [1, 1, 1]} : vector<3x32x96xf32> to vector<1x32x96xf32>
    %399 = vector.shape_cast %398 : vector<1x32x96xf32> to vector<32x96xf32>
    %cst_119 = arith.constant dense<0.000000e+00> : vector<64x96xf32>
    %400 = tpu.matmul %397, %399, %cst_119 {dimension_numbers = #tpu.dot_dimension_numbers<[1], [0], [0], [1], [0, 0, 1, 1], [], []>} : vector<64x32xf32>, vector<32x96xf32>, vector<64x96xf32> -> vector<64x96xf32>
    %401 = vector.shape_cast %390 : vector<2x32x32xf32> to vector<64x32xf32>
    %402 = vector.extract_strided_slice %389 {offsets = [1, 0, 0], sizes = [1, 32, 96], strides = [1, 1, 1]} : vector<3x32x96xf32> to vector<1x32x96xf32>
    %403 = vector.shape_cast %402 : vector<1x32x96xf32> to vector<32x96xf32>
    %cst_120 = arith.constant dense<0.000000e+00> : vector<64x96xf32>
    %404 = tpu.matmul %401, %403, %cst_120 {dimension_numbers = #tpu.dot_dimension_numbers<[1], [0], [0], [1], [0, 0, 1, 1], [], []>} : vector<64x32xf32>, vector<32x96xf32>, vector<64x96xf32> -> vector<64x96xf32>
    %405 = arith.addf %400, %404 : vector<64x96xf32>
    %406 = vector.shape_cast %396 : vector<2x32x32xf32> to vector<64x32xf32>
    %407 = vector.extract_strided_slice %389 {offsets = [2, 0, 0], sizes = [1, 32, 96], strides = [1, 1, 1]} : vector<3x32x96xf32> to vector<1x32x96xf32>
    %408 = vector.shape_cast %407 : vector<1x32x96xf32> to vector<32x96xf32>
    %cst_121 = arith.constant dense<0.000000e+00> : vector<64x96xf32>
    %409 = tpu.matmul %406, %408, %cst_121 {dimension_numbers = #tpu.dot_dimension_numbers<[1], [0], [0], [1], [0, 0, 1, 1], [], []>} : vector<64x32xf32>, vector<32x96xf32>, vector<64x96xf32> -> vector<64x96xf32>
    %410 = arith.addf %405, %409 : vector<64x96xf32>
    %411 = vector.shape_cast %410 : vector<64x96xf32> to vector<8x8x96xf32>
    %412 = vector.extract_strided_slice %411 {offsets = [0, 0, 0], sizes = [8, 8, 32], strides = [1, 1, 1]} : vector<8x8x96xf32> to vector<8x8x32xf32>
    %413 = vector.extract_strided_slice %412 {offsets = [0, 7, 0], sizes = [8, 1, 32], strides = [1, 1, 1]} : vector<8x8x32xf32> to vector<8x1x32xf32>
    %414 = vector.extract_strided_slice %412 {offsets = [0, 0, 0], sizes = [8, 7, 32], strides = [1, 1, 1]} : vector<8x8x32xf32> to vector<8x7x32xf32>
    %415 = tpu.concatenate %413, %414 in 1 : vector<8x1x32xf32>, vector<8x7x32xf32> -> vector<8x8x32xf32>
    %416 = vector.extract_strided_slice %411 {offsets = [0, 0, 32], sizes = [8, 8, 32], strides = [1, 1, 1]} : vector<8x8x96xf32> to vector<8x8x32xf32>
    %417 = arith.addf %415, %416 : vector<8x8x32xf32>
    %418 = vector.extract_strided_slice %411 {offsets = [0, 0, 64], sizes = [8, 8, 32], strides = [1, 1, 1]} : vector<8x8x96xf32> to vector<8x8x32xf32>
    %419 = vector.extract_strided_slice %418 {offsets = [0, 1, 0], sizes = [8, 7, 32], strides = [1, 1, 1]} : vector<8x8x32xf32> to vector<8x7x32xf32>
    %420 = vector.extract_strided_slice %418 {offsets = [0, 0, 0], sizes = [8, 1, 32], strides = [1, 1, 1]} : vector<8x8x32xf32> to vector<8x1x32xf32>
    %421 = tpu.concatenate %419, %420 in 1 : vector<8x7x32xf32>, vector<8x1x32xf32> -> vector<8x8x32xf32>
    %422 = arith.addf %417, %421 : vector<8x8x32xf32>
    %423 = vector.shape_cast %422 : vector<8x8x32xf32> to vector<64x32xf32>
    %c5_122 = arith.constant 5 : index
    %c0_123 = arith.constant 0 : index
    %c0_124 = arith.constant 0 : index
    %424 = vector.load %arg5[%c5_122, %c0_123, %c0_124] : memref<12x1x32xf32, #tpu.memory_space<vmem>>, vector<1x1x32xf32>
    %425 = vector.shape_cast %424 : vector<1x1x32xf32> to vector<1x32xf32>
    %c5_125 = arith.constant 5 : index
    %c0_126 = arith.constant 0 : index
    %c0_127 = arith.constant 0 : index
    %426 = vector.load %arg6[%c5_125, %c0_126, %c0_127] : memref<12x1x32xf32, #tpu.memory_space<vmem>>, vector<1x1x32xf32>
    %427 = vector.shape_cast %426 : vector<1x1x32xf32> to vector<1x32xf32>
    %cst_128 = arith.constant dense<0.000000e+00> : vector<1x32xf32>
    %428 = tpu.matmul %1, %423, %cst_128 {dimension_numbers = #tpu.dot_dimension_numbers<[1], [0], [0], [1], [0, 0, 1, 1], [], []>} : vector<1x64xf32>, vector<64x32xf32>, vector<1x32xf32> -> vector<1x32xf32>
    %cst_129 = arith.constant 1.562500e-02 : f32
    %429 = vector.broadcast %cst_129 : f32 to vector<1x32xf32>
    %430 = arith.mulf %428, %429 : vector<1x32xf32>
    %431 = arith.mulf %423, %423 : vector<64x32xf32>
    %cst_130 = arith.constant dense<0.000000e+00> : vector<1x32xf32>
    %432 = tpu.matmul %1, %431, %cst_130 {dimension_numbers = #tpu.dot_dimension_numbers<[1], [0], [0], [1], [0, 0, 1, 1], [], []>} : vector<1x64xf32>, vector<64x32xf32>, vector<1x32xf32> -> vector<1x32xf32>
    %cst_131 = arith.constant 1.562500e-02 : f32
    %433 = vector.broadcast %cst_131 : f32 to vector<1x32xf32>
    %434 = arith.mulf %432, %433 : vector<1x32xf32>
    %435 = arith.mulf %430, %430 : vector<1x32xf32>
    %436 = arith.subf %434, %435 : vector<1x32xf32>
    %cst_132 = arith.constant 0.000000e+00 : f32
    %437 = vector.broadcast %cst_132 : f32 to vector<1x32xf32>
    %438 = arith.maximumf %436, %437 : vector<1x32xf32>
    %cst_133 = arith.constant 9.99999974E-6 : f32
    %439 = vector.broadcast %cst_133 : f32 to vector<1x32xf32>
    %440 = arith.addf %438, %439 : vector<1x32xf32>
    %441 = math.rsqrt %440 : vector<1x32xf32>
    %442 = arith.mulf %425, %441 : vector<1x32xf32>
    %443 = vector.broadcast %442 : vector<1x32xf32> to vector<64x32xf32>
    %444 = arith.mulf %423, %443 : vector<64x32xf32>
    %445 = arith.mulf %430, %442 : vector<1x32xf32>
    %446 = arith.subf %427, %445 : vector<1x32xf32>
    %447 = vector.broadcast %446 : vector<1x32xf32> to vector<64x32xf32>
    %448 = arith.addf %444, %447 : vector<64x32xf32>
    %449 = vector.shape_cast %448 : vector<64x32xf32> to vector<2x4x8x32xf32>
    %450 = arith.addf %387, %449 : vector<2x4x8x32xf32>
    %cst_134 = arith.constant 0.000000e+00 : f32
    %451 = vector.broadcast %cst_134 : f32 to vector<2x4x8x32xf32>
    %452 = arith.maximumf %450, %451 : vector<2x4x8x32xf32>
    %c6 = arith.constant 6 : index
    %c0_135 = arith.constant 0 : index
    %c0_136 = arith.constant 0 : index
    %c0_137 = arith.constant 0 : index
    %453 = vector.load %arg4[%c6, %c0_135, %c0_136, %c0_137] : memref<12x3x32x96xf32, #tpu.memory_space<vmem>>, vector<1x3x32x96xf32>
    %454 = vector.shape_cast %453 : vector<1x3x32x96xf32> to vector<3x32x96xf32>
    %455 = vector.shape_cast %452 : vector<2x4x8x32xf32> to vector<2x32x32xf32>
    %456 = vector.extract_strided_slice %455 {offsets = [0, 24, 0], sizes = [2, 8, 32], strides = [1, 1, 1]} : vector<2x32x32xf32> to vector<2x8x32xf32>
    %457 = vector.extract_strided_slice %455 {offsets = [0, 0, 0], sizes = [2, 24, 32], strides = [1, 1, 1]} : vector<2x32x32xf32> to vector<2x24x32xf32>
    %458 = tpu.concatenate %456, %457 in 1 : vector<2x8x32xf32>, vector<2x24x32xf32> -> vector<2x32x32xf32>
    %459 = vector.extract_strided_slice %455 {offsets = [0, 8, 0], sizes = [2, 24, 32], strides = [1, 1, 1]} : vector<2x32x32xf32> to vector<2x24x32xf32>
    %460 = vector.extract_strided_slice %455 {offsets = [0, 0, 0], sizes = [2, 8, 32], strides = [1, 1, 1]} : vector<2x32x32xf32> to vector<2x8x32xf32>
    %461 = tpu.concatenate %459, %460 in 1 : vector<2x24x32xf32>, vector<2x8x32xf32> -> vector<2x32x32xf32>
    %462 = vector.shape_cast %458 : vector<2x32x32xf32> to vector<64x32xf32>
    %463 = vector.extract_strided_slice %454 {offsets = [0, 0, 0], sizes = [1, 32, 96], strides = [1, 1, 1]} : vector<3x32x96xf32> to vector<1x32x96xf32>
    %464 = vector.shape_cast %463 : vector<1x32x96xf32> to vector<32x96xf32>
    %cst_138 = arith.constant dense<0.000000e+00> : vector<64x96xf32>
    %465 = tpu.matmul %462, %464, %cst_138 {dimension_numbers = #tpu.dot_dimension_numbers<[1], [0], [0], [1], [0, 0, 1, 1], [], []>} : vector<64x32xf32>, vector<32x96xf32>, vector<64x96xf32> -> vector<64x96xf32>
    %466 = vector.shape_cast %455 : vector<2x32x32xf32> to vector<64x32xf32>
    %467 = vector.extract_strided_slice %454 {offsets = [1, 0, 0], sizes = [1, 32, 96], strides = [1, 1, 1]} : vector<3x32x96xf32> to vector<1x32x96xf32>
    %468 = vector.shape_cast %467 : vector<1x32x96xf32> to vector<32x96xf32>
    %cst_139 = arith.constant dense<0.000000e+00> : vector<64x96xf32>
    %469 = tpu.matmul %466, %468, %cst_139 {dimension_numbers = #tpu.dot_dimension_numbers<[1], [0], [0], [1], [0, 0, 1, 1], [], []>} : vector<64x32xf32>, vector<32x96xf32>, vector<64x96xf32> -> vector<64x96xf32>
    %470 = arith.addf %465, %469 : vector<64x96xf32>
    %471 = vector.shape_cast %461 : vector<2x32x32xf32> to vector<64x32xf32>
    %472 = vector.extract_strided_slice %454 {offsets = [2, 0, 0], sizes = [1, 32, 96], strides = [1, 1, 1]} : vector<3x32x96xf32> to vector<1x32x96xf32>
    %473 = vector.shape_cast %472 : vector<1x32x96xf32> to vector<32x96xf32>
    %cst_140 = arith.constant dense<0.000000e+00> : vector<64x96xf32>
    %474 = tpu.matmul %471, %473, %cst_140 {dimension_numbers = #tpu.dot_dimension_numbers<[1], [0], [0], [1], [0, 0, 1, 1], [], []>} : vector<64x32xf32>, vector<32x96xf32>, vector<64x96xf32> -> vector<64x96xf32>
    %475 = arith.addf %470, %474 : vector<64x96xf32>
    %476 = vector.shape_cast %475 : vector<64x96xf32> to vector<8x8x96xf32>
    %477 = vector.extract_strided_slice %476 {offsets = [0, 0, 0], sizes = [8, 8, 32], strides = [1, 1, 1]} : vector<8x8x96xf32> to vector<8x8x32xf32>
    %478 = vector.extract_strided_slice %477 {offsets = [0, 7, 0], sizes = [8, 1, 32], strides = [1, 1, 1]} : vector<8x8x32xf32> to vector<8x1x32xf32>
    %479 = vector.extract_strided_slice %477 {offsets = [0, 0, 0], sizes = [8, 7, 32], strides = [1, 1, 1]} : vector<8x8x32xf32> to vector<8x7x32xf32>
    %480 = tpu.concatenate %478, %479 in 1 : vector<8x1x32xf32>, vector<8x7x32xf32> -> vector<8x8x32xf32>
    %481 = vector.extract_strided_slice %476 {offsets = [0, 0, 32], sizes = [8, 8, 32], strides = [1, 1, 1]} : vector<8x8x96xf32> to vector<8x8x32xf32>
    %482 = arith.addf %480, %481 : vector<8x8x32xf32>
    %483 = vector.extract_strided_slice %476 {offsets = [0, 0, 64], sizes = [8, 8, 32], strides = [1, 1, 1]} : vector<8x8x96xf32> to vector<8x8x32xf32>
    %484 = vector.extract_strided_slice %483 {offsets = [0, 1, 0], sizes = [8, 7, 32], strides = [1, 1, 1]} : vector<8x8x32xf32> to vector<8x7x32xf32>
    %485 = vector.extract_strided_slice %483 {offsets = [0, 0, 0], sizes = [8, 1, 32], strides = [1, 1, 1]} : vector<8x8x32xf32> to vector<8x1x32xf32>
    %486 = tpu.concatenate %484, %485 in 1 : vector<8x7x32xf32>, vector<8x1x32xf32> -> vector<8x8x32xf32>
    %487 = arith.addf %482, %486 : vector<8x8x32xf32>
    %488 = vector.shape_cast %487 : vector<8x8x32xf32> to vector<64x32xf32>
    %c6_141 = arith.constant 6 : index
    %c0_142 = arith.constant 0 : index
    %c0_143 = arith.constant 0 : index
    %489 = vector.load %arg5[%c6_141, %c0_142, %c0_143] : memref<12x1x32xf32, #tpu.memory_space<vmem>>, vector<1x1x32xf32>
    %490 = vector.shape_cast %489 : vector<1x1x32xf32> to vector<1x32xf32>
    %c6_144 = arith.constant 6 : index
    %c0_145 = arith.constant 0 : index
    %c0_146 = arith.constant 0 : index
    %491 = vector.load %arg6[%c6_144, %c0_145, %c0_146] : memref<12x1x32xf32, #tpu.memory_space<vmem>>, vector<1x1x32xf32>
    %492 = vector.shape_cast %491 : vector<1x1x32xf32> to vector<1x32xf32>
    %cst_147 = arith.constant dense<0.000000e+00> : vector<1x32xf32>
    %493 = tpu.matmul %1, %488, %cst_147 {dimension_numbers = #tpu.dot_dimension_numbers<[1], [0], [0], [1], [0, 0, 1, 1], [], []>} : vector<1x64xf32>, vector<64x32xf32>, vector<1x32xf32> -> vector<1x32xf32>
    %cst_148 = arith.constant 1.562500e-02 : f32
    %494 = vector.broadcast %cst_148 : f32 to vector<1x32xf32>
    %495 = arith.mulf %493, %494 : vector<1x32xf32>
    %496 = arith.mulf %488, %488 : vector<64x32xf32>
    %cst_149 = arith.constant dense<0.000000e+00> : vector<1x32xf32>
    %497 = tpu.matmul %1, %496, %cst_149 {dimension_numbers = #tpu.dot_dimension_numbers<[1], [0], [0], [1], [0, 0, 1, 1], [], []>} : vector<1x64xf32>, vector<64x32xf32>, vector<1x32xf32> -> vector<1x32xf32>
    %cst_150 = arith.constant 1.562500e-02 : f32
    %498 = vector.broadcast %cst_150 : f32 to vector<1x32xf32>
    %499 = arith.mulf %497, %498 : vector<1x32xf32>
    %500 = arith.mulf %495, %495 : vector<1x32xf32>
    %501 = arith.subf %499, %500 : vector<1x32xf32>
    %cst_151 = arith.constant 0.000000e+00 : f32
    %502 = vector.broadcast %cst_151 : f32 to vector<1x32xf32>
    %503 = arith.maximumf %501, %502 : vector<1x32xf32>
    %cst_152 = arith.constant 9.99999974E-6 : f32
    %504 = vector.broadcast %cst_152 : f32 to vector<1x32xf32>
    %505 = arith.addf %503, %504 : vector<1x32xf32>
    %506 = math.rsqrt %505 : vector<1x32xf32>
    %507 = arith.mulf %490, %506 : vector<1x32xf32>
    %508 = vector.broadcast %507 : vector<1x32xf32> to vector<64x32xf32>
    %509 = arith.mulf %488, %508 : vector<64x32xf32>
    %510 = arith.mulf %495, %507 : vector<1x32xf32>
    %511 = arith.subf %492, %510 : vector<1x32xf32>
    %512 = vector.broadcast %511 : vector<1x32xf32> to vector<64x32xf32>
    %513 = arith.addf %509, %512 : vector<64x32xf32>
    %514 = vector.shape_cast %513 : vector<64x32xf32> to vector<2x4x8x32xf32>
    %515 = arith.addf %452, %514 : vector<2x4x8x32xf32>
    %cst_153 = arith.constant 0.000000e+00 : f32
    %516 = vector.broadcast %cst_153 : f32 to vector<2x4x8x32xf32>
    %517 = arith.maximumf %515, %516 : vector<2x4x8x32xf32>
    %c7 = arith.constant 7 : index
    %c0_154 = arith.constant 0 : index
    %c0_155 = arith.constant 0 : index
    %c0_156 = arith.constant 0 : index
    %518 = vector.load %arg4[%c7, %c0_154, %c0_155, %c0_156] : memref<12x3x32x96xf32, #tpu.memory_space<vmem>>, vector<1x3x32x96xf32>
    %519 = vector.shape_cast %518 : vector<1x3x32x96xf32> to vector<3x32x96xf32>
    %520 = vector.shape_cast %517 : vector<2x4x8x32xf32> to vector<2x32x32xf32>
    %521 = vector.extract_strided_slice %520 {offsets = [0, 24, 0], sizes = [2, 8, 32], strides = [1, 1, 1]} : vector<2x32x32xf32> to vector<2x8x32xf32>
    %522 = vector.extract_strided_slice %520 {offsets = [0, 0, 0], sizes = [2, 24, 32], strides = [1, 1, 1]} : vector<2x32x32xf32> to vector<2x24x32xf32>
    %523 = tpu.concatenate %521, %522 in 1 : vector<2x8x32xf32>, vector<2x24x32xf32> -> vector<2x32x32xf32>
    %524 = vector.extract_strided_slice %520 {offsets = [0, 8, 0], sizes = [2, 24, 32], strides = [1, 1, 1]} : vector<2x32x32xf32> to vector<2x24x32xf32>
    %525 = vector.extract_strided_slice %520 {offsets = [0, 0, 0], sizes = [2, 8, 32], strides = [1, 1, 1]} : vector<2x32x32xf32> to vector<2x8x32xf32>
    %526 = tpu.concatenate %524, %525 in 1 : vector<2x24x32xf32>, vector<2x8x32xf32> -> vector<2x32x32xf32>
    %527 = vector.shape_cast %523 : vector<2x32x32xf32> to vector<64x32xf32>
    %528 = vector.extract_strided_slice %519 {offsets = [0, 0, 0], sizes = [1, 32, 96], strides = [1, 1, 1]} : vector<3x32x96xf32> to vector<1x32x96xf32>
    %529 = vector.shape_cast %528 : vector<1x32x96xf32> to vector<32x96xf32>
    %cst_157 = arith.constant dense<0.000000e+00> : vector<64x96xf32>
    %530 = tpu.matmul %527, %529, %cst_157 {dimension_numbers = #tpu.dot_dimension_numbers<[1], [0], [0], [1], [0, 0, 1, 1], [], []>} : vector<64x32xf32>, vector<32x96xf32>, vector<64x96xf32> -> vector<64x96xf32>
    %531 = vector.shape_cast %520 : vector<2x32x32xf32> to vector<64x32xf32>
    %532 = vector.extract_strided_slice %519 {offsets = [1, 0, 0], sizes = [1, 32, 96], strides = [1, 1, 1]} : vector<3x32x96xf32> to vector<1x32x96xf32>
    %533 = vector.shape_cast %532 : vector<1x32x96xf32> to vector<32x96xf32>
    %cst_158 = arith.constant dense<0.000000e+00> : vector<64x96xf32>
    %534 = tpu.matmul %531, %533, %cst_158 {dimension_numbers = #tpu.dot_dimension_numbers<[1], [0], [0], [1], [0, 0, 1, 1], [], []>} : vector<64x32xf32>, vector<32x96xf32>, vector<64x96xf32> -> vector<64x96xf32>
    %535 = arith.addf %530, %534 : vector<64x96xf32>
    %536 = vector.shape_cast %526 : vector<2x32x32xf32> to vector<64x32xf32>
    %537 = vector.extract_strided_slice %519 {offsets = [2, 0, 0], sizes = [1, 32, 96], strides = [1, 1, 1]} : vector<3x32x96xf32> to vector<1x32x96xf32>
    %538 = vector.shape_cast %537 : vector<1x32x96xf32> to vector<32x96xf32>
    %cst_159 = arith.constant dense<0.000000e+00> : vector<64x96xf32>
    %539 = tpu.matmul %536, %538, %cst_159 {dimension_numbers = #tpu.dot_dimension_numbers<[1], [0], [0], [1], [0, 0, 1, 1], [], []>} : vector<64x32xf32>, vector<32x96xf32>, vector<64x96xf32> -> vector<64x96xf32>
    %540 = arith.addf %535, %539 : vector<64x96xf32>
    %541 = vector.shape_cast %540 : vector<64x96xf32> to vector<8x8x96xf32>
    %542 = vector.extract_strided_slice %541 {offsets = [0, 0, 0], sizes = [8, 8, 32], strides = [1, 1, 1]} : vector<8x8x96xf32> to vector<8x8x32xf32>
    %543 = vector.extract_strided_slice %542 {offsets = [0, 7, 0], sizes = [8, 1, 32], strides = [1, 1, 1]} : vector<8x8x32xf32> to vector<8x1x32xf32>
    %544 = vector.extract_strided_slice %542 {offsets = [0, 0, 0], sizes = [8, 7, 32], strides = [1, 1, 1]} : vector<8x8x32xf32> to vector<8x7x32xf32>
    %545 = tpu.concatenate %543, %544 in 1 : vector<8x1x32xf32>, vector<8x7x32xf32> -> vector<8x8x32xf32>
    %546 = vector.extract_strided_slice %541 {offsets = [0, 0, 32], sizes = [8, 8, 32], strides = [1, 1, 1]} : vector<8x8x96xf32> to vector<8x8x32xf32>
    %547 = arith.addf %545, %546 : vector<8x8x32xf32>
    %548 = vector.extract_strided_slice %541 {offsets = [0, 0, 64], sizes = [8, 8, 32], strides = [1, 1, 1]} : vector<8x8x96xf32> to vector<8x8x32xf32>
    %549 = vector.extract_strided_slice %548 {offsets = [0, 1, 0], sizes = [8, 7, 32], strides = [1, 1, 1]} : vector<8x8x32xf32> to vector<8x7x32xf32>
    %550 = vector.extract_strided_slice %548 {offsets = [0, 0, 0], sizes = [8, 1, 32], strides = [1, 1, 1]} : vector<8x8x32xf32> to vector<8x1x32xf32>
    %551 = tpu.concatenate %549, %550 in 1 : vector<8x7x32xf32>, vector<8x1x32xf32> -> vector<8x8x32xf32>
    %552 = arith.addf %547, %551 : vector<8x8x32xf32>
    %553 = vector.shape_cast %552 : vector<8x8x32xf32> to vector<64x32xf32>
    %c7_160 = arith.constant 7 : index
    %c0_161 = arith.constant 0 : index
    %c0_162 = arith.constant 0 : index
    %554 = vector.load %arg5[%c7_160, %c0_161, %c0_162] : memref<12x1x32xf32, #tpu.memory_space<vmem>>, vector<1x1x32xf32>
    %555 = vector.shape_cast %554 : vector<1x1x32xf32> to vector<1x32xf32>
    %c7_163 = arith.constant 7 : index
    %c0_164 = arith.constant 0 : index
    %c0_165 = arith.constant 0 : index
    %556 = vector.load %arg6[%c7_163, %c0_164, %c0_165] : memref<12x1x32xf32, #tpu.memory_space<vmem>>, vector<1x1x32xf32>
    %557 = vector.shape_cast %556 : vector<1x1x32xf32> to vector<1x32xf32>
    %cst_166 = arith.constant dense<0.000000e+00> : vector<1x32xf32>
    %558 = tpu.matmul %1, %553, %cst_166 {dimension_numbers = #tpu.dot_dimension_numbers<[1], [0], [0], [1], [0, 0, 1, 1], [], []>} : vector<1x64xf32>, vector<64x32xf32>, vector<1x32xf32> -> vector<1x32xf32>
    %cst_167 = arith.constant 1.562500e-02 : f32
    %559 = vector.broadcast %cst_167 : f32 to vector<1x32xf32>
    %560 = arith.mulf %558, %559 : vector<1x32xf32>
    %561 = arith.mulf %553, %553 : vector<64x32xf32>
    %cst_168 = arith.constant dense<0.000000e+00> : vector<1x32xf32>
    %562 = tpu.matmul %1, %561, %cst_168 {dimension_numbers = #tpu.dot_dimension_numbers<[1], [0], [0], [1], [0, 0, 1, 1], [], []>} : vector<1x64xf32>, vector<64x32xf32>, vector<1x32xf32> -> vector<1x32xf32>
    %cst_169 = arith.constant 1.562500e-02 : f32
    %563 = vector.broadcast %cst_169 : f32 to vector<1x32xf32>
    %564 = arith.mulf %562, %563 : vector<1x32xf32>
    %565 = arith.mulf %560, %560 : vector<1x32xf32>
    %566 = arith.subf %564, %565 : vector<1x32xf32>
    %cst_170 = arith.constant 0.000000e+00 : f32
    %567 = vector.broadcast %cst_170 : f32 to vector<1x32xf32>
    %568 = arith.maximumf %566, %567 : vector<1x32xf32>
    %cst_171 = arith.constant 9.99999974E-6 : f32
    %569 = vector.broadcast %cst_171 : f32 to vector<1x32xf32>
    %570 = arith.addf %568, %569 : vector<1x32xf32>
    %571 = math.rsqrt %570 : vector<1x32xf32>
    %572 = arith.mulf %555, %571 : vector<1x32xf32>
    %573 = vector.broadcast %572 : vector<1x32xf32> to vector<64x32xf32>
    %574 = arith.mulf %553, %573 : vector<64x32xf32>
    %575 = arith.mulf %560, %572 : vector<1x32xf32>
    %576 = arith.subf %557, %575 : vector<1x32xf32>
    %577 = vector.broadcast %576 : vector<1x32xf32> to vector<64x32xf32>
    %578 = arith.addf %574, %577 : vector<64x32xf32>
    %579 = vector.shape_cast %578 : vector<64x32xf32> to vector<2x4x8x32xf32>
    %580 = arith.addf %517, %579 : vector<2x4x8x32xf32>
    %cst_172 = arith.constant 0.000000e+00 : f32
    %581 = vector.broadcast %cst_172 : f32 to vector<2x4x8x32xf32>
    %582 = arith.maximumf %580, %581 : vector<2x4x8x32xf32>
    %c8 = arith.constant 8 : index
    %c0_173 = arith.constant 0 : index
    %c0_174 = arith.constant 0 : index
    %c0_175 = arith.constant 0 : index
    %583 = vector.load %arg4[%c8, %c0_173, %c0_174, %c0_175] : memref<12x3x32x96xf32, #tpu.memory_space<vmem>>, vector<1x3x32x96xf32>
    %584 = vector.shape_cast %583 : vector<1x3x32x96xf32> to vector<3x32x96xf32>
    %585 = vector.shape_cast %582 : vector<2x4x8x32xf32> to vector<2x32x32xf32>
    %586 = vector.extract_strided_slice %585 {offsets = [0, 24, 0], sizes = [2, 8, 32], strides = [1, 1, 1]} : vector<2x32x32xf32> to vector<2x8x32xf32>
    %587 = vector.extract_strided_slice %585 {offsets = [0, 0, 0], sizes = [2, 24, 32], strides = [1, 1, 1]} : vector<2x32x32xf32> to vector<2x24x32xf32>
    %588 = tpu.concatenate %586, %587 in 1 : vector<2x8x32xf32>, vector<2x24x32xf32> -> vector<2x32x32xf32>
    %589 = vector.extract_strided_slice %585 {offsets = [0, 8, 0], sizes = [2, 24, 32], strides = [1, 1, 1]} : vector<2x32x32xf32> to vector<2x24x32xf32>
    %590 = vector.extract_strided_slice %585 {offsets = [0, 0, 0], sizes = [2, 8, 32], strides = [1, 1, 1]} : vector<2x32x32xf32> to vector<2x8x32xf32>
    %591 = tpu.concatenate %589, %590 in 1 : vector<2x24x32xf32>, vector<2x8x32xf32> -> vector<2x32x32xf32>
    %592 = vector.shape_cast %588 : vector<2x32x32xf32> to vector<64x32xf32>
    %593 = vector.extract_strided_slice %584 {offsets = [0, 0, 0], sizes = [1, 32, 96], strides = [1, 1, 1]} : vector<3x32x96xf32> to vector<1x32x96xf32>
    %594 = vector.shape_cast %593 : vector<1x32x96xf32> to vector<32x96xf32>
    %cst_176 = arith.constant dense<0.000000e+00> : vector<64x96xf32>
    %595 = tpu.matmul %592, %594, %cst_176 {dimension_numbers = #tpu.dot_dimension_numbers<[1], [0], [0], [1], [0, 0, 1, 1], [], []>} : vector<64x32xf32>, vector<32x96xf32>, vector<64x96xf32> -> vector<64x96xf32>
    %596 = vector.shape_cast %585 : vector<2x32x32xf32> to vector<64x32xf32>
    %597 = vector.extract_strided_slice %584 {offsets = [1, 0, 0], sizes = [1, 32, 96], strides = [1, 1, 1]} : vector<3x32x96xf32> to vector<1x32x96xf32>
    %598 = vector.shape_cast %597 : vector<1x32x96xf32> to vector<32x96xf32>
    %cst_177 = arith.constant dense<0.000000e+00> : vector<64x96xf32>
    %599 = tpu.matmul %596, %598, %cst_177 {dimension_numbers = #tpu.dot_dimension_numbers<[1], [0], [0], [1], [0, 0, 1, 1], [], []>} : vector<64x32xf32>, vector<32x96xf32>, vector<64x96xf32> -> vector<64x96xf32>
    %600 = arith.addf %595, %599 : vector<64x96xf32>
    %601 = vector.shape_cast %591 : vector<2x32x32xf32> to vector<64x32xf32>
    %602 = vector.extract_strided_slice %584 {offsets = [2, 0, 0], sizes = [1, 32, 96], strides = [1, 1, 1]} : vector<3x32x96xf32> to vector<1x32x96xf32>
    %603 = vector.shape_cast %602 : vector<1x32x96xf32> to vector<32x96xf32>
    %cst_178 = arith.constant dense<0.000000e+00> : vector<64x96xf32>
    %604 = tpu.matmul %601, %603, %cst_178 {dimension_numbers = #tpu.dot_dimension_numbers<[1], [0], [0], [1], [0, 0, 1, 1], [], []>} : vector<64x32xf32>, vector<32x96xf32>, vector<64x96xf32> -> vector<64x96xf32>
    %605 = arith.addf %600, %604 : vector<64x96xf32>
    %606 = vector.shape_cast %605 : vector<64x96xf32> to vector<8x8x96xf32>
    %607 = vector.extract_strided_slice %606 {offsets = [0, 0, 0], sizes = [8, 8, 32], strides = [1, 1, 1]} : vector<8x8x96xf32> to vector<8x8x32xf32>
    %608 = vector.extract_strided_slice %607 {offsets = [0, 7, 0], sizes = [8, 1, 32], strides = [1, 1, 1]} : vector<8x8x32xf32> to vector<8x1x32xf32>
    %609 = vector.extract_strided_slice %607 {offsets = [0, 0, 0], sizes = [8, 7, 32], strides = [1, 1, 1]} : vector<8x8x32xf32> to vector<8x7x32xf32>
    %610 = tpu.concatenate %608, %609 in 1 : vector<8x1x32xf32>, vector<8x7x32xf32> -> vector<8x8x32xf32>
    %611 = vector.extract_strided_slice %606 {offsets = [0, 0, 32], sizes = [8, 8, 32], strides = [1, 1, 1]} : vector<8x8x96xf32> to vector<8x8x32xf32>
    %612 = arith.addf %610, %611 : vector<8x8x32xf32>
    %613 = vector.extract_strided_slice %606 {offsets = [0, 0, 64], sizes = [8, 8, 32], strides = [1, 1, 1]} : vector<8x8x96xf32> to vector<8x8x32xf32>
    %614 = vector.extract_strided_slice %613 {offsets = [0, 1, 0], sizes = [8, 7, 32], strides = [1, 1, 1]} : vector<8x8x32xf32> to vector<8x7x32xf32>
    %615 = vector.extract_strided_slice %613 {offsets = [0, 0, 0], sizes = [8, 1, 32], strides = [1, 1, 1]} : vector<8x8x32xf32> to vector<8x1x32xf32>
    %616 = tpu.concatenate %614, %615 in 1 : vector<8x7x32xf32>, vector<8x1x32xf32> -> vector<8x8x32xf32>
    %617 = arith.addf %612, %616 : vector<8x8x32xf32>
    %618 = vector.shape_cast %617 : vector<8x8x32xf32> to vector<64x32xf32>
    %c8_179 = arith.constant 8 : index
    %c0_180 = arith.constant 0 : index
    %c0_181 = arith.constant 0 : index
    %619 = vector.load %arg5[%c8_179, %c0_180, %c0_181] : memref<12x1x32xf32, #tpu.memory_space<vmem>>, vector<1x1x32xf32>
    %620 = vector.shape_cast %619 : vector<1x1x32xf32> to vector<1x32xf32>
    %c8_182 = arith.constant 8 : index
    %c0_183 = arith.constant 0 : index
    %c0_184 = arith.constant 0 : index
    %621 = vector.load %arg6[%c8_182, %c0_183, %c0_184] : memref<12x1x32xf32, #tpu.memory_space<vmem>>, vector<1x1x32xf32>
    %622 = vector.shape_cast %621 : vector<1x1x32xf32> to vector<1x32xf32>
    %cst_185 = arith.constant dense<0.000000e+00> : vector<1x32xf32>
    %623 = tpu.matmul %1, %618, %cst_185 {dimension_numbers = #tpu.dot_dimension_numbers<[1], [0], [0], [1], [0, 0, 1, 1], [], []>} : vector<1x64xf32>, vector<64x32xf32>, vector<1x32xf32> -> vector<1x32xf32>
    %cst_186 = arith.constant 1.562500e-02 : f32
    %624 = vector.broadcast %cst_186 : f32 to vector<1x32xf32>
    %625 = arith.mulf %623, %624 : vector<1x32xf32>
    %626 = arith.mulf %618, %618 : vector<64x32xf32>
    %cst_187 = arith.constant dense<0.000000e+00> : vector<1x32xf32>
    %627 = tpu.matmul %1, %626, %cst_187 {dimension_numbers = #tpu.dot_dimension_numbers<[1], [0], [0], [1], [0, 0, 1, 1], [], []>} : vector<1x64xf32>, vector<64x32xf32>, vector<1x32xf32> -> vector<1x32xf32>
    %cst_188 = arith.constant 1.562500e-02 : f32
    %628 = vector.broadcast %cst_188 : f32 to vector<1x32xf32>
    %629 = arith.mulf %627, %628 : vector<1x32xf32>
    %630 = arith.mulf %625, %625 : vector<1x32xf32>
    %631 = arith.subf %629, %630 : vector<1x32xf32>
    %cst_189 = arith.constant 0.000000e+00 : f32
    %632 = vector.broadcast %cst_189 : f32 to vector<1x32xf32>
    %633 = arith.maximumf %631, %632 : vector<1x32xf32>
    %cst_190 = arith.constant 9.99999974E-6 : f32
    %634 = vector.broadcast %cst_190 : f32 to vector<1x32xf32>
    %635 = arith.addf %633, %634 : vector<1x32xf32>
    %636 = math.rsqrt %635 : vector<1x32xf32>
    %637 = arith.mulf %620, %636 : vector<1x32xf32>
    %638 = vector.broadcast %637 : vector<1x32xf32> to vector<64x32xf32>
    %639 = arith.mulf %618, %638 : vector<64x32xf32>
    %640 = arith.mulf %625, %637 : vector<1x32xf32>
    %641 = arith.subf %622, %640 : vector<1x32xf32>
    %642 = vector.broadcast %641 : vector<1x32xf32> to vector<64x32xf32>
    %643 = arith.addf %639, %642 : vector<64x32xf32>
    %644 = vector.shape_cast %643 : vector<64x32xf32> to vector<2x4x8x32xf32>
    %645 = arith.addf %582, %644 : vector<2x4x8x32xf32>
    %cst_191 = arith.constant 0.000000e+00 : f32
    %646 = vector.broadcast %cst_191 : f32 to vector<2x4x8x32xf32>
    %647 = arith.maximumf %645, %646 : vector<2x4x8x32xf32>
    %c9 = arith.constant 9 : index
    %c0_192 = arith.constant 0 : index
    %c0_193 = arith.constant 0 : index
    %c0_194 = arith.constant 0 : index
    %648 = vector.load %arg4[%c9, %c0_192, %c0_193, %c0_194] : memref<12x3x32x96xf32, #tpu.memory_space<vmem>>, vector<1x3x32x96xf32>
    %649 = vector.shape_cast %648 : vector<1x3x32x96xf32> to vector<3x32x96xf32>
    %650 = vector.shape_cast %647 : vector<2x4x8x32xf32> to vector<2x32x32xf32>
    %651 = vector.extract_strided_slice %650 {offsets = [0, 24, 0], sizes = [2, 8, 32], strides = [1, 1, 1]} : vector<2x32x32xf32> to vector<2x8x32xf32>
    %652 = vector.extract_strided_slice %650 {offsets = [0, 0, 0], sizes = [2, 24, 32], strides = [1, 1, 1]} : vector<2x32x32xf32> to vector<2x24x32xf32>
    %653 = tpu.concatenate %651, %652 in 1 : vector<2x8x32xf32>, vector<2x24x32xf32> -> vector<2x32x32xf32>
    %654 = vector.extract_strided_slice %650 {offsets = [0, 8, 0], sizes = [2, 24, 32], strides = [1, 1, 1]} : vector<2x32x32xf32> to vector<2x24x32xf32>
    %655 = vector.extract_strided_slice %650 {offsets = [0, 0, 0], sizes = [2, 8, 32], strides = [1, 1, 1]} : vector<2x32x32xf32> to vector<2x8x32xf32>
    %656 = tpu.concatenate %654, %655 in 1 : vector<2x24x32xf32>, vector<2x8x32xf32> -> vector<2x32x32xf32>
    %657 = vector.shape_cast %653 : vector<2x32x32xf32> to vector<64x32xf32>
    %658 = vector.extract_strided_slice %649 {offsets = [0, 0, 0], sizes = [1, 32, 96], strides = [1, 1, 1]} : vector<3x32x96xf32> to vector<1x32x96xf32>
    %659 = vector.shape_cast %658 : vector<1x32x96xf32> to vector<32x96xf32>
    %cst_195 = arith.constant dense<0.000000e+00> : vector<64x96xf32>
    %660 = tpu.matmul %657, %659, %cst_195 {dimension_numbers = #tpu.dot_dimension_numbers<[1], [0], [0], [1], [0, 0, 1, 1], [], []>} : vector<64x32xf32>, vector<32x96xf32>, vector<64x96xf32> -> vector<64x96xf32>
    %661 = vector.shape_cast %650 : vector<2x32x32xf32> to vector<64x32xf32>
    %662 = vector.extract_strided_slice %649 {offsets = [1, 0, 0], sizes = [1, 32, 96], strides = [1, 1, 1]} : vector<3x32x96xf32> to vector<1x32x96xf32>
    %663 = vector.shape_cast %662 : vector<1x32x96xf32> to vector<32x96xf32>
    %cst_196 = arith.constant dense<0.000000e+00> : vector<64x96xf32>
    %664 = tpu.matmul %661, %663, %cst_196 {dimension_numbers = #tpu.dot_dimension_numbers<[1], [0], [0], [1], [0, 0, 1, 1], [], []>} : vector<64x32xf32>, vector<32x96xf32>, vector<64x96xf32> -> vector<64x96xf32>
    %665 = arith.addf %660, %664 : vector<64x96xf32>
    %666 = vector.shape_cast %656 : vector<2x32x32xf32> to vector<64x32xf32>
    %667 = vector.extract_strided_slice %649 {offsets = [2, 0, 0], sizes = [1, 32, 96], strides = [1, 1, 1]} : vector<3x32x96xf32> to vector<1x32x96xf32>
    %668 = vector.shape_cast %667 : vector<1x32x96xf32> to vector<32x96xf32>
    %cst_197 = arith.constant dense<0.000000e+00> : vector<64x96xf32>
    %669 = tpu.matmul %666, %668, %cst_197 {dimension_numbers = #tpu.dot_dimension_numbers<[1], [0], [0], [1], [0, 0, 1, 1], [], []>} : vector<64x32xf32>, vector<32x96xf32>, vector<64x96xf32> -> vector<64x96xf32>
    %670 = arith.addf %665, %669 : vector<64x96xf32>
    %671 = vector.shape_cast %670 : vector<64x96xf32> to vector<8x8x96xf32>
    %672 = vector.extract_strided_slice %671 {offsets = [0, 0, 0], sizes = [8, 8, 32], strides = [1, 1, 1]} : vector<8x8x96xf32> to vector<8x8x32xf32>
    %673 = vector.extract_strided_slice %672 {offsets = [0, 7, 0], sizes = [8, 1, 32], strides = [1, 1, 1]} : vector<8x8x32xf32> to vector<8x1x32xf32>
    %674 = vector.extract_strided_slice %672 {offsets = [0, 0, 0], sizes = [8, 7, 32], strides = [1, 1, 1]} : vector<8x8x32xf32> to vector<8x7x32xf32>
    %675 = tpu.concatenate %673, %674 in 1 : vector<8x1x32xf32>, vector<8x7x32xf32> -> vector<8x8x32xf32>
    %676 = vector.extract_strided_slice %671 {offsets = [0, 0, 32], sizes = [8, 8, 32], strides = [1, 1, 1]} : vector<8x8x96xf32> to vector<8x8x32xf32>
    %677 = arith.addf %675, %676 : vector<8x8x32xf32>
    %678 = vector.extract_strided_slice %671 {offsets = [0, 0, 64], sizes = [8, 8, 32], strides = [1, 1, 1]} : vector<8x8x96xf32> to vector<8x8x32xf32>
    %679 = vector.extract_strided_slice %678 {offsets = [0, 1, 0], sizes = [8, 7, 32], strides = [1, 1, 1]} : vector<8x8x32xf32> to vector<8x7x32xf32>
    %680 = vector.extract_strided_slice %678 {offsets = [0, 0, 0], sizes = [8, 1, 32], strides = [1, 1, 1]} : vector<8x8x32xf32> to vector<8x1x32xf32>
    %681 = tpu.concatenate %679, %680 in 1 : vector<8x7x32xf32>, vector<8x1x32xf32> -> vector<8x8x32xf32>
    %682 = arith.addf %677, %681 : vector<8x8x32xf32>
    %683 = vector.shape_cast %682 : vector<8x8x32xf32> to vector<64x32xf32>
    %c9_198 = arith.constant 9 : index
    %c0_199 = arith.constant 0 : index
    %c0_200 = arith.constant 0 : index
    %684 = vector.load %arg5[%c9_198, %c0_199, %c0_200] : memref<12x1x32xf32, #tpu.memory_space<vmem>>, vector<1x1x32xf32>
    %685 = vector.shape_cast %684 : vector<1x1x32xf32> to vector<1x32xf32>
    %c9_201 = arith.constant 9 : index
    %c0_202 = arith.constant 0 : index
    %c0_203 = arith.constant 0 : index
    %686 = vector.load %arg6[%c9_201, %c0_202, %c0_203] : memref<12x1x32xf32, #tpu.memory_space<vmem>>, vector<1x1x32xf32>
    %687 = vector.shape_cast %686 : vector<1x1x32xf32> to vector<1x32xf32>
    %cst_204 = arith.constant dense<0.000000e+00> : vector<1x32xf32>
    %688 = tpu.matmul %1, %683, %cst_204 {dimension_numbers = #tpu.dot_dimension_numbers<[1], [0], [0], [1], [0, 0, 1, 1], [], []>} : vector<1x64xf32>, vector<64x32xf32>, vector<1x32xf32> -> vector<1x32xf32>
    %cst_205 = arith.constant 1.562500e-02 : f32
    %689 = vector.broadcast %cst_205 : f32 to vector<1x32xf32>
    %690 = arith.mulf %688, %689 : vector<1x32xf32>
    %691 = arith.mulf %683, %683 : vector<64x32xf32>
    %cst_206 = arith.constant dense<0.000000e+00> : vector<1x32xf32>
    %692 = tpu.matmul %1, %691, %cst_206 {dimension_numbers = #tpu.dot_dimension_numbers<[1], [0], [0], [1], [0, 0, 1, 1], [], []>} : vector<1x64xf32>, vector<64x32xf32>, vector<1x32xf32> -> vector<1x32xf32>
    %cst_207 = arith.constant 1.562500e-02 : f32
    %693 = vector.broadcast %cst_207 : f32 to vector<1x32xf32>
    %694 = arith.mulf %692, %693 : vector<1x32xf32>
    %695 = arith.mulf %690, %690 : vector<1x32xf32>
    %696 = arith.subf %694, %695 : vector<1x32xf32>
    %cst_208 = arith.constant 0.000000e+00 : f32
    %697 = vector.broadcast %cst_208 : f32 to vector<1x32xf32>
    %698 = arith.maximumf %696, %697 : vector<1x32xf32>
    %cst_209 = arith.constant 9.99999974E-6 : f32
    %699 = vector.broadcast %cst_209 : f32 to vector<1x32xf32>
    %700 = arith.addf %698, %699 : vector<1x32xf32>
    %701 = math.rsqrt %700 : vector<1x32xf32>
    %702 = arith.mulf %685, %701 : vector<1x32xf32>
    %703 = vector.broadcast %702 : vector<1x32xf32> to vector<64x32xf32>
    %704 = arith.mulf %683, %703 : vector<64x32xf32>
    %705 = arith.mulf %690, %702 : vector<1x32xf32>
    %706 = arith.subf %687, %705 : vector<1x32xf32>
    %707 = vector.broadcast %706 : vector<1x32xf32> to vector<64x32xf32>
    %708 = arith.addf %704, %707 : vector<64x32xf32>
    %709 = vector.shape_cast %708 : vector<64x32xf32> to vector<2x4x8x32xf32>
    %710 = arith.addf %647, %709 : vector<2x4x8x32xf32>
    %cst_210 = arith.constant 0.000000e+00 : f32
    %711 = vector.broadcast %cst_210 : f32 to vector<2x4x8x32xf32>
    %712 = arith.maximumf %710, %711 : vector<2x4x8x32xf32>
    %c10 = arith.constant 10 : index
    %c0_211 = arith.constant 0 : index
    %c0_212 = arith.constant 0 : index
    %c0_213 = arith.constant 0 : index
    %713 = vector.load %arg4[%c10, %c0_211, %c0_212, %c0_213] : memref<12x3x32x96xf32, #tpu.memory_space<vmem>>, vector<1x3x32x96xf32>
    %714 = vector.shape_cast %713 : vector<1x3x32x96xf32> to vector<3x32x96xf32>
    %715 = vector.shape_cast %712 : vector<2x4x8x32xf32> to vector<2x32x32xf32>
    %716 = vector.extract_strided_slice %715 {offsets = [0, 24, 0], sizes = [2, 8, 32], strides = [1, 1, 1]} : vector<2x32x32xf32> to vector<2x8x32xf32>
    %717 = vector.extract_strided_slice %715 {offsets = [0, 0, 0], sizes = [2, 24, 32], strides = [1, 1, 1]} : vector<2x32x32xf32> to vector<2x24x32xf32>
    %718 = tpu.concatenate %716, %717 in 1 : vector<2x8x32xf32>, vector<2x24x32xf32> -> vector<2x32x32xf32>
    %719 = vector.extract_strided_slice %715 {offsets = [0, 8, 0], sizes = [2, 24, 32], strides = [1, 1, 1]} : vector<2x32x32xf32> to vector<2x24x32xf32>
    %720 = vector.extract_strided_slice %715 {offsets = [0, 0, 0], sizes = [2, 8, 32], strides = [1, 1, 1]} : vector<2x32x32xf32> to vector<2x8x32xf32>
    %721 = tpu.concatenate %719, %720 in 1 : vector<2x24x32xf32>, vector<2x8x32xf32> -> vector<2x32x32xf32>
    %722 = vector.shape_cast %718 : vector<2x32x32xf32> to vector<64x32xf32>
    %723 = vector.extract_strided_slice %714 {offsets = [0, 0, 0], sizes = [1, 32, 96], strides = [1, 1, 1]} : vector<3x32x96xf32> to vector<1x32x96xf32>
    %724 = vector.shape_cast %723 : vector<1x32x96xf32> to vector<32x96xf32>
    %cst_214 = arith.constant dense<0.000000e+00> : vector<64x96xf32>
    %725 = tpu.matmul %722, %724, %cst_214 {dimension_numbers = #tpu.dot_dimension_numbers<[1], [0], [0], [1], [0, 0, 1, 1], [], []>} : vector<64x32xf32>, vector<32x96xf32>, vector<64x96xf32> -> vector<64x96xf32>
    %726 = vector.shape_cast %715 : vector<2x32x32xf32> to vector<64x32xf32>
    %727 = vector.extract_strided_slice %714 {offsets = [1, 0, 0], sizes = [1, 32, 96], strides = [1, 1, 1]} : vector<3x32x96xf32> to vector<1x32x96xf32>
    %728 = vector.shape_cast %727 : vector<1x32x96xf32> to vector<32x96xf32>
    %cst_215 = arith.constant dense<0.000000e+00> : vector<64x96xf32>
    %729 = tpu.matmul %726, %728, %cst_215 {dimension_numbers = #tpu.dot_dimension_numbers<[1], [0], [0], [1], [0, 0, 1, 1], [], []>} : vector<64x32xf32>, vector<32x96xf32>, vector<64x96xf32> -> vector<64x96xf32>
    %730 = arith.addf %725, %729 : vector<64x96xf32>
    %731 = vector.shape_cast %721 : vector<2x32x32xf32> to vector<64x32xf32>
    %732 = vector.extract_strided_slice %714 {offsets = [2, 0, 0], sizes = [1, 32, 96], strides = [1, 1, 1]} : vector<3x32x96xf32> to vector<1x32x96xf32>
    %733 = vector.shape_cast %732 : vector<1x32x96xf32> to vector<32x96xf32>
    %cst_216 = arith.constant dense<0.000000e+00> : vector<64x96xf32>
    %734 = tpu.matmul %731, %733, %cst_216 {dimension_numbers = #tpu.dot_dimension_numbers<[1], [0], [0], [1], [0, 0, 1, 1], [], []>} : vector<64x32xf32>, vector<32x96xf32>, vector<64x96xf32> -> vector<64x96xf32>
    %735 = arith.addf %730, %734 : vector<64x96xf32>
    %736 = vector.shape_cast %735 : vector<64x96xf32> to vector<8x8x96xf32>
    %737 = vector.extract_strided_slice %736 {offsets = [0, 0, 0], sizes = [8, 8, 32], strides = [1, 1, 1]} : vector<8x8x96xf32> to vector<8x8x32xf32>
    %738 = vector.extract_strided_slice %737 {offsets = [0, 7, 0], sizes = [8, 1, 32], strides = [1, 1, 1]} : vector<8x8x32xf32> to vector<8x1x32xf32>
    %739 = vector.extract_strided_slice %737 {offsets = [0, 0, 0], sizes = [8, 7, 32], strides = [1, 1, 1]} : vector<8x8x32xf32> to vector<8x7x32xf32>
    %740 = tpu.concatenate %738, %739 in 1 : vector<8x1x32xf32>, vector<8x7x32xf32> -> vector<8x8x32xf32>
    %741 = vector.extract_strided_slice %736 {offsets = [0, 0, 32], sizes = [8, 8, 32], strides = [1, 1, 1]} : vector<8x8x96xf32> to vector<8x8x32xf32>
    %742 = arith.addf %740, %741 : vector<8x8x32xf32>
    %743 = vector.extract_strided_slice %736 {offsets = [0, 0, 64], sizes = [8, 8, 32], strides = [1, 1, 1]} : vector<8x8x96xf32> to vector<8x8x32xf32>
    %744 = vector.extract_strided_slice %743 {offsets = [0, 1, 0], sizes = [8, 7, 32], strides = [1, 1, 1]} : vector<8x8x32xf32> to vector<8x7x32xf32>
    %745 = vector.extract_strided_slice %743 {offsets = [0, 0, 0], sizes = [8, 1, 32], strides = [1, 1, 1]} : vector<8x8x32xf32> to vector<8x1x32xf32>
    %746 = tpu.concatenate %744, %745 in 1 : vector<8x7x32xf32>, vector<8x1x32xf32> -> vector<8x8x32xf32>
    %747 = arith.addf %742, %746 : vector<8x8x32xf32>
    %748 = vector.shape_cast %747 : vector<8x8x32xf32> to vector<64x32xf32>
    %c10_217 = arith.constant 10 : index
    %c0_218 = arith.constant 0 : index
    %c0_219 = arith.constant 0 : index
    %749 = vector.load %arg5[%c10_217, %c0_218, %c0_219] : memref<12x1x32xf32, #tpu.memory_space<vmem>>, vector<1x1x32xf32>
    %750 = vector.shape_cast %749 : vector<1x1x32xf32> to vector<1x32xf32>
    %c10_220 = arith.constant 10 : index
    %c0_221 = arith.constant 0 : index
    %c0_222 = arith.constant 0 : index
    %751 = vector.load %arg6[%c10_220, %c0_221, %c0_222] : memref<12x1x32xf32, #tpu.memory_space<vmem>>, vector<1x1x32xf32>
    %752 = vector.shape_cast %751 : vector<1x1x32xf32> to vector<1x32xf32>
    %cst_223 = arith.constant dense<0.000000e+00> : vector<1x32xf32>
    %753 = tpu.matmul %1, %748, %cst_223 {dimension_numbers = #tpu.dot_dimension_numbers<[1], [0], [0], [1], [0, 0, 1, 1], [], []>} : vector<1x64xf32>, vector<64x32xf32>, vector<1x32xf32> -> vector<1x32xf32>
    %cst_224 = arith.constant 1.562500e-02 : f32
    %754 = vector.broadcast %cst_224 : f32 to vector<1x32xf32>
    %755 = arith.mulf %753, %754 : vector<1x32xf32>
    %756 = arith.mulf %748, %748 : vector<64x32xf32>
    %cst_225 = arith.constant dense<0.000000e+00> : vector<1x32xf32>
    %757 = tpu.matmul %1, %756, %cst_225 {dimension_numbers = #tpu.dot_dimension_numbers<[1], [0], [0], [1], [0, 0, 1, 1], [], []>} : vector<1x64xf32>, vector<64x32xf32>, vector<1x32xf32> -> vector<1x32xf32>
    %cst_226 = arith.constant 1.562500e-02 : f32
    %758 = vector.broadcast %cst_226 : f32 to vector<1x32xf32>
    %759 = arith.mulf %757, %758 : vector<1x32xf32>
    %760 = arith.mulf %755, %755 : vector<1x32xf32>
    %761 = arith.subf %759, %760 : vector<1x32xf32>
    %cst_227 = arith.constant 0.000000e+00 : f32
    %762 = vector.broadcast %cst_227 : f32 to vector<1x32xf32>
    %763 = arith.maximumf %761, %762 : vector<1x32xf32>
    %cst_228 = arith.constant 9.99999974E-6 : f32
    %764 = vector.broadcast %cst_228 : f32 to vector<1x32xf32>
    %765 = arith.addf %763, %764 : vector<1x32xf32>
    %766 = math.rsqrt %765 : vector<1x32xf32>
    %767 = arith.mulf %750, %766 : vector<1x32xf32>
    %768 = vector.broadcast %767 : vector<1x32xf32> to vector<64x32xf32>
    %769 = arith.mulf %748, %768 : vector<64x32xf32>
    %770 = arith.mulf %755, %767 : vector<1x32xf32>
    %771 = arith.subf %752, %770 : vector<1x32xf32>
    %772 = vector.broadcast %771 : vector<1x32xf32> to vector<64x32xf32>
    %773 = arith.addf %769, %772 : vector<64x32xf32>
    %774 = vector.shape_cast %773 : vector<64x32xf32> to vector<2x4x8x32xf32>
    %775 = arith.addf %712, %774 : vector<2x4x8x32xf32>
    %cst_229 = arith.constant 0.000000e+00 : f32
    %776 = vector.broadcast %cst_229 : f32 to vector<2x4x8x32xf32>
    %777 = arith.maximumf %775, %776 : vector<2x4x8x32xf32>
    %c11 = arith.constant 11 : index
    %c0_230 = arith.constant 0 : index
    %c0_231 = arith.constant 0 : index
    %c0_232 = arith.constant 0 : index
    %778 = vector.load %arg4[%c11, %c0_230, %c0_231, %c0_232] : memref<12x3x32x96xf32, #tpu.memory_space<vmem>>, vector<1x3x32x96xf32>
    %779 = vector.shape_cast %778 : vector<1x3x32x96xf32> to vector<3x32x96xf32>
    %780 = vector.shape_cast %777 : vector<2x4x8x32xf32> to vector<2x32x32xf32>
    %781 = vector.extract_strided_slice %780 {offsets = [0, 24, 0], sizes = [2, 8, 32], strides = [1, 1, 1]} : vector<2x32x32xf32> to vector<2x8x32xf32>
    %782 = vector.extract_strided_slice %780 {offsets = [0, 0, 0], sizes = [2, 24, 32], strides = [1, 1, 1]} : vector<2x32x32xf32> to vector<2x24x32xf32>
    %783 = tpu.concatenate %781, %782 in 1 : vector<2x8x32xf32>, vector<2x24x32xf32> -> vector<2x32x32xf32>
    %784 = vector.extract_strided_slice %780 {offsets = [0, 8, 0], sizes = [2, 24, 32], strides = [1, 1, 1]} : vector<2x32x32xf32> to vector<2x24x32xf32>
    %785 = vector.extract_strided_slice %780 {offsets = [0, 0, 0], sizes = [2, 8, 32], strides = [1, 1, 1]} : vector<2x32x32xf32> to vector<2x8x32xf32>
    %786 = tpu.concatenate %784, %785 in 1 : vector<2x24x32xf32>, vector<2x8x32xf32> -> vector<2x32x32xf32>
    %787 = vector.shape_cast %783 : vector<2x32x32xf32> to vector<64x32xf32>
    %788 = vector.extract_strided_slice %779 {offsets = [0, 0, 0], sizes = [1, 32, 96], strides = [1, 1, 1]} : vector<3x32x96xf32> to vector<1x32x96xf32>
    %789 = vector.shape_cast %788 : vector<1x32x96xf32> to vector<32x96xf32>
    %cst_233 = arith.constant dense<0.000000e+00> : vector<64x96xf32>
    %790 = tpu.matmul %787, %789, %cst_233 {dimension_numbers = #tpu.dot_dimension_numbers<[1], [0], [0], [1], [0, 0, 1, 1], [], []>} : vector<64x32xf32>, vector<32x96xf32>, vector<64x96xf32> -> vector<64x96xf32>
    %791 = vector.shape_cast %780 : vector<2x32x32xf32> to vector<64x32xf32>
    %792 = vector.extract_strided_slice %779 {offsets = [1, 0, 0], sizes = [1, 32, 96], strides = [1, 1, 1]} : vector<3x32x96xf32> to vector<1x32x96xf32>
    %793 = vector.shape_cast %792 : vector<1x32x96xf32> to vector<32x96xf32>
    %cst_234 = arith.constant dense<0.000000e+00> : vector<64x96xf32>
    %794 = tpu.matmul %791, %793, %cst_234 {dimension_numbers = #tpu.dot_dimension_numbers<[1], [0], [0], [1], [0, 0, 1, 1], [], []>} : vector<64x32xf32>, vector<32x96xf32>, vector<64x96xf32> -> vector<64x96xf32>
    %795 = arith.addf %790, %794 : vector<64x96xf32>
    %796 = vector.shape_cast %786 : vector<2x32x32xf32> to vector<64x32xf32>
    %797 = vector.extract_strided_slice %779 {offsets = [2, 0, 0], sizes = [1, 32, 96], strides = [1, 1, 1]} : vector<3x32x96xf32> to vector<1x32x96xf32>
    %798 = vector.shape_cast %797 : vector<1x32x96xf32> to vector<32x96xf32>
    %cst_235 = arith.constant dense<0.000000e+00> : vector<64x96xf32>
    %799 = tpu.matmul %796, %798, %cst_235 {dimension_numbers = #tpu.dot_dimension_numbers<[1], [0], [0], [1], [0, 0, 1, 1], [], []>} : vector<64x32xf32>, vector<32x96xf32>, vector<64x96xf32> -> vector<64x96xf32>
    %800 = arith.addf %795, %799 : vector<64x96xf32>
    %801 = vector.shape_cast %800 : vector<64x96xf32> to vector<8x8x96xf32>
    %802 = vector.extract_strided_slice %801 {offsets = [0, 0, 0], sizes = [8, 8, 32], strides = [1, 1, 1]} : vector<8x8x96xf32> to vector<8x8x32xf32>
    %803 = vector.extract_strided_slice %802 {offsets = [0, 7, 0], sizes = [8, 1, 32], strides = [1, 1, 1]} : vector<8x8x32xf32> to vector<8x1x32xf32>
    %804 = vector.extract_strided_slice %802 {offsets = [0, 0, 0], sizes = [8, 7, 32], strides = [1, 1, 1]} : vector<8x8x32xf32> to vector<8x7x32xf32>
    %805 = tpu.concatenate %803, %804 in 1 : vector<8x1x32xf32>, vector<8x7x32xf32> -> vector<8x8x32xf32>
    %806 = vector.extract_strided_slice %801 {offsets = [0, 0, 32], sizes = [8, 8, 32], strides = [1, 1, 1]} : vector<8x8x96xf32> to vector<8x8x32xf32>
    %807 = arith.addf %805, %806 : vector<8x8x32xf32>
    %808 = vector.extract_strided_slice %801 {offsets = [0, 0, 64], sizes = [8, 8, 32], strides = [1, 1, 1]} : vector<8x8x96xf32> to vector<8x8x32xf32>
    %809 = vector.extract_strided_slice %808 {offsets = [0, 1, 0], sizes = [8, 7, 32], strides = [1, 1, 1]} : vector<8x8x32xf32> to vector<8x7x32xf32>
    %810 = vector.extract_strided_slice %808 {offsets = [0, 0, 0], sizes = [8, 1, 32], strides = [1, 1, 1]} : vector<8x8x32xf32> to vector<8x1x32xf32>
    %811 = tpu.concatenate %809, %810 in 1 : vector<8x7x32xf32>, vector<8x1x32xf32> -> vector<8x8x32xf32>
    %812 = arith.addf %807, %811 : vector<8x8x32xf32>
    %813 = vector.shape_cast %812 : vector<8x8x32xf32> to vector<64x32xf32>
    %c11_236 = arith.constant 11 : index
    %c0_237 = arith.constant 0 : index
    %c0_238 = arith.constant 0 : index
    %814 = vector.load %arg5[%c11_236, %c0_237, %c0_238] : memref<12x1x32xf32, #tpu.memory_space<vmem>>, vector<1x1x32xf32>
    %815 = vector.shape_cast %814 : vector<1x1x32xf32> to vector<1x32xf32>
    %c11_239 = arith.constant 11 : index
    %c0_240 = arith.constant 0 : index
    %c0_241 = arith.constant 0 : index
    %816 = vector.load %arg6[%c11_239, %c0_240, %c0_241] : memref<12x1x32xf32, #tpu.memory_space<vmem>>, vector<1x1x32xf32>
    %817 = vector.shape_cast %816 : vector<1x1x32xf32> to vector<1x32xf32>
    %cst_242 = arith.constant dense<0.000000e+00> : vector<1x32xf32>
    %818 = tpu.matmul %1, %813, %cst_242 {dimension_numbers = #tpu.dot_dimension_numbers<[1], [0], [0], [1], [0, 0, 1, 1], [], []>} : vector<1x64xf32>, vector<64x32xf32>, vector<1x32xf32> -> vector<1x32xf32>
    %cst_243 = arith.constant 1.562500e-02 : f32
    %819 = vector.broadcast %cst_243 : f32 to vector<1x32xf32>
    %820 = arith.mulf %818, %819 : vector<1x32xf32>
    %821 = arith.mulf %813, %813 : vector<64x32xf32>
    %cst_244 = arith.constant dense<0.000000e+00> : vector<1x32xf32>
    %822 = tpu.matmul %1, %821, %cst_244 {dimension_numbers = #tpu.dot_dimension_numbers<[1], [0], [0], [1], [0, 0, 1, 1], [], []>} : vector<1x64xf32>, vector<64x32xf32>, vector<1x32xf32> -> vector<1x32xf32>
    %cst_245 = arith.constant 1.562500e-02 : f32
    %823 = vector.broadcast %cst_245 : f32 to vector<1x32xf32>
    %824 = arith.mulf %822, %823 : vector<1x32xf32>
    %825 = arith.mulf %820, %820 : vector<1x32xf32>
    %826 = arith.subf %824, %825 : vector<1x32xf32>
    %cst_246 = arith.constant 0.000000e+00 : f32
    %827 = vector.broadcast %cst_246 : f32 to vector<1x32xf32>
    %828 = arith.maximumf %826, %827 : vector<1x32xf32>
    %cst_247 = arith.constant 9.99999974E-6 : f32
    %829 = vector.broadcast %cst_247 : f32 to vector<1x32xf32>
    %830 = arith.addf %828, %829 : vector<1x32xf32>
    %831 = math.rsqrt %830 : vector<1x32xf32>
    %832 = arith.mulf %815, %831 : vector<1x32xf32>
    %833 = vector.broadcast %832 : vector<1x32xf32> to vector<64x32xf32>
    %834 = arith.mulf %813, %833 : vector<64x32xf32>
    %835 = arith.mulf %820, %832 : vector<1x32xf32>
    %836 = arith.subf %817, %835 : vector<1x32xf32>
    %837 = vector.broadcast %836 : vector<1x32xf32> to vector<64x32xf32>
    %838 = arith.addf %834, %837 : vector<64x32xf32>
    %839 = vector.shape_cast %838 : vector<64x32xf32> to vector<2x4x8x32xf32>
    %840 = arith.addf %777, %839 : vector<2x4x8x32xf32>
    %cst_248 = arith.constant 0.000000e+00 : f32
    %841 = vector.broadcast %cst_248 : f32 to vector<2x4x8x32xf32>
    %842 = arith.maximumf %840, %841 : vector<2x4x8x32xf32>
    %843 = vector.extract_strided_slice %0 {offsets = [0, 0, 0, 0], sizes = [2, 4, 8, 1], strides = [1, 1, 1, 1]} : vector<2x4x8x32xf32> to vector<2x4x8x1xf32>
    %844 = vector.broadcast %843 : vector<2x4x8x1xf32> to vector<2x4x8x32xf32>
    %845 = arith.mulf %842, %844 : vector<2x4x8x32xf32>
    %846 = vector.shape_cast %845 : vector<2x4x8x32xf32> to vector<2x32x32xf32>
    %cst_249 = arith.constant dense<0.000000e+00> : vector<2x32xf32>
    %847 = vector.multi_reduction <add>, %846, %cst_249 [1] : vector<2x32x32xf32> to vector<2x32xf32>
    %848 = vector.shape_cast %842 : vector<2x4x8x32xf32> to vector<2x32x32xf32>
    %cst_250 = arith.constant dense<0.000000e+00> : vector<2x32xf32>
    %849 = vector.multi_reduction <add>, %848, %cst_250 [1] : vector<2x32x32xf32> to vector<2x32xf32>
    %cst_251 = arith.constant 3.125000e-02 : f32
    %850 = vector.broadcast %cst_251 : f32 to vector<2x32xf32>
    %851 = arith.mulf %849, %850 : vector<2x32xf32>
    %c0_252 = arith.constant 0 : index
    %c0_253 = arith.constant 0 : index
    %852 = vector.load %arg7[%c0_252, %c0_253] : memref<32x5xf32, #tpu.memory_space<vmem>>, vector<32x5xf32>
    %cst_254 = arith.constant dense<0.000000e+00> : vector<2x5xf32>
    %853 = tpu.matmul %847, %852, %cst_254 {dimension_numbers = #tpu.dot_dimension_numbers<[1], [0], [0], [1], [0, 0, 1, 1], [], []>} : vector<2x32xf32>, vector<32x5xf32>, vector<2x5xf32> -> vector<2x5xf32>
    %c0_255 = arith.constant 0 : index
    %c0_256 = arith.constant 0 : index
    %854 = vector.load %arg8[%c0_255, %c0_256] : memref<32x5xf32, #tpu.memory_space<vmem>>, vector<32x5xf32>
    %cst_257 = arith.constant dense<0.000000e+00> : vector<2x5xf32>
    %855 = tpu.matmul %851, %854, %cst_257 {dimension_numbers = #tpu.dot_dimension_numbers<[1], [0], [0], [1], [0, 0, 1, 1], [], []>} : vector<2x32xf32>, vector<32x5xf32>, vector<2x5xf32> -> vector<2x5xf32>
    %856 = arith.addf %853, %855 : vector<2x5xf32>
    %857 = vector.extract_strided_slice %856 {offsets = [0, 0], sizes = [2, 4], strides = [1, 1]} : vector<2x5xf32> to vector<2x4xf32>
    %c0_258 = arith.constant 0 : index
    %c0_259 = arith.constant 0 : index
    %858 = vector.load %arg9[%c0_258, %c0_259] : memref<2x4xf32, #tpu.memory_space<vmem>>, vector<2x4xf32>
    tpu.vector_store %arg9[%c0_258, %c0_259], %857 {strides = array<i32>} : memref<2x4xf32, #tpu.memory_space<vmem>>, vector<2x4xf32>,
    %859 = vector.extract_strided_slice %856 {offsets = [0, 4], sizes = [2, 1], strides = [1, 1]} : vector<2x5xf32> to vector<2x1xf32>
    %860 = math.tanh %859 : vector<2x1xf32>
    %c0_260 = arith.constant 0 : index
    %c0_261 = arith.constant 0 : index
    %861 = vector.load %arg10[%c0_260, %c0_261] : memref<2x1xf32, #tpu.memory_space<vmem>>, vector<2x1xf32>
    tpu.vector_store %arg10[%c0_260, %c0_261], %860 {strides = array<i32>} : memref<2x1xf32, #tpu.memory_space<vmem>>, vector<2x1xf32>,
    return
  }
}

</mosaic_0001>

<llo_original>
// kernel: tpu_custom_call.1
$region0: #{tpu_custom_call.1}
  #allocation0 [shape = 'u32[]', space=smem, size = 0x4, offset = 0x4, fixed_abs, tag = 'smem constant byte address 0x4 - core index']
  #allocation1 [shape = 'u32[72,128]{1,0:T(1,128)}', space=vmem, size = 0x9000, scoped, tag = 'internal scratch']
  %s0 = inlined_call_operand.hbm [shape: f32[2,32,32], index: 0, kind: input, shape index: {}]
  %s1 = inlined_call_operand.hbm [shape: f32[2,32,32], index: 1, kind: output, shape index: {}]
  %s2 = sld [smem:[#allocation0]]
  $region18: #{tpu_custom_call.1} parent=0
    _
  %s4 = ssub.s32 1, %s2
  %s5 = scalar_select 0, %s4, %s2
  $region1: #{tpu_custom_call.1} parent=0
    #allocation2 [shape = 'u8[32768]{0}', space=vmem, size = 0x8000, scoped, tag = 'input window, operand 0, single buffered']
    #allocation3 [shape = 's32[1]{0}', space=sflag, size = 0x4, scoped, tag = 'scoped memory for tpu_custom_call.1']
    #allocation4 [shape = 's32[1]{0}', space=sflag, size = 0x4, scoped, tag = 'scoped memory for tpu_custom_call.1']
    #allocation5 [shape = 'u8[32768]{0}', space=vmem, size = 0x8000, scoped, tag = 'output window, operand 0, single buffered']
    %6 = vsyncpa [#allocation3], 0
    %7 = vsyncpa [#allocation4], 0
    // Predicated region
    $region2: #{tpu_custom_call.1} parent=1 // pred_check
      _
    $region3: #{tpu_custom_call.1} parent=1 // pred_check_branch
      %9 = sbr.rel (0) target = $region5
    $region4: #{tpu_custom_call.1} parent=1 // pred_region
      %11 = vsyncadd [#allocation3], 0
      %s12 = sshll.u32 %s0, 4
      %s13 = int_to_ptr.hbm [resolvable:$true] %s12
      %s14 = sshll.u32 [#allocation2], 4
      %s15 = int_to_ptr.vmem [resolvable:$true] %s14
      %20 = dma.hbm_to_vmem [thread:$0]  %s13, 1024, %s15, [#allocation3], 128, 128, 8
    $region5: #{tpu_custom_call.1} parent=1 // pred_fallthru
      _
    // Predicated region
    $region6: #{tpu_custom_call.1} parent=1 // pred_check
      _
    $region7: #{tpu_custom_call.1} parent=1 // pred_check_branch
      %22 = sbr.rel (0) target = $region9
    $region8: #{tpu_custom_call.1} parent=1 // pred_region
      %24 = dma.done [#allocation3], 1024
    $region9: #{tpu_custom_call.1} parent=1 // pred_fallthru
      _
    %v25 = vld [vmem:[#allocation2] sm:$0xff]
    %v26 = vld [vmem:[#allocation2 + $0x8] sm:$0xff]
    %v27 = vld [vmem:[#allocation2 + $0x10] sm:$0xff]
    %v28 = vld [vmem:[#allocation2 + $0x18] sm:$0xff]
    %v29 = vld [vmem:[#allocation2 + $0x20] sm:$0xff]
    %v30 = vld [vmem:[#allocation2 + $0x28] sm:$0xff]
    %v31 = vld [vmem:[#allocation2 + $0x30] sm:$0xff]
    %v32 = vld [vmem:[#allocation2 + $0x38] sm:$0xff]
    %vm33 = vcmask 261120
    %34 = vst.msk [vmem:[#allocation5] sm:$0xff] %vm33, %v28
    %35 = vst.msk [vmem:[#allocation5 + $0x8] sm:$0xff] %vm33, %v25
    %36 = vst.msk [vmem:[#allocation5 + $0x10] sm:$0xff] %vm33, %v26
    %37 = vst.msk [vmem:[#allocation5 + $0x18] sm:$0xff] %vm33, %v27
    %38 = vst.msk [vmem:[#allocation5 + $0x20] sm:$0xff] %vm33, %v32
    %39 = vst.msk [vmem:[#allocation5 + $0x28] sm:$0xff] %vm33, %v29
    %40 = vst.msk [vmem:[#allocation5 + $0x30] sm:$0xff] %vm33, %v30
    %41 = vst.msk [vmem:[#allocation5 + $0x38] sm:$0xff] %vm33, %v31
    // Predicated region
    $region10: #{tpu_custom_call.1} parent=1 // pred_check
      _
    $region11: #{tpu_custom_call.1} parent=1 // pred_check_branch
      %43 = sbr.rel (0) target = $region13
    $region12: #{tpu_custom_call.1} parent=1 // pred_region
      %45 = vsyncadd [#allocation4], 0
      %s46 = sshll.u32 [#allocation5], 4
      %s47 = int_to_ptr.vmem [resolvable:$true] %s46
      %s48 = sshll.u32 %s1, 4
      %s49 = int_to_ptr.hbm [resolvable:$true] %s48
      %54 = dma.vmem_to_hbm [thread:$0]  %s47, 1024, %s49, [#allocation4], 128, 128, 8
    $region13: #{tpu_custom_call.1} parent=1 // pred_fallthru
      _
    // Predicated region
    $region14: #{tpu_custom_call.1} parent=1 // pred_check
      _
    $region15: #{tpu_custom_call.1} parent=1 // pred_check_branch
      %56 = sbr.rel (0) target = $region17
    $region16: #{tpu_custom_call.1} parent=1 // pred_region
      %58 = dma.done [#allocation4], 1024
    $region17: #{tpu_custom_call.1} parent=1 // pred_fallthru
      _
    %59 = vsyncpa [#allocation3], 1
    %60 = vsyncpa [#allocation4], 1

// kernel: geese_net_pallas.1
$region0: #{geese_net_pallas.1}
  #allocation0 [shape = 'u32[]', space=smem, size = 0x4, offset = 0x4, fixed_abs, tag = 'smem constant byte address 0x4 - core index']
  #allocation1 [shape = 'u32[72,128]{1,0:T(1,128)}', space=vmem, size = 0x9000, scoped, tag = 'internal scratch']
  %s0 = inlined_call_operand.vmem [shape: f32[2,4,8,32], index: 0, kind: input, shape index: {}]
  %s1 = inlined_call_operand.vmem [shape: f32[3,32,96], index: 1, kind: input, shape index: {}]
  %s2 = inlined_call_operand.vmem [shape: f32[1,32], index: 2, kind: input, shape index: {}]
  %s3 = inlined_call_operand.vmem [shape: f32[1,32], index: 3, kind: input, shape index: {}]
  %s4 = inlined_call_operand.hbm [shape: f32[12,3,32,96], index: 4, kind: input, shape index: {}]
  %s5 = inlined_call_operand.vmem [shape: f32[12,1,32], index: 5, kind: input, shape index: {}]
  %s6 = inlined_call_operand.vmem [shape: f32[12,1,32], index: 6, kind: input, shape index: {}]
  %s7 = inlined_call_operand.vmem [shape: f32[32,5], index: 7, kind: input, shape index: {}]
  %s8 = inlined_call_operand.vmem [shape: f32[32,5], index: 8, kind: input, shape index: {}]
  %s9 = inlined_call_operand.hbm [shape: f32[2,4], index: 9, kind: output, shape index: {0}]
  %s10 = inlined_call_operand.vmem [shape: f32[2,1], index: 10, kind: output, shape index: {1}]
  %11 = xla_tuple %s9, %s10
  %s12 = sld [smem:[#allocation0]]
  $region58: #{geese_net_pallas.1} parent=0
    _
  %s14 = ssub.s32 1, %s12
  %s15 = scalar_select 0, %s14, %s12
  $region1: #{geese_net_pallas.1} parent=0
    #allocation2 [shape = 'u8[589824]{0}', space=vmem, size = 0x90000, scoped, tag = 'input window, operand 4, single buffered']
    #allocation3 [shape = 's32[1]{0}', space=sflag, size = 0x4, scoped, tag = 'scoped memory for geese_net_pallas.1']
    #allocation4 [shape = 's32[1]{0}', space=sflag, size = 0x4, scoped, tag = 'scoped memory for geese_net_pallas.1']
    #allocation5 [shape = 'u8[1024]{0}', space=vmem, size = 0x400, scoped, tag = 'output window, operand 0, single buffered']
    %16 = vsyncpa [#allocation3], 0
    %17 = vsyncpa [#allocation4], 0
    // Predicated region
    $region2: #{geese_net_pallas.1} parent=1 // pred_check
      _
    $region3: #{geese_net_pallas.1} parent=1 // pred_check_branch
      %19 = sbr.rel (0) target = $region5
    $region4: #{geese_net_pallas.1} parent=1 // pred_region
      _
    $region5: #{geese_net_pallas.1} parent=1 // pred_fallthru
      _
    // Predicated region
    $region6: #{geese_net_pallas.1} parent=1 // pred_check
      _
    $region7: #{geese_net_pallas.1} parent=1 // pred_check_branch
      %21 = sbr.rel (0) target = $region9
    $region8: #{geese_net_pallas.1} parent=1 // pred_region
      _
    $region9: #{geese_net_pallas.1} parent=1 // pred_fallthru
      _
    // Predicated region
    $region10: #{geese_net_pallas.1} parent=1 // pred_check
      _
    $region11: #{geese_net_pallas.1} parent=1 // pred_check_branch
      %23 = sbr.rel (0) target = $region13
    $region12: #{geese_net_pallas.1} parent=1 // pred_region
      _
    $region13: #{geese_net_pallas.1} parent=1 // pred_fallthru
      _
    // Predicated region
    $region14: #{geese_net_pallas.1} parent=1 // pred_check
      _
    $region15: #{geese_net_pallas.1} parent=1 // pred_check_branch
      %25 = sbr.rel (0) target = $region17
    $region16: #{geese_net_pallas.1} parent=1 // pred_region
      _
    $region17: #{geese_net_pallas.1} parent=1 // pred_fallthru
      _
    // Predicated region
    $region18: #{geese_net_pallas.1} parent=1 // pred_check
      _
    $region19: #{geese_net_pallas.1} parent=1 // pred_check_branch
      %27 = sbr.rel (0) target = $region21
    $region20: #{geese_net_pallas.1} parent=1 // pred_region
      %29 = vsyncadd [#allocation3], 0
      %s30 = sshll.u32 %s4, 4
      %s31 = int_to_ptr.hbm [resolvable:$true] %s30
      %s32 = sshll.u32 [#allocation2], 4
      %s33 = int_to_ptr.vmem [resolvable:$true] %s32
      %38 = dma.hbm_to_vmem [thread:$0]  %s31, 18432, %s33, [#allocation3], 128, 128, 8
    $region21: #{geese_net_pallas.1} parent=1 // pred_fallthru
      _
    // Predicated region
    $region22: #{geese_net_pallas.1} parent=1 // pred_check
      _
    $region23: #{geese_net_pallas.1} parent=1 // pred_check_branch
      %40 = sbr.rel (0) target = $region25
    $region24: #{geese_net_pallas.1} parent=1 // pred_region
      _
    $region25: #{geese_net_pallas.1} parent=1 // pred_fallthru
      _
    // Predicated region
    $region26: #{geese_net_pallas.1} parent=1 // pred_check
      _
    $region27: #{geese_net_pallas.1} parent=1 // pred_check_branch
      %42 = sbr.rel (0) target = $region29
    $region28: #{geese_net_pallas.1} parent=1 // pred_region
      _
    $region29: #{geese_net_pallas.1} parent=1 // pred_fallthru
      _
    // Predicated region
    $region30: #{geese_net_pallas.1} parent=1 // pred_check
      _
    $region31: #{geese_net_pallas.1} parent=1 // pred_check_branch
      %44 = sbr.rel (0) target = $region33
    $region32: #{geese_net_pallas.1} parent=1 // pred_region
      _
    $region33: #{geese_net_pallas.1} parent=1 // pred_fallthru
      _
    // Predicated region
    $region34: #{geese_net_pallas.1} parent=1 // pred_check
      _
    $region35: #{geese_net_pallas.1} parent=1 // pred_check_branch
      %46 = sbr.rel (0) target = $region37
    $region36: #{geese_net_pallas.1} parent=1 // pred_region
      _
    $region37: #{geese_net_pallas.1} parent=1 // pred_fallthru
      _
    // Predicated region
    $region38: #{geese_net_pallas.1} parent=1 // pred_check
      _
    $region39: #{geese_net_pallas.1} parent=1 // pred_check_branch
      %48 = sbr.rel (0) target = $region41
    $region40: #{geese_net_pallas.1} parent=1 // pred_region
      %50 = dma.done [#allocation3], 18432
    $region41: #{geese_net_pallas.1} parent=1 // pred_fallthru
      _
    %v51 = vld [vmem:[%s0] sm:$0xff]
    %v52 = vld [vmem:[%s0 + $0x8] sm:$0xff]
    %v53 = vld [vmem:[%s0 + $0x10] sm:$0xff]
    %v54 = vld [vmem:[%s0 + $0x18] sm:$0xff]
    %v55 = vld [vmem:[%s0 + $0x20] sm:$0xff]
    %v56 = vld [vmem:[%s0 + $0x28] sm:$0xff]
    %v57 = vld [vmem:[%s0 + $0x30] sm:$0xff]
    %v58 = vld [vmem:[%s0 + $0x38] sm:$0xff]
    %v59 = vld [vmem:[%s1] sm:$0xff]
    %v60 = vld [vmem:[%s1 + $0x8] sm:$0xff]
    %v61 = vld [vmem:[%s1 + $0x10] sm:$0xff]
    %v62 = vld [vmem:[%s1 + $0x18] sm:$0xff]
    %v63 = vld [vmem:[%s1 + $0x20] sm:$0xff]
    %v64 = vld [vmem:[%s1 + $0x28] sm:$0xff]
    %v65 = vld [vmem:[%s1 + $0x30] sm:$0xff]
    %v66 = vld [vmem:[%s1 + $0x38] sm:$0xff]
    %v67 = vld [vmem:[%s1 + $0x40] sm:$0xff]
    %v68 = vld [vmem:[%s1 + $0x48] sm:$0xff]
    %v69 = vld [vmem:[%s1 + $0x50] sm:$0xff]
    %v70 = vld [vmem:[%s1 + $0x58] sm:$0xff]
    %vm71 = vcmask 261120
    %v73 = vsel %vm71, %v51, 0
    %v76 = vsel %vm71, %v52, 0
    %v79 = vsel %vm71, %v53, 0
    %v82 = vsel %vm71, %v54, 0
    %v85 = vsel %vm71, %v55, 0
    %v88 = vsel %vm71, %v56, 0
    %v91 = vsel %vm71, %v57, 0
    %v94 = vsel %vm71, %v58, 0
    %96 = vmatpush.msra.mxu0 0.0
    %97 = vmatpush.msra.mxu0 0.0
    %98 = vmatpush.msra.mxu0 0.0
    %99 = vmatpush.msra.mxu0 0.0
    %100 = vmatpush.msra.mxu0 0.0
    %101 = vmatpush.msra.mxu0 0.0
    %102 = vmatpush.msra.mxu0 0.0
    %103 = vmatpush.msra.mxu0 0.0
    %104 = vmatpush.msra.mxu0 0.0
    %105 = vmatpush.msra.mxu0 0.0
    %106 = vmatpush.msra.mxu0 0.0
    %107 = vmatpush.msra.mxu0 0.0
    %108 = vmatpush.msra.mxu0 %v66
    %109 = vmatpush.msra.mxu0 %v65
    %110 = vmatpush.msra.mxu0 %v64
    %111 = vmatpush.msra.mxu0 %v63
    %112 = vmatmul.f32.gmra.mxu0 %v73
    %v113 = vpop.f32.mrf.mxu0
    %v114 = vadd.f32 0.0, %v113
    %115 = vmatmul.f32.gmra.mxu0 %v76
    %v116 = vpop.f32.mrf.mxu0
    %v117 = vadd.f32 0.0, %v116
    %118 = vmatmul.f32.gmra.mxu0 %v79
    %v119 = vpop.f32.mrf.mxu0
    %v120 = vadd.f32 0.0, %v119
    %121 = vmatmul.f32.gmra.mxu0 %v82
    %v122 = vpop.f32.mrf.mxu0
    %v123 = vadd.f32 0.0, %v122
    %124 = vmatmul.f32.gmra.mxu0 %v85
    %v125 = vpop.f32.mrf.mxu0
    %v126 = vadd.f32 0.0, %v125
    %127 = vmatmul.f32.gmra.mxu0 %v88
    %v128 = vpop.f32.mrf.mxu0
    %v129 = vadd.f32 0.0, %v128
    %130 = vmatmul.f32.gmra.mxu0 %v91
    %v131 = vpop.f32.mrf.mxu0
    %v132 = vadd.f32 0.0, %v131
    %133 = vmatmul.f32.gmra.mxu0 %v94
    %v134 = vpop.f32.mrf.mxu0
    %v135 = vadd.f32 0.0, %v134
    %136 = vdwg.mxu0
    %137 = vmatpush.msra.mxu0 0.0
    %138 = vmatpush.msra.mxu0 0.0
    %139 = vmatpush.msra.mxu0 0.0
    %140 = vmatpush.msra.mxu0 0.0
    %141 = vmatpush.msra.mxu0 0.0
    %142 = vmatpush.msra.mxu0 0.0
    %143 = vmatpush.msra.mxu0 0.0
    %144 = vmatpush.msra.mxu0 0.0
    %145 = vmatpush.msra.mxu0 0.0
    %146 = vmatpush.msra.mxu0 0.0
    %147 = vmatpush.msra.mxu0 0.0
    %148 = vmatpush.msra.mxu0 0.0
    %149 = vmatpush.msra.mxu0 %v62
    %150 = vmatpush.msra.mxu0 %v61
    %151 = vmatpush.msra.mxu0 %v60
    %152 = vmatpush.msra.mxu0 %v59
    %153 = vmatmul.f32.gmra.mxu0 %v82
    %v154 = vpop.f32.mrf.mxu0
    %v155 = vadd.f32 %v114, %v154
    %156 = vmatmul.f32.gmra.mxu0 %v73
    %v157 = vpop.f32.mrf.mxu0
    %v158 = vadd.f32 %v117, %v157
    %159 = vmatmul.f32.gmra.mxu0 %v76
    %v160 = vpop.f32.mrf.mxu0
    %v161 = vadd.f32 %v120, %v160
    %162 = vmatmul.f32.gmra.mxu0 %v79
    %v163 = vpop.f32.mrf.mxu0
    %v164 = vadd.f32 %v123, %v163
    %165 = vmatmul.f32.gmra.mxu0 %v94
    %v166 = vpop.f32.mrf.mxu0
    %v167 = vadd.f32 %v126, %v166
    %168 = vmatmul.f32.gmra.mxu0 %v85
    %v169 = vpop.f32.mrf.mxu0
    %v170 = vadd.f32 %v129, %v169
    %171 = vmatmul.f32.gmra.mxu0 %v88
    %v172 = vpop.f32.mrf.mxu0
    %v173 = vadd.f32 %v132, %v172
    %174 = vmatmul.f32.gmra.mxu0 %v91
    %v175 = vpop.f32.mrf.mxu0
    %v176 = vadd.f32 %v135, %v175
    %177 = vdwg.mxu0
    %178 = vmatpush.msra.mxu0 0.0
    %179 = vmatpush.msra.mxu0 0.0
    %180 = vmatpush.msra.mxu0 0.0
    %181 = vmatpush.msra.mxu0 0.0
    %182 = vmatpush.msra.mxu0 0.0
    %183 = vmatpush.msra.mxu0 0.0
    %184 = vmatpush.msra.mxu0 0.0
    %185 = vmatpush.msra.mxu0 0.0
    %186 = vmatpush.msra.mxu0 0.0
    %187 = vmatpush.msra.mxu0 0.0
    %188 = vmatpush.msra.mxu0 0.0
    %189 = vmatpush.msra.mxu0 0.0
    %190 = vmatpush.msra.mxu0 %v70
    %191 = vmatpush.msra.mxu0 %v69
    %192 = vmatpush.msra.mxu0 %v68
    %193 = vmatpush.msra.mxu0 %v67
    %194 = vmatmul.f32.gmra.mxu0 %v76
    %v195 = vpop.f32.mrf.mxu0
    %v196 = vadd.f32 0.0, %v195
    %197 = vmatmul.f32.gmra.mxu0 %v79
    %v198 = vpop.f32.mrf.mxu0
    %v199 = vadd.f32 0.0, %v198
    %200 = vmatmul.f32.gmra.mxu0 %v82
    %v201 = vpop.f32.mrf.mxu0
    %v202 = vadd.f32 0.0, %v201
    %203 = vmatmul.f32.gmra.mxu0 %v73
    %v204 = vpop.f32.mrf.mxu0
    %v205 = vadd.f32 0.0, %v204
    %206 = vmatmul.f32.gmra.mxu0 %v88
    %v207 = vpop.f32.mrf.mxu0
    %v208 = vadd.f32 0.0, %v207
    %209 = vmatmul.f32.gmra.mxu0 %v91
    %v210 = vpop.f32.mrf.mxu0
    %v211 = vadd.f32 0.0, %v210
    %212 = vmatmul.f32.gmra.mxu0 %v94
    %v213 = vpop.f32.mrf.mxu0
    %v214 = vadd.f32 0.0, %v213
    %215 = vmatmul.f32.gmra.mxu0 %v85
    %v216 = vpop.f32.mrf.mxu0
    %v217 = vadd.f32 0.0, %v216
    %218 = vdwg.mxu0
    %v219 = vadd.f32 %v155, %v196
    %v220 = vadd.f32 %v158, %v199
    %v221 = vadd.f32 %v161, %v202
    %v222 = vadd.f32 %v164, %v205
    %v223 = vadd.f32 %v167, %v208
    %v224 = vadd.f32 %v170, %v211
    %v225 = vadd.f32 %v173, %v214
    %v226 = vadd.f32 %v176, %v217
    %v235 = vrot.slane %v219, 7
    %v236 = vrot.slane %v220, 7
    %v237 = vrot.slane %v221, 7
    %v238 = vrot.slane %v222, 7
    %v239 = vrot.slane %v223, 7
    %v240 = vrot.slane %v224, 7
    %v241 = vrot.slane %v225, 7
    %v242 = vrot.slane %v226, 7
    %vm251 = vcmask 1040384
    %v252 = vsel %vm251, %v235, %v235
    %v253 = vsel %vm251, %v236, %v236
    %v254 = vsel %vm251, %v237, %v237
    %v255 = vsel %vm251, %v238, %v238
    %v256 = vsel %vm251, %v239, %v239
    %v257 = vsel %vm251, %v240, %v240
    %v258 = vsel %vm251, %v241, %v241
    %v259 = vsel %vm251, %v242, %v242
    %260 = vrot.lane.b32.xlu0 %v219, 96
    %v261 = vpop.permute.xlu0 %260
    %262 = vrot.lane.b32.xlu0 %v220, 96
    %v263 = vpop.permute.xlu0 %262
    %264 = vrot.lane.b32.xlu0 %v221, 96
    %v265 = vpop.permute.xlu0 %264
    %266 = vrot.lane.b32.xlu0 %v222, 96
    %v267 = vpop.permute.xlu0 %266
    %268 = vrot.lane.b32.xlu0 %v223, 96
    %v269 = vpop.permute.xlu0 %268
    %270 = vrot.lane.b32.xlu0 %v224, 96
    %v271 = vpop.permute.xlu0 %270
    %272 = vrot.lane.b32.xlu0 %v225, 96
    %v273 = vpop.permute.xlu0 %272
    %274 = vrot.lane.b32.xlu0 %v226, 96
    %v275 = vpop.permute.xlu0 %274
    %v284 = vadd.f32 %v252, %v261
    %v285 = vadd.f32 %v253, %v263
    %v286 = vadd.f32 %v254, %v265
    %v287 = vadd.f32 %v255, %v267
    %v288 = vadd.f32 %v256, %v269
    %v289 = vadd.f32 %v257, %v271
    %v290 = vadd.f32 %v258, %v273
    %v291 = vadd.f32 %v259, %v275
    %v292 = vrot.slane %v219, 1
    %v293 = vrot.slane %v220, 1
    %v294 = vrot.slane %v221, 1
    %v295 = vrot.slane %v222, 1
    %v296 = vrot.slane %v223, 1
    %v297 = vrot.slane %v224, 1
    %v298 = vrot.slane %v225, 1
    %v299 = vrot.slane %v226, 1
    %vm308 = vcmask 1046528
    %v309 = vsel %vm308, %v292, %v292
    %v310 = vsel %vm308, %v293, %v293
    %v311 = vsel %vm308, %v294, %v294
    %v312 = vsel %vm308, %v295, %v295
    %v313 = vsel %vm308, %v296, %v296
    %v314 = vsel %vm308, %v297, %v297
    %v315 = vsel %vm308, %v298, %v298
    %v316 = vsel %vm308, %v299, %v299
    %325 = vrot.lane.b32.xlu0 %v309, 64
    %v326 = vpop.permute.xlu0 %325
    %327 = vrot.lane.b32.xlu0 %v310, 64
    %v328 = vpop.permute.xlu0 %327
    %329 = vrot.lane.b32.xlu0 %v311, 64
    %v330 = vpop.permute.xlu0 %329
    %331 = vrot.lane.b32.xlu0 %v312, 64
    %v332 = vpop.permute.xlu0 %331
    %333 = vrot.lane.b32.xlu0 %v313, 64
    %v334 = vpop.permute.xlu0 %333
    %335 = vrot.lane.b32.xlu0 %v314, 64
    %v336 = vpop.permute.xlu0 %335
    %337 = vrot.lane.b32.xlu0 %v315, 64
    %v338 = vpop.permute.xlu0 %337
    %339 = vrot.lane.b32.xlu0 %v316, 64
    %v340 = vpop.permute.xlu0 %339
    %v349 = vadd.f32 %v284, %v326
    %v350 = vadd.f32 %v285, %v328
    %v351 = vadd.f32 %v286, %v330
    %v352 = vadd.f32 %v287, %v332
    %v353 = vadd.f32 %v288, %v334
    %v354 = vadd.f32 %v289, %v336
    %v355 = vadd.f32 %v290, %v338
    %v356 = vadd.f32 %v291, %v340
    %v357 = vld [vmem:[%s2] sm:$0x1]
    %v358 = vld [vmem:[%s3] sm:$0x1]
    %vm359 = vcmask 523264
    %v361 = vsel %vm359, 1.0, 0
    %363 = vmatpush.msra.mxu0 0.0
    %364 = vmatpush.msra.mxu0 0.0
    %365 = vmatpush.msra.mxu0 0.0
    %366 = vmatpush.msra.mxu0 0.0
    %367 = vmatpush.msra.mxu0 0.0
    %368 = vmatpush.msra.mxu0 0.0
    %369 = vmatpush.msra.mxu0 0.0
    %370 = vmatpush.msra.mxu0 0.0
    %371 = vmatpush.msra.mxu0 %v356
    %372 = vmatpush.msra.mxu0 %v355
    %373 = vmatpush.msra.mxu0 %v354
    %374 = vmatpush.msra.mxu0 %v353
    %375 = vmatpush.msra.mxu0 %v352
    %376 = vmatpush.msra.mxu0 %v351
    %377 = vmatpush.msra.mxu0 %v350
    %378 = vmatpush.msra.mxu0 %v349
    %379 = vmatmul.f32.gmra.mxu0 %v361
    %v380 = vpop.f32.mrf.mxu0
    %v381 = vadd.f32 0.0, %v380
    %382 = vdwg.mxu0
    %v383 = vmul.f32 %v381, 0.015625
    %v384 = vmul.f32 %v349, %v349
    %v385 = vmul.f32 %v350, %v350
    %v386 = vmul.f32 %v351, %v351
    %v387 = vmul.f32 %v352, %v352
    %v388 = vmul.f32 %v353, %v353
    %v389 = vmul.f32 %v354, %v354
    %v390 = vmul.f32 %v355, %v355
    %v391 = vmul.f32 %v356, %v356
    %392 = vmatpush.msra.mxu0 0.0
    %393 = vmatpush.msra.mxu0 0.0
    %394 = vmatpush.msra.mxu0 0.0
    %395 = vmatpush.msra.mxu0 0.0
    %396 = vmatpush.msra.mxu0 0.0
    %397 = vmatpush.msra.mxu0 0.0
    %398 = vmatpush.msra.mxu0 0.0
    %399 = vmatpush.msra.mxu0 0.0
    %400 = vmatpush.msra.mxu0 %v391
    %401 = vmatpush.msra.mxu0 %v390
    %402 = vmatpush.msra.mxu0 %v389
    %403 = vmatpush.msra.mxu0 %v388
    %404 = vmatpush.msra.mxu0 %v387
    %405 = vmatpush.msra.mxu0 %v386
    %406 = vmatpush.msra.mxu0 %v385
    %407 = vmatpush.msra.mxu0 %v384
    %408 = vmatmul.f32.gmra.mxu0 %v361
    %v409 = vpop.f32.mrf.mxu0
    %v410 = vadd.f32 0.0, %v409
    %411 = vdwg.mxu0
    %v412 = vmul.f32 %v410, 0.015625
    %v413 = vmul.f32 %v383, %v383
    %v414 = vsub.f32 %v412, %v413
    %v415 = vmax.f32 %v414, 0.0
    %v416 = vadd.f32 %v415, 1e-05
    %v417 = vrsqrt.pop %v416
    %v418 = vmul.f32 %v417, %v416
    %v419 = vmul.f32 %v418, %v417
    %v420 = vmul.f32 0.5, %v419
    %v421 = vsub.f32 1.5, %v420
    %v422 = vmul.f32 %v417, %v421
    %vm423 = vweird.f32 %v416
    %vm424 = vweird.f32 %v417
    %vm425 = vmor %vm423, %vm424
    %v426 = vsel %vm425, %v417, %v422
    %v427 = vmul.f32 %v357, %v426
    %v429 = vperm.slane %v427, 0
    %v431 = vmul.f32 %v349, %v429
    %v432 = vmul.f32 %v350, %v429
    %v433 = vmul.f32 %v351, %v429
    %v434 = vmul.f32 %v352, %v429
    %v435 = vmul.f32 %v353, %v429
    %v436 = vmul.f32 %v354, %v429
    %v437 = vmul.f32 %v355, %v429
    %v438 = vmul.f32 %v356, %v429
    %v439 = vmul.f32 %v383, %v427
    %v440 = vsub.f32 %v358, %v439
    %v442 = vperm.slane %v440, 0
    %v444 = vadd.f32 %v431, %v442
    %v445 = vadd.f32 %v432, %v442
    %v446 = vadd.f32 %v433, %v442
    %v447 = vadd.f32 %v434, %v442
    %v448 = vadd.f32 %v435, %v442
    %v449 = vadd.f32 %v436, %v442
    %v450 = vadd.f32 %v437, %v442
    %v451 = vadd.f32 %v438, %v442
    %v452 = vmax.f32 %v444, 0.0
    %v453 = vmax.f32 %v445, 0.0
    %v454 = vmax.f32 %v446, 0.0
    %v455 = vmax.f32 %v447, 0.0
    %v456 = vmax.f32 %v448, 0.0
    %v457 = vmax.f32 %v449, 0.0
    %v458 = vmax.f32 %v450, 0.0
    %v459 = vmax.f32 %v451, 0.0
    %v460 = vld [vmem:[#allocation2] sm:$0xff]
    %v461 = vld [vmem:[#allocation2 + $0x8] sm:$0xff]
    %v462 = vld [vmem:[#allocation2 + $0x10] sm:$0xff]
    %v463 = vld [vmem:[#allocation2 + $0x18] sm:$0xff]
    %v464 = vld [vmem:[#allocation2 + $0x20] sm:$0xff]
    %v465 = vld [vmem:[#allocation2 + $0x28] sm:$0xff]
    %v466 = vld [vmem:[#allocation2 + $0x30] sm:$0xff]
    %v467 = vld [vmem:[#allocation2 + $0x38] sm:$0xff]
    %v468 = vld [vmem:[#allocation2 + $0x40] sm:$0xff]
    %v469 = vld [vmem:[#allocation2 + $0x48] sm:$0xff]
    %v470 = vld [vmem:[#allocation2 + $0x50] sm:$0xff]
    %v471 = vld [vmem:[#allocation2 + $0x58] sm:$0xff]
    %v473 = vsel %vm71, %v452, 0
    %v476 = vsel %vm71, %v453, 0
    %v479 = vsel %vm71, %v454, 0
    %v482 = vsel %vm71, %v455, 0
    %v485 = vsel %vm71, %v456, 0
    %v488 = vsel %vm71, %v457, 0
    %v491 = vsel %vm71, %v458, 0
    %v494 = vsel %vm71, %v459, 0
    %496 = vmatpush.msra.mxu0 0.0
    %497 = vmatpush.msra.mxu0 0.0
    %498 = vmatpush.msra.mxu0 0.0
    %499 = vmatpush.msra.mxu0 0.0
    %500 = vmatpush.msra.mxu0 0.0
    %501 = vmatpush.msra.mxu0 0.0
    %502 = vmatpush.msra.mxu0 0.0
    %503 = vmatpush.msra.mxu0 0.0
    %504 = vmatpush.msra.mxu0 0.0
    %505 = vmatpush.msra.mxu0 0.0
    %506 = vmatpush.msra.mxu0 0.0
    %507 = vmatpush.msra.mxu0 0.0
    %508 = vmatpush.msra.mxu0 %v467
    %509 = vmatpush.msra.mxu0 %v466
    %510 = vmatpush.msra.mxu0 %v465
    %511 = vmatpush.msra.mxu0 %v464
    %512 = vmatmul.f32.gmra.mxu0 %v473
    %v513 = vpop.f32.mrf.mxu0
    %v514 = vadd.f32 0.0, %v513
    %515 = vmatmul.f32.gmra.mxu0 %v476
    %v516 = vpop.f32.mrf.mxu0
    %v517 = vadd.f32 0.0, %v516
    %518 = vmatmul.f32.gmra.mxu0 %v479
    %v519 = vpop.f32.mrf.mxu0
    %v520 = vadd.f32 0.0, %v519
    %521 = vmatmul.f32.gmra.mxu0 %v482
    %v522 = vpop.f32.mrf.mxu0
    %v523 = vadd.f32 0.0, %v522
    %524 = vmatmul.f32.gmra.mxu0 %v485
    %v525 = vpop.f32.mrf.mxu0
    %v526 = vadd.f32 0.0, %v525
    %527 = vmatmul.f32.gmra.mxu0 %v488
    %v528 = vpop.f32.mrf.mxu0
    %v529 = vadd.f32 0.0, %v528
    %530 = vmatmul.f32.gmra.mxu0 %v491
    %v531 = vpop.f32.mrf.mxu0
    %v532 = vadd.f32 0.0, %v531
    %533 = vmatmul.f32.gmra.mxu0 %v494
    %v534 = vpop.f32.mrf.mxu0
    %v535 = vadd.f32 0.0, %v534
    %536 = vdwg.mxu0
    %537 = vmatpush.msra.mxu0 0.0
    %538 = vmatpush.msra.mxu0 0.0
    %539 = vmatpush.msra.mxu0 0.0
    %540 = vmatpush.msra.mxu0 0.0
    %541 = vmatpush.msra.mxu0 0.0
    %542 = vmatpush.msra.mxu0 0.0
    %543 = vmatpush.msra.mxu0 0.0
    %544 = vmatpush.msra.mxu0 0.0
    %545 = vmatpush.msra.mxu0 0.0
    %546 = vmatpush.msra.mxu0 0.0
    %547 = vmatpush.msra.mxu0 0.0
    %548 = vmatpush.msra.mxu0 0.0
    %549 = vmatpush.msra.mxu0 %v463
    %550 = vmatpush.msra.mxu0 %v462
    %551 = vmatpush.msra.mxu0 %v461
    %552 = vmatpush.msra.mxu0 %v460
    %553 = vmatmul.f32.gmra.mxu0 %v482
    %v554 = vpop.f32.mrf.mxu0
    %v555 = vadd.f32 %v514, %v554
    %556 = vmatmul.f32.gmra.mxu0 %v473
    %v557 = vpop.f32.mrf.mxu0
    %v558 = vadd.f32 %v517, %v557
    %559 = vmatmul.f32.gmra.mxu0 %v476
    %v560 = vpop.f32.mrf.mxu0
    %v561 = vadd.f32 %v520, %v560
    %562 = vmatmul.f32.gmra.mxu0 %v479
    %v563 = vpop.f32.mrf.mxu0
    %v564 = vadd.f32 %v523, %v563
    %565 = vmatmul.f32.gmra.mxu0 %v494
    %v566 = vpop.f32.mrf.mxu0
    %v567 = vadd.f32 %v526, %v566
    %568 = vmatmul.f32.gmra.mxu0 %v485
    %v569 = vpop.f32.mrf.mxu0
    %v570 = vadd.f32 %v529, %v569
    %571 = vmatmul.f32.gmra.mxu0 %v488
    %v572 = vpop.f32.mrf.mxu0
    %v573 = vadd.f32 %v532, %v572
    %574 = vmatmul.f32.gmra.mxu0 %v491
    %v575 = vpop.f32.mrf.mxu0
    %v576 = vadd.f32 %v535, %v575
    %577 = vdwg.mxu0
    %578 = vmatpush.msra.mxu0 0.0
    %579 = vmatpush.msra.mxu0 0.0
    %580 = vmatpush.msra.mxu0 0.0
    %581 = vmatpush.msra.mxu0 0.0
    %582 = vmatpush.msra.mxu0 0.0
    %583 = vmatpush.msra.mxu0 0.0
    %584 = vmatpush.msra.mxu0 0.0
    %585 = vmatpush.msra.mxu0 0.0
    %586 = vmatpush.msra.mxu0 0.0
    %587 = vmatpush.msra.mxu0 0.0
    %588 = vmatpush.msra.mxu0 0.0
    %589 = vmatpush.msra.mxu0 0.0
    %590 = vmatpush.msra.mxu0 %v471
    %591 = vmatpush.msra.mxu0 %v470
    %592 = vmatpush.msra.mxu0 %v469
    %593 = vmatpush.msra.mxu0 %v468
    %594 = vmatmul.f32.gmra.mxu0 %v476
    %v595 = vpop.f32.mrf.mxu0
    %v596 = vadd.f32 0.0, %v595
    %597 = vmatmul.f32.gmra.mxu0 %v479
    %v598 = vpop.f32.mrf.mxu0
    %v599 = vadd.f32 0.0, %v598
    %600 = vmatmul.f32.gmra.mxu0 %v482
    %v601 = vpop.f32.mrf.mxu0
    %v602 = vadd.f32 0.0, %v601
    %603 = vmatmul.f32.gmra.mxu0 %v473
    %v604 = vpop.f32.mrf.mxu0
    %v605 = vadd.f32 0.0, %v604
    %606 = vmatmul.f32.gmra.mxu0 %v488
    %v607 = vpop.f32.mrf.mxu0
    %v608 = vadd.f32 0.0, %v607
    %609 = vmatmul.f32.gmra.mxu0 %v491
    %v610 = vpop.f32.mrf.mxu0
    %v611 = vadd.f32 0.0, %v610
    %612 = vmatmul.f32.gmra.mxu0 %v494
    %v613 = vpop.f32.mrf.mxu0
    %v614 = vadd.f32 0.0, %v613
    %615 = vmatmul.f32.gmra.mxu0 %v485
    %v616 = vpop.f32.mrf.mxu0
    %v617 = vadd.f32 0.0, %v616
    %618 = vdwg.mxu0
    %v619 = vadd.f32 %v555, %v596
    %v620 = vadd.f32 %v558, %v599
    %v621 = vadd.f32 %v561, %v602
    %v622 = vadd.f32 %v564, %v605
    %v623 = vadd.f32 %v567, %v608
    %v624 = vadd.f32 %v570, %v611
    %v625 = vadd.f32 %v573, %v614
    %v626 = vadd.f32 %v576, %v617
    %v635 = vrot.slane %v619, 7
    %v636 = vrot.slane %v620, 7
    %v637 = vrot.slane %v621, 7
    %v638 = vrot.slane %v622, 7
    %v639 = vrot.slane %v623, 7
    %v640 = vrot.slane %v624, 7
    %v641 = vrot.slane %v625, 7
    %v642 = vrot.slane %v626, 7
    %v651 = vsel %vm251, %v635, %v635
    %v652 = vsel %vm251, %v636, %v636
    %v653 = vsel %vm251, %v637, %v637
    %v654 = vsel %vm251, %v638, %v638
    %v655 = vsel %vm251, %v639, %v639
    %v656 = vsel %vm251, %v640, %v640
    %v657 = vsel %vm251, %v641, %v641
    %v658 = vsel %vm251, %v642, %v642
    %659 = vrot.lane.b32.xlu0 %v619, 96
    %v660 = vpop.permute.xlu0 %659
    %661 = vrot.lane.b32.xlu0 %v620, 96
    %v662 = vpop.permute.xlu0 %661
    %663 = vrot.lane.b32.xlu0 %v621, 96
    %v664 = vpop.permute.xlu0 %663
    %665 = vrot.lane.b32.xlu0 %v622, 96
    %v666 = vpop.permute.xlu0 %665
    %667 = vrot.lane.b32.xlu0 %v623, 96
    %v668 = vpop.permute.xlu0 %667
    %669 = vrot.lane.b32.xlu0 %v624, 96
    %v670 = vpop.permute.xlu0 %669
    %671 = vrot.lane.b32.xlu0 %v625, 96
    %v672 = vpop.permute.xlu0 %671
    %673 = vrot.lane.b32.xlu0 %v626, 96
    %v674 = vpop.permute.xlu0 %673
    %v683 = vadd.f32 %v651, %v660
    %v684 = vadd.f32 %v652, %v662
    %v685 = vadd.f32 %v653, %v664
    %v686 = vadd.f32 %v654, %v666
    %v687 = vadd.f32 %v655, %v668
    %v688 = vadd.f32 %v656, %v670
    %v689 = vadd.f32 %v657, %v672
    %v690 = vadd.f32 %v658, %v674
    %v691 = vrot.slane %v619, 1
    %v692 = vrot.slane %v620, 1
    %v693 = vrot.slane %v621, 1
    %v694 = vrot.slane %v622, 1
    %v695 = vrot.slane %v623, 1
    %v696 = vrot.slane %v624, 1
    %v697 = vrot.slane %v625, 1
    %v698 = vrot.slane %v626, 1
    %v707 = vsel %vm308, %v691, %v691
    %v708 = vsel %vm308, %v692, %v692
    %v709 = vsel %vm308, %v693, %v693
    %v710 = vsel %vm308, %v694, %v694
    %v711 = vsel %vm308, %v695, %v695
    %v712 = vsel %vm308, %v696, %v696
    %v713 = vsel %vm308, %v697, %v697
    %v714 = vsel %vm308, %v698, %v698
    %723 = vrot.lane.b32.xlu0 %v707, 64
    %v724 = vpop.permute.xlu0 %723
    %725 = vrot.lane.b32.xlu0 %v708, 64
    %v726 = vpop.permute.xlu0 %725
    %727 = vrot.lane.b32.xlu0 %v709, 64
    %v728 = vpop.permute.xlu0 %727
    %729 = vrot.lane.b32.xlu0 %v710, 64
    %v730 = vpop.permute.xlu0 %729
    %731 = vrot.lane.b32.xlu0 %v711, 64
    %v732 = vpop.permute.xlu0 %731
    %733 = vrot.lane.b32.xlu0 %v712, 64
    %v734 = vpop.permute.xlu0 %733
    %735 = vrot.lane.b32.xlu0 %v713, 64
    %v736 = vpop.permute.xlu0 %735
    %737 = vrot.lane.b32.xlu0 %v714, 64
    %v738 = vpop.permute.xlu0 %737
    %v747 = vadd.f32 %v683, %v724
    %v748 = vadd.f32 %v684, %v726
    %v749 = vadd.f32 %v685, %v728
    %v750 = vadd.f32 %v686, %v730
    %v751 = vadd.f32 %v687, %v732
    %v752 = vadd.f32 %v688, %v734
    %v753 = vadd.f32 %v689, %v736
    %v754 = vadd.f32 %v690, %v738
    %v755 = vld [vmem:[%s5] sm:$0x1]
    %v756 = vld [vmem:[%s6] sm:$0x1]
    %757 = vmatpush.msra.mxu0 0.0
    %758 = vmatpush.msra.mxu0 0.0
    %759 = vmatpush.msra.mxu0 0.0
    %760 = vmatpush.msra.mxu0 0.0
    %761 = vmatpush.msra.mxu0 0.0
    %762 = vmatpush.msra.mxu0 0.0
    %763 = vmatpush.msra.mxu0 0.0
    %764 = vmatpush.msra.mxu0 0.0
    %765 = vmatpush.msra.mxu0 %v754
    %766 = vmatpush.msra.mxu0 %v753
    %767 = vmatpush.msra.mxu0 %v752
    %768 = vmatpush.msra.mxu0 %v751
    %769 = vmatpush.msra.mxu0 %v750
    %770 = vmatpush.msra.mxu0 %v749
    %771 = vmatpush.msra.mxu0 %v748
    %772 = vmatpush.msra.mxu0 %v747
    %773 = vmatmul.f32.gmra.mxu0 %v361
    %v774 = vpop.f32.mrf.mxu0
    %v775 = vadd.f32 0.0, %v774
    %776 = vdwg.mxu0
    %v777 = vmul.f32 %v775, 0.015625
    %v778 = vmul.f32 %v747, %v747
    %v779 = vmul.f32 %v748, %v748
    %v780 = vmul.f32 %v749, %v749
    %v781 = vmul.f32 %v750, %v750
    %v782 = vmul.f32 %v751, %v751
    %v783 = vmul.f32 %v752, %v752
    %v784 = vmul.f32 %v753, %v753
    %v785 = vmul.f32 %v754, %v754
    %786 = vmatpush.msra.mxu0 0.0
    %787 = vmatpush.msra.mxu0 0.0
    %788 = vmatpush.msra.mxu0 0.0
    %789 = vmatpush.msra.mxu0 0.0
    %790 = vmatpush.msra.mxu0 0.0
    %791 = vmatpush.msra.mxu0 0.0
    %792 = vmatpush.msra.mxu0 0.0
    %793 = vmatpush.msra.mxu0 0.0
    %794 = vmatpush.msra.mxu0 %v785
    %795 = vmatpush.msra.mxu0 %v784
    %796 = vmatpush.msra.mxu0 %v783
    %797 = vmatpush.msra.mxu0 %v782
    %798 = vmatpush.msra.mxu0 %v781
    %799 = vmatpush.msra.mxu0 %v780
    %800 = vmatpush.msra.mxu0 %v779
    %801 = vmatpush.msra.mxu0 %v778
    %802 = vmatmul.f32.gmra.mxu0 %v361
    %v803 = vpop.f32.mrf.mxu0
    %v804 = vadd.f32 0.0, %v803
    %805 = vdwg.mxu0
    %v806 = vmul.f32 %v804, 0.015625
    %v807 = vmul.f32 %v777, %v777
    %v808 = vsub.f32 %v806, %v807
    %v809 = vmax.f32 %v808, 0.0
    %v810 = vadd.f32 %v809, 1e-05
    %v811 = vrsqrt.pop %v810
    %v812 = vmul.f32 %v811, %v810
    %v813 = vmul.f32 %v812, %v811
    %v814 = vmul.f32 0.5, %v813
    %v815 = vsub.f32 1.5, %v814
    %v816 = vmul.f32 %v811, %v815
    %vm817 = vweird.f32 %v810
    %vm818 = vweird.f32 %v811
    %vm819 = vmor %vm817, %vm818
    %v820 = vsel %vm819, %v811, %v816
    %v821 = vmul.f32 %v755, %v820
    %v823 = vperm.slane %v821, 0
    %v825 = vmul.f32 %v747, %v823
    %v826 = vmul.f32 %v748, %v823
    %v827 = vmul.f32 %v749, %v823
    %v828 = vmul.f32 %v750, %v823
    %v829 = vmul.f32 %v751, %v823
    %v830 = vmul.f32 %v752, %v823
    %v831 = vmul.f32 %v753, %v823
    %v832 = vmul.f32 %v754, %v823
    %v833 = vmul.f32 %v777, %v821
    %v834 = vsub.f32 %v756, %v833
    %v836 = vperm.slane %v834, 0
    %v838 = vadd.f32 %v825, %v836
    %v839 = vadd.f32 %v826, %v836
    %v840 = vadd.f32 %v827, %v836
    %v841 = vadd.f32 %v828, %v836
    %v842 = vadd.f32 %v829, %v836
    %v843 = vadd.f32 %v830, %v836
    %v844 = vadd.f32 %v831, %v836
    %v845 = vadd.f32 %v832, %v836
    %v846 = vadd.f32 %v452, %v838
    %v847 = vadd.f32 %v453, %v839
    %v848 = vadd.f32 %v454, %v840
    %v849 = vadd.f32 %v455, %v841
    %v850 = vadd.f32 %v456, %v842
    %v851 = vadd.f32 %v457, %v843
    %v852 = vadd.f32 %v458, %v844
    %v853 = vadd.f32 %v459, %v845
    %v854 = vmax.f32 %v846, 0.0
    %v855 = vmax.f32 %v847, 0.0
    %v856 = vmax.f32 %v848, 0.0
    %v857 = vmax.f32 %v849, 0.0
    %v858 = vmax.f32 %v850, 0.0
    %v859 = vmax.f32 %v851, 0.0
    %v860 = vmax.f32 %v852, 0.0
    %v861 = vmax.f32 %v853, 0.0
    %s862 = scalar_lea.vmem [#allocation2], 96
    %v863 = vld [vmem:[%s862] sm:$0xff]
    %v864 = vld [vmem:[%s862 + $0x8] sm:$0xff]
    %v865 = vld [vmem:[%s862 + $0x10] sm:$0xff]
    %v866 = vld [vmem:[%s862 + $0x18] sm:$0xff]
    %v867 = vld [vmem:[%s862 + $0x20] sm:$0xff]
    %v868 = vld [vmem:[%s862 + $0x28] sm:$0xff]
    %v869 = vld [vmem:[%s862 + $0x30] sm:$0xff]
    %v870 = vld [vmem:[%s862 + $0x38] sm:$0xff]
    %v871 = vld [vmem:[%s862 + $0x40] sm:$0xff]
    %v872 = vld [vmem:[%s862 + $0x48] sm:$0xff]
    %v873 = vld [vmem:[%s862 + $0x50] sm:$0xff]
    %v874 = vld [vmem:[%s862 + $0x58] sm:$0xff]
    %v876 = vsel %vm71, %v854, 0
    %v879 = vsel %vm71, %v855, 0
    %v882 = vsel %vm71, %v856, 0
    %v885 = vsel %vm71, %v857, 0
    %v888 = vsel %vm71, %v858, 0
    %v891 = vsel %vm71, %v859, 0
    %v894 = vsel %vm71, %v860, 0
    %v897 = vsel %vm71, %v861, 0
    %899 = vmatpush.msra.mxu0 0.0
    %900 = vmatpush.msra.mxu0 0.0
    %901 = vmatpush.msra.mxu0 0.0
    %902 = vmatpush.msra.mxu0 0.0
    %903 = vmatpush.msra.mxu0 0.0
    %904 = vmatpush.msra.mxu0 0.0
    %905 = vmatpush.msra.mxu0 0.0
    %906 = vmatpush.msra.mxu0 0.0
    %907 = vmatpush.msra.mxu0 0.0
    %908 = vmatpush.msra.mxu0 0.0
    %909 = vmatpush.msra.mxu0 0.0
    %910 = vmatpush.msra.mxu0 0.0
    %911 = vmatpush.msra.mxu0 %v870
    %912 = vmatpush.msra.mxu0 %v869
    %913 = vmatpush.msra.mxu0 %v868
    %914 = vmatpush.msra.mxu0 %v867
    %915 = vmatmul.f32.gmra.mxu0 %v876
    %v916 = vpop.f32.mrf.mxu0
    %v917 = vadd.f32 0.0, %v916
    %918 = vmatmul.f32.gmra.mxu0 %v879
    %v919 = vpop.f32.mrf.mxu0
    %v920 = vadd.f32 0.0, %v919
    %921 = vmatmul.f32.gmra.mxu0 %v882
    %v922 = vpop.f32.mrf.mxu0
    %v923 = vadd.f32 0.0, %v922
    %924 = vmatmul.f32.gmra.mxu0 %v885
    %v925 = vpop.f32.mrf.mxu0
    %v926 = vadd.f32 0.0, %v925
    %927 = vmatmul.f32.gmra.mxu0 %v888
    %v928 = vpop.f32.mrf.mxu0
    %v929 = vadd.f32 0.0, %v928
    %930 = vmatmul.f32.gmra.mxu0 %v891
    %v931 = vpop.f32.mrf.mxu0
    %v932 = vadd.f32 0.0, %v931
    %933 = vmatmul.f32.gmra.mxu0 %v894
    %v934 = vpop.f32.mrf.mxu0
    %v935 = vadd.f32 0.0, %v934
    %936 = vmatmul.f32.gmra.mxu0 %v897
    %v937 = vpop.f32.mrf.mxu0
    %v938 = vadd.f32 0.0, %v937
    %939 = vdwg.mxu0
    %940 = vmatpush.msra.mxu0 0.0
    %941 = vmatpush.msra.mxu0 0.0
    %942 = vmatpush.msra.mxu0 0.0
    %943 = vmatpush.msra.mxu0 0.0
    %944 = vmatpush.msra.mxu0 0.0
    %945 = vmatpush.msra.mxu0 0.0
    %946 = vmatpush.msra.mxu0 0.0
    %947 = vmatpush.msra.mxu0 0.0
    %948 = vmatpush.msra.mxu0 0.0
    %949 = vmatpush.msra.mxu0 0.0
    %950 = vmatpush.msra.mxu0 0.0
    %951 = vmatpush.msra.mxu0 0.0
    %952 = vmatpush.msra.mxu0 %v866
    %953 = vmatpush.msra.mxu0 %v865
    %954 = vmatpush.msra.mxu0 %v864
    %955 = vmatpush.msra.mxu0 %v863
    %956 = vmatmul.f32.gmra.mxu0 %v885
    %v957 = vpop.f32.mrf.mxu0
    %v958 = vadd.f32 %v917, %v957
    %959 = vmatmul.f32.gmra.mxu0 %v876
    %v960 = vpop.f32.mrf.mxu0
    %v961 = vadd.f32 %v920, %v960
    %962 = vmatmul.f32.gmra.mxu0 %v879
    %v963 = vpop.f32.mrf.mxu0
    %v964 = vadd.f32 %v923, %v963
    %965 = vmatmul.f32.gmra.mxu0 %v882
    %v966 = vpop.f32.mrf.mxu0
    %v967 = vadd.f32 %v926, %v966
    %968 = vmatmul.f32.gmra.mxu0 %v897
    %v969 = vpop.f32.mrf.mxu0
    %v970 = vadd.f32 %v929, %v969
    %971 = vmatmul.f32.gmra.mxu0 %v888
    %v972 = vpop.f32.mrf.mxu0
    %v973 = vadd.f32 %v932, %v972
    %974 = vmatmul.f32.gmra.mxu0 %v891
    %v975 = vpop.f32.mrf.mxu0
    %v976 = vadd.f32 %v935, %v975
    %977 = vmatmul.f32.gmra.mxu0 %v894
    %v978 = vpop.f32.mrf.mxu0
    %v979 = vadd.f32 %v938, %v978
    %980 = vdwg.mxu0
    %981 = vmatpush.msra.mxu0 0.0
    %982 = vmatpush.msra.mxu0 0.0
    %983 = vmatpush.msra.mxu0 0.0
    %984 = vmatpush.msra.mxu0 0.0
    %985 = vmatpush.msra.mxu0 0.0
    %986 = vmatpush.msra.mxu0 0.0
    %987 = vmatpush.msra.mxu0 0.0
    %988 = vmatpush.msra.mxu0 0.0
    %989 = vmatpush.msra.mxu0 0.0
    %990 = vmatpush.msra.mxu0 0.0
    %991 = vmatpush.msra.mxu0 0.0
    %992 = vmatpush.msra.mxu0 0.0
    %993 = vmatpush.msra.mxu0 %v874
    %994 = vmatpush.msra.mxu0 %v873
    %995 = vmatpush.msra.mxu0 %v872
    %996 = vmatpush.msra.mxu0 %v871
    %997 = vmatmul.f32.gmra.mxu0 %v879
    %v998 = vpop.f32.mrf.mxu0
    %v999 = vadd.f32 0.0, %v998
    %1000 = vmatmul.f32.gmra.mxu0 %v882
    %v1001 = vpop.f32.mrf.mxu0
    %v1002 = vadd.f32 0.0, %v1001
    %1003 = vmatmul.f32.gmra.mxu0 %v885
    %v1004 = vpop.f32.mrf.mxu0
    %v1005 = vadd.f32 0.0, %v1004
    %1006 = vmatmul.f32.gmra.mxu0 %v876
    %v1007 = vpop.f32.mrf.mxu0
    %v1008 = vadd.f32 0.0, %v1007
    %1009 = vmatmul.f32.gmra.mxu0 %v891
    %v1010 = vpop.f32.mrf.mxu0
    %v1011 = vadd.f32 0.0, %v1010
    %1012 = vmatmul.f32.gmra.mxu0 %v894
    %v1013 = vpop.f32.mrf.mxu0
    %v1014 = vadd.f32 0.0, %v1013
    %1015 = vmatmul.f32.gmra.mxu0 %v897
    %v1016 = vpop.f32.mrf.mxu0
    %v1017 = vadd.f32 0.0, %v1016
    %1018 = vmatmul.f32.gmra.mxu0 %v888
    %v1019 = vpop.f32.mrf.mxu0
    %v1020 = vadd.f32 0.0, %v1019
    %1021 = vdwg.mxu0
    %v1022 = vadd.f32 %v958, %v999
    %v1023 = vadd.f32 %v961, %v1002
    %v1024 = vadd.f32 %v964, %v1005
    %v1025 = vadd.f32 %v967, %v1008
    %v1026 = vadd.f32 %v970, %v1011
    %v1027 = vadd.f32 %v973, %v1014
    %v1028 = vadd.f32 %v976, %v1017
    %v1029 = vadd.f32 %v979, %v1020
    %v1038 = vrot.slane %v1022, 7
    %v1039 = vrot.slane %v1023, 7
    %v1040 = vrot.slane %v1024, 7
    %v1041 = vrot.slane %v1025, 7
    %v1042 = vrot.slane %v1026, 7
    %v1043 = vrot.slane %v1027, 7
    %v1044 = vrot.slane %v1028, 7
    %v1045 = vrot.slane %v1029, 7
    %v1054 = vsel %vm251, %v1038, %v1038
    %v1055 = vsel %vm251, %v1039, %v1039
    %v1056 = vsel %vm251, %v1040, %v1040
    %v1057 = vsel %vm251, %v1041, %v1041
    %v1058 = vsel %vm251, %v1042, %v1042
    %v1059 = vsel %vm251, %v1043, %v1043
    %v1060 = vsel %vm251, %v1044, %v1044
    %v1061 = vsel %vm251, %v1045, %v1045
    %1062 = vrot.lane.b32.xlu0 %v1022, 96
    %v1063 = vpop.permute.xlu0 %1062
    %1064 = vrot.lane.b32.xlu0 %v1023, 96
    %v1065 = vpop.permute.xlu0 %1064
    %1066 = vrot.lane.b32.xlu0 %v1024, 96
    %v1067 = vpop.permute.xlu0 %1066
    %1068 = vrot.lane.b32.xlu0 %v1025, 96
    %v1069 = vpop.permute.xlu0 %1068
    %1070 = vrot.lane.b32.xlu0 %v1026, 96
    %v1071 = vpop.permute.xlu0 %1070
    %1072 = vrot.lane.b32.xlu0 %v1027, 96
    %v1073 = vpop.permute.xlu0 %1072
    %1074 = vrot.lane.b32.xlu0 %v1028, 96
    %v1075 = vpop.permute.xlu0 %1074
    %1076 = vrot.lane.b32.xlu0 %v1029, 96
    %v1077 = vpop.permute.xlu0 %1076
    %v1086 = vadd.f32 %v1054, %v1063
    %v1087 = vadd.f32 %v1055, %v1065
    %v1088 = vadd.f32 %v1056, %v1067
    %v1089 = vadd.f32 %v1057, %v1069
    %v1090 = vadd.f32 %v1058, %v1071
    %v1091 = vadd.f32 %v1059, %v1073
    %v1092 = vadd.f32 %v1060, %v1075
    %v1093 = vadd.f32 %v1061, %v1077
    %v1094 = vrot.slane %v1022, 1
    %v1095 = vrot.slane %v1023, 1
    %v1096 = vrot.slane %v1024, 1
    %v1097 = vrot.slane %v1025, 1
    %v1098 = vrot.slane %v1026, 1
    %v1099 = vrot.slane %v1027, 1
    %v1100 = vrot.slane %v1028, 1
    %v1101 = vrot.slane %v1029, 1
    %v1110 = vsel %vm308, %v1094, %v1094
    %v1111 = vsel %vm308, %v1095, %v1095
    %v1112 = vsel %vm308, %v1096, %v1096
    %v1113 = vsel %vm308, %v1097, %v1097
    %v1114 = vsel %vm308, %v1098, %v1098
    %v1115 = vsel %vm308, %v1099, %v1099
    %v1116 = vsel %vm308, %v1100, %v1100
    %v1117 = vsel %vm308, %v1101, %v1101
    %1126 = vrot.lane.b32.xlu0 %v1110, 64
    %v1127 = vpop.permute.xlu0 %1126
    %1128 = vrot.lane.b32.xlu0 %v1111, 64
    %v1129 = vpop.permute.xlu0 %1128
    %1130 = vrot.lane.b32.xlu0 %v1112, 64
    %v1131 = vpop.permute.xlu0 %1130
    %1132 = vrot.lane.b32.xlu0 %v1113, 64
    %v1133 = vpop.permute.xlu0 %1132
    %1134 = vrot.lane.b32.xlu0 %v1114, 64
    %v1135 = vpop.permute.xlu0 %1134
    %1136 = vrot.lane.b32.xlu0 %v1115, 64
    %v1137 = vpop.permute.xlu0 %1136
    %1138 = vrot.lane.b32.xlu0 %v1116, 64
    %v1139 = vpop.permute.xlu0 %1138
    %1140 = vrot.lane.b32.xlu0 %v1117, 64
    %v1141 = vpop.permute.xlu0 %1140
    %v1150 = vadd.f32 %v1086, %v1127
    %v1151 = vadd.f32 %v1087, %v1129
    %v1152 = vadd.f32 %v1088, %v1131
    %v1153 = vadd.f32 %v1089, %v1133
    %v1154 = vadd.f32 %v1090, %v1135
    %v1155 = vadd.f32 %v1091, %v1137
    %v1156 = vadd.f32 %v1092, %v1139
    %v1157 = vadd.f32 %v1093, %v1141
    %s1158 = scalar_lea.vmem %s5, 1
    %v1159 = vld [vmem:[%s1158] sm:$0x1]
    %s1160 = scalar_lea.vmem %s6, 1
    %v1161 = vld [vmem:[%s1160] sm:$0x1]
    %1162 = vmatpush.msra.mxu0 0.0
    %1163 = vmatpush.msra.mxu0 0.0
    %1164 = vmatpush.msra.mxu0 0.0
    %1165 = vmatpush.msra.mxu0 0.0
    %1166 = vmatpush.msra.mxu0 0.0
    %1167 = vmatpush.msra.mxu0 0.0
    %1168 = vmatpush.msra.mxu0 0.0
    %1169 = vmatpush.msra.mxu0 0.0
    %1170 = vmatpush.msra.mxu0 %v1157
    %1171 = vmatpush.msra.mxu0 %v1156
    %1172 = vmatpush.msra.mxu0 %v1155
    %1173 = vmatpush.msra.mxu0 %v1154
    %1174 = vmatpush.msra.mxu0 %v1153
    %1175 = vmatpush.msra.mxu0 %v1152
    %1176 = vmatpush.msra.mxu0 %v1151
    %1177 = vmatpush.msra.mxu0 %v1150
    %1178 = vmatmul.f32.gmra.mxu0 %v361
    %v1179 = vpop.f32.mrf.mxu0
    %v1180 = vadd.f32 0.0, %v1179
    %1181 = vdwg.mxu0
    %v1182 = vmul.f32 %v1180, 0.015625
    %v1183 = vmul.f32 %v1150, %v1150
    %v1184 = vmul.f32 %v1151, %v1151
    %v1185 = vmul.f32 %v1152, %v1152
    %v1186 = vmul.f32 %v1153, %v1153
    %v1187 = vmul.f32 %v1154, %v1154
    %v1188 = vmul.f32 %v1155, %v1155
    %v1189 = vmul.f32 %v1156, %v1156
    %v1190 = vmul.f32 %v1157, %v1157
    %1191 = vmatpush.msra.mxu0 0.0
    %1192 = vmatpush.msra.mxu0 0.0
    %1193 = vmatpush.msra.mxu0 0.0
    %1194 = vmatpush.msra.mxu0 0.0
    %1195 = vmatpush.msra.mxu0 0.0
    %1196 = vmatpush.msra.mxu0 0.0
    %1197 = vmatpush.msra.mxu0 0.0
    %1198 = vmatpush.msra.mxu0 0.0
    %1199 = vmatpush.msra.mxu0 %v1190
    %1200 = vmatpush.msra.mxu0 %v1189
    %1201 = vmatpush.msra.mxu0 %v1188
    %1202 = vmatpush.msra.mxu0 %v1187
    %1203 = vmatpush.msra.mxu0 %v1186
    %1204 = vmatpush.msra.mxu0 %v1185
    %1205 = vmatpush.msra.mxu0 %v1184
    %1206 = vmatpush.msra.mxu0 %v1183
    %1207 = vmatmul.f32.gmra.mxu0 %v361
    %v1208 = vpop.f32.mrf.mxu0
    %v1209 = vadd.f32 0.0, %v1208
    %1210 = vdwg.mxu0
    %v1211 = vmul.f32 %v1209, 0.015625
    %v1212 = vmul.f32 %v1182, %v1182
    %v1213 = vsub.f32 %v1211, %v1212
    %v1214 = vmax.f32 %v1213, 0.0
    %v1215 = vadd.f32 %v1214, 1e-05
    %v1216 = vrsqrt.pop %v1215
    %v1217 = vmul.f32 %v1216, %v1215
    %v1218 = vmul.f32 %v1217, %v1216
    %v1219 = vmul.f32 0.5, %v1218
    %v1220 = vsub.f32 1.5, %v1219
    %v1221 = vmul.f32 %v1216, %v1220
    %vm1222 = vweird.f32 %v1215
    %vm1223 = vweird.f32 %v1216
    %vm1224 = vmor %vm1222, %vm1223
    %v1225 = vsel %vm1224, %v1216, %v1221
    %v1226 = vmul.f32 %v1159, %v1225
    %v1228 = vperm.slane %v1226, 0
    %v1230 = vmul.f32 %v1150, %v1228
    %v1231 = vmul.f32 %v1151, %v1228
    %v1232 = vmul.f32 %v1152, %v1228
    %v1233 = vmul.f32 %v1153, %v1228
    %v1234 = vmul.f32 %v1154, %v1228
    %v1235 = vmul.f32 %v1155, %v1228
    %v1236 = vmul.f32 %v1156, %v1228
    %v1237 = vmul.f32 %v1157, %v1228
    %v1238 = vmul.f32 %v1182, %v1226
    %v1239 = vsub.f32 %v1161, %v1238
    %v1241 = vperm.slane %v1239, 0
    %v1243 = vadd.f32 %v1230, %v1241
    %v1244 = vadd.f32 %v1231, %v1241
    %v1245 = vadd.f32 %v1232, %v1241
    %v1246 = vadd.f32 %v1233, %v1241
    %v1247 = vadd.f32 %v1234, %v1241
    %v1248 = vadd.f32 %v1235, %v1241
    %v1249 = vadd.f32 %v1236, %v1241
    %v1250 = vadd.f32 %v1237, %v1241
    %v1251 = vadd.f32 %v854, %v1243
    %v1252 = vadd.f32 %v855, %v1244
    %v1253 = vadd.f32 %v856, %v1245
    %v1254 = vadd.f32 %v857, %v1246
    %v1255 = vadd.f32 %v858, %v1247
    %v1256 = vadd.f32 %v859, %v1248
    %v1257 = vadd.f32 %v860, %v1249
    %v1258 = vadd.f32 %v861, %v1250
    %v1259 = vmax.f32 %v1251, 0.0
    %v1260 = vmax.f32 %v1252, 0.0
    %v1261 = vmax.f32 %v1253, 0.0
    %v1262 = vmax.f32 %v1254, 0.0
    %v1263 = vmax.f32 %v1255, 0.0
    %v1264 = vmax.f32 %v1256, 0.0
    %v1265 = vmax.f32 %v1257, 0.0
    %v1266 = vmax.f32 %v1258, 0.0
    %s1267 = scalar_lea.vmem [#allocation2], 192
    %v1268 = vld [vmem:[%s1267] sm:$0xff]
    %v1269 = vld [vmem:[%s1267 + $0x8] sm:$0xff]
    %v1270 = vld [vmem:[%s1267 + $0x10] sm:$0xff]
    %v1271 = vld [vmem:[%s1267 + $0x18] sm:$0xff]
    %v1272 = vld [vmem:[%s1267 + $0x20] sm:$0xff]
    %v1273 = vld [vmem:[%s1267 + $0x28] sm:$0xff]
    %v1274 = vld [vmem:[%s1267 + $0x30] sm:$0xff]
    %v1275 = vld [vmem:[%s1267 + $0x38] sm:$0xff]
    %v1276 = vld [vmem:[%s1267 + $0x40] sm:$0xff]
    %v1277 = vld [vmem:[%s1267 + $0x48] sm:$0xff]
    %v1278 = vld [vmem:[%s1267 + $0x50] sm:$0xff]
    %v1279 = vld [vmem:[%s1267 + $0x58] sm:$0xff]
    %v1281 = vsel %vm71, %v1259, 0
    %v1284 = vsel %vm71, %v1260, 0
    %v1287 = vsel %vm71, %v1261, 0
    %v1290 = vsel %vm71, %v1262, 0
    %v1293 = vsel %vm71, %v1263, 0
    %v1296 = vsel %vm71, %v1264, 0
    %v1299 = vsel %vm71, %v1265, 0
    %v1302 = vsel %vm71, %v1266, 0
    %1304 = vmatpush.msra.mxu0 0.0
    %1305 = vmatpush.msra.mxu0 0.0
    %1306 = vmatpush.msra.mxu0 0.0
    %1307 = vmatpush.msra.mxu0 0.0
    %1308 = vmatpush.msra.mxu0 0.0
    %1309 = vmatpush.msra.mxu0 0.0
    %1310 = vmatpush.msra.mxu0 0.0
    %1311 = vmatpush.msra.mxu0 0.0
    %1312 = vmatpush.msra.mxu0 0.0
    %1313 = vmatpush.msra.mxu0 0.0
    %1314 = vmatpush.msra.mxu0 0.0
    %1315 = vmatpush.msra.mxu0 0.0
    %1316 = vmatpush.msra.mxu0 %v1275
    %1317 = vmatpush.msra.mxu0 %v1274
    %1318 = vmatpush.msra.mxu0 %v1273
    %1319 = vmatpush.msra.mxu0 %v1272
    %1320 = vmatmul.f32.gmra.mxu0 %v1281
    %v1321 = vpop.f32.mrf.mxu0
    %v1322 = vadd.f32 0.0, %v1321
    %1323 = vmatmul.f32.gmra.mxu0 %v1284
    %v1324 = vpop.f32.mrf.mxu0
    %v1325 = vadd.f32 0.0, %v1324
    %1326 = vmatmul.f32.gmra.mxu0 %v1287
    %v1327 = vpop.f32.mrf.mxu0
    %v1328 = vadd.f32 0.0, %v1327
    %1329 = vmatmul.f32.gmra.mxu0 %v1290
    %v1330 = vpop.f32.mrf.mxu0
    %v1331 = vadd.f32 0.0, %v1330
    %1332 = vmatmul.f32.gmra.mxu0 %v1293
    %v1333 = vpop.f32.mrf.mxu0
    %v1334 = vadd.f32 0.0, %v1333
    %1335 = vmatmul.f32.gmra.mxu0 %v1296
    %v1336 = vpop.f32.mrf.mxu0
    %v1337 = vadd.f32 0.0, %v1336
    %1338 = vmatmul.f32.gmra.mxu0 %v1299
    %v1339 = vpop.f32.mrf.mxu0
    %v1340 = vadd.f32 0.0, %v1339
    %1341 = vmatmul.f32.gmra.mxu0 %v1302
    %v1342 = vpop.f32.mrf.mxu0
    %v1343 = vadd.f32 0.0, %v1342
    %1344 = vdwg.mxu0
    %1345 = vmatpush.msra.mxu0 0.0
    %1346 = vmatpush.msra.mxu0 0.0
    %1347 = vmatpush.msra.mxu0 0.0
    %1348 = vmatpush.msra.mxu0 0.0
    %1349 = vmatpush.msra.mxu0 0.0
    %1350 = vmatpush.msra.mxu0 0.0
    %1351 = vmatpush.msra.mxu0 0.0
    %1352 = vmatpush.msra.mxu0 0.0
    %1353 = vmatpush.msra.mxu0 0.0
    %1354 = vmatpush.msra.mxu0 0.0
    %1355 = vmatpush.msra.mxu0 0.0
    %1356 = vmatpush.msra.mxu0 0.0
    %1357 = vmatpush.msra.mxu0 %v1271
    %1358 = vmatpush.msra.mxu0 %v1270
    %1359 = vmatpush.msra.mxu0 %v1269
    %1360 = vmatpush.msra.mxu0 %v1268
    %1361 = vmatmul.f32.gmra.mxu0 %v1290
    %v1362 = vpop.f32.mrf.mxu0
    %v1363 = vadd.f32 %v1322, %v1362
    %1364 = vmatmul.f32.gmra.mxu0 %v1281
    %v1365 = vpop.f32.mrf.mxu0
    %v1366 = vadd.f32 %v1325, %v1365
    %1367 = vmatmul.f32.gmra.mxu0 %v1284
    %v1368 = vpop.f32.mrf.mxu0
    %v1369 = vadd.f32 %v1328, %v1368
    %1370 = vmatmul.f32.gmra.mxu0 %v1287
    %v1371 = vpop.f32.mrf.mxu0
    %v1372 = vadd.f32 %v1331, %v1371
    %1373 = vmatmul.f32.gmra.mxu0 %v1302
    %v1374 = vpop.f32.mrf.mxu0
    %v1375 = vadd.f32 %v1334, %v1374
    %1376 = vmatmul.f32.gmra.mxu0 %v1293
    %v1377 = vpop.f32.mrf.mxu0
    %v1378 = vadd.f32 %v1337, %v1377
    %1379 = vmatmul.f32.gmra.mxu0 %v1296
    %v1380 = vpop.f32.mrf.mxu0
    %v1381 = vadd.f32 %v1340, %v1380
    %1382 = vmatmul.f32.gmra.mxu0 %v1299
    %v1383 = vpop.f32.mrf.mxu0
    %v1384 = vadd.f32 %v1343, %v1383
    %1385 = vdwg.mxu0
    %1386 = vmatpush.msra.mxu0 0.0
    %1387 = vmatpush.msra.mxu0 0.0
    %1388 = vmatpush.msra.mxu0 0.0
    %1389 = vmatpush.msra.mxu0 0.0
    %1390 = vmatpush.msra.mxu0 0.0
    %1391 = vmatpush.msra.mxu0 0.0
    %1392 = vmatpush.msra.mxu0 0.0
    %1393 = vmatpush.msra.mxu0 0.0
    %1394 = vmatpush.msra.mxu0 0.0
    %1395 = vmatpush.msra.mxu0 0.0
    %1396 = vmatpush.msra.mxu0 0.0
    %1397 = vmatpush.msra.mxu0 0.0
    %1398 = vmatpush.msra.mxu0 %v1279
    %1399 = vmatpush.msra.mxu0 %v1278
    %1400 = vmatpush.msra.mxu0 %v1277
    %1401 = vmatpush.msra.mxu0 %v1276
    %1402 = vmatmul.f32.gmra.mxu0 %v1284
    %v1403 = vpop.f32.mrf.mxu0
    %v1404 = vadd.f32 0.0, %v1403
    %1405 = vmatmul.f32.gmra.mxu0 %v1287
    %v1406 = vpop.f32.mrf.mxu0
    %v1407 = vadd.f32 0.0, %v1406
    %1408 = vmatmul.f32.gmra.mxu0 %v1290
    %v1409 = vpop.f32.mrf.mxu0
    %v1410 = vadd.f32 0.0, %v1409
    %1411 = vmatmul.f32.gmra.mxu0 %v1281
    %v1412 = vpop.f32.mrf.mxu0
    %v1413 = vadd.f32 0.0, %v1412
    %1414 = vmatmul.f32.gmra.mxu0 %v1296
    %v1415 = vpop.f32.mrf.mxu0
    %v1416 = vadd.f32 0.0, %v1415
    %1417 = vmatmul.f32.gmra.mxu0 %v1299
    %v1418 = vpop.f32.mrf.mxu0
    %v1419 = vadd.f32 0.0, %v1418
    %1420 = vmatmul.f32.gmra.mxu0 %v1302
    %v1421 = vpop.f32.mrf.mxu0
    %v1422 = vadd.f32 0.0, %v1421
    %1423 = vmatmul.f32.gmra.mxu0 %v1293
    %v1424 = vpop.f32.mrf.mxu0
    %v1425 = vadd.f32 0.0, %v1424
    %1426 = vdwg.mxu0
    %v1427 = vadd.f32 %v1363, %v1404
    %v1428 = vadd.f32 %v1366, %v1407
    %v1429 = vadd.f32 %v1369, %v1410
    %v1430 = vadd.f32 %v1372, %v1413
    %v1431 = vadd.f32 %v1375, %v1416
    %v1432 = vadd.f32 %v1378, %v1419
    %v1433 = vadd.f32 %v1381, %v1422
    %v1434 = vadd.f32 %v1384, %v1425
    %v1443 = vrot.slane %v1427, 7
    %v1444 = vrot.slane %v1428, 7
    %v1445 = vrot.slane %v1429, 7
    %v1446 = vrot.slane %v1430, 7
    %v1447 = vrot.slane %v1431, 7
    %v1448 = vrot.slane %v1432, 7
    %v1449 = vrot.slane %v1433, 7
    %v1450 = vrot.slane %v1434, 7
    %v1459 = vsel %vm251, %v1443, %v1443
    %v1460 = vsel %vm251, %v1444, %v1444
    %v1461 = vsel %vm251, %v1445, %v1445
    %v1462 = vsel %vm251, %v1446, %v1446
    %v1463 = vsel %vm251, %v1447, %v1447
    %v1464 = vsel %vm251, %v1448, %v1448
    %v1465 = vsel %vm251, %v1449, %v1449
    %v1466 = vsel %vm251, %v1450, %v1450
    %1467 = vrot.lane.b32.xlu0 %v1427, 96
    %v1468 = vpop.permute.xlu0 %1467
    %1469 = vrot.lane.b32.xlu0 %v1428, 96
    %v1470 = vpop.permute.xlu0 %1469
    %1471 = vrot.lane.b32.xlu0 %v1429, 96
    %v1472 = vpop.permute.xlu0 %1471
    %1473 = vrot.lane.b32.xlu0 %v1430, 96
    %v1474 = vpop.permute.xlu0 %1473
    %1475 = vrot.lane.b32.xlu0 %v1431, 96
    %v1476 = vpop.permute.xlu0 %1475
    %1477 = vrot.lane.b32.xlu0 %v1432, 96
    %v1478 = vpop.permute.xlu0 %1477
    %1479 = vrot.lane.b32.xlu0 %v1433, 96
    %v1480 = vpop.permute.xlu0 %1479
    %1481 = vrot.lane.b32.xlu0 %v1434, 96
    %v1482 = vpop.permute.xlu0 %1481
    %v1491 = vadd.f32 %v1459, %v1468
    %v1492 = vadd.f32 %v1460, %v1470
    %v1493 = vadd.f32 %v1461, %v1472
    %v1494 = vadd.f32 %v1462, %v1474
    %v1495 = vadd.f32 %v1463, %v1476
    %v1496 = vadd.f32 %v1464, %v1478
    %v1497 = vadd.f32 %v1465, %v1480
    %v1498 = vadd.f32 %v1466, %v1482
    %v1499 = vrot.slane %v1427, 1
    %v1500 = vrot.slane %v1428, 1
    %v1501 = vrot.slane %v1429, 1
    %v1502 = vrot.slane %v1430, 1
    %v1503 = vrot.slane %v1431, 1
    %v1504 = vrot.slane %v1432, 1
    %v1505 = vrot.slane %v1433, 1
    %v1506 = vrot.slane %v1434, 1
    %v1515 = vsel %vm308, %v1499, %v1499
    %v1516 = vsel %vm308, %v1500, %v1500
    %v1517 = vsel %vm308, %v1501, %v1501
    %v1518 = vsel %vm308, %v1502, %v1502
    %v1519 = vsel %vm308, %v1503, %v1503
    %v1520 = vsel %vm308, %v1504, %v1504
    %v1521 = vsel %vm308, %v1505, %v1505
    %v1522 = vsel %vm308, %v1506, %v1506
    %1531 = vrot.lane.b32.xlu0 %v1515, 64
    %v1532 = vpop.permute.xlu0 %1531
    %1533 = vrot.lane.b32.xlu0 %v1516, 64
    %v1534 = vpop.permute.xlu0 %1533
    %1535 = vrot.lane.b32.xlu0 %v1517, 64
    %v1536 = vpop.permute.xlu0 %1535
    %1537 = vrot.lane.b32.xlu0 %v1518, 64
    %v1538 = vpop.permute.xlu0 %1537
    %1539 = vrot.lane.b32.xlu0 %v1519, 64
    %v1540 = vpop.permute.xlu0 %1539
    %1541 = vrot.lane.b32.xlu0 %v1520, 64
    %v1542 = vpop.permute.xlu0 %1541
    %1543 = vrot.lane.b32.xlu0 %v1521, 64
    %v1544 = vpop.permute.xlu0 %1543
    %1545 = vrot.lane.b32.xlu0 %v1522, 64
    %v1546 = vpop.permute.xlu0 %1545
    %v1555 = vadd.f32 %v1491, %v1532
    %v1556 = vadd.f32 %v1492, %v1534
    %v1557 = vadd.f32 %v1493, %v1536
    %v1558 = vadd.f32 %v1494, %v1538
    %v1559 = vadd.f32 %v1495, %v1540
    %v1560 = vadd.f32 %v1496, %v1542
    %v1561 = vadd.f32 %v1497, %v1544
    %v1562 = vadd.f32 %v1498, %v1546
    %s1563 = scalar_lea.vmem %s5, 2
    %v1564 = vld [vmem:[%s1563] sm:$0x1]
    %s1565 = scalar_lea.vmem %s6, 2
    %v1566 = vld [vmem:[%s1565] sm:$0x1]
    %1567 = vmatpush.msra.mxu0 0.0
    %1568 = vmatpush.msra.mxu0 0.0
    %1569 = vmatpush.msra.mxu0 0.0
    %1570 = vmatpush.msra.mxu0 0.0
    %1571 = vmatpush.msra.mxu0 0.0
    %1572 = vmatpush.msra.mxu0 0.0
    %1573 = vmatpush.msra.mxu0 0.0
    %1574 = vmatpush.msra.mxu0 0.0
    %1575 = vmatpush.msra.mxu0 %v1562
    %1576 = vmatpush.msra.mxu0 %v1561
    %1577 = vmatpush.msra.mxu0 %v1560
    %1578 = vmatpush.msra.mxu0 %v1559
    %1579 = vmatpush.msra.mxu0 %v1558
    %1580 = vmatpush.msra.mxu0 %v1557
    %1581 = vmatpush.msra.mxu0 %v1556
    %1582 = vmatpush.msra.mxu0 %v1555
    %1583 = vmatmul.f32.gmra.mxu0 %v361
    %v1584 = vpop.f32.mrf.mxu0
    %v1585 = vadd.f32 0.0, %v1584
    %1586 = vdwg.mxu0
    %v1587 = vmul.f32 %v1585, 0.015625
    %v1588 = vmul.f32 %v1555, %v1555
    %v1589 = vmul.f32 %v1556, %v1556
    %v1590 = vmul.f32 %v1557, %v1557
    %v1591 = vmul.f32 %v1558, %v1558
    %v1592 = vmul.f32 %v1559, %v1559
    %v1593 = vmul.f32 %v1560, %v1560
    %v1594 = vmul.f32 %v1561, %v1561
    %v1595 = vmul.f32 %v1562, %v1562
    %1596 = vmatpush.msra.mxu0 0.0
    %1597 = vmatpush.msra.mxu0 0.0
    %1598 = vmatpush.msra.mxu0 0.0
    %1599 = vmatpush.msra.mxu0 0.0
    %1600 = vmatpush.msra.mxu0 0.0
    %1601 = vmatpush.msra.mxu0 0.0
    %1602 = vmatpush.msra.mxu0 0.0
    %1603 = vmatpush.msra.mxu0 0.0
    %1604 = vmatpush.msra.mxu0 %v1595
    %1605 = vmatpush.msra.mxu0 %v1594
    %1606 = vmatpush.msra.mxu0 %v1593
    %1607 = vmatpush.msra.mxu0 %v1592
    %1608 = vmatpush.msra.mxu0 %v1591
    %1609 = vmatpush.msra.mxu0 %v1590
    %1610 = vmatpush.msra.mxu0 %v1589
    %1611 = vmatpush.msra.mxu0 %v1588
    %1612 = vmatmul.f32.gmra.mxu0 %v361
    %v1613 = vpop.f32.mrf.mxu0
    %v1614 = vadd.f32 0.0, %v1613
    %1615 = vdwg.mxu0
    %v1616 = vmul.f32 %v1614, 0.015625
    %v1617 = vmul.f32 %v1587, %v1587
    %v1618 = vsub.f32 %v1616, %v1617
    %v1619 = vmax.f32 %v1618, 0.0
    %v1620 = vadd.f32 %v1619, 1e-05
    %v1621 = vrsqrt.pop %v1620
    %v1622 = vmul.f32 %v1621, %v1620
    %v1623 = vmul.f32 %v1622, %v1621
    %v1624 = vmul.f32 0.5, %v1623
    %v1625 = vsub.f32 1.5, %v1624
    %v1626 = vmul.f32 %v1621, %v1625
    %vm1627 = vweird.f32 %v1620
    %vm1628 = vweird.f32 %v1621
    %vm1629 = vmor %vm1627, %vm1628
    %v1630 = vsel %vm1629, %v1621, %v1626
    %v1631 = vmul.f32 %v1564, %v1630
    %v1633 = vperm.slane %v1631, 0
    %v1635 = vmul.f32 %v1555, %v1633
    %v1636 = vmul.f32 %v1556, %v1633
    %v1637 = vmul.f32 %v1557, %v1633
    %v1638 = vmul.f32 %v1558, %v1633
    %v1639 = vmul.f32 %v1559, %v1633
    %v1640 = vmul.f32 %v1560, %v1633
    %v1641 = vmul.f32 %v1561, %v1633
    %v1642 = vmul.f32 %v1562, %v1633
    %v1643 = vmul.f32 %v1587, %v1631
    %v1644 = vsub.f32 %v1566, %v1643
    %v1646 = vperm.slane %v1644, 0
    %v1648 = vadd.f32 %v1635, %v1646
    %v1649 = vadd.f32 %v1636, %v1646
    %v1650 = vadd.f32 %v1637, %v1646
    %v1651 = vadd.f32 %v1638, %v1646
    %v1652 = vadd.f32 %v1639, %v1646
    %v1653 = vadd.f32 %v1640, %v1646
    %v1654 = vadd.f32 %v1641, %v1646
    %v1655 = vadd.f32 %v1642, %v1646
    %v1656 = vadd.f32 %v1259, %v1648
    %v1657 = vadd.f32 %v1260, %v1649
    %v1658 = vadd.f32 %v1261, %v1650
    %v1659 = vadd.f32 %v1262, %v1651
    %v1660 = vadd.f32 %v1263, %v1652
    %v1661 = vadd.f32 %v1264, %v1653
    %v1662 = vadd.f32 %v1265, %v1654
    %v1663 = vadd.f32 %v1266, %v1655
    %v1664 = vmax.f32 %v1656, 0.0
    %v1665 = vmax.f32 %v1657, 0.0
    %v1666 = vmax.f32 %v1658, 0.0
    %v1667 = vmax.f32 %v1659, 0.0
    %v1668 = vmax.f32 %v1660, 0.0
    %v1669 = vmax.f32 %v1661, 0.0
    %v1670 = vmax.f32 %v1662, 0.0
    %v1671 = vmax.f32 %v1663, 0.0
    %s1672 = scalar_lea.vmem [#allocation2], 288
    %v1673 = vld [vmem:[%s1672] sm:$0xff]
    %v1674 = vld [vmem:[%s1672 + $0x8] sm:$0xff]
    %v1675 = vld [vmem:[%s1672 + $0x10] sm:$0xff]
    %v1676 = vld [vmem:[%s1672 + $0x18] sm:$0xff]
    %v1677 = vld [vmem:[%s1672 + $0x20] sm:$0xff]
    %v1678 = vld [vmem:[%s1672 + $0x28] sm:$0xff]
    %v1679 = vld [vmem:[%s1672 + $0x30] sm:$0xff]
    %v1680 = vld [vmem:[%s1672 + $0x38] sm:$0xff]
    %v1681 = vld [vmem:[%s1672 + $0x40] sm:$0xff]
    %v1682 = vld [vmem:[%s1672 + $0x48] sm:$0xff]
    %v1683 = vld [vmem:[%s1672 + $0x50] sm:$0xff]
    %v1684 = vld [vmem:[%s1672 + $0x58] sm:$0xff]
    %v1686 = vsel %vm71, %v1664, 0
    %v1689 = vsel %vm71, %v1665, 0
    %v1692 = vsel %vm71, %v1666, 0
    %v1695 = vsel %vm71, %v1667, 0
    %v1698 = vsel %vm71, %v1668, 0
    %v1701 = vsel %vm71, %v1669, 0
    %v1704 = vsel %vm71, %v1670, 0
    %v1707 = vsel %vm71, %v1671, 0
    %1709 = vmatpush.msra.mxu0 0.0
    %1710 = vmatpush.msra.mxu0 0.0
    %1711 = vmatpush.msra.mxu0 0.0
    %1712 = vmatpush.msra.mxu0 0.0
    %1713 = vmatpush.msra.mxu0 0.0
    %1714 = vmatpush.msra.mxu0 0.0
    %1715 = vmatpush.msra.mxu0 0.0
    %1716 = vmatpush.msra.mxu0 0.0
    %1717 = vmatpush.msra.mxu0 0.0
    %1718 = vmatpush.msra.mxu0 0.0
    %1719 = vmatpush.msra.mxu0 0.0
    %1720 = vmatpush.msra.mxu0 0.0
    %1721 = vmatpush.msra.mxu0 %v1680
    %1722 = vmatpush.msra.mxu0 %v1679
    %1723 = vmatpush.msra.mxu0 %v1678
    %1724 = vmatpush.msra.mxu0 %v1677
    %1725 = vmatmul.f32.gmra.mxu0 %v1686
    %v1726 = vpop.f32.mrf.mxu0
    %v1727 = vadd.f32 0.0, %v1726
    %1728 = vmatmul.f32.gmra.mxu0 %v1689
    %v1729 = vpop.f32.mrf.mxu0
    %v1730 = vadd.f32 0.0, %v1729
    %1731 = vmatmul.f32.gmra.mxu0 %v1692
    %v1732 = vpop.f32.mrf.mxu0
    %v1733 = vadd.f32 0.0, %v1732
    %1734 = vmatmul.f32.gmra.mxu0 %v1695
    %v1735 = vpop.f32.mrf.mxu0
    %v1736 = vadd.f32 0.0, %v1735
    %1737 = vmatmul.f32.gmra.mxu0 %v1698
    %v1738 = vpop.f32.mrf.mxu0
    %v1739 = vadd.f32 0.0, %v1738
    %1740 = vmatmul.f32.gmra.mxu0 %v1701
    %v1741 = vpop.f32.mrf.mxu0
    %v1742 = vadd.f32 0.0, %v1741
    %1743 = vmatmul.f32.gmra.mxu0 %v1704
    %v1744 = vpop.f32.mrf.mxu0
    %v1745 = vadd.f32 0.0, %v1744
    %1746 = vmatmul.f32.gmra.mxu0 %v1707
    %v1747 = vpop.f32.mrf.mxu0
    %v1748 = vadd.f32 0.0, %v1747
    %1749 = vdwg.mxu0
    %1750 = vmatpush.msra.mxu0 0.0
    %1751 = vmatpush.msra.mxu0 0.0
    %1752 = vmatpush.msra.mxu0 0.0
    %1753 = vmatpush.msra.mxu0 0.0
    %1754 = vmatpush.msra.mxu0 0.0
    %1755 = vmatpush.msra.mxu0 0.0
    %1756 = vmatpush.msra.mxu0 0.0
    %1757 = vmatpush.msra.mxu0 0.0
    %1758 = vmatpush.msra.mxu0 0.0
    %1759 = vmatpush.msra.mxu0 0.0
    %1760 = vmatpush.msra.mxu0 0.0
    %1761 = vmatpush.msra.mxu0 0.0
    %1762 = vmatpush.msra.mxu0 %v1676
    %1763 = vmatpush.msra.mxu0 %v1675
    %1764 = vmatpush.msra.mxu0 %v1674
    %1765 = vmatpush.msra.mxu0 %v1673
    %1766 = vmatmul.f32.gmra.mxu0 %v1695
    %v1767 = vpop.f32.mrf.mxu0
    %v1768 = vadd.f32 %v1727, %v1767
    %1769 = vmatmul.f32.gmra.mxu0 %v1686
    %v1770 = vpop.f32.mrf.mxu0
    %v1771 = vadd.f32 %v1730, %v1770
    %1772 = vmatmul.f32.gmra.mxu0 %v1689
    %v1773 = vpop.f32.mrf.mxu0
    %v1774 = vadd.f32 %v1733, %v1773
    %1775 = vmatmul.f32.gmra.mxu0 %v1692
    %v1776 = vpop.f32.mrf.mxu0
    %v1777 = vadd.f32 %v1736, %v1776
    %1778 = vmatmul.f32.gmra.mxu0 %v1707
    %v1779 = vpop.f32.mrf.mxu0
    %v1780 = vadd.f32 %v1739, %v1779
    %1781 = vmatmul.f32.gmra.mxu0 %v1698
    %v1782 = vpop.f32.mrf.mxu0
    %v1783 = vadd.f32 %v1742, %v1782
    %1784 = vmatmul.f32.gmra.mxu0 %v1701
    %v1785 = vpop.f32.mrf.mxu0
    %v1786 = vadd.f32 %v1745, %v1785
    %1787 = vmatmul.f32.gmra.mxu0 %v1704
    %v1788 = vpop.f32.mrf.mxu0
    %v1789 = vadd.f32 %v1748, %v1788
    %1790 = vdwg.mxu0
    %1791 = vmatpush.msra.mxu0 0.0
    %1792 = vmatpush.msra.mxu0 0.0
    %1793 = vmatpush.msra.mxu0 0.0
    %1794 = vmatpush.msra.mxu0 0.0
    %1795 = vmatpush.msra.mxu0 0.0
    %1796 = vmatpush.msra.mxu0 0.0
    %1797 = vmatpush.msra.mxu0 0.0
    %1798 = vmatpush.msra.mxu0 0.0
    %1799 = vmatpush.msra.mxu0 0.0
    %1800 = vmatpush.msra.mxu0 0.0
    %1801 = vmatpush.msra.mxu0 0.0
    %1802 = vmatpush.msra.mxu0 0.0
    %1803 = vmatpush.msra.mxu0 %v1684
    %1804 = vmatpush.msra.mxu0 %v1683
    %1805 = vmatpush.msra.mxu0 %v1682
    %1806 = vmatpush.msra.mxu0 %v1681
    %1807 = vmatmul.f32.gmra.mxu0 %v1689
    %v1808 = vpop.f32.mrf.mxu0
    %v1809 = vadd.f32 0.0, %v1808
    %1810 = vmatmul.f32.gmra.mxu0 %v1692
    %v1811 = vpop.f32.mrf.mxu0
    %v1812 = vadd.f32 0.0, %v1811
    %1813 = vmatmul.f32.gmra.mxu0 %v1695
    %v1814 = vpop.f32.mrf.mxu0
    %v1815 = vadd.f32 0.0, %v1814
    %1816 = vmatmul.f32.gmra.mxu0 %v1686
    %v1817 = vpop.f32.mrf.mxu0
    %v1818 = vadd.f32 0.0, %v1817
    %1819 = vmatmul.f32.gmra.mxu0 %v1701
    %v1820 = vpop.f32.mrf.mxu0
    %v1821 = vadd.f32 0.0, %v1820
    %1822 = vmatmul.f32.gmra.mxu0 %v1704
    %v1823 = vpop.f32.mrf.mxu0
    %v1824 = vadd.f32 0.0, %v1823
    %1825 = vmatmul.f32.gmra.mxu0 %v1707
    %v1826 = vpop.f32.mrf.mxu0
    %v1827 = vadd.f32 0.0, %v1826
    %1828 = vmatmul.f32.gmra.mxu0 %v1698
    %v1829 = vpop.f32.mrf.mxu0
    %v1830 = vadd.f32 0.0, %v1829
    %1831 = vdwg.mxu0
    %v1832 = vadd.f32 %v1768, %v1809
    %v1833 = vadd.f32 %v1771, %v1812
    %v1834 = vadd.f32 %v1774, %v1815
    %v1835 = vadd.f32 %v1777, %v1818
    %v1836 = vadd.f32 %v1780, %v1821
    %v1837 = vadd.f32 %v1783, %v1824
    %v1838 = vadd.f32 %v1786, %v1827
    %v1839 = vadd.f32 %v1789, %v1830
    %v1848 = vrot.slane %v1832, 7
    %v1849 = vrot.slane %v1833, 7
    %v1850 = vrot.slane %v1834, 7
    %v1851 = vrot.slane %v1835, 7
    %v1852 = vrot.slane %v1836, 7
    %v1853 = vrot.slane %v1837, 7
    %v1854 = vrot.slane %v1838, 7
    %v1855 = vrot.slane %v1839, 7
    %v1864 = vsel %vm251, %v1848, %v1848
    %v1865 = vsel %vm251, %v1849, %v1849
    %v1866 = vsel %vm251, %v1850, %v1850
    %v1867 = vsel %vm251, %v1851, %v1851
    %v1868 = vsel %vm251, %v1852, %v1852
    %v1869 = vsel %vm251, %v1853, %v1853
    %v1870 = vsel %vm251, %v1854, %v1854
    %v1871 = vsel %vm251, %v1855, %v1855
    %1872 = vrot.lane.b32.xlu0 %v1832, 96
    %v1873 = vpop.permute.xlu0 %1872
    %1874 = vrot.lane.b32.xlu0 %v1833, 96
    %v1875 = vpop.permute.xlu0 %1874
    %1876 = vrot.lane.b32.xlu0 %v1834, 96
    %v1877 = vpop.permute.xlu0 %1876
    %1878 = vrot.lane.b32.xlu0 %v1835, 96
    %v1879 = vpop.permute.xlu0 %1878
    %1880 = vrot.lane.b32.xlu0 %v1836, 96
    %v1881 = vpop.permute.xlu0 %1880
    %1882 = vrot.lane.b32.xlu0 %v1837, 96
    %v1883 = vpop.permute.xlu0 %1882
    %1884 = vrot.lane.b32.xlu0 %v1838, 96
    %v1885 = vpop.permute.xlu0 %1884
    %1886 = vrot.lane.b32.xlu0 %v1839, 96
    %v1887 = vpop.permute.xlu0 %1886
    %v1896 = vadd.f32 %v1864, %v1873
    %v1897 = vadd.f32 %v1865, %v1875
    %v1898 = vadd.f32 %v1866, %v1877
    %v1899 = vadd.f32 %v1867, %v1879
    %v1900 = vadd.f32 %v1868, %v1881
    %v1901 = vadd.f32 %v1869, %v1883
    %v1902 = vadd.f32 %v1870, %v1885
    %v1903 = vadd.f32 %v1871, %v1887
    %v1904 = vrot.slane %v1832, 1
    %v1905 = vrot.slane %v1833, 1
    %v1906 = vrot.slane %v1834, 1
    %v1907 = vrot.slane %v1835, 1
    %v1908 = vrot.slane %v1836, 1
    %v1909 = vrot.slane %v1837, 1
    %v1910 = vrot.slane %v1838, 1
    %v1911 = vrot.slane %v1839, 1
    %v1920 = vsel %vm308, %v1904, %v1904
    %v1921 = vsel %vm308, %v1905, %v1905
    %v1922 = vsel %vm308, %v1906, %v1906
    %v1923 = vsel %vm308, %v1907, %v1907
    %v1924 = vsel %vm308, %v1908, %v1908
    %v1925 = vsel %vm308, %v1909, %v1909
    %v1926 = vsel %vm308, %v1910, %v1910
    %v1927 = vsel %vm308, %v1911, %v1911
    %1936 = vrot.lane.b32.xlu0 %v1920, 64
    %v1937 = vpop.permute.xlu0 %1936
    %1938 = vrot.lane.b32.xlu0 %v1921, 64
    %v1939 = vpop.permute.xlu0 %1938
    %1940 = vrot.lane.b32.xlu0 %v1922, 64
    %v1941 = vpop.permute.xlu0 %1940
    %1942 = vrot.lane.b32.xlu0 %v1923, 64
    %v1943 = vpop.permute.xlu0 %1942
    %1944 = vrot.lane.b32.xlu0 %v1924, 64
    %v1945 = vpop.permute.xlu0 %1944
    %1946 = vrot.lane.b32.xlu0 %v1925, 64
    %v1947 = vpop.permute.xlu0 %1946
    %1948 = vrot.lane.b32.xlu0 %v1926, 64
    %v1949 = vpop.permute.xlu0 %1948
    %1950 = vrot.lane.b32.xlu0 %v1927, 64
    %v1951 = vpop.permute.xlu0 %1950
    %v1960 = vadd.f32 %v1896, %v1937
    %v1961 = vadd.f32 %v1897, %v1939
    %v1962 = vadd.f32 %v1898, %v1941
    %v1963 = vadd.f32 %v1899, %v1943
    %v1964 = vadd.f32 %v1900, %v1945
    %v1965 = vadd.f32 %v1901, %v1947
    %v1966 = vadd.f32 %v1902, %v1949
    %v1967 = vadd.f32 %v1903, %v1951
    %s1968 = scalar_lea.vmem %s5, 3
    %v1969 = vld [vmem:[%s1968] sm:$0x1]
    %s1970 = scalar_lea.vmem %s6, 3
    %v1971 = vld [vmem:[%s1970] sm:$0x1]
    %1972 = vmatpush.msra.mxu0 0.0
    %1973 = vmatpush.msra.mxu0 0.0
    %1974 = vmatpush.msra.mxu0 0.0
    %1975 = vmatpush.msra.mxu0 0.0
    %1976 = vmatpush.msra.mxu0 0.0
    %1977 = vmatpush.msra.mxu0 0.0
    %1978 = vmatpush.msra.mxu0 0.0
    %1979 = vmatpush.msra.mxu0 0.0
    %1980 = vmatpush.msra.mxu0 %v1967
    %1981 = vmatpush.msra.mxu0 %v1966
    %1982 = vmatpush.msra.mxu0 %v1965
    %1983 = vmatpush.msra.mxu0 %v1964
    %1984 = vmatpush.msra.mxu0 %v1963
    %1985 = vmatpush.msra.mxu0 %v1962
    %1986 = vmatpush.msra.mxu0 %v1961
    %1987 = vmatpush.msra.mxu0 %v1960
    %1988 = vmatmul.f32.gmra.mxu0 %v361
    %v1989 = vpop.f32.mrf.mxu0
    %v1990 = vadd.f32 0.0, %v1989
    %1991 = vdwg.mxu0
    %v1992 = vmul.f32 %v1990, 0.015625
    %v1993 = vmul.f32 %v1960, %v1960
    %v1994 = vmul.f32 %v1961, %v1961
    %v1995 = vmul.f32 %v1962, %v1962
    %v1996 = vmul.f32 %v1963, %v1963
    %v1997 = vmul.f32 %v1964, %v1964
    %v1998 = vmul.f32 %v1965, %v1965
    %v1999 = vmul.f32 %v1966, %v1966
    %v2000 = vmul.f32 %v1967, %v1967
    %2001 = vmatpush.msra.mxu0 0.0
    %2002 = vmatpush.msra.mxu0 0.0
    %2003 = vmatpush.msra.mxu0 0.0
    %2004 = vmatpush.msra.mxu0 0.0
    %2005 = vmatpush.msra.mxu0 0.0
    %2006 = vmatpush.msra.mxu0 0.0
    %2007 = vmatpush.msra.mxu0 0.0
    %2008 = vmatpush.msra.mxu0 0.0
    %2009 = vmatpush.msra.mxu0 %v2000
    %2010 = vmatpush.msra.mxu0 %v1999
    %2011 = vmatpush.msra.mxu0 %v1998
    %2012 = vmatpush.msra.mxu0 %v1997
    %2013 = vmatpush.msra.mxu0 %v1996
    %2014 = vmatpush.msra.mxu0 %v1995
    %2015 = vmatpush.msra.mxu0 %v1994
    %2016 = vmatpush.msra.mxu0 %v1993
    %2017 = vmatmul.f32.gmra.mxu0 %v361
    %v2018 = vpop.f32.mrf.mxu0
    %v2019 = vadd.f32 0.0, %v2018
    %2020 = vdwg.mxu0
    %v2021 = vmul.f32 %v2019, 0.015625
    %v2022 = vmul.f32 %v1992, %v1992
    %v2023 = vsub.f32 %v2021, %v2022
    %v2024 = vmax.f32 %v2023, 0.0
    %v2025 = vadd.f32 %v2024, 1e-05
    %v2026 = vrsqrt.pop %v2025
    %v2027 = vmul.f32 %v2026, %v2025
    %v2028 = vmul.f32 %v2027, %v2026
    %v2029 = vmul.f32 0.5, %v2028
    %v2030 = vsub.f32 1.5, %v2029
    %v2031 = vmul.f32 %v2026, %v2030
    %vm2032 = vweird.f32 %v2025
    %vm2033 = vweird.f32 %v2026
    %vm2034 = vmor %vm2032, %vm2033
    %v2035 = vsel %vm2034, %v2026, %v2031
    %v2036 = vmul.f32 %v1969, %v2035
    %v2038 = vperm.slane %v2036, 0
    %v2040 = vmul.f32 %v1960, %v2038
    %v2041 = vmul.f32 %v1961, %v2038
    %v2042 = vmul.f32 %v1962, %v2038
    %v2043 = vmul.f32 %v1963, %v2038
    %v2044 = vmul.f32 %v1964, %v2038
    %v2045 = vmul.f32 %v1965, %v2038
    %v2046 = vmul.f32 %v1966, %v2038
    %v2047 = vmul.f32 %v1967, %v2038
    %v2048 = vmul.f32 %v1992, %v2036
    %v2049 = vsub.f32 %v1971, %v2048
    %v2051 = vperm.slane %v2049, 0
    %v2053 = vadd.f32 %v2040, %v2051
    %v2054 = vadd.f32 %v2041, %v2051
    %v2055 = vadd.f32 %v2042, %v2051
    %v2056 = vadd.f32 %v2043, %v2051
    %v2057 = vadd.f32 %v2044, %v2051
    %v2058 = vadd.f32 %v2045, %v2051
    %v2059 = vadd.f32 %v2046, %v2051
    %v2060 = vadd.f32 %v2047, %v2051
    %v2061 = vadd.f32 %v1664, %v2053
    %v2062 = vadd.f32 %v1665, %v2054
    %v2063 = vadd.f32 %v1666, %v2055
    %v2064 = vadd.f32 %v1667, %v2056
    %v2065 = vadd.f32 %v1668, %v2057
    %v2066 = vadd.f32 %v1669, %v2058
    %v2067 = vadd.f32 %v1670, %v2059
    %v2068 = vadd.f32 %v1671, %v2060
    %v2069 = vmax.f32 %v2061, 0.0
    %v2070 = vmax.f32 %v2062, 0.0
    %v2071 = vmax.f32 %v2063, 0.0
    %v2072 = vmax.f32 %v2064, 0.0
    %v2073 = vmax.f32 %v2065, 0.0
    %v2074 = vmax.f32 %v2066, 0.0
    %v2075 = vmax.f32 %v2067, 0.0
    %v2076 = vmax.f32 %v2068, 0.0
    %s2077 = scalar_lea.vmem [#allocation2], 384
    %v2078 = vld [vmem:[%s2077] sm:$0xff]
    %v2079 = vld [vmem:[%s2077 + $0x8] sm:$0xff]
    %v2080 = vld [vmem:[%s2077 + $0x10] sm:$0xff]
    %v2081 = vld [vmem:[%s2077 + $0x18] sm:$0xff]
    %v2082 = vld [vmem:[%s2077 + $0x20] sm:$0xff]
    %v2083 = vld [vmem:[%s2077 + $0x28] sm:$0xff]
    %v2084 = vld [vmem:[%s2077 + $0x30] sm:$0xff]
    %v2085 = vld [vmem:[%s2077 + $0x38] sm:$0xff]
    %v2086 = vld [vmem:[%s2077 + $0x40] sm:$0xff]
    %v2087 = vld [vmem:[%s2077 + $0x48] sm:$0xff]
    %v2088 = vld [vmem:[%s2077 + $0x50] sm:$0xff]
    %v2089 = vld [vmem:[%s2077 + $0x58] sm:$0xff]
    %v2091 = vsel %vm71, %v2069, 0
    %v2094 = vsel %vm71, %v2070, 0
    %v2097 = vsel %vm71, %v2071, 0
    %v2100 = vsel %vm71, %v2072, 0
    %v2103 = vsel %vm71, %v2073, 0
    %v2106 = vsel %vm71, %v2074, 0
    %v2109 = vsel %vm71, %v2075, 0
    %v2112 = vsel %vm71, %v2076, 0
    %2114 = vmatpush.msra.mxu0 0.0
    %2115 = vmatpush.msra.mxu0 0.0
    %2116 = vmatpush.msra.mxu0 0.0
    %2117 = vmatpush.msra.mxu0 0.0
    %2118 = vmatpush.msra.mxu0 0.0
    %2119 = vmatpush.msra.mxu0 0.0
    %2120 = vmatpush.msra.mxu0 0.0
    %2121 = vmatpush.msra.mxu0 0.0
    %2122 = vmatpush.msra.mxu0 0.0
    %2123 = vmatpush.msra.mxu0 0.0
    %2124 = vmatpush.msra.mxu0 0.0
    %2125 = vmatpush.msra.mxu0 0.0
    %2126 = vmatpush.msra.mxu0 %v2085
    %2127 = vmatpush.msra.mxu0 %v2084
    %2128 = vmatpush.msra.mxu0 %v2083
    %2129 = vmatpush.msra.mxu0 %v2082
    %2130 = vmatmul.f32.gmra.mxu0 %v2091
    %v2131 = vpop.f32.mrf.mxu0
    %v2132 = vadd.f32 0.0, %v2131
    %2133 = vmatmul.f32.gmra.mxu0 %v2094
    %v2134 = vpop.f32.mrf.mxu0
    %v2135 = vadd.f32 0.0, %v2134
    %2136 = vmatmul.f32.gmra.mxu0 %v2097
    %v2137 = vpop.f32.mrf.mxu0
    %v2138 = vadd.f32 0.0, %v2137
    %2139 = vmatmul.f32.gmra.mxu0 %v2100
    %v2140 = vpop.f32.mrf.mxu0
    %v2141 = vadd.f32 0.0, %v2140
    %2142 = vmatmul.f32.gmra.mxu0 %v2103
    %v2143 = vpop.f32.mrf.mxu0
    %v2144 = vadd.f32 0.0, %v2143
    %2145 = vmatmul.f32.gmra.mxu0 %v2106
    %v2146 = vpop.f32.mrf.mxu0
    %v2147 = vadd.f32 0.0, %v2146
    %2148 = vmatmul.f32.gmra.mxu0 %v2109
    %v2149 = vpop.f32.mrf.mxu0
    %v2150 = vadd.f32 0.0, %v2149
    %2151 = vmatmul.f32.gmra.mxu0 %v2112
    %v2152 = vpop.f32.mrf.mxu0
    %v2153 = vadd.f32 0.0, %v2152
    %2154 = vdwg.mxu0
    %2155 = vmatpush.msra.mxu0 0.0
    %2156 = vmatpush.msra.mxu0 0.0
    %2157 = vmatpush.msra.mxu0 0.0
    %2158 = vmatpush.msra.mxu0 0.0
    %2159 = vmatpush.msra.mxu0 0.0
    %2160 = vmatpush.msra.mxu0 0.0
    %2161 = vmatpush.msra.mxu0 0.0
    %2162 = vmatpush.msra.mxu0 0.0
    %2163 = vmatpush.msra.mxu0 0.0
    %2164 = vmatpush.msra.mxu0 0.0
    %2165 = vmatpush.msra.mxu0 0.0
    %2166 = vmatpush.msra.mxu0 0.0
    %2167 = vmatpush.msra.mxu0 %v2081
    %2168 = vmatpush.msra.mxu0 %v2080
    %2169 = vmatpush.msra.mxu0 %v2079
    %2170 = vmatpush.msra.mxu0 %v2078
    %2171 = vmatmul.f32.gmra.mxu0 %v2100
    %v2172 = vpop.f32.mrf.mxu0
    %v2173 = vadd.f32 %v2132, %v2172
    %2174 = vmatmul.f32.gmra.mxu0 %v2091
    %v2175 = vpop.f32.mrf.mxu0
    %v2176 = vadd.f32 %v2135, %v2175
    %2177 = vmatmul.f32.gmra.mxu0 %v2094
    %v2178 = vpop.f32.mrf.mxu0
    %v2179 = vadd.f32 %v2138, %v2178
    %2180 = vmatmul.f32.gmra.mxu0 %v2097
    %v2181 = vpop.f32.mrf.mxu0
    %v2182 = vadd.f32 %v2141, %v2181
    %2183 = vmatmul.f32.gmra.mxu0 %v2112
    %v2184 = vpop.f32.mrf.mxu0
    %v2185 = vadd.f32 %v2144, %v2184
    %2186 = vmatmul.f32.gmra.mxu0 %v2103
    %v2187 = vpop.f32.mrf.mxu0
    %v2188 = vadd.f32 %v2147, %v2187
    %2189 = vmatmul.f32.gmra.mxu0 %v2106
    %v2190 = vpop.f32.mrf.mxu0
    %v2191 = vadd.f32 %v2150, %v2190
    %2192 = vmatmul.f32.gmra.mxu0 %v2109
    %v2193 = vpop.f32.mrf.mxu0
    %v2194 = vadd.f32 %v2153, %v2193
    %2195 = vdwg.mxu0
    %2196 = vmatpush.msra.mxu0 0.0
    %2197 = vmatpush.msra.mxu0 0.0
    %2198 = vmatpush.msra.mxu0 0.0
    %2199 = vmatpush.msra.mxu0 0.0
    %2200 = vmatpush.msra.mxu0 0.0
    %2201 = vmatpush.msra.mxu0 0.0
    %2202 = vmatpush.msra.mxu0 0.0
    %2203 = vmatpush.msra.mxu0 0.0
    %2204 = vmatpush.msra.mxu0 0.0
    %2205 = vmatpush.msra.mxu0 0.0
    %2206 = vmatpush.msra.mxu0 0.0
    %2207 = vmatpush.msra.mxu0 0.0
    %2208 = vmatpush.msra.mxu0 %v2089
    %2209 = vmatpush.msra.mxu0 %v2088
    %2210 = vmatpush.msra.mxu0 %v2087
    %2211 = vmatpush.msra.mxu0 %v2086
    %2212 = vmatmul.f32.gmra.mxu0 %v2094
    %v2213 = vpop.f32.mrf.mxu0
    %v2214 = vadd.f32 0.0, %v2213
    %2215 = vmatmul.f32.gmra.mxu0 %v2097
    %v2216 = vpop.f32.mrf.mxu0
    %v2217 = vadd.f32 0.0, %v2216
    %2218 = vmatmul.f32.gmra.mxu0 %v2100
    %v2219 = vpop.f32.mrf.mxu0
    %v2220 = vadd.f32 0.0, %v2219
    %2221 = vmatmul.f32.gmra.mxu0 %v2091
    %v2222 = vpop.f32.mrf.mxu0
    %v2223 = vadd.f32 0.0, %v2222
    %2224 = vmatmul.f32.gmra.mxu0 %v2106
    %v2225 = vpop.f32.mrf.mxu0
    %v2226 = vadd.f32 0.0, %v2225
    %2227 = vmatmul.f32.gmra.mxu0 %v2109
    %v2228 = vpop.f32.mrf.mxu0
    %v2229 = vadd.f32 0.0, %v2228
    %2230 = vmatmul.f32.gmra.mxu0 %v2112
    %v2231 = vpop.f32.mrf.mxu0
    %v2232 = vadd.f32 0.0, %v2231
    %2233 = vmatmul.f32.gmra.mxu0 %v2103
    %v2234 = vpop.f32.mrf.mxu0
    %v2235 = vadd.f32 0.0, %v2234
    %2236 = vdwg.mxu0
    %v2237 = vadd.f32 %v2173, %v2214
    %v2238 = vadd.f32 %v2176, %v2217
    %v2239 = vadd.f32 %v2179, %v2220
    %v2240 = vadd.f32 %v2182, %v2223
    %v2241 = vadd.f32 %v2185, %v2226
    %v2242 = vadd.f32 %v2188, %v2229
    %v2243 = vadd.f32 %v2191, %v2232
    %v2244 = vadd.f32 %v2194, %v2235
    %v2253 = vrot.slane %v2237, 7
    %v2254 = vrot.slane %v2238, 7
    %v2255 = vrot.slane %v2239, 7
    %v2256 = vrot.slane %v2240, 7
    %v2257 = vrot.slane %v2241, 7
    %v2258 = vrot.slane %v2242, 7
    %v2259 = vrot.slane %v2243, 7
    %v2260 = vrot.slane %v2244, 7
    %v2269 = vsel %vm251, %v2253, %v2253
    %v2270 = vsel %vm251, %v2254, %v2254
    %v2271 = vsel %vm251, %v2255, %v2255
    %v2272 = vsel %vm251, %v2256, %v2256
    %v2273 = vsel %vm251, %v2257, %v2257
    %v2274 = vsel %vm251, %v2258, %v2258
    %v2275 = vsel %vm251, %v2259, %v2259
    %v2276 = vsel %vm251, %v2260, %v2260
    %2277 = vrot.lane.b32.xlu0 %v2237, 96
    %v2278 = vpop.permute.xlu0 %2277
    %2279 = vrot.lane.b32.xlu0 %v2238, 96
    %v2280 = vpop.permute.xlu0 %2279
    %2281 = vrot.lane.b32.xlu0 %v2239, 96
    %v2282 = vpop.permute.xlu0 %2281
    %2283 = vrot.lane.b32.xlu0 %v2240, 96
    %v2284 = vpop.permute.xlu0 %2283
    %2285 = vrot.lane.b32.xlu0 %v2241, 96
    %v2286 = vpop.permute.xlu0 %2285
    %2287 = vrot.lane.b32.xlu0 %v2242, 96
    %v2288 = vpop.permute.xlu0 %2287
    %2289 = vrot.lane.b32.xlu0 %v2243, 96
    %v2290 = vpop.permute.xlu0 %2289
    %2291 = vrot.lane.b32.xlu0 %v2244, 96
    %v2292 = vpop.permute.xlu0 %2291
    %v2301 = vadd.f32 %v2269, %v2278
    %v2302 = vadd.f32 %v2270, %v2280
    %v2303 = vadd.f32 %v2271, %v2282
    %v2304 = vadd.f32 %v2272, %v2284
    %v2305 = vadd.f32 %v2273, %v2286
    %v2306 = vadd.f32 %v2274, %v2288
    %v2307 = vadd.f32 %v2275, %v2290
    %v2308 = vadd.f32 %v2276, %v2292
    %v2309 = vrot.slane %v2237, 1
    %v2310 = vrot.slane %v2238, 1
    %v2311 = vrot.slane %v2239, 1
    %v2312 = vrot.slane %v2240, 1
    %v2313 = vrot.slane %v2241, 1
    %v2314 = vrot.slane %v2242, 1
    %v2315 = vrot.slane %v2243, 1
    %v2316 = vrot.slane %v2244, 1
    %v2325 = vsel %vm308, %v2309, %v2309
    %v2326 = vsel %vm308, %v2310, %v2310
    %v2327 = vsel %vm308, %v2311, %v2311
    %v2328 = vsel %vm308, %v2312, %v2312
    %v2329 = vsel %vm308, %v2313, %v2313
    %v2330 = vsel %vm308, %v2314, %v2314
    %v2331 = vsel %vm308, %v2315, %v2315
    %v2332 = vsel %vm308, %v2316, %v2316
    %2341 = vrot.lane.b32.xlu0 %v2325, 64
    %v2342 = vpop.permute.xlu0 %2341
    %2343 = vrot.lane.b32.xlu0 %v2326, 64
    %v2344 = vpop.permute.xlu0 %2343
    %2345 = vrot.lane.b32.xlu0 %v2327, 64
    %v2346 = vpop.permute.xlu0 %2345
    %2347 = vrot.lane.b32.xlu0 %v2328, 64
    %v2348 = vpop.permute.xlu0 %2347
    %2349 = vrot.lane.b32.xlu0 %v2329, 64
    %v2350 = vpop.permute.xlu0 %2349
    %2351 = vrot.lane.b32.xlu0 %v2330, 64
    %v2352 = vpop.permute.xlu0 %2351
    %2353 = vrot.lane.b32.xlu0 %v2331, 64
    %v2354 = vpop.permute.xlu0 %2353
    %2355 = vrot.lane.b32.xlu0 %v2332, 64
    %v2356 = vpop.permute.xlu0 %2355
    %v2365 = vadd.f32 %v2301, %v2342
    %v2366 = vadd.f32 %v2302, %v2344
    %v2367 = vadd.f32 %v2303, %v2346
    %v2368 = vadd.f32 %v2304, %v2348
    %v2369 = vadd.f32 %v2305, %v2350
    %v2370 = vadd.f32 %v2306, %v2352
    %v2371 = vadd.f32 %v2307, %v2354
    %v2372 = vadd.f32 %v2308, %v2356
    %s2373 = scalar_lea.vmem %s5, 4
    %v2374 = vld [vmem:[%s2373] sm:$0x1]
    %s2375 = scalar_lea.vmem %s6, 4
    %v2376 = vld [vmem:[%s2375] sm:$0x1]
    %2377 = vmatpush.msra.mxu0 0.0
    %2378 = vmatpush.msra.mxu0 0.0
    %2379 = vmatpush.msra.mxu0 0.0
    %2380 = vmatpush.msra.mxu0 0.0
    %2381 = vmatpush.msra.mxu0 0.0
    %2382 = vmatpush.msra.mxu0 0.0
    %2383 = vmatpush.msra.mxu0 0.0
    %2384 = vmatpush.msra.mxu0 0.0
    %2385 = vmatpush.msra.mxu0 %v2372
    %2386 = vmatpush.msra.mxu0 %v2371
    %2387 = vmatpush.msra.mxu0 %v2370
    %2388 = vmatpush.msra.mxu0 %v2369
    %2389 = vmatpush.msra.mxu0 %v2368
    %2390 = vmatpush.msra.mxu0 %v2367
    %2391 = vmatpush.msra.mxu0 %v2366
    %2392 = vmatpush.msra.mxu0 %v2365
    %2393 = vmatmul.f32.gmra.mxu0 %v361
    %v2394 = vpop.f32.mrf.mxu0
    %v2395 = vadd.f32 0.0, %v2394
    %2396 = vdwg.mxu0
    %v2397 = vmul.f32 %v2395, 0.015625
    %v2398 = vmul.f32 %v2365, %v2365
    %v2399 = vmul.f32 %v2366, %v2366
    %v2400 = vmul.f32 %v2367, %v2367
    %v2401 = vmul.f32 %v2368, %v2368
    %v2402 = vmul.f32 %v2369, %v2369
    %v2403 = vmul.f32 %v2370, %v2370
    %v2404 = vmul.f32 %v2371, %v2371
    %v2405 = vmul.f32 %v2372, %v2372
    %2406 = vmatpush.msra.mxu0 0.0
    %2407 = vmatpush.msra.mxu0 0.0
    %2408 = vmatpush.msra.mxu0 0.0
    %2409 = vmatpush.msra.mxu0 0.0
    %2410 = vmatpush.msra.mxu0 0.0
    %2411 = vmatpush.msra.mxu0 0.0
    %2412 = vmatpush.msra.mxu0 0.0
    %2413 = vmatpush.msra.mxu0 0.0
    %2414 = vmatpush.msra.mxu0 %v2405
    %2415 = vmatpush.msra.mxu0 %v2404
    %2416 = vmatpush.msra.mxu0 %v2403
    %2417 = vmatpush.msra.mxu0 %v2402
    %2418 = vmatpush.msra.mxu0 %v2401
    %2419 = vmatpush.msra.mxu0 %v2400
    %2420 = vmatpush.msra.mxu0 %v2399
    %2421 = vmatpush.msra.mxu0 %v2398
    %2422 = vmatmul.f32.gmra.mxu0 %v361
    %v2423 = vpop.f32.mrf.mxu0
    %v2424 = vadd.f32 0.0, %v2423
    %2425 = vdwg.mxu0
    %v2426 = vmul.f32 %v2424, 0.015625
    %v2427 = vmul.f32 %v2397, %v2397
    %v2428 = vsub.f32 %v2426, %v2427
    %v2429 = vmax.f32 %v2428, 0.0
    %v2430 = vadd.f32 %v2429, 1e-05
    %v2431 = vrsqrt.pop %v2430
    %v2432 = vmul.f32 %v2431, %v2430
    %v2433 = vmul.f32 %v2432, %v2431
    %v2434 = vmul.f32 0.5, %v2433
    %v2435 = vsub.f32 1.5, %v2434
    %v2436 = vmul.f32 %v2431, %v2435
    %vm2437 = vweird.f32 %v2430
    %vm2438 = vweird.f32 %v2431
    %vm2439 = vmor %vm2437, %vm2438
    %v2440 = vsel %vm2439, %v2431, %v2436
    %v2441 = vmul.f32 %v2374, %v2440
    %v2443 = vperm.slane %v2441, 0
    %v2445 = vmul.f32 %v2365, %v2443
    %v2446 = vmul.f32 %v2366, %v2443
    %v2447 = vmul.f32 %v2367, %v2443
    %v2448 = vmul.f32 %v2368, %v2443
    %v2449 = vmul.f32 %v2369, %v2443
    %v2450 = vmul.f32 %v2370, %v2443
    %v2451 = vmul.f32 %v2371, %v2443
    %v2452 = vmul.f32 %v2372, %v2443
    %v2453 = vmul.f32 %v2397, %v2441
    %v2454 = vsub.f32 %v2376, %v2453
    %v2456 = vperm.slane %v2454, 0
    %v2458 = vadd.f32 %v2445, %v2456
    %v2459 = vadd.f32 %v2446, %v2456
    %v2460 = vadd.f32 %v2447, %v2456
    %v2461 = vadd.f32 %v2448, %v2456
    %v2462 = vadd.f32 %v2449, %v2456
    %v2463 = vadd.f32 %v2450, %v2456
    %v2464 = vadd.f32 %v2451, %v2456
    %v2465 = vadd.f32 %v2452, %v2456
    %v2466 = vadd.f32 %v2069, %v2458
    %v2467 = vadd.f32 %v2070, %v2459
    %v2468 = vadd.f32 %v2071, %v2460
    %v2469 = vadd.f32 %v2072, %v2461
    %v2470 = vadd.f32 %v2073, %v2462
    %v2471 = vadd.f32 %v2074, %v2463
    %v2472 = vadd.f32 %v2075, %v2464
    %v2473 = vadd.f32 %v2076, %v2465
    %v2474 = vmax.f32 %v2466, 0.0
    %v2475 = vmax.f32 %v2467, 0.0
    %v2476 = vmax.f32 %v2468, 0.0
    %v2477 = vmax.f32 %v2469, 0.0
    %v2478 = vmax.f32 %v2470, 0.0
    %v2479 = vmax.f32 %v2471, 0.0
    %v2480 = vmax.f32 %v2472, 0.0
    %v2481 = vmax.f32 %v2473, 0.0
    %s2482 = scalar_lea.vmem [#allocation2], 480
    %v2483 = vld [vmem:[%s2482] sm:$0xff]
    %v2484 = vld [vmem:[%s2482 + $0x8] sm:$0xff]
    %v2485 = vld [vmem:[%s2482 + $0x10] sm:$0xff]
    %v2486 = vld [vmem:[%s2482 + $0x18] sm:$0xff]
    %v2487 = vld [vmem:[%s2482 + $0x20] sm:$0xff]
    %v2488 = vld [vmem:[%s2482 + $0x28] sm:$0xff]
    %v2489 = vld [vmem:[%s2482 + $0x30] sm:$0xff]
    %v2490 = vld [vmem:[%s2482 + $0x38] sm:$0xff]
    %v2491 = vld [vmem:[%s2482 + $0x40] sm:$0xff]
    %v2492 = vld [vmem:[%s2482 + $0x48] sm:$0xff]
    %v2493 = vld [vmem:[%s2482 + $0x50] sm:$0xff]
    %v2494 = vld [vmem:[%s2482 + $0x58] sm:$0xff]
    %v2496 = vsel %vm71, %v2474, 0
    %v2499 = vsel %vm71, %v2475, 0
    %v2502 = vsel %vm71, %v2476, 0
    %v2505 = vsel %vm71, %v2477, 0
    %v2508 = vsel %vm71, %v2478, 0
    %v2511 = vsel %vm71, %v2479, 0
    %v2514 = vsel %vm71, %v2480, 0
    %v2517 = vsel %vm71, %v2481, 0
    %2519 = vmatpush.msra.mxu0 0.0
    %2520 = vmatpush.msra.mxu0 0.0
    %2521 = vmatpush.msra.mxu0 0.0
    %2522 = vmatpush.msra.mxu0 0.0
    %2523 = vmatpush.msra.mxu0 0.0
    %2524 = vmatpush.msra.mxu0 0.0
    %2525 = vmatpush.msra.mxu0 0.0
    %2526 = vmatpush.msra.mxu0 0.0
    %2527 = vmatpush.msra.mxu0 0.0
    %2528 = vmatpush.msra.mxu0 0.0
    %2529 = vmatpush.msra.mxu0 0.0
    %2530 = vmatpush.msra.mxu0 0.0
    %2531 = vmatpush.msra.mxu0 %v2490
    %2532 = vmatpush.msra.mxu0 %v2489
    %2533 = vmatpush.msra.mxu0 %v2488
    %2534 = vmatpush.msra.mxu0 %v2487
    %2535 = vmatmul.f32.gmra.mxu0 %v2496
    %v2536 = vpop.f32.mrf.mxu0
    %v2537 = vadd.f32 0.0, %v2536
    %2538 = vmatmul.f32.gmra.mxu0 %v2499
    %v2539 = vpop.f32.mrf.mxu0
    %v2540 = vadd.f32 0.0, %v2539
    %2541 = vmatmul.f32.gmra.mxu0 %v2502
    %v2542 = vpop.f32.mrf.mxu0
    %v2543 = vadd.f32 0.0, %v2542
    %2544 = vmatmul.f32.gmra.mxu0 %v2505
    %v2545 = vpop.f32.mrf.mxu0
    %v2546 = vadd.f32 0.0, %v2545
    %2547 = vmatmul.f32.gmra.mxu0 %v2508
    %v2548 = vpop.f32.mrf.mxu0
    %v2549 = vadd.f32 0.0, %v2548
    %2550 = vmatmul.f32.gmra.mxu0 %v2511
    %v2551 = vpop.f32.mrf.mxu0
    %v2552 = vadd.f32 0.0, %v2551
    %2553 = vmatmul.f32.gmra.mxu0 %v2514
    %v2554 = vpop.f32.mrf.mxu0
    %v2555 = vadd.f32 0.0, %v2554
    %2556 = vmatmul.f32.gmra.mxu0 %v2517
    %v2557 = vpop.f32.mrf.mxu0
    %v2558 = vadd.f32 0.0, %v2557
    %2559 = vdwg.mxu0
    %2560 = vmatpush.msra.mxu0 0.0
    %2561 = vmatpush.msra.mxu0 0.0
    %2562 = vmatpush.msra.mxu0 0.0
    %2563 = vmatpush.msra.mxu0 0.0
    %2564 = vmatpush.msra.mxu0 0.0
    %2565 = vmatpush.msra.mxu0 0.0
    %2566 = vmatpush.msra.mxu0 0.0
    %2567 = vmatpush.msra.mxu0 0.0
    %2568 = vmatpush.msra.mxu0 0.0
    %2569 = vmatpush.msra.mxu0 0.0
    %2570 = vmatpush.msra.mxu0 0.0
    %2571 = vmatpush.msra.mxu0 0.0
    %2572 = vmatpush.msra.mxu0 %v2486
    %2573 = vmatpush.msra.mxu0 %v2485
    %2574 = vmatpush.msra.mxu0 %v2484
    %2575 = vmatpush.msra.mxu0 %v2483
    %2576 = vmatmul.f32.gmra.mxu0 %v2505
    %v2577 = vpop.f32.mrf.mxu0
    %v2578 = vadd.f32 %v2537, %v2577
    %2579 = vmatmul.f32.gmra.mxu0 %v2496
    %v2580 = vpop.f32.mrf.mxu0
    %v2581 = vadd.f32 %v2540, %v2580
    %2582 = vmatmul.f32.gmra.mxu0 %v2499
    %v2583 = vpop.f32.mrf.mxu0
    %v2584 = vadd.f32 %v2543, %v2583
    %2585 = vmatmul.f32.gmra.mxu0 %v2502
    %v2586 = vpop.f32.mrf.mxu0
    %v2587 = vadd.f32 %v2546, %v2586
    %2588 = vmatmul.f32.gmra.mxu0 %v2517
    %v2589 = vpop.f32.mrf.mxu0
    %v2590 = vadd.f32 %v2549, %v2589
    %2591 = vmatmul.f32.gmra.mxu0 %v2508
    %v2592 = vpop.f32.mrf.mxu0
    %v2593 = vadd.f32 %v2552, %v2592
    %2594 = vmatmul.f32.gmra.mxu0 %v2511
    %v2595 = vpop.f32.mrf.mxu0
    %v2596 = vadd.f32 %v2555, %v2595
    %2597 = vmatmul.f32.gmra.mxu0 %v2514
    %v2598 = vpop.f32.mrf.mxu0
    %v2599 = vadd.f32 %v2558, %v2598
    %2600 = vdwg.mxu0
    %2601 = vmatpush.msra.mxu0 0.0
    %2602 = vmatpush.msra.mxu0 0.0
    %2603 = vmatpush.msra.mxu0 0.0
    %2604 = vmatpush.msra.mxu0 0.0
    %2605 = vmatpush.msra.mxu0 0.0
    %2606 = vmatpush.msra.mxu0 0.0
    %2607 = vmatpush.msra.mxu0 0.0
    %2608 = vmatpush.msra.mxu0 0.0
    %2609 = vmatpush.msra.mxu0 0.0
    %2610 = vmatpush.msra.mxu0 0.0
    %2611 = vmatpush.msra.mxu0 0.0
    %2612 = vmatpush.msra.mxu0 0.0
    %2613 = vmatpush.msra.mxu0 %v2494
    %2614 = vmatpush.msra.mxu0 %v2493
    %2615 = vmatpush.msra.mxu0 %v2492
    %2616 = vmatpush.msra.mxu0 %v2491
    %2617 = vmatmul.f32.gmra.mxu0 %v2499
    %v2618 = vpop.f32.mrf.mxu0
    %v2619 = vadd.f32 0.0, %v2618
    %2620 = vmatmul.f32.gmra.mxu0 %v2502
    %v2621 = vpop.f32.mrf.mxu0
    %v2622 = vadd.f32 0.0, %v2621
    %2623 = vmatmul.f32.gmra.mxu0 %v2505
    %v2624 = vpop.f32.mrf.mxu0
    %v2625 = vadd.f32 0.0, %v2624
    %2626 = vmatmul.f32.gmra.mxu0 %v2496
    %v2627 = vpop.f32.mrf.mxu0
    %v2628 = vadd.f32 0.0, %v2627
    %2629 = vmatmul.f32.gmra.mxu0 %v2511
    %v2630 = vpop.f32.mrf.mxu0
    %v2631 = vadd.f32 0.0, %v2630
    %2632 = vmatmul.f32.gmra.mxu0 %v2514
    %v2633 = vpop.f32.mrf.mxu0
    %v2634 = vadd.f32 0.0, %v2633
    %2635 = vmatmul.f32.gmra.mxu0 %v2517
    %v2636 = vpop.f32.mrf.mxu0
    %v2637 = vadd.f32 0.0, %v2636
    %2638 = vmatmul.f32.gmra.mxu0 %v2508
    %v2639 = vpop.f32.mrf.mxu0
    %v2640 = vadd.f32 0.0, %v2639
    %2641 = vdwg.mxu0
    %v2642 = vadd.f32 %v2578, %v2619
    %v2643 = vadd.f32 %v2581, %v2622
    %v2644 = vadd.f32 %v2584, %v2625
    %v2645 = vadd.f32 %v2587, %v2628
    %v2646 = vadd.f32 %v2590, %v2631
    %v2647 = vadd.f32 %v2593, %v2634
    %v2648 = vadd.f32 %v2596, %v2637
    %v2649 = vadd.f32 %v2599, %v2640
    %v2658 = vrot.slane %v2642, 7
    %v2659 = vrot.slane %v2643, 7
    %v2660 = vrot.slane %v2644, 7
    %v2661 = vrot.slane %v2645, 7
    %v2662 = vrot.slane %v2646, 7
    %v2663 = vrot.slane %v2647, 7
    %v2664 = vrot.slane %v2648, 7
    %v2665 = vrot.slane %v2649, 7
    %v2674 = vsel %vm251, %v2658, %v2658
    %v2675 = vsel %vm251, %v2659, %v2659
    %v2676 = vsel %vm251, %v2660, %v2660
    %v2677 = vsel %vm251, %v2661, %v2661
    %v2678 = vsel %vm251, %v2662, %v2662
    %v2679 = vsel %vm251, %v2663, %v2663
    %v2680 = vsel %vm251, %v2664, %v2664
    %v2681 = vsel %vm251, %v2665, %v2665
    %2682 = vrot.lane.b32.xlu0 %v2642, 96
    %v2683 = vpop.permute.xlu0 %2682
    %2684 = vrot.lane.b32.xlu0 %v2643, 96
    %v2685 = vpop.permute.xlu0 %2684
    %2686 = vrot.lane.b32.xlu0 %v2644, 96
    %v2687 = vpop.permute.xlu0 %2686
    %2688 = vrot.lane.b32.xlu0 %v2645, 96
    %v2689 = vpop.permute.xlu0 %2688
    %2690 = vrot.lane.b32.xlu0 %v2646, 96
    %v2691 = vpop.permute.xlu0 %2690
    %2692 = vrot.lane.b32.xlu0 %v2647, 96
    %v2693 = vpop.permute.xlu0 %2692
    %2694 = vrot.lane.b32.xlu0 %v2648, 96
    %v2695 = vpop.permute.xlu0 %2694
    %2696 = vrot.lane.b32.xlu0 %v2649, 96
    %v2697 = vpop.permute.xlu0 %2696
    %v2706 = vadd.f32 %v2674, %v2683
    %v2707 = vadd.f32 %v2675, %v2685
    %v2708 = vadd.f32 %v2676, %v2687
    %v2709 = vadd.f32 %v2677, %v2689
    %v2710 = vadd.f32 %v2678, %v2691
    %v2711 = vadd.f32 %v2679, %v2693
    %v2712 = vadd.f32 %v2680, %v2695
    %v2713 = vadd.f32 %v2681, %v2697
    %v2714 = vrot.slane %v2642, 1
    %v2715 = vrot.slane %v2643, 1
    %v2716 = vrot.slane %v2644, 1
    %v2717 = vrot.slane %v2645, 1
    %v2718 = vrot.slane %v2646, 1
    %v2719 = vrot.slane %v2647, 1
    %v2720 = vrot.slane %v2648, 1
    %v2721 = vrot.slane %v2649, 1
    %v2730 = vsel %vm308, %v2714, %v2714
    %v2731 = vsel %vm308, %v2715, %v2715
    %v2732 = vsel %vm308, %v2716, %v2716
    %v2733 = vsel %vm308, %v2717, %v2717
    %v2734 = vsel %vm308, %v2718, %v2718
    %v2735 = vsel %vm308, %v2719, %v2719
    %v2736 = vsel %vm308, %v2720, %v2720
    %v2737 = vsel %vm308, %v2721, %v2721
    %2746 = vrot.lane.b32.xlu0 %v2730, 64
    %v2747 = vpop.permute.xlu0 %2746
    %2748 = vrot.lane.b32.xlu0 %v2731, 64
    %v2749 = vpop.permute.xlu0 %2748
    %2750 = vrot.lane.b32.xlu0 %v2732, 64
    %v2751 = vpop.permute.xlu0 %2750
    %2752 = vrot.lane.b32.xlu0 %v2733, 64
    %v2753 = vpop.permute.xlu0 %2752
    %2754 = vrot.lane.b32.xlu0 %v2734, 64
    %v2755 = vpop.permute.xlu0 %2754
    %2756 = vrot.lane.b32.xlu0 %v2735, 64
    %v2757 = vpop.permute.xlu0 %2756
    %2758 = vrot.lane.b32.xlu0 %v2736, 64
    %v2759 = vpop.permute.xlu0 %2758
    %2760 = vrot.lane.b32.xlu0 %v2737, 64
    %v2761 = vpop.permute.xlu0 %2760
    %v2770 = vadd.f32 %v2706, %v2747
    %v2771 = vadd.f32 %v2707, %v2749
    %v2772 = vadd.f32 %v2708, %v2751
    %v2773 = vadd.f32 %v2709, %v2753
    %v2774 = vadd.f32 %v2710, %v2755
    %v2775 = vadd.f32 %v2711, %v2757
    %v2776 = vadd.f32 %v2712, %v2759
    %v2777 = vadd.f32 %v2713, %v2761
    %s2778 = scalar_lea.vmem %s5, 5
    %v2779 = vld [vmem:[%s2778] sm:$0x1]
    %s2780 = scalar_lea.vmem %s6, 5
    %v2781 = vld [vmem:[%s2780] sm:$0x1]
    %2782 = vmatpush.msra.mxu0 0.0
    %2783 = vmatpush.msra.mxu0 0.0
    %2784 = vmatpush.msra.mxu0 0.0
    %2785 = vmatpush.msra.mxu0 0.0
    %2786 = vmatpush.msra.mxu0 0.0
    %2787 = vmatpush.msra.mxu0 0.0
    %2788 = vmatpush.msra.mxu0 0.0
    %2789 = vmatpush.msra.mxu0 0.0
    %2790 = vmatpush.msra.mxu0 %v2777
    %2791 = vmatpush.msra.mxu0 %v2776
    %2792 = vmatpush.msra.mxu0 %v2775
    %2793 = vmatpush.msra.mxu0 %v2774
    %2794 = vmatpush.msra.mxu0 %v2773
    %2795 = vmatpush.msra.mxu0 %v2772
    %2796 = vmatpush.msra.mxu0 %v2771
    %2797 = vmatpush.msra.mxu0 %v2770
    %2798 = vmatmul.f32.gmra.mxu0 %v361
    %v2799 = vpop.f32.mrf.mxu0
    %v2800 = vadd.f32 0.0, %v2799
    %2801 = vdwg.mxu0
    %v2802 = vmul.f32 %v2800, 0.015625
    %v2803 = vmul.f32 %v2770, %v2770
    %v2804 = vmul.f32 %v2771, %v2771
    %v2805 = vmul.f32 %v2772, %v2772
    %v2806 = vmul.f32 %v2773, %v2773
    %v2807 = vmul.f32 %v2774, %v2774
    %v2808 = vmul.f32 %v2775, %v2775
    %v2809 = vmul.f32 %v2776, %v2776
    %v2810 = vmul.f32 %v2777, %v2777
    %2811 = vmatpush.msra.mxu0 0.0
    %2812 = vmatpush.msra.mxu0 0.0
    %2813 = vmatpush.msra.mxu0 0.0
    %2814 = vmatpush.msra.mxu0 0.0
    %2815 = vmatpush.msra.mxu0 0.0
    %2816 = vmatpush.msra.mxu0 0.0
    %2817 = vmatpush.msra.mxu0 0.0
    %2818 = vmatpush.msra.mxu0 0.0
    %2819 = vmatpush.msra.mxu0 %v2810
    %2820 = vmatpush.msra.mxu0 %v2809
    %2821 = vmatpush.msra.mxu0 %v2808
    %2822 = vmatpush.msra.mxu0 %v2807
    %2823 = vmatpush.msra.mxu0 %v2806
    %2824 = vmatpush.msra.mxu0 %v2805
    %2825 = vmatpush.msra.mxu0 %v2804
    %2826 = vmatpush.msra.mxu0 %v2803
    %2827 = vmatmul.f32.gmra.mxu0 %v361
    %v2828 = vpop.f32.mrf.mxu0
    %v2829 = vadd.f32 0.0, %v2828
    %2830 = vdwg.mxu0
    %v2831 = vmul.f32 %v2829, 0.015625
    %v2832 = vmul.f32 %v2802, %v2802
    %v2833 = vsub.f32 %v2831, %v2832
    %v2834 = vmax.f32 %v2833, 0.0
    %v2835 = vadd.f32 %v2834, 1e-05
    %v2836 = vrsqrt.pop %v2835
    %v2837 = vmul.f32 %v2836, %v2835
    %v2838 = vmul.f32 %v2837, %v2836
    %v2839 = vmul.f32 0.5, %v2838
    %v2840 = vsub.f32 1.5, %v2839
    %v2841 = vmul.f32 %v2836, %v2840
    %vm2842 = vweird.f32 %v2835
    %vm2843 = vweird.f32 %v2836
    %vm2844 = vmor %vm2842, %vm2843
    %v2845 = vsel %vm2844, %v2836, %v2841
    %v2846 = vmul.f32 %v2779, %v2845
    %v2848 = vperm.slane %v2846, 0
    %v2850 = vmul.f32 %v2770, %v2848
    %v2851 = vmul.f32 %v2771, %v2848
    %v2852 = vmul.f32 %v2772, %v2848
    %v2853 = vmul.f32 %v2773, %v2848
    %v2854 = vmul.f32 %v2774, %v2848
    %v2855 = vmul.f32 %v2775, %v2848
    %v2856 = vmul.f32 %v2776, %v2848
    %v2857 = vmul.f32 %v2777, %v2848
    %v2858 = vmul.f32 %v2802, %v2846
    %v2859 = vsub.f32 %v2781, %v2858
    %v2861 = vperm.slane %v2859, 0
    %v2863 = vadd.f32 %v2850, %v2861
    %v2864 = vadd.f32 %v2851, %v2861
    %v2865 = vadd.f32 %v2852, %v2861
    %v2866 = vadd.f32 %v2853, %v2861
    %v2867 = vadd.f32 %v2854, %v2861
    %v2868 = vadd.f32 %v2855, %v2861
    %v2869 = vadd.f32 %v2856, %v2861
    %v2870 = vadd.f32 %v2857, %v2861
    %v2871 = vadd.f32 %v2474, %v2863
    %v2872 = vadd.f32 %v2475, %v2864
    %v2873 = vadd.f32 %v2476, %v2865
    %v2874 = vadd.f32 %v2477, %v2866
    %v2875 = vadd.f32 %v2478, %v2867
    %v2876 = vadd.f32 %v2479, %v2868
    %v2877 = vadd.f32 %v2480, %v2869
    %v2878 = vadd.f32 %v2481, %v2870
    %v2879 = vmax.f32 %v2871, 0.0
    %v2880 = vmax.f32 %v2872, 0.0
    %v2881 = vmax.f32 %v2873, 0.0
    %v2882 = vmax.f32 %v2874, 0.0
    %v2883 = vmax.f32 %v2875, 0.0
    %v2884 = vmax.f32 %v2876, 0.0
    %v2885 = vmax.f32 %v2877, 0.0
    %v2886 = vmax.f32 %v2878, 0.0
    %s2887 = scalar_lea.vmem [#allocation2], 576
    %v2888 = vld [vmem:[%s2887] sm:$0xff]
    %v2889 = vld [vmem:[%s2887 + $0x8] sm:$0xff]
    %v2890 = vld [vmem:[%s2887 + $0x10] sm:$0xff]
    %v2891 = vld [vmem:[%s2887 + $0x18] sm:$0xff]
    %v2892 = vld [vmem:[%s2887 + $0x20] sm:$0xff]
    %v2893 = vld [vmem:[%s2887 + $0x28] sm:$0xff]
    %v2894 = vld [vmem:[%s2887 + $0x30] sm:$0xff]
    %v2895 = vld [vmem:[%s2887 + $0x38] sm:$0xff]
    %v2896 = vld [vmem:[%s2887 + $0x40] sm:$0xff]
    %v2897 = vld [vmem:[%s2887 + $0x48] sm:$0xff]
    %v2898 = vld [vmem:[%s2887 + $0x50] sm:$0xff]
    %v2899 = vld [vmem:[%s2887 + $0x58] sm:$0xff]
    %v2901 = vsel %vm71, %v2879, 0
    %v2904 = vsel %vm71, %v2880, 0
    %v2907 = vsel %vm71, %v2881, 0
    %v2910 = vsel %vm71, %v2882, 0
    %v2913 = vsel %vm71, %v2883, 0
    %v2916 = vsel %vm71, %v2884, 0
    %v2919 = vsel %vm71, %v2885, 0
    %v2922 = vsel %vm71, %v2886, 0
    %2924 = vmatpush.msra.mxu0 0.0
    %2925 = vmatpush.msra.mxu0 0.0
    %2926 = vmatpush.msra.mxu0 0.0
    %2927 = vmatpush.msra.mxu0 0.0
    %2928 = vmatpush.msra.mxu0 0.0
    %2929 = vmatpush.msra.mxu0 0.0
    %2930 = vmatpush.msra.mxu0 0.0
    %2931 = vmatpush.msra.mxu0 0.0
    %2932 = vmatpush.msra.mxu0 0.0
    %2933 = vmatpush.msra.mxu0 0.0
    %2934 = vmatpush.msra.mxu0 0.0
    %2935 = vmatpush.msra.mxu0 0.0
    %2936 = vmatpush.msra.mxu0 %v2895
    %2937 = vmatpush.msra.mxu0 %v2894
    %2938 = vmatpush.msra.mxu0 %v2893
    %2939 = vmatpush.msra.mxu0 %v2892
    %2940 = vmatmul.f32.gmra.mxu0 %v2901
    %v2941 = vpop.f32.mrf.mxu0
    %v2942 = vadd.f32 0.0, %v2941
    %2943 = vmatmul.f32.gmra.mxu0 %v2904
    %v2944 = vpop.f32.mrf.mxu0
    %v2945 = vadd.f32 0.0, %v2944
    %2946 = vmatmul.f32.gmra.mxu0 %v2907
    %v2947 = vpop.f32.mrf.mxu0
    %v2948 = vadd.f32 0.0, %v2947
    %2949 = vmatmul.f32.gmra.mxu0 %v2910
    %v2950 = vpop.f32.mrf.mxu0
    %v2951 = vadd.f32 0.0, %v2950
    %2952 = vmatmul.f32.gmra.mxu0 %v2913
    %v2953 = vpop.f32.mrf.mxu0
    %v2954 = vadd.f32 0.0, %v2953
    %2955 = vmatmul.f32.gmra.mxu0 %v2916
    %v2956 = vpop.f32.mrf.mxu0
    %v2957 = vadd.f32 0.0, %v2956
    %2958 = vmatmul.f32.gmra.mxu0 %v2919
    %v2959 = vpop.f32.mrf.mxu0
    %v2960 = vadd.f32 0.0, %v2959
    %2961 = vmatmul.f32.gmra.mxu0 %v2922
    %v2962 = vpop.f32.mrf.mxu0
    %v2963 = vadd.f32 0.0, %v2962
    %2964 = vdwg.mxu0
    %2965 = vmatpush.msra.mxu0 0.0
    %2966 = vmatpush.msra.mxu0 0.0
    %2967 = vmatpush.msra.mxu0 0.0
    %2968 = vmatpush.msra.mxu0 0.0
    %2969 = vmatpush.msra.mxu0 0.0
    %2970 = vmatpush.msra.mxu0 0.0
    %2971 = vmatpush.msra.mxu0 0.0
    %2972 = vmatpush.msra.mxu0 0.0
    %2973 = vmatpush.msra.mxu0 0.0
    %2974 = vmatpush.msra.mxu0 0.0
    %2975 = vmatpush.msra.mxu0 0.0
    %2976 = vmatpush.msra.mxu0 0.0
    %2977 = vmatpush.msra.mxu0 %v2891
    %2978 = vmatpush.msra.mxu0 %v2890
    %2979 = vmatpush.msra.mxu0 %v2889
    %2980 = vmatpush.msra.mxu0 %v2888
    %2981 = vmatmul.f32.gmra.mxu0 %v2910
    %v2982 = vpop.f32.mrf.mxu0
    %v2983 = vadd.f32 %v2942, %v2982
    %2984 = vmatmul.f32.gmra.mxu0 %v2901
    %v2985 = vpop.f32.mrf.mxu0
    %v2986 = vadd.f32 %v2945, %v2985
    %2987 = vmatmul.f32.gmra.mxu0 %v2904
    %v2988 = vpop.f32.mrf.mxu0
    %v2989 = vadd.f32 %v2948, %v2988
    %2990 = vmatmul.f32.gmra.mxu0 %v2907
    %v2991 = vpop.f32.mrf.mxu0
    %v2992 = vadd.f32 %v2951, %v2991
    %2993 = vmatmul.f32.gmra.mxu0 %v2922
    %v2994 = vpop.f32.mrf.mxu0
    %v2995 = vadd.f32 %v2954, %v2994
    %2996 = vmatmul.f32.gmra.mxu0 %v2913
    %v2997 = vpop.f32.mrf.mxu0
    %v2998 = vadd.f32 %v2957, %v2997
    %2999 = vmatmul.f32.gmra.mxu0 %v2916
    %v3000 = vpop.f32.mrf.mxu0
    %v3001 = vadd.f32 %v2960, %v3000
    %3002 = vmatmul.f32.gmra.mxu0 %v2919
    %v3003 = vpop.f32.mrf.mxu0
    %v3004 = vadd.f32 %v2963, %v3003
    %3005 = vdwg.mxu0
    %3006 = vmatpush.msra.mxu0 0.0
    %3007 = vmatpush.msra.mxu0 0.0
    %3008 = vmatpush.msra.mxu0 0.0
    %3009 = vmatpush.msra.mxu0 0.0
    %3010 = vmatpush.msra.mxu0 0.0
    %3011 = vmatpush.msra.mxu0 0.0
    %3012 = vmatpush.msra.mxu0 0.0
    %3013 = vmatpush.msra.mxu0 0.0
    %3014 = vmatpush.msra.mxu0 0.0
    %3015 = vmatpush.msra.mxu0 0.0
    %3016 = vmatpush.msra.mxu0 0.0
    %3017 = vmatpush.msra.mxu0 0.0
    %3018 = vmatpush.msra.mxu0 %v2899
    %3019 = vmatpush.msra.mxu0 %v2898
    %3020 = vmatpush.msra.mxu0 %v2897
    %3021 = vmatpush.msra.mxu0 %v2896
    %3022 = vmatmul.f32.gmra.mxu0 %v2904
    %v3023 = vpop.f32.mrf.mxu0
    %v3024 = vadd.f32 0.0, %v3023
    %3025 = vmatmul.f32.gmra.mxu0 %v2907
    %v3026 = vpop.f32.mrf.mxu0
    %v3027 = vadd.f32 0.0, %v3026
    %3028 = vmatmul.f32.gmra.mxu0 %v2910
    %v3029 = vpop.f32.mrf.mxu0
    %v3030 = vadd.f32 0.0, %v3029
    %3031 = vmatmul.f32.gmra.mxu0 %v2901
    %v3032 = vpop.f32.mrf.mxu0
    %v3033 = vadd.f32 0.0, %v3032
    %3034 = vmatmul.f32.gmra.mxu0 %v2916
    %v3035 = vpop.f32.mrf.mxu0
    %v3036 = vadd.f32 0.0, %v3035
    %3037 = vmatmul.f32.gmra.mxu0 %v2919
    %v3038 = vpop.f32.mrf.mxu0
    %v3039 = vadd.f32 0.0, %v3038
    %3040 = vmatmul.f32.gmra.mxu0 %v2922
    %v3041 = vpop.f32.mrf.mxu0
    %v3042 = vadd.f32 0.0, %v3041
    %3043 = vmatmul.f32.gmra.mxu0 %v2913
    %v3044 = vpop.f32.mrf.mxu0
    %v3045 = vadd.f32 0.0, %v3044
    %3046 = vdwg.mxu0
    %v3047 = vadd.f32 %v2983, %v3024
    %v3048 = vadd.f32 %v2986, %v3027
    %v3049 = vadd.f32 %v2989, %v3030
    %v3050 = vadd.f32 %v2992, %v3033
    %v3051 = vadd.f32 %v2995, %v3036
    %v3052 = vadd.f32 %v2998, %v3039
    %v3053 = vadd.f32 %v3001, %v3042
    %v3054 = vadd.f32 %v3004, %v3045
    %v3063 = vrot.slane %v3047, 7
    %v3064 = vrot.slane %v3048, 7
    %v3065 = vrot.slane %v3049, 7
    %v3066 = vrot.slane %v3050, 7
    %v3067 = vrot.slane %v3051, 7
    %v3068 = vrot.slane %v3052, 7
    %v3069 = vrot.slane %v3053, 7
    %v3070 = vrot.slane %v3054, 7
    %v3079 = vsel %vm251, %v3063, %v3063
    %v3080 = vsel %vm251, %v3064, %v3064
    %v3081 = vsel %vm251, %v3065, %v3065
    %v3082 = vsel %vm251, %v3066, %v3066
    %v3083 = vsel %vm251, %v3067, %v3067
    %v3084 = vsel %vm251, %v3068, %v3068
    %v3085 = vsel %vm251, %v3069, %v3069
    %v3086 = vsel %vm251, %v3070, %v3070
    %3087 = vrot.lane.b32.xlu0 %v3047, 96
    %v3088 = vpop.permute.xlu0 %3087
    %3089 = vrot.lane.b32.xlu0 %v3048, 96
    %v3090 = vpop.permute.xlu0 %3089
    %3091 = vrot.lane.b32.xlu0 %v3049, 96
    %v3092 = vpop.permute.xlu0 %3091
    %3093 = vrot.lane.b32.xlu0 %v3050, 96
    %v3094 = vpop.permute.xlu0 %3093
    %3095 = vrot.lane.b32.xlu0 %v3051, 96
    %v3096 = vpop.permute.xlu0 %3095
    %3097 = vrot.lane.b32.xlu0 %v3052, 96
    %v3098 = vpop.permute.xlu0 %3097
    %3099 = vrot.lane.b32.xlu0 %v3053, 96
    %v3100 = vpop.permute.xlu0 %3099
    %3101 = vrot.lane.b32.xlu0 %v3054, 96
    %v3102 = vpop.permute.xlu0 %3101
    %v3111 = vadd.f32 %v3079, %v3088
    %v3112 = vadd.f32 %v3080, %v3090
    %v3113 = vadd.f32 %v3081, %v3092
    %v3114 = vadd.f32 %v3082, %v3094
    %v3115 = vadd.f32 %v3083, %v3096
    %v3116 = vadd.f32 %v3084, %v3098
    %v3117 = vadd.f32 %v3085, %v3100
    %v3118 = vadd.f32 %v3086, %v3102
    %v3119 = vrot.slane %v3047, 1
    %v3120 = vrot.slane %v3048, 1
    %v3121 = vrot.slane %v3049, 1
    %v3122 = vrot.slane %v3050, 1
    %v3123 = vrot.slane %v3051, 1
    %v3124 = vrot.slane %v3052, 1
    %v3125 = vrot.slane %v3053, 1
    %v3126 = vrot.slane %v3054, 1
    %v3135 = vsel %vm308, %v3119, %v3119
    %v3136 = vsel %vm308, %v3120, %v3120
    %v3137 = vsel %vm308, %v3121, %v3121
    %v3138 = vsel %vm308, %v3122, %v3122
    %v3139 = vsel %vm308, %v3123, %v3123
    %v3140 = vsel %vm308, %v3124, %v3124
    %v3141 = vsel %vm308, %v3125, %v3125
    %v3142 = vsel %vm308, %v3126, %v3126
    %3151 = vrot.lane.b32.xlu0 %v3135, 64
    %v3152 = vpop.permute.xlu0 %3151
    %3153 = vrot.lane.b32.xlu0 %v3136, 64
    %v3154 = vpop.permute.xlu0 %3153
    %3155 = vrot.lane.b32.xlu0 %v3137, 64
    %v3156 = vpop.permute.xlu0 %3155
    %3157 = vrot.lane.b32.xlu0 %v3138, 64
    %v3158 = vpop.permute.xlu0 %3157
    %3159 = vrot.lane.b32.xlu0 %v3139, 64
    %v3160 = vpop.permute.xlu0 %3159
    %3161 = vrot.lane.b32.xlu0 %v3140, 64
    %v3162 = vpop.permute.xlu0 %3161
    %3163 = vrot.lane.b32.xlu0 %v3141, 64
    %v3164 = vpop.permute.xlu0 %3163
    %3165 = vrot.lane.b32.xlu0 %v3142, 64
    %v3166 = vpop.permute.xlu0 %3165
    %v3175 = vadd.f32 %v3111, %v3152
    %v3176 = vadd.f32 %v3112, %v3154
    %v3177 = vadd.f32 %v3113, %v3156
    %v3178 = vadd.f32 %v3114, %v3158
    %v3179 = vadd.f32 %v3115, %v3160
    %v3180 = vadd.f32 %v3116, %v3162
    %v3181 = vadd.f32 %v3117, %v3164
    %v3182 = vadd.f32 %v3118, %v3166
    %s3183 = scalar_lea.vmem %s5, 6
    %v3184 = vld [vmem:[%s3183] sm:$0x1]
    %s3185 = scalar_lea.vmem %s6, 6
    %v3186 = vld [vmem:[%s3185] sm:$0x1]
    %3187 = vmatpush.msra.mxu0 0.0
    %3188 = vmatpush.msra.mxu0 0.0
    %3189 = vmatpush.msra.mxu0 0.0
    %3190 = vmatpush.msra.mxu0 0.0
    %3191 = vmatpush.msra.mxu0 0.0
    %3192 = vmatpush.msra.mxu0 0.0
    %3193 = vmatpush.msra.mxu0 0.0
    %3194 = vmatpush.msra.mxu0 0.0
    %3195 = vmatpush.msra.mxu0 %v3182
    %3196 = vmatpush.msra.mxu0 %v3181
    %3197 = vmatpush.msra.mxu0 %v3180
    %3198 = vmatpush.msra.mxu0 %v3179
    %3199 = vmatpush.msra.mxu0 %v3178
    %3200 = vmatpush.msra.mxu0 %v3177
    %3201 = vmatpush.msra.mxu0 %v3176
    %3202 = vmatpush.msra.mxu0 %v3175
    %3203 = vmatmul.f32.gmra.mxu0 %v361
    %v3204 = vpop.f32.mrf.mxu0
    %v3205 = vadd.f32 0.0, %v3204
    %3206 = vdwg.mxu0
    %v3207 = vmul.f32 %v3205, 0.015625
    %v3208 = vmul.f32 %v3175, %v3175
    %v3209 = vmul.f32 %v3176, %v3176
    %v3210 = vmul.f32 %v3177, %v3177
    %v3211 = vmul.f32 %v3178, %v3178
    %v3212 = vmul.f32 %v3179, %v3179
    %v3213 = vmul.f32 %v3180, %v3180
    %v3214 = vmul.f32 %v3181, %v3181
    %v3215 = vmul.f32 %v3182, %v3182
    %3216 = vmatpush.msra.mxu0 0.0
    %3217 = vmatpush.msra.mxu0 0.0
    %3218 = vmatpush.msra.mxu0 0.0
    %3219 = vmatpush.msra.mxu0 0.0
    %3220 = vmatpush.msra.mxu0 0.0
    %3221 = vmatpush.msra.mxu0 0.0
    %3222 = vmatpush.msra.mxu0 0.0
    %3223 = vmatpush.msra.mxu0 0.0
    %3224 = vmatpush.msra.mxu0 %v3215
    %3225 = vmatpush.msra.mxu0 %v3214
    %3226 = vmatpush.msra.mxu0 %v3213
    %3227 = vmatpush.msra.mxu0 %v3212
    %3228 = vmatpush.msra.mxu0 %v3211
    %3229 = vmatpush.msra.mxu0 %v3210
    %3230 = vmatpush.msra.mxu0 %v3209
    %3231 = vmatpush.msra.mxu0 %v3208
    %3232 = vmatmul.f32.gmra.mxu0 %v361
    %v3233 = vpop.f32.mrf.mxu0
    %v3234 = vadd.f32 0.0, %v3233
    %3235 = vdwg.mxu0
    %v3236 = vmul.f32 %v3234, 0.015625
    %v3237 = vmul.f32 %v3207, %v3207
    %v3238 = vsub.f32 %v3236, %v3237
    %v3239 = vmax.f32 %v3238, 0.0
    %v3240 = vadd.f32 %v3239, 1e-05
    %v3241 = vrsqrt.pop %v3240
    %v3242 = vmul.f32 %v3241, %v3240
    %v3243 = vmul.f32 %v3242, %v3241
    %v3244 = vmul.f32 0.5, %v3243
    %v3245 = vsub.f32 1.5, %v3244
    %v3246 = vmul.f32 %v3241, %v3245
    %vm3247 = vweird.f32 %v3240
    %vm3248 = vweird.f32 %v3241
    %vm3249 = vmor %vm3247, %vm3248
    %v3250 = vsel %vm3249, %v3241, %v3246
    %v3251 = vmul.f32 %v3184, %v3250
    %v3253 = vperm.slane %v3251, 0
    %v3255 = vmul.f32 %v3175, %v3253
    %v3256 = vmul.f32 %v3176, %v3253
    %v3257 = vmul.f32 %v3177, %v3253
    %v3258 = vmul.f32 %v3178, %v3253
    %v3259 = vmul.f32 %v3179, %v3253
    %v3260 = vmul.f32 %v3180, %v3253
    %v3261 = vmul.f32 %v3181, %v3253
    %v3262 = vmul.f32 %v3182, %v3253
    %v3263 = vmul.f32 %v3207, %v3251
    %v3264 = vsub.f32 %v3186, %v3263
    %v3266 = vperm.slane %v3264, 0
    %v3268 = vadd.f32 %v3255, %v3266
    %v3269 = vadd.f32 %v3256, %v3266
    %v3270 = vadd.f32 %v3257, %v3266
    %v3271 = vadd.f32 %v3258, %v3266
    %v3272 = vadd.f32 %v3259, %v3266
    %v3273 = vadd.f32 %v3260, %v3266
    %v3274 = vadd.f32 %v3261, %v3266
    %v3275 = vadd.f32 %v3262, %v3266
    %v3276 = vadd.f32 %v2879, %v3268
    %v3277 = vadd.f32 %v2880, %v3269
    %v3278 = vadd.f32 %v2881, %v3270
    %v3279 = vadd.f32 %v2882, %v3271
    %v3280 = vadd.f32 %v2883, %v3272
    %v3281 = vadd.f32 %v2884, %v3273
    %v3282 = vadd.f32 %v2885, %v3274
    %v3283 = vadd.f32 %v2886, %v3275
    %v3284 = vmax.f32 %v3276, 0.0
    %v3285 = vmax.f32 %v3277, 0.0
    %v3286 = vmax.f32 %v3278, 0.0
    %v3287 = vmax.f32 %v3279, 0.0
    %v3288 = vmax.f32 %v3280, 0.0
    %v3289 = vmax.f32 %v3281, 0.0
    %v3290 = vmax.f32 %v3282, 0.0
    %v3291 = vmax.f32 %v3283, 0.0
    %s3292 = scalar_lea.vmem [#allocation2], 672
    %v3293 = vld [vmem:[%s3292] sm:$0xff]
    %v3294 = vld [vmem:[%s3292 + $0x8] sm:$0xff]
    %v3295 = vld [vmem:[%s3292 + $0x10] sm:$0xff]
    %v3296 = vld [vmem:[%s3292 + $0x18] sm:$0xff]
    %v3297 = vld [vmem:[%s3292 + $0x20] sm:$0xff]
    %v3298 = vld [vmem:[%s3292 + $0x28] sm:$0xff]
    %v3299 = vld [vmem:[%s3292 + $0x30] sm:$0xff]
    %v3300 = vld [vmem:[%s3292 + $0x38] sm:$0xff]
    %v3301 = vld [vmem:[%s3292 + $0x40] sm:$0xff]
    %v3302 = vld [vmem:[%s3292 + $0x48] sm:$0xff]
    %v3303 = vld [vmem:[%s3292 + $0x50] sm:$0xff]
    %v3304 = vld [vmem:[%s3292 + $0x58] sm:$0xff]
    %v3306 = vsel %vm71, %v3284, 0
    %v3309 = vsel %vm71, %v3285, 0
    %v3312 = vsel %vm71, %v3286, 0
    %v3315 = vsel %vm71, %v3287, 0
    %v3318 = vsel %vm71, %v3288, 0
    %v3321 = vsel %vm71, %v3289, 0
    %v3324 = vsel %vm71, %v3290, 0
    %v3327 = vsel %vm71, %v3291, 0
    %3329 = vmatpush.msra.mxu0 0.0
    %3330 = vmatpush.msra.mxu0 0.0
    %3331 = vmatpush.msra.mxu0 0.0
    %3332 = vmatpush.msra.mxu0 0.0
    %3333 = vmatpush.msra.mxu0 0.0
    %3334 = vmatpush.msra.mxu0 0.0
    %3335 = vmatpush.msra.mxu0 0.0
    %3336 = vmatpush.msra.mxu0 0.0
    %3337 = vmatpush.msra.mxu0 0.0
    %3338 = vmatpush.msra.mxu0 0.0
    %3339 = vmatpush.msra.mxu0 0.0
    %3340 = vmatpush.msra.mxu0 0.0
    %3341 = vmatpush.msra.mxu0 %v3300
    %3342 = vmatpush.msra.mxu0 %v3299
    %3343 = vmatpush.msra.mxu0 %v3298
    %3344 = vmatpush.msra.mxu0 %v3297
    %3345 = vmatmul.f32.gmra.mxu0 %v3306
    %v3346 = vpop.f32.mrf.mxu0
    %v3347 = vadd.f32 0.0, %v3346
    %3348 = vmatmul.f32.gmra.mxu0 %v3309
    %v3349 = vpop.f32.mrf.mxu0
    %v3350 = vadd.f32 0.0, %v3349
    %3351 = vmatmul.f32.gmra.mxu0 %v3312
    %v3352 = vpop.f32.mrf.mxu0
    %v3353 = vadd.f32 0.0, %v3352
    %3354 = vmatmul.f32.gmra.mxu0 %v3315
    %v3355 = vpop.f32.mrf.mxu0
    %v3356 = vadd.f32 0.0, %v3355
    %3357 = vmatmul.f32.gmra.mxu0 %v3318
    %v3358 = vpop.f32.mrf.mxu0
    %v3359 = vadd.f32 0.0, %v3358
    %3360 = vmatmul.f32.gmra.mxu0 %v3321
    %v3361 = vpop.f32.mrf.mxu0
    %v3362 = vadd.f32 0.0, %v3361
    %3363 = vmatmul.f32.gmra.mxu0 %v3324
    %v3364 = vpop.f32.mrf.mxu0
    %v3365 = vadd.f32 0.0, %v3364
    %3366 = vmatmul.f32.gmra.mxu0 %v3327
    %v3367 = vpop.f32.mrf.mxu0
    %v3368 = vadd.f32 0.0, %v3367
    %3369 = vdwg.mxu0
    %3370 = vmatpush.msra.mxu0 0.0
    %3371 = vmatpush.msra.mxu0 0.0
    %3372 = vmatpush.msra.mxu0 0.0
    %3373 = vmatpush.msra.mxu0 0.0
    %3374 = vmatpush.msra.mxu0 0.0
    %3375 = vmatpush.msra.mxu0 0.0
    %3376 = vmatpush.msra.mxu0 0.0
    %3377 = vmatpush.msra.mxu0 0.0
    %3378 = vmatpush.msra.mxu0 0.0
    %3379 = vmatpush.msra.mxu0 0.0
    %3380 = vmatpush.msra.mxu0 0.0
    %3381 = vmatpush.msra.mxu0 0.0
    %3382 = vmatpush.msra.mxu0 %v3296
    %3383 = vmatpush.msra.mxu0 %v3295
    %3384 = vmatpush.msra.mxu0 %v3294
    %3385 = vmatpush.msra.mxu0 %v3293
    %3386 = vmatmul.f32.gmra.mxu0 %v3315
    %v3387 = vpop.f32.mrf.mxu0
    %v3388 = vadd.f32 %v3347, %v3387
    %3389 = vmatmul.f32.gmra.mxu0 %v3306
    %v3390 = vpop.f32.mrf.mxu0
    %v3391 = vadd.f32 %v3350, %v3390
    %3392 = vmatmul.f32.gmra.mxu0 %v3309
    %v3393 = vpop.f32.mrf.mxu0
    %v3394 = vadd.f32 %v3353, %v3393
    %3395 = vmatmul.f32.gmra.mxu0 %v3312
    %v3396 = vpop.f32.mrf.mxu0
    %v3397 = vadd.f32 %v3356, %v3396
    %3398 = vmatmul.f32.gmra.mxu0 %v3327
    %v3399 = vpop.f32.mrf.mxu0
    %v3400 = vadd.f32 %v3359, %v3399
    %3401 = vmatmul.f32.gmra.mxu0 %v3318
    %v3402 = vpop.f32.mrf.mxu0
    %v3403 = vadd.f32 %v3362, %v3402
    %3404 = vmatmul.f32.gmra.mxu0 %v3321
    %v3405 = vpop.f32.mrf.mxu0
    %v3406 = vadd.f32 %v3365, %v3405
    %3407 = vmatmul.f32.gmra.mxu0 %v3324
    %v3408 = vpop.f32.mrf.mxu0
    %v3409 = vadd.f32 %v3368, %v3408
    %3410 = vdwg.mxu0
    %3411 = vmatpush.msra.mxu0 0.0
    %3412 = vmatpush.msra.mxu0 0.0
    %3413 = vmatpush.msra.mxu0 0.0
    %3414 = vmatpush.msra.mxu0 0.0
    %3415 = vmatpush.msra.mxu0 0.0
    %3416 = vmatpush.msra.mxu0 0.0
    %3417 = vmatpush.msra.mxu0 0.0
    %3418 = vmatpush.msra.mxu0 0.0
    %3419 = vmatpush.msra.mxu0 0.0
    %3420 = vmatpush.msra.mxu0 0.0
    %3421 = vmatpush.msra.mxu0 0.0
    %3422 = vmatpush.msra.mxu0 0.0
    %3423 = vmatpush.msra.mxu0 %v3304
    %3424 = vmatpush.msra.mxu0 %v3303
    %3425 = vmatpush.msra.mxu0 %v3302
    %3426 = vmatpush.msra.mxu0 %v3301
    %3427 = vmatmul.f32.gmra.mxu0 %v3309
    %v3428 = vpop.f32.mrf.mxu0
    %v3429 = vadd.f32 0.0, %v3428
    %3430 = vmatmul.f32.gmra.mxu0 %v3312
    %v3431 = vpop.f32.mrf.mxu0
    %v3432 = vadd.f32 0.0, %v3431
    %3433 = vmatmul.f32.gmra.mxu0 %v3315
    %v3434 = vpop.f32.mrf.mxu0
    %v3435 = vadd.f32 0.0, %v3434
    %3436 = vmatmul.f32.gmra.mxu0 %v3306
    %v3437 = vpop.f32.mrf.mxu0
    %v3438 = vadd.f32 0.0, %v3437
    %3439 = vmatmul.f32.gmra.mxu0 %v3321
    %v3440 = vpop.f32.mrf.mxu0
    %v3441 = vadd.f32 0.0, %v3440
    %3442 = vmatmul.f32.gmra.mxu0 %v3324
    %v3443 = vpop.f32.mrf.mxu0
    %v3444 = vadd.f32 0.0, %v3443
    %3445 = vmatmul.f32.gmra.mxu0 %v3327
    %v3446 = vpop.f32.mrf.mxu0
    %v3447 = vadd.f32 0.0, %v3446
    %3448 = vmatmul.f32.gmra.mxu0 %v3318
    %v3449 = vpop.f32.mrf.mxu0
    %v3450 = vadd.f32 0.0, %v3449
    %3451 = vdwg.mxu0
    %v3452 = vadd.f32 %v3388, %v3429
    %v3453 = vadd.f32 %v3391, %v3432
    %v3454 = vadd.f32 %v3394, %v3435
    %v3455 = vadd.f32 %v3397, %v3438
    %v3456 = vadd.f32 %v3400, %v3441
    %v3457 = vadd.f32 %v3403, %v3444
    %v3458 = vadd.f32 %v3406, %v3447
    %v3459 = vadd.f32 %v3409, %v3450
    %v3468 = vrot.slane %v3452, 7
    %v3469 = vrot.slane %v3453, 7
    %v3470 = vrot.slane %v3454, 7
    %v3471 = vrot.slane %v3455, 7
    %v3472 = vrot.slane %v3456, 7
    %v3473 = vrot.slane %v3457, 7
    %v3474 = vrot.slane %v3458, 7
    %v3475 = vrot.slane %v3459, 7
    %v3484 = vsel %vm251, %v3468, %v3468
    %v3485 = vsel %vm251, %v3469, %v3469
    %v3486 = vsel %vm251, %v3470, %v3470
    %v3487 = vsel %vm251, %v3471, %v3471
    %v3488 = vsel %vm251, %v3472, %v3472
    %v3489 = vsel %vm251, %v3473, %v3473
    %v3490 = vsel %vm251, %v3474, %v3474
    %v3491 = vsel %vm251, %v3475, %v3475
    %3492 = vrot.lane.b32.xlu0 %v3452, 96
    %v3493 = vpop.permute.xlu0 %3492
    %3494 = vrot.lane.b32.xlu0 %v3453, 96
    %v3495 = vpop.permute.xlu0 %3494
    %3496 = vrot.lane.b32.xlu0 %v3454, 96
    %v3497 = vpop.permute.xlu0 %3496
    %3498 = vrot.lane.b32.xlu0 %v3455, 96
    %v3499 = vpop.permute.xlu0 %3498
    %3500 = vrot.lane.b32.xlu0 %v3456, 96
    %v3501 = vpop.permute.xlu0 %3500
    %3502 = vrot.lane.b32.xlu0 %v3457, 96
    %v3503 = vpop.permute.xlu0 %3502
    %3504 = vrot.lane.b32.xlu0 %v3458, 96
    %v3505 = vpop.permute.xlu0 %3504
    %3506 = vrot.lane.b32.xlu0 %v3459, 96
    %v3507 = vpop.permute.xlu0 %3506
    %v3516 = vadd.f32 %v3484, %v3493
    %v3517 = vadd.f32 %v3485, %v3495
    %v3518 = vadd.f32 %v3486, %v3497
    %v3519 = vadd.f32 %v3487, %v3499
    %v3520 = vadd.f32 %v3488, %v3501
    %v3521 = vadd.f32 %v3489, %v3503
    %v3522 = vadd.f32 %v3490, %v3505
    %v3523 = vadd.f32 %v3491, %v3507
    %v3524 = vrot.slane %v3452, 1
    %v3525 = vrot.slane %v3453, 1
    %v3526 = vrot.slane %v3454, 1
    %v3527 = vrot.slane %v3455, 1
    %v3528 = vrot.slane %v3456, 1
    %v3529 = vrot.slane %v3457, 1
    %v3530 = vrot.slane %v3458, 1
    %v3531 = vrot.slane %v3459, 1
    %v3540 = vsel %vm308, %v3524, %v3524
    %v3541 = vsel %vm308, %v3525, %v3525
    %v3542 = vsel %vm308, %v3526, %v3526
    %v3543 = vsel %vm308, %v3527, %v3527
    %v3544 = vsel %vm308, %v3528, %v3528
    %v3545 = vsel %vm308, %v3529, %v3529
    %v3546 = vsel %vm308, %v3530, %v3530
    %v3547 = vsel %vm308, %v3531, %v3531
    %3556 = vrot.lane.b32.xlu0 %v3540, 64
    %v3557 = vpop.permute.xlu0 %3556
    %3558 = vrot.lane.b32.xlu0 %v3541, 64
    %v3559 = vpop.permute.xlu0 %3558
    %3560 = vrot.lane.b32.xlu0 %v3542, 64
    %v3561 = vpop.permute.xlu0 %3560
    %3562 = vrot.lane.b32.xlu0 %v3543, 64
    %v3563 = vpop.permute.xlu0 %3562
    %3564 = vrot.lane.b32.xlu0 %v3544, 64
    %v3565 = vpop.permute.xlu0 %3564
    %3566 = vrot.lane.b32.xlu0 %v3545, 64
    %v3567 = vpop.permute.xlu0 %3566
    %3568 = vrot.lane.b32.xlu0 %v3546, 64
    %v3569 = vpop.permute.xlu0 %3568
    %3570 = vrot.lane.b32.xlu0 %v3547, 64
    %v3571 = vpop.permute.xlu0 %3570
    %v3580 = vadd.f32 %v3516, %v3557
    %v3581 = vadd.f32 %v3517, %v3559
    %v3582 = vadd.f32 %v3518, %v3561
    %v3583 = vadd.f32 %v3519, %v3563
    %v3584 = vadd.f32 %v3520, %v3565
    %v3585 = vadd.f32 %v3521, %v3567
    %v3586 = vadd.f32 %v3522, %v3569
    %v3587 = vadd.f32 %v3523, %v3571
    %s3588 = scalar_lea.vmem %s5, 7
    %v3589 = vld [vmem:[%s3588] sm:$0x1]
    %s3590 = scalar_lea.vmem %s6, 7
    %v3591 = vld [vmem:[%s3590] sm:$0x1]
    %3592 = vmatpush.msra.mxu0 0.0
    %3593 = vmatpush.msra.mxu0 0.0
    %3594 = vmatpush.msra.mxu0 0.0
    %3595 = vmatpush.msra.mxu0 0.0
    %3596 = vmatpush.msra.mxu0 0.0
    %3597 = vmatpush.msra.mxu0 0.0
    %3598 = vmatpush.msra.mxu0 0.0
    %3599 = vmatpush.msra.mxu0 0.0
    %3600 = vmatpush.msra.mxu0 %v3587
    %3601 = vmatpush.msra.mxu0 %v3586
    %3602 = vmatpush.msra.mxu0 %v3585
    %3603 = vmatpush.msra.mxu0 %v3584
    %3604 = vmatpush.msra.mxu0 %v3583
    %3605 = vmatpush.msra.mxu0 %v3582
    %3606 = vmatpush.msra.mxu0 %v3581
    %3607 = vmatpush.msra.mxu0 %v3580
    %3608 = vmatmul.f32.gmra.mxu0 %v361
    %v3609 = vpop.f32.mrf.mxu0
    %v3610 = vadd.f32 0.0, %v3609
    %3611 = vdwg.mxu0
    %v3612 = vmul.f32 %v3610, 0.015625
    %v3613 = vmul.f32 %v3580, %v3580
    %v3614 = vmul.f32 %v3581, %v3581
    %v3615 = vmul.f32 %v3582, %v3582
    %v3616 = vmul.f32 %v3583, %v3583
    %v3617 = vmul.f32 %v3584, %v3584
    %v3618 = vmul.f32 %v3585, %v3585
    %v3619 = vmul.f32 %v3586, %v3586
    %v3620 = vmul.f32 %v3587, %v3587
    %3621 = vmatpush.msra.mxu0 0.0
    %3622 = vmatpush.msra.mxu0 0.0
    %3623 = vmatpush.msra.mxu0 0.0
    %3624 = vmatpush.msra.mxu0 0.0
    %3625 = vmatpush.msra.mxu0 0.0
    %3626 = vmatpush.msra.mxu0 0.0
    %3627 = vmatpush.msra.mxu0 0.0
    %3628 = vmatpush.msra.mxu0 0.0
    %3629 = vmatpush.msra.mxu0 %v3620
    %3630 = vmatpush.msra.mxu0 %v3619
    %3631 = vmatpush.msra.mxu0 %v3618
    %3632 = vmatpush.msra.mxu0 %v3617
    %3633 = vmatpush.msra.mxu0 %v3616
    %3634 = vmatpush.msra.mxu0 %v3615
    %3635 = vmatpush.msra.mxu0 %v3614
    %3636 = vmatpush.msra.mxu0 %v3613
    %3637 = vmatmul.f32.gmra.mxu0 %v361
    %v3638 = vpop.f32.mrf.mxu0
    %v3639 = vadd.f32 0.0, %v3638
    %3640 = vdwg.mxu0
    %v3641 = vmul.f32 %v3639, 0.015625
    %v3642 = vmul.f32 %v3612, %v3612
    %v3643 = vsub.f32 %v3641, %v3642
    %v3644 = vmax.f32 %v3643, 0.0
    %v3645 = vadd.f32 %v3644, 1e-05
    %v3646 = vrsqrt.pop %v3645
    %v3647 = vmul.f32 %v3646, %v3645
    %v3648 = vmul.f32 %v3647, %v3646
    %v3649 = vmul.f32 0.5, %v3648
    %v3650 = vsub.f32 1.5, %v3649
    %v3651 = vmul.f32 %v3646, %v3650
    %vm3652 = vweird.f32 %v3645
    %vm3653 = vweird.f32 %v3646
    %vm3654 = vmor %vm3652, %vm3653
    %v3655 = vsel %vm3654, %v3646, %v3651
    %v3656 = vmul.f32 %v3589, %v3655
    %v3658 = vperm.slane %v3656, 0
    %v3660 = vmul.f32 %v3580, %v3658
    %v3661 = vmul.f32 %v3581, %v3658
    %v3662 = vmul.f32 %v3582, %v3658
    %v3663 = vmul.f32 %v3583, %v3658
    %v3664 = vmul.f32 %v3584, %v3658
    %v3665 = vmul.f32 %v3585, %v3658
    %v3666 = vmul.f32 %v3586, %v3658
    %v3667 = vmul.f32 %v3587, %v3658
    %v3668 = vmul.f32 %v3612, %v3656
    %v3669 = vsub.f32 %v3591, %v3668
    %v3671 = vperm.slane %v3669, 0
    %v3673 = vadd.f32 %v3660, %v3671
    %v3674 = vadd.f32 %v3661, %v3671
    %v3675 = vadd.f32 %v3662, %v3671
    %v3676 = vadd.f32 %v3663, %v3671
    %v3677 = vadd.f32 %v3664, %v3671
    %v3678 = vadd.f32 %v3665, %v3671
    %v3679 = vadd.f32 %v3666, %v3671
    %v3680 = vadd.f32 %v3667, %v3671
    %v3681 = vadd.f32 %v3284, %v3673
    %v3682 = vadd.f32 %v3285, %v3674
    %v3683 = vadd.f32 %v3286, %v3675
    %v3684 = vadd.f32 %v3287, %v3676
    %v3685 = vadd.f32 %v3288, %v3677
    %v3686 = vadd.f32 %v3289, %v3678
    %v3687 = vadd.f32 %v3290, %v3679
    %v3688 = vadd.f32 %v3291, %v3680
    %v3689 = vmax.f32 %v3681, 0.0
    %v3690 = vmax.f32 %v3682, 0.0
    %v3691 = vmax.f32 %v3683, 0.0
    %v3692 = vmax.f32 %v3684, 0.0
    %v3693 = vmax.f32 %v3685, 0.0
    %v3694 = vmax.f32 %v3686, 0.0
    %v3695 = vmax.f32 %v3687, 0.0
    %v3696 = vmax.f32 %v3688, 0.0
    %s3697 = scalar_lea.vmem [#allocation2], 768
    %v3698 = vld [vmem:[%s3697] sm:$0xff]
    %v3699 = vld [vmem:[%s3697 + $0x8] sm:$0xff]
    %v3700 = vld [vmem:[%s3697 + $0x10] sm:$0xff]
    %v3701 = vld [vmem:[%s3697 + $0x18] sm:$0xff]
    %v3702 = vld [vmem:[%s3697 + $0x20] sm:$0xff]
    %v3703 = vld [vmem:[%s3697 + $0x28] sm:$0xff]
    %v3704 = vld [vmem:[%s3697 + $0x30] sm:$0xff]
    %v3705 = vld [vmem:[%s3697 + $0x38] sm:$0xff]
    %v3706 = vld [vmem:[%s3697 + $0x40] sm:$0xff]
    %v3707 = vld [vmem:[%s3697 + $0x48] sm:$0xff]
    %v3708 = vld [vmem:[%s3697 + $0x50] sm:$0xff]
    %v3709 = vld [vmem:[%s3697 + $0x58] sm:$0xff]
    %v3711 = vsel %vm71, %v3689, 0
    %v3714 = vsel %vm71, %v3690, 0
    %v3717 = vsel %vm71, %v3691, 0
    %v3720 = vsel %vm71, %v3692, 0
    %v3723 = vsel %vm71, %v3693, 0
    %v3726 = vsel %vm71, %v3694, 0
    %v3729 = vsel %vm71, %v3695, 0
    %v3732 = vsel %vm71, %v3696, 0
    %3734 = vmatpush.msra.mxu0 0.0
    %3735 = vmatpush.msra.mxu0 0.0
    %3736 = vmatpush.msra.mxu0 0.0
    %3737 = vmatpush.msra.mxu0 0.0
    %3738 = vmatpush.msra.mxu0 0.0
    %3739 = vmatpush.msra.mxu0 0.0
    %3740 = vmatpush.msra.mxu0 0.0
    %3741 = vmatpush.msra.mxu0 0.0
    %3742 = vmatpush.msra.mxu0 0.0
    %3743 = vmatpush.msra.mxu0 0.0
    %3744 = vmatpush.msra.mxu0 0.0
    %3745 = vmatpush.msra.mxu0 0.0
    %3746 = vmatpush.msra.mxu0 %v3705
    %3747 = vmatpush.msra.mxu0 %v3704
    %3748 = vmatpush.msra.mxu0 %v3703
    %3749 = vmatpush.msra.mxu0 %v3702
    %3750 = vmatmul.f32.gmra.mxu0 %v3711
    %v3751 = vpop.f32.mrf.mxu0
    %v3752 = vadd.f32 0.0, %v3751
    %3753 = vmatmul.f32.gmra.mxu0 %v3714
    %v3754 = vpop.f32.mrf.mxu0
    %v3755 = vadd.f32 0.0, %v3754
    %3756 = vmatmul.f32.gmra.mxu0 %v3717
    %v3757 = vpop.f32.mrf.mxu0
    %v3758 = vadd.f32 0.0, %v3757
    %3759 = vmatmul.f32.gmra.mxu0 %v3720
    %v3760 = vpop.f32.mrf.mxu0
    %v3761 = vadd.f32 0.0, %v3760
    %3762 = vmatmul.f32.gmra.mxu0 %v3723
    %v3763 = vpop.f32.mrf.mxu0
    %v3764 = vadd.f32 0.0, %v3763
    %3765 = vmatmul.f32.gmra.mxu0 %v3726
    %v3766 = vpop.f32.mrf.mxu0
    %v3767 = vadd.f32 0.0, %v3766
    %3768 = vmatmul.f32.gmra.mxu0 %v3729
    %v3769 = vpop.f32.mrf.mxu0
    %v3770 = vadd.f32 0.0, %v3769
    %3771 = vmatmul.f32.gmra.mxu0 %v3732
    %v3772 = vpop.f32.mrf.mxu0
    %v3773 = vadd.f32 0.0, %v3772
    %3774 = vdwg.mxu0
    %3775 = vmatpush.msra.mxu0 0.0
    %3776 = vmatpush.msra.mxu0 0.0
    %3777 = vmatpush.msra.mxu0 0.0
    %3778 = vmatpush.msra.mxu0 0.0
    %3779 = vmatpush.msra.mxu0 0.0
    %3780 = vmatpush.msra.mxu0 0.0
    %3781 = vmatpush.msra.mxu0 0.0
    %3782 = vmatpush.msra.mxu0 0.0
    %3783 = vmatpush.msra.mxu0 0.0
    %3784 = vmatpush.msra.mxu0 0.0
    %3785 = vmatpush.msra.mxu0 0.0
    %3786 = vmatpush.msra.mxu0 0.0
    %3787 = vmatpush.msra.mxu0 %v3701
    %3788 = vmatpush.msra.mxu0 %v3700
    %3789 = vmatpush.msra.mxu0 %v3699
    %3790 = vmatpush.msra.mxu0 %v3698
    %3791 = vmatmul.f32.gmra.mxu0 %v3720
    %v3792 = vpop.f32.mrf.mxu0
    %v3793 = vadd.f32 %v3752, %v3792
    %3794 = vmatmul.f32.gmra.mxu0 %v3711
    %v3795 = vpop.f32.mrf.mxu0
    %v3796 = vadd.f32 %v3755, %v3795
    %3797 = vmatmul.f32.gmra.mxu0 %v3714
    %v3798 = vpop.f32.mrf.mxu0
    %v3799 = vadd.f32 %v3758, %v3798
    %3800 = vmatmul.f32.gmra.mxu0 %v3717
    %v3801 = vpop.f32.mrf.mxu0
    %v3802 = vadd.f32 %v3761, %v3801
    %3803 = vmatmul.f32.gmra.mxu0 %v3732
    %v3804 = vpop.f32.mrf.mxu0
    %v3805 = vadd.f32 %v3764, %v3804
    %3806 = vmatmul.f32.gmra.mxu0 %v3723
    %v3807 = vpop.f32.mrf.mxu0
    %v3808 = vadd.f32 %v3767, %v3807
    %3809 = vmatmul.f32.gmra.mxu0 %v3726
    %v3810 = vpop.f32.mrf.mxu0
    %v3811 = vadd.f32 %v3770, %v3810
    %3812 = vmatmul.f32.gmra.mxu0 %v3729
    %v3813 = vpop.f32.mrf.mxu0
    %v3814 = vadd.f32 %v3773, %v3813
    %3815 = vdwg.mxu0
    %3816 = vmatpush.msra.mxu0 0.0
    %3817 = vmatpush.msra.mxu0 0.0
    %3818 = vmatpush.msra.mxu0 0.0
    %3819 = vmatpush.msra.mxu0 0.0
    %3820 = vmatpush.msra.mxu0 0.0
    %3821 = vmatpush.msra.mxu0 0.0
    %3822 = vmatpush.msra.mxu0 0.0
    %3823 = vmatpush.msra.mxu0 0.0
    %3824 = vmatpush.msra.mxu0 0.0
    %3825 = vmatpush.msra.mxu0 0.0
    %3826 = vmatpush.msra.mxu0 0.0
    %3827 = vmatpush.msra.mxu0 0.0
    %3828 = vmatpush.msra.mxu0 %v3709
    %3829 = vmatpush.msra.mxu0 %v3708
    %3830 = vmatpush.msra.mxu0 %v3707
    %3831 = vmatpush.msra.mxu0 %v3706
    %3832 = vmatmul.f32.gmra.mxu0 %v3714
    %v3833 = vpop.f32.mrf.mxu0
    %v3834 = vadd.f32 0.0, %v3833
    %3835 = vmatmul.f32.gmra.mxu0 %v3717
    %v3836 = vpop.f32.mrf.mxu0
    %v3837 = vadd.f32 0.0, %v3836
    %3838 = vmatmul.f32.gmra.mxu0 %v3720
    %v3839 = vpop.f32.mrf.mxu0
    %v3840 = vadd.f32 0.0, %v3839
    %3841 = vmatmul.f32.gmra.mxu0 %v3711
    %v3842 = vpop.f32.mrf.mxu0
    %v3843 = vadd.f32 0.0, %v3842
    %3844 = vmatmul.f32.gmra.mxu0 %v3726
    %v3845 = vpop.f32.mrf.mxu0
    %v3846 = vadd.f32 0.0, %v3845
    %3847 = vmatmul.f32.gmra.mxu0 %v3729
    %v3848 = vpop.f32.mrf.mxu0
    %v3849 = vadd.f32 0.0, %v3848
    %3850 = vmatmul.f32.gmra.mxu0 %v3732
    %v3851 = vpop.f32.mrf.mxu0
    %v3852 = vadd.f32 0.0, %v3851
    %3853 = vmatmul.f32.gmra.mxu0 %v3723
    %v3854 = vpop.f32.mrf.mxu0
    %v3855 = vadd.f32 0.0, %v3854
    %3856 = vdwg.mxu0
    %v3857 = vadd.f32 %v3793, %v3834
    %v3858 = vadd.f32 %v3796, %v3837
    %v3859 = vadd.f32 %v3799, %v3840
    %v3860 = vadd.f32 %v3802, %v3843
    %v3861 = vadd.f32 %v3805, %v3846
    %v3862 = vadd.f32 %v3808, %v3849
    %v3863 = vadd.f32 %v3811, %v3852
    %v3864 = vadd.f32 %v3814, %v3855
    %v3873 = vrot.slane %v3857, 7
    %v3874 = vrot.slane %v3858, 7
    %v3875 = vrot.slane %v3859, 7
    %v3876 = vrot.slane %v3860, 7
    %v3877 = vrot.slane %v3861, 7
    %v3878 = vrot.slane %v3862, 7
    %v3879 = vrot.slane %v3863, 7
    %v3880 = vrot.slane %v3864, 7
    %v3889 = vsel %vm251, %v3873, %v3873
    %v3890 = vsel %vm251, %v3874, %v3874
    %v3891 = vsel %vm251, %v3875, %v3875
    %v3892 = vsel %vm251, %v3876, %v3876
    %v3893 = vsel %vm251, %v3877, %v3877
    %v3894 = vsel %vm251, %v3878, %v3878
    %v3895 = vsel %vm251, %v3879, %v3879
    %v3896 = vsel %vm251, %v3880, %v3880
    %3897 = vrot.lane.b32.xlu0 %v3857, 96
    %v3898 = vpop.permute.xlu0 %3897
    %3899 = vrot.lane.b32.xlu0 %v3858, 96
    %v3900 = vpop.permute.xlu0 %3899
    %3901 = vrot.lane.b32.xlu0 %v3859, 96
    %v3902 = vpop.permute.xlu0 %3901
    %3903 = vrot.lane.b32.xlu0 %v3860, 96
    %v3904 = vpop.permute.xlu0 %3903
    %3905 = vrot.lane.b32.xlu0 %v3861, 96
    %v3906 = vpop.permute.xlu0 %3905
    %3907 = vrot.lane.b32.xlu0 %v3862, 96
    %v3908 = vpop.permute.xlu0 %3907
    %3909 = vrot.lane.b32.xlu0 %v3863, 96
    %v3910 = vpop.permute.xlu0 %3909
    %3911 = vrot.lane.b32.xlu0 %v3864, 96
    %v3912 = vpop.permute.xlu0 %3911
    %v3921 = vadd.f32 %v3889, %v3898
    %v3922 = vadd.f32 %v3890, %v3900
    %v3923 = vadd.f32 %v3891, %v3902
    %v3924 = vadd.f32 %v3892, %v3904
    %v3925 = vadd.f32 %v3893, %v3906
    %v3926 = vadd.f32 %v3894, %v3908
    %v3927 = vadd.f32 %v3895, %v3910
    %v3928 = vadd.f32 %v3896, %v3912
    %v3929 = vrot.slane %v3857, 1
    %v3930 = vrot.slane %v3858, 1
    %v3931 = vrot.slane %v3859, 1
    %v3932 = vrot.slane %v3860, 1
    %v3933 = vrot.slane %v3861, 1
    %v3934 = vrot.slane %v3862, 1
    %v3935 = vrot.slane %v3863, 1
    %v3936 = vrot.slane %v3864, 1
    %v3945 = vsel %vm308, %v3929, %v3929
    %v3946 = vsel %vm308, %v3930, %v3930
    %v3947 = vsel %vm308, %v3931, %v3931
    %v3948 = vsel %vm308, %v3932, %v3932
    %v3949 = vsel %vm308, %v3933, %v3933
    %v3950 = vsel %vm308, %v3934, %v3934
    %v3951 = vsel %vm308, %v3935, %v3935
    %v3952 = vsel %vm308, %v3936, %v3936
    %3961 = vrot.lane.b32.xlu0 %v3945, 64
    %v3962 = vpop.permute.xlu0 %3961
    %3963 = vrot.lane.b32.xlu0 %v3946, 64
    %v3964 = vpop.permute.xlu0 %3963
    %3965 = vrot.lane.b32.xlu0 %v3947, 64
    %v3966 = vpop.permute.xlu0 %3965
    %3967 = vrot.lane.b32.xlu0 %v3948, 64
    %v3968 = vpop.permute.xlu0 %3967
    %3969 = vrot.lane.b32.xlu0 %v3949, 64
    %v3970 = vpop.permute.xlu0 %3969
    %3971 = vrot.lane.b32.xlu0 %v3950, 64
    %v3972 = vpop.permute.xlu0 %3971
    %3973 = vrot.lane.b32.xlu0 %v3951, 64
    %v3974 = vpop.permute.xlu0 %3973
    %3975 = vrot.lane.b32.xlu0 %v3952, 64
    %v3976 = vpop.permute.xlu0 %3975
    %v3985 = vadd.f32 %v3921, %v3962
    %v3986 = vadd.f32 %v3922, %v3964
    %v3987 = vadd.f32 %v3923, %v3966
    %v3988 = vadd.f32 %v3924, %v3968
    %v3989 = vadd.f32 %v3925, %v3970
    %v3990 = vadd.f32 %v3926, %v3972
    %v3991 = vadd.f32 %v3927, %v3974
    %v3992 = vadd.f32 %v3928, %v3976
    %s3993 = scalar_lea.vmem %s5, 8
    %v3994 = vld [vmem:[%s3993] sm:$0x1]
    %s3995 = scalar_lea.vmem %s6, 8
    %v3996 = vld [vmem:[%s3995] sm:$0x1]
    %3997 = vmatpush.msra.mxu0 0.0
    %3998 = vmatpush.msra.mxu0 0.0
    %3999 = vmatpush.msra.mxu0 0.0
    %4000 = vmatpush.msra.mxu0 0.0
    %4001 = vmatpush.msra.mxu0 0.0
    %4002 = vmatpush.msra.mxu0 0.0
    %4003 = vmatpush.msra.mxu0 0.0
    %4004 = vmatpush.msra.mxu0 0.0
    %4005 = vmatpush.msra.mxu0 %v3992
    %4006 = vmatpush.msra.mxu0 %v3991
    %4007 = vmatpush.msra.mxu0 %v3990
    %4008 = vmatpush.msra.mxu0 %v3989
    %4009 = vmatpush.msra.mxu0 %v3988
    %4010 = vmatpush.msra.mxu0 %v3987
    %4011 = vmatpush.msra.mxu0 %v3986
    %4012 = vmatpush.msra.mxu0 %v3985
    %4013 = vmatmul.f32.gmra.mxu0 %v361
    %v4014 = vpop.f32.mrf.mxu0
    %v4015 = vadd.f32 0.0, %v4014
    %4016 = vdwg.mxu0
    %v4017 = vmul.f32 %v4015, 0.015625
    %v4018 = vmul.f32 %v3985, %v3985
    %v4019 = vmul.f32 %v3986, %v3986
    %v4020 = vmul.f32 %v3987, %v3987
    %v4021 = vmul.f32 %v3988, %v3988
    %v4022 = vmul.f32 %v3989, %v3989
    %v4023 = vmul.f32 %v3990, %v3990
    %v4024 = vmul.f32 %v3991, %v3991
    %v4025 = vmul.f32 %v3992, %v3992
    %4026 = vmatpush.msra.mxu0 0.0
    %4027 = vmatpush.msra.mxu0 0.0
    %4028 = vmatpush.msra.mxu0 0.0
    %4029 = vmatpush.msra.mxu0 0.0
    %4030 = vmatpush.msra.mxu0 0.0
    %4031 = vmatpush.msra.mxu0 0.0
    %4032 = vmatpush.msra.mxu0 0.0
    %4033 = vmatpush.msra.mxu0 0.0
    %4034 = vmatpush.msra.mxu0 %v4025
    %4035 = vmatpush.msra.mxu0 %v4024
    %4036 = vmatpush.msra.mxu0 %v4023
    %4037 = vmatpush.msra.mxu0 %v4022
    %4038 = vmatpush.msra.mxu0 %v4021
    %4039 = vmatpush.msra.mxu0 %v4020
    %4040 = vmatpush.msra.mxu0 %v4019
    %4041 = vmatpush.msra.mxu0 %v4018
    %4042 = vmatmul.f32.gmra.mxu0 %v361
    %v4043 = vpop.f32.mrf.mxu0
    %v4044 = vadd.f32 0.0, %v4043
    %4045 = vdwg.mxu0
    %v4046 = vmul.f32 %v4044, 0.015625
    %v4047 = vmul.f32 %v4017, %v4017
    %v4048 = vsub.f32 %v4046, %v4047
    %v4049 = vmax.f32 %v4048, 0.0
    %v4050 = vadd.f32 %v4049, 1e-05
    %v4051 = vrsqrt.pop %v4050
    %v4052 = vmul.f32 %v4051, %v4050
    %v4053 = vmul.f32 %v4052, %v4051
    %v4054 = vmul.f32 0.5, %v4053
    %v4055 = vsub.f32 1.5, %v4054
    %v4056 = vmul.f32 %v4051, %v4055
    %vm4057 = vweird.f32 %v4050
    %vm4058 = vweird.f32 %v4051
    %vm4059 = vmor %vm4057, %vm4058
    %v4060 = vsel %vm4059, %v4051, %v4056
    %v4061 = vmul.f32 %v3994, %v4060
    %v4063 = vperm.slane %v4061, 0
    %v4065 = vmul.f32 %v3985, %v4063
    %v4066 = vmul.f32 %v3986, %v4063
    %v4067 = vmul.f32 %v3987, %v4063
    %v4068 = vmul.f32 %v3988, %v4063
    %v4069 = vmul.f32 %v3989, %v4063
    %v4070 = vmul.f32 %v3990, %v4063
    %v4071 = vmul.f32 %v3991, %v4063
    %v4072 = vmul.f32 %v3992, %v4063
    %v4073 = vmul.f32 %v4017, %v4061
    %v4074 = vsub.f32 %v3996, %v4073
    %v4076 = vperm.slane %v4074, 0
    %v4078 = vadd.f32 %v4065, %v4076
    %v4079 = vadd.f32 %v4066, %v4076
    %v4080 = vadd.f32 %v4067, %v4076
    %v4081 = vadd.f32 %v4068, %v4076
    %v4082 = vadd.f32 %v4069, %v4076
    %v4083 = vadd.f32 %v4070, %v4076
    %v4084 = vadd.f32 %v4071, %v4076
    %v4085 = vadd.f32 %v4072, %v4076
    %v4086 = vadd.f32 %v3689, %v4078
    %v4087 = vadd.f32 %v3690, %v4079
    %v4088 = vadd.f32 %v3691, %v4080
    %v4089 = vadd.f32 %v3692, %v4081
    %v4090 = vadd.f32 %v3693, %v4082
    %v4091 = vadd.f32 %v3694, %v4083
    %v4092 = vadd.f32 %v3695, %v4084
    %v4093 = vadd.f32 %v3696, %v4085
    %v4094 = vmax.f32 %v4086, 0.0
    %v4095 = vmax.f32 %v4087, 0.0
    %v4096 = vmax.f32 %v4088, 0.0
    %v4097 = vmax.f32 %v4089, 0.0
    %v4098 = vmax.f32 %v4090, 0.0
    %v4099 = vmax.f32 %v4091, 0.0
    %v4100 = vmax.f32 %v4092, 0.0
    %v4101 = vmax.f32 %v4093, 0.0
    %s4102 = scalar_lea.vmem [#allocation2], 864
    %v4103 = vld [vmem:[%s4102] sm:$0xff]
    %v4104 = vld [vmem:[%s4102 + $0x8] sm:$0xff]
    %v4105 = vld [vmem:[%s4102 + $0x10] sm:$0xff]
    %v4106 = vld [vmem:[%s4102 + $0x18] sm:$0xff]
    %v4107 = vld [vmem:[%s4102 + $0x20] sm:$0xff]
    %v4108 = vld [vmem:[%s4102 + $0x28] sm:$0xff]
    %v4109 = vld [vmem:[%s4102 + $0x30] sm:$0xff]
    %v4110 = vld [vmem:[%s4102 + $0x38] sm:$0xff]
    %v4111 = vld [vmem:[%s4102 + $0x40] sm:$0xff]
    %v4112 = vld [vmem:[%s4102 + $0x48] sm:$0xff]
    %v4113 = vld [vmem:[%s4102 + $0x50] sm:$0xff]
    %v4114 = vld [vmem:[%s4102 + $0x58] sm:$0xff]
    %v4116 = vsel %vm71, %v4094, 0
    %v4119 = vsel %vm71, %v4095, 0
    %v4122 = vsel %vm71, %v4096, 0
    %v4125 = vsel %vm71, %v4097, 0
    %v4128 = vsel %vm71, %v4098, 0
    %v4131 = vsel %vm71, %v4099, 0
    %v4134 = vsel %vm71, %v4100, 0
    %v4137 = vsel %vm71, %v4101, 0
    %4139 = vmatpush.msra.mxu0 0.0
    %4140 = vmatpush.msra.mxu0 0.0
    %4141 = vmatpush.msra.mxu0 0.0
    %4142 = vmatpush.msra.mxu0 0.0
    %4143 = vmatpush.msra.mxu0 0.0
    %4144 = vmatpush.msra.mxu0 0.0
    %4145 = vmatpush.msra.mxu0 0.0
    %4146 = vmatpush.msra.mxu0 0.0
    %4147 = vmatpush.msra.mxu0 0.0
    %4148 = vmatpush.msra.mxu0 0.0
    %4149 = vmatpush.msra.mxu0 0.0
    %4150 = vmatpush.msra.mxu0 0.0
    %4151 = vmatpush.msra.mxu0 %v4110
    %4152 = vmatpush.msra.mxu0 %v4109
    %4153 = vmatpush.msra.mxu0 %v4108
    %4154 = vmatpush.msra.mxu0 %v4107
    %4155 = vmatmul.f32.gmra.mxu0 %v4116
    %v4156 = vpop.f32.mrf.mxu0
    %v4157 = vadd.f32 0.0, %v4156
    %4158 = vmatmul.f32.gmra.mxu0 %v4119
    %v4159 = vpop.f32.mrf.mxu0
    %v4160 = vadd.f32 0.0, %v4159
    %4161 = vmatmul.f32.gmra.mxu0 %v4122
    %v4162 = vpop.f32.mrf.mxu0
    %v4163 = vadd.f32 0.0, %v4162
    %4164 = vmatmul.f32.gmra.mxu0 %v4125
    %v4165 = vpop.f32.mrf.mxu0
    %v4166 = vadd.f32 0.0, %v4165
    %4167 = vmatmul.f32.gmra.mxu0 %v4128
    %v4168 = vpop.f32.mrf.mxu0
    %v4169 = vadd.f32 0.0, %v4168
    %4170 = vmatmul.f32.gmra.mxu0 %v4131
    %v4171 = vpop.f32.mrf.mxu0
    %v4172 = vadd.f32 0.0, %v4171
    %4173 = vmatmul.f32.gmra.mxu0 %v4134
    %v4174 = vpop.f32.mrf.mxu0
    %v4175 = vadd.f32 0.0, %v4174
    %4176 = vmatmul.f32.gmra.mxu0 %v4137
    %v4177 = vpop.f32.mrf.mxu0
    %v4178 = vadd.f32 0.0, %v4177
    %4179 = vdwg.mxu0
    %4180 = vmatpush.msra.mxu0 0.0
    %4181 = vmatpush.msra.mxu0 0.0
    %4182 = vmatpush.msra.mxu0 0.0
    %4183 = vmatpush.msra.mxu0 0.0
    %4184 = vmatpush.msra.mxu0 0.0
    %4185 = vmatpush.msra.mxu0 0.0
    %4186 = vmatpush.msra.mxu0 0.0
    %4187 = vmatpush.msra.mxu0 0.0
    %4188 = vmatpush.msra.mxu0 0.0
    %4189 = vmatpush.msra.mxu0 0.0
    %4190 = vmatpush.msra.mxu0 0.0
    %4191 = vmatpush.msra.mxu0 0.0
    %4192 = vmatpush.msra.mxu0 %v4106
    %4193 = vmatpush.msra.mxu0 %v4105
    %4194 = vmatpush.msra.mxu0 %v4104
    %4195 = vmatpush.msra.mxu0 %v4103
    %4196 = vmatmul.f32.gmra.mxu0 %v4125
    %v4197 = vpop.f32.mrf.mxu0
    %v4198 = vadd.f32 %v4157, %v4197
    %4199 = vmatmul.f32.gmra.mxu0 %v4116
    %v4200 = vpop.f32.mrf.mxu0
    %v4201 = vadd.f32 %v4160, %v4200
    %4202 = vmatmul.f32.gmra.mxu0 %v4119
    %v4203 = vpop.f32.mrf.mxu0
    %v4204 = vadd.f32 %v4163, %v4203
    %4205 = vmatmul.f32.gmra.mxu0 %v4122
    %v4206 = vpop.f32.mrf.mxu0
    %v4207 = vadd.f32 %v4166, %v4206
    %4208 = vmatmul.f32.gmra.mxu0 %v4137
    %v4209 = vpop.f32.mrf.mxu0
    %v4210 = vadd.f32 %v4169, %v4209
    %4211 = vmatmul.f32.gmra.mxu0 %v4128
    %v4212 = vpop.f32.mrf.mxu0
    %v4213 = vadd.f32 %v4172, %v4212
    %4214 = vmatmul.f32.gmra.mxu0 %v4131
    %v4215 = vpop.f32.mrf.mxu0
    %v4216 = vadd.f32 %v4175, %v4215
    %4217 = vmatmul.f32.gmra.mxu0 %v4134
    %v4218 = vpop.f32.mrf.mxu0
    %v4219 = vadd.f32 %v4178, %v4218
    %4220 = vdwg.mxu0
    %4221 = vmatpush.msra.mxu0 0.0
    %4222 = vmatpush.msra.mxu0 0.0
    %4223 = vmatpush.msra.mxu0 0.0
    %4224 = vmatpush.msra.mxu0 0.0
    %4225 = vmatpush.msra.mxu0 0.0
    %4226 = vmatpush.msra.mxu0 0.0
    %4227 = vmatpush.msra.mxu0 0.0
    %4228 = vmatpush.msra.mxu0 0.0
    %4229 = vmatpush.msra.mxu0 0.0
    %4230 = vmatpush.msra.mxu0 0.0
    %4231 = vmatpush.msra.mxu0 0.0
    %4232 = vmatpush.msra.mxu0 0.0
    %4233 = vmatpush.msra.mxu0 %v4114
    %4234 = vmatpush.msra.mxu0 %v4113
    %4235 = vmatpush.msra.mxu0 %v4112
    %4236 = vmatpush.msra.mxu0 %v4111
    %4237 = vmatmul.f32.gmra.mxu0 %v4119
    %v4238 = vpop.f32.mrf.mxu0
    %v4239 = vadd.f32 0.0, %v4238
    %4240 = vmatmul.f32.gmra.mxu0 %v4122
    %v4241 = vpop.f32.mrf.mxu0
    %v4242 = vadd.f32 0.0, %v4241
    %4243 = vmatmul.f32.gmra.mxu0 %v4125
    %v4244 = vpop.f32.mrf.mxu0
    %v4245 = vadd.f32 0.0, %v4244
    %4246 = vmatmul.f32.gmra.mxu0 %v4116
    %v4247 = vpop.f32.mrf.mxu0
    %v4248 = vadd.f32 0.0, %v4247
    %4249 = vmatmul.f32.gmra.mxu0 %v4131
    %v4250 = vpop.f32.mrf.mxu0
    %v4251 = vadd.f32 0.0, %v4250
    %4252 = vmatmul.f32.gmra.mxu0 %v4134
    %v4253 = vpop.f32.mrf.mxu0
    %v4254 = vadd.f32 0.0, %v4253
    %4255 = vmatmul.f32.gmra.mxu0 %v4137
    %v4256 = vpop.f32.mrf.mxu0
    %v4257 = vadd.f32 0.0, %v4256
    %4258 = vmatmul.f32.gmra.mxu0 %v4128
    %v4259 = vpop.f32.mrf.mxu0
    %v4260 = vadd.f32 0.0, %v4259
    %4261 = vdwg.mxu0
    %v4262 = vadd.f32 %v4198, %v4239
    %v4263 = vadd.f32 %v4201, %v4242
    %v4264 = vadd.f32 %v4204, %v4245
    %v4265 = vadd.f32 %v4207, %v4248
    %v4266 = vadd.f32 %v4210, %v4251
    %v4267 = vadd.f32 %v4213, %v4254
    %v4268 = vadd.f32 %v4216, %v4257
    %v4269 = vadd.f32 %v4219, %v4260
    %v4278 = vrot.slane %v4262, 7
    %v4279 = vrot.slane %v4263, 7
    %v4280 = vrot.slane %v4264, 7
    %v4281 = vrot.slane %v4265, 7
    %v4282 = vrot.slane %v4266, 7
    %v4283 = vrot.slane %v4267, 7
    %v4284 = vrot.slane %v4268, 7
    %v4285 = vrot.slane %v4269, 7
    %v4294 = vsel %vm251, %v4278, %v4278
    %v4295 = vsel %vm251, %v4279, %v4279
    %v4296 = vsel %vm251, %v4280, %v4280
    %v4297 = vsel %vm251, %v4281, %v4281
    %v4298 = vsel %vm251, %v4282, %v4282
    %v4299 = vsel %vm251, %v4283, %v4283
    %v4300 = vsel %vm251, %v4284, %v4284
    %v4301 = vsel %vm251, %v4285, %v4285
    %4302 = vrot.lane.b32.xlu0 %v4262, 96
    %v4303 = vpop.permute.xlu0 %4302
    %4304 = vrot.lane.b32.xlu0 %v4263, 96
    %v4305 = vpop.permute.xlu0 %4304
    %4306 = vrot.lane.b32.xlu0 %v4264, 96
    %v4307 = vpop.permute.xlu0 %4306
    %4308 = vrot.lane.b32.xlu0 %v4265, 96
    %v4309 = vpop.permute.xlu0 %4308
    %4310 = vrot.lane.b32.xlu0 %v4266, 96
    %v4311 = vpop.permute.xlu0 %4310
    %4312 = vrot.lane.b32.xlu0 %v4267, 96
    %v4313 = vpop.permute.xlu0 %4312
    %4314 = vrot.lane.b32.xlu0 %v4268, 96
    %v4315 = vpop.permute.xlu0 %4314
    %4316 = vrot.lane.b32.xlu0 %v4269, 96
    %v4317 = vpop.permute.xlu0 %4316
    %v4326 = vadd.f32 %v4294, %v4303
    %v4327 = vadd.f32 %v4295, %v4305
    %v4328 = vadd.f32 %v4296, %v4307
    %v4329 = vadd.f32 %v4297, %v4309
    %v4330 = vadd.f32 %v4298, %v4311
    %v4331 = vadd.f32 %v4299, %v4313
    %v4332 = vadd.f32 %v4300, %v4315
    %v4333 = vadd.f32 %v4301, %v4317
    %v4334 = vrot.slane %v4262, 1
    %v4335 = vrot.slane %v4263, 1
    %v4336 = vrot.slane %v4264, 1
    %v4337 = vrot.slane %v4265, 1
    %v4338 = vrot.slane %v4266, 1
    %v4339 = vrot.slane %v4267, 1
    %v4340 = vrot.slane %v4268, 1
    %v4341 = vrot.slane %v4269, 1
    %v4350 = vsel %vm308, %v4334, %v4334
    %v4351 = vsel %vm308, %v4335, %v4335
    %v4352 = vsel %vm308, %v4336, %v4336
    %v4353 = vsel %vm308, %v4337, %v4337
    %v4354 = vsel %vm308, %v4338, %v4338
    %v4355 = vsel %vm308, %v4339, %v4339
    %v4356 = vsel %vm308, %v4340, %v4340
    %v4357 = vsel %vm308, %v4341, %v4341
    %4366 = vrot.lane.b32.xlu0 %v4350, 64
    %v4367 = vpop.permute.xlu0 %4366
    %4368 = vrot.lane.b32.xlu0 %v4351, 64
    %v4369 = vpop.permute.xlu0 %4368
    %4370 = vrot.lane.b32.xlu0 %v4352, 64
    %v4371 = vpop.permute.xlu0 %4370
    %4372 = vrot.lane.b32.xlu0 %v4353, 64
    %v4373 = vpop.permute.xlu0 %4372
    %4374 = vrot.lane.b32.xlu0 %v4354, 64
    %v4375 = vpop.permute.xlu0 %4374
    %4376 = vrot.lane.b32.xlu0 %v4355, 64
    %v4377 = vpop.permute.xlu0 %4376
    %4378 = vrot.lane.b32.xlu0 %v4356, 64
    %v4379 = vpop.permute.xlu0 %4378
    %4380 = vrot.lane.b32.xlu0 %v4357, 64
    %v4381 = vpop.permute.xlu0 %4380
    %v4390 = vadd.f32 %v4326, %v4367
    %v4391 = vadd.f32 %v4327, %v4369
    %v4392 = vadd.f32 %v4328, %v4371
    %v4393 = vadd.f32 %v4329, %v4373
    %v4394 = vadd.f32 %v4330, %v4375
    %v4395 = vadd.f32 %v4331, %v4377
    %v4396 = vadd.f32 %v4332, %v4379
    %v4397 = vadd.f32 %v4333, %v4381
    %s4398 = scalar_lea.vmem %s5, 9
    %v4399 = vld [vmem:[%s4398] sm:$0x1]
    %s4400 = scalar_lea.vmem %s6, 9
    %v4401 = vld [vmem:[%s4400] sm:$0x1]
    %4402 = vmatpush.msra.mxu0 0.0
    %4403 = vmatpush.msra.mxu0 0.0
    %4404 = vmatpush.msra.mxu0 0.0
    %4405 = vmatpush.msra.mxu0 0.0
    %4406 = vmatpush.msra.mxu0 0.0
    %4407 = vmatpush.msra.mxu0 0.0
    %4408 = vmatpush.msra.mxu0 0.0
    %4409 = vmatpush.msra.mxu0 0.0
    %4410 = vmatpush.msra.mxu0 %v4397
    %4411 = vmatpush.msra.mxu0 %v4396
    %4412 = vmatpush.msra.mxu0 %v4395
    %4413 = vmatpush.msra.mxu0 %v4394
    %4414 = vmatpush.msra.mxu0 %v4393
    %4415 = vmatpush.msra.mxu0 %v4392
    %4416 = vmatpush.msra.mxu0 %v4391
    %4417 = vmatpush.msra.mxu0 %v4390
    %4418 = vmatmul.f32.gmra.mxu0 %v361
    %v4419 = vpop.f32.mrf.mxu0
    %v4420 = vadd.f32 0.0, %v4419
    %4421 = vdwg.mxu0
    %v4422 = vmul.f32 %v4420, 0.015625
    %v4423 = vmul.f32 %v4390, %v4390
    %v4424 = vmul.f32 %v4391, %v4391
    %v4425 = vmul.f32 %v4392, %v4392
    %v4426 = vmul.f32 %v4393, %v4393
    %v4427 = vmul.f32 %v4394, %v4394
    %v4428 = vmul.f32 %v4395, %v4395
    %v4429 = vmul.f32 %v4396, %v4396
    %v4430 = vmul.f32 %v4397, %v4397
    %4431 = vmatpush.msra.mxu0 0.0
    %4432 = vmatpush.msra.mxu0 0.0
    %4433 = vmatpush.msra.mxu0 0.0
    %4434 = vmatpush.msra.mxu0 0.0
    %4435 = vmatpush.msra.mxu0 0.0
    %4436 = vmatpush.msra.mxu0 0.0
    %4437 = vmatpush.msra.mxu0 0.0
    %4438 = vmatpush.msra.mxu0 0.0
    %4439 = vmatpush.msra.mxu0 %v4430
    %4440 = vmatpush.msra.mxu0 %v4429
    %4441 = vmatpush.msra.mxu0 %v4428
    %4442 = vmatpush.msra.mxu0 %v4427
    %4443 = vmatpush.msra.mxu0 %v4426
    %4444 = vmatpush.msra.mxu0 %v4425
    %4445 = vmatpush.msra.mxu0 %v4424
    %4446 = vmatpush.msra.mxu0 %v4423
    %4447 = vmatmul.f32.gmra.mxu0 %v361
    %v4448 = vpop.f32.mrf.mxu0
    %v4449 = vadd.f32 0.0, %v4448
    %4450 = vdwg.mxu0
    %v4451 = vmul.f32 %v4449, 0.015625
    %v4452 = vmul.f32 %v4422, %v4422
    %v4453 = vsub.f32 %v4451, %v4452
    %v4454 = vmax.f32 %v4453, 0.0
    %v4455 = vadd.f32 %v4454, 1e-05
    %v4456 = vrsqrt.pop %v4455
    %v4457 = vmul.f32 %v4456, %v4455
    %v4458 = vmul.f32 %v4457, %v4456
    %v4459 = vmul.f32 0.5, %v4458
    %v4460 = vsub.f32 1.5, %v4459
    %v4461 = vmul.f32 %v4456, %v4460
    %vm4462 = vweird.f32 %v4455
    %vm4463 = vweird.f32 %v4456
    %vm4464 = vmor %vm4462, %vm4463
    %v4465 = vsel %vm4464, %v4456, %v4461
    %v4466 = vmul.f32 %v4399, %v4465
    %v4468 = vperm.slane %v4466, 0
    %v4470 = vmul.f32 %v4390, %v4468
    %v4471 = vmul.f32 %v4391, %v4468
    %v4472 = vmul.f32 %v4392, %v4468
    %v4473 = vmul.f32 %v4393, %v4468
    %v4474 = vmul.f32 %v4394, %v4468
    %v4475 = vmul.f32 %v4395, %v4468
    %v4476 = vmul.f32 %v4396, %v4468
    %v4477 = vmul.f32 %v4397, %v4468
    %v4478 = vmul.f32 %v4422, %v4466
    %v4479 = vsub.f32 %v4401, %v4478
    %v4481 = vperm.slane %v4479, 0
    %v4483 = vadd.f32 %v4470, %v4481
    %v4484 = vadd.f32 %v4471, %v4481
    %v4485 = vadd.f32 %v4472, %v4481
    %v4486 = vadd.f32 %v4473, %v4481
    %v4487 = vadd.f32 %v4474, %v4481
    %v4488 = vadd.f32 %v4475, %v4481
    %v4489 = vadd.f32 %v4476, %v4481
    %v4490 = vadd.f32 %v4477, %v4481
    %v4491 = vadd.f32 %v4094, %v4483
    %v4492 = vadd.f32 %v4095, %v4484
    %v4493 = vadd.f32 %v4096, %v4485
    %v4494 = vadd.f32 %v4097, %v4486
    %v4495 = vadd.f32 %v4098, %v4487
    %v4496 = vadd.f32 %v4099, %v4488
    %v4497 = vadd.f32 %v4100, %v4489
    %v4498 = vadd.f32 %v4101, %v4490
    %v4499 = vmax.f32 %v4491, 0.0
    %v4500 = vmax.f32 %v4492, 0.0
    %v4501 = vmax.f32 %v4493, 0.0
    %v4502 = vmax.f32 %v4494, 0.0
    %v4503 = vmax.f32 %v4495, 0.0
    %v4504 = vmax.f32 %v4496, 0.0
    %v4505 = vmax.f32 %v4497, 0.0
    %v4506 = vmax.f32 %v4498, 0.0
    %s4507 = scalar_lea.vmem [#allocation2], 960
    %v4508 = vld [vmem:[%s4507] sm:$0xff]
    %v4509 = vld [vmem:[%s4507 + $0x8] sm:$0xff]
    %v4510 = vld [vmem:[%s4507 + $0x10] sm:$0xff]
    %v4511 = vld [vmem:[%s4507 + $0x18] sm:$0xff]
    %v4512 = vld [vmem:[%s4507 + $0x20] sm:$0xff]
    %v4513 = vld [vmem:[%s4507 + $0x28] sm:$0xff]
    %v4514 = vld [vmem:[%s4507 + $0x30] sm:$0xff]
    %v4515 = vld [vmem:[%s4507 + $0x38] sm:$0xff]
    %v4516 = vld [vmem:[%s4507 + $0x40] sm:$0xff]
    %v4517 = vld [vmem:[%s4507 + $0x48] sm:$0xff]
    %v4518 = vld [vmem:[%s4507 + $0x50] sm:$0xff]
    %v4519 = vld [vmem:[%s4507 + $0x58] sm:$0xff]
    %v4521 = vsel %vm71, %v4499, 0
    %v4524 = vsel %vm71, %v4500, 0
    %v4527 = vsel %vm71, %v4501, 0
    %v4530 = vsel %vm71, %v4502, 0
    %v4533 = vsel %vm71, %v4503, 0
    %v4536 = vsel %vm71, %v4504, 0
    %v4539 = vsel %vm71, %v4505, 0
    %v4542 = vsel %vm71, %v4506, 0
    %4544 = vmatpush.msra.mxu0 0.0
    %4545 = vmatpush.msra.mxu0 0.0
    %4546 = vmatpush.msra.mxu0 0.0
    %4547 = vmatpush.msra.mxu0 0.0
    %4548 = vmatpush.msra.mxu0 0.0
    %4549 = vmatpush.msra.mxu0 0.0
    %4550 = vmatpush.msra.mxu0 0.0
    %4551 = vmatpush.msra.mxu0 0.0
    %4552 = vmatpush.msra.mxu0 0.0
    %4553 = vmatpush.msra.mxu0 0.0
    %4554 = vmatpush.msra.mxu0 0.0
    %4555 = vmatpush.msra.mxu0 0.0
    %4556 = vmatpush.msra.mxu0 %v4515
    %4557 = vmatpush.msra.mxu0 %v4514
    %4558 = vmatpush.msra.mxu0 %v4513
    %4559 = vmatpush.msra.mxu0 %v4512
    %4560 = vmatmul.f32.gmra.mxu0 %v4521
    %v4561 = vpop.f32.mrf.mxu0
    %v4562 = vadd.f32 0.0, %v4561
    %4563 = vmatmul.f32.gmra.mxu0 %v4524
    %v4564 = vpop.f32.mrf.mxu0
    %v4565 = vadd.f32 0.0, %v4564
    %4566 = vmatmul.f32.gmra.mxu0 %v4527
    %v4567 = vpop.f32.mrf.mxu0
    %v4568 = vadd.f32 0.0, %v4567
    %4569 = vmatmul.f32.gmra.mxu0 %v4530
    %v4570 = vpop.f32.mrf.mxu0
    %v4571 = vadd.f32 0.0, %v4570
    %4572 = vmatmul.f32.gmra.mxu0 %v4533
    %v4573 = vpop.f32.mrf.mxu0
    %v4574 = vadd.f32 0.0, %v4573
    %4575 = vmatmul.f32.gmra.mxu0 %v4536
    %v4576 = vpop.f32.mrf.mxu0
    %v4577 = vadd.f32 0.0, %v4576
    %4578 = vmatmul.f32.gmra.mxu0 %v4539
    %v4579 = vpop.f32.mrf.mxu0
    %v4580 = vadd.f32 0.0, %v4579
    %4581 = vmatmul.f32.gmra.mxu0 %v4542
    %v4582 = vpop.f32.mrf.mxu0
    %v4583 = vadd.f32 0.0, %v4582
    %4584 = vdwg.mxu0
    %4585 = vmatpush.msra.mxu0 0.0
    %4586 = vmatpush.msra.mxu0 0.0
    %4587 = vmatpush.msra.mxu0 0.0
    %4588 = vmatpush.msra.mxu0 0.0
    %4589 = vmatpush.msra.mxu0 0.0
    %4590 = vmatpush.msra.mxu0 0.0
    %4591 = vmatpush.msra.mxu0 0.0
    %4592 = vmatpush.msra.mxu0 0.0
    %4593 = vmatpush.msra.mxu0 0.0
    %4594 = vmatpush.msra.mxu0 0.0
    %4595 = vmatpush.msra.mxu0 0.0
    %4596 = vmatpush.msra.mxu0 0.0
    %4597 = vmatpush.msra.mxu0 %v4511
    %4598 = vmatpush.msra.mxu0 %v4510
    %4599 = vmatpush.msra.mxu0 %v4509
    %4600 = vmatpush.msra.mxu0 %v4508
    %4601 = vmatmul.f32.gmra.mxu0 %v4530
    %v4602 = vpop.f32.mrf.mxu0
    %v4603 = vadd.f32 %v4562, %v4602
    %4604 = vmatmul.f32.gmra.mxu0 %v4521
    %v4605 = vpop.f32.mrf.mxu0
    %v4606 = vadd.f32 %v4565, %v4605
    %4607 = vmatmul.f32.gmra.mxu0 %v4524
    %v4608 = vpop.f32.mrf.mxu0
    %v4609 = vadd.f32 %v4568, %v4608
    %4610 = vmatmul.f32.gmra.mxu0 %v4527
    %v4611 = vpop.f32.mrf.mxu0
    %v4612 = vadd.f32 %v4571, %v4611
    %4613 = vmatmul.f32.gmra.mxu0 %v4542
    %v4614 = vpop.f32.mrf.mxu0
    %v4615 = vadd.f32 %v4574, %v4614
    %4616 = vmatmul.f32.gmra.mxu0 %v4533
    %v4617 = vpop.f32.mrf.mxu0
    %v4618 = vadd.f32 %v4577, %v4617
    %4619 = vmatmul.f32.gmra.mxu0 %v4536
    %v4620 = vpop.f32.mrf.mxu0
    %v4621 = vadd.f32 %v4580, %v4620
    %4622 = vmatmul.f32.gmra.mxu0 %v4539
    %v4623 = vpop.f32.mrf.mxu0
    %v4624 = vadd.f32 %v4583, %v4623
    %4625 = vdwg.mxu0
    %4626 = vmatpush.msra.mxu0 0.0
    %4627 = vmatpush.msra.mxu0 0.0
    %4628 = vmatpush.msra.mxu0 0.0
    %4629 = vmatpush.msra.mxu0 0.0
    %4630 = vmatpush.msra.mxu0 0.0
    %4631 = vmatpush.msra.mxu0 0.0
    %4632 = vmatpush.msra.mxu0 0.0
    %4633 = vmatpush.msra.mxu0 0.0
    %4634 = vmatpush.msra.mxu0 0.0
    %4635 = vmatpush.msra.mxu0 0.0
    %4636 = vmatpush.msra.mxu0 0.0
    %4637 = vmatpush.msra.mxu0 0.0
    %4638 = vmatpush.msra.mxu0 %v4519
    %4639 = vmatpush.msra.mxu0 %v4518
    %4640 = vmatpush.msra.mxu0 %v4517
    %4641 = vmatpush.msra.mxu0 %v4516
    %4642 = vmatmul.f32.gmra.mxu0 %v4524
    %v4643 = vpop.f32.mrf.mxu0
    %v4644 = vadd.f32 0.0, %v4643
    %4645 = vmatmul.f32.gmra.mxu0 %v4527
    %v4646 = vpop.f32.mrf.mxu0
    %v4647 = vadd.f32 0.0, %v4646
    %4648 = vmatmul.f32.gmra.mxu0 %v4530
    %v4649 = vpop.f32.mrf.mxu0
    %v4650 = vadd.f32 0.0, %v4649
    %4651 = vmatmul.f32.gmra.mxu0 %v4521
    %v4652 = vpop.f32.mrf.mxu0
    %v4653 = vadd.f32 0.0, %v4652
    %4654 = vmatmul.f32.gmra.mxu0 %v4536
    %v4655 = vpop.f32.mrf.mxu0
    %v4656 = vadd.f32 0.0, %v4655
    %4657 = vmatmul.f32.gmra.mxu0 %v4539
    %v4658 = vpop.f32.mrf.mxu0
    %v4659 = vadd.f32 0.0, %v4658
    %4660 = vmatmul.f32.gmra.mxu0 %v4542
    %v4661 = vpop.f32.mrf.mxu0
    %v4662 = vadd.f32 0.0, %v4661
    %4663 = vmatmul.f32.gmra.mxu0 %v4533
    %v4664 = vpop.f32.mrf.mxu0
    %v4665 = vadd.f32 0.0, %v4664
    %4666 = vdwg.mxu0
    %v4667 = vadd.f32 %v4603, %v4644
    %v4668 = vadd.f32 %v4606, %v4647
    %v4669 = vadd.f32 %v4609, %v4650
    %v4670 = vadd.f32 %v4612, %v4653
    %v4671 = vadd.f32 %v4615, %v4656
    %v4672 = vadd.f32 %v4618, %v4659
    %v4673 = vadd.f32 %v4621, %v4662
    %v4674 = vadd.f32 %v4624, %v4665
    %v4683 = vrot.slane %v4667, 7
    %v4684 = vrot.slane %v4668, 7
    %v4685 = vrot.slane %v4669, 7
    %v4686 = vrot.slane %v4670, 7
    %v4687 = vrot.slane %v4671, 7
    %v4688 = vrot.slane %v4672, 7
    %v4689 = vrot.slane %v4673, 7
    %v4690 = vrot.slane %v4674, 7
    %v4699 = vsel %vm251, %v4683, %v4683
    %v4700 = vsel %vm251, %v4684, %v4684
    %v4701 = vsel %vm251, %v4685, %v4685
    %v4702 = vsel %vm251, %v4686, %v4686
    %v4703 = vsel %vm251, %v4687, %v4687
    %v4704 = vsel %vm251, %v4688, %v4688
    %v4705 = vsel %vm251, %v4689, %v4689
    %v4706 = vsel %vm251, %v4690, %v4690
    %4707 = vrot.lane.b32.xlu0 %v4667, 96
    %v4708 = vpop.permute.xlu0 %4707
    %4709 = vrot.lane.b32.xlu0 %v4668, 96
    %v4710 = vpop.permute.xlu0 %4709
    %4711 = vrot.lane.b32.xlu0 %v4669, 96
    %v4712 = vpop.permute.xlu0 %4711
    %4713 = vrot.lane.b32.xlu0 %v4670, 96
    %v4714 = vpop.permute.xlu0 %4713
    %4715 = vrot.lane.b32.xlu0 %v4671, 96
    %v4716 = vpop.permute.xlu0 %4715
    %4717 = vrot.lane.b32.xlu0 %v4672, 96
    %v4718 = vpop.permute.xlu0 %4717
    %4719 = vrot.lane.b32.xlu0 %v4673, 96
    %v4720 = vpop.permute.xlu0 %4719
    %4721 = vrot.lane.b32.xlu0 %v4674, 96
    %v4722 = vpop.permute.xlu0 %4721
    %v4731 = vadd.f32 %v4699, %v4708
    %v4732 = vadd.f32 %v4700, %v4710
    %v4733 = vadd.f32 %v4701, %v4712
    %v4734 = vadd.f32 %v4702, %v4714
    %v4735 = vadd.f32 %v4703, %v4716
    %v4736 = vadd.f32 %v4704, %v4718
    %v4737 = vadd.f32 %v4705, %v4720
    %v4738 = vadd.f32 %v4706, %v4722
    %v4739 = vrot.slane %v4667, 1
    %v4740 = vrot.slane %v4668, 1
    %v4741 = vrot.slane %v4669, 1
    %v4742 = vrot.slane %v4670, 1
    %v4743 = vrot.slane %v4671, 1
    %v4744 = vrot.slane %v4672, 1
    %v4745 = vrot.slane %v4673, 1
    %v4746 = vrot.slane %v4674, 1
    %v4755 = vsel %vm308, %v4739, %v4739
    %v4756 = vsel %vm308, %v4740, %v4740
    %v4757 = vsel %vm308, %v4741, %v4741
    %v4758 = vsel %vm308, %v4742, %v4742
    %v4759 = vsel %vm308, %v4743, %v4743
    %v4760 = vsel %vm308, %v4744, %v4744
    %v4761 = vsel %vm308, %v4745, %v4745
    %v4762 = vsel %vm308, %v4746, %v4746
    %4771 = vrot.lane.b32.xlu0 %v4755, 64
    %v4772 = vpop.permute.xlu0 %4771
    %4773 = vrot.lane.b32.xlu0 %v4756, 64
    %v4774 = vpop.permute.xlu0 %4773
    %4775 = vrot.lane.b32.xlu0 %v4757, 64
    %v4776 = vpop.permute.xlu0 %4775
    %4777 = vrot.lane.b32.xlu0 %v4758, 64
    %v4778 = vpop.permute.xlu0 %4777
    %4779 = vrot.lane.b32.xlu0 %v4759, 64
    %v4780 = vpop.permute.xlu0 %4779
    %4781 = vrot.lane.b32.xlu0 %v4760, 64
    %v4782 = vpop.permute.xlu0 %4781
    %4783 = vrot.lane.b32.xlu0 %v4761, 64
    %v4784 = vpop.permute.xlu0 %4783
    %4785 = vrot.lane.b32.xlu0 %v4762, 64
    %v4786 = vpop.permute.xlu0 %4785
    %v4795 = vadd.f32 %v4731, %v4772
    %v4796 = vadd.f32 %v4732, %v4774
    %v4797 = vadd.f32 %v4733, %v4776
    %v4798 = vadd.f32 %v4734, %v4778
    %v4799 = vadd.f32 %v4735, %v4780
    %v4800 = vadd.f32 %v4736, %v4782
    %v4801 = vadd.f32 %v4737, %v4784
    %v4802 = vadd.f32 %v4738, %v4786
    %s4803 = scalar_lea.vmem %s5, 10
    %v4804 = vld [vmem:[%s4803] sm:$0x1]
    %s4805 = scalar_lea.vmem %s6, 10
    %v4806 = vld [vmem:[%s4805] sm:$0x1]
    %4807 = vmatpush.msra.mxu0 0.0
    %4808 = vmatpush.msra.mxu0 0.0
    %4809 = vmatpush.msra.mxu0 0.0
    %4810 = vmatpush.msra.mxu0 0.0
    %4811 = vmatpush.msra.mxu0 0.0
    %4812 = vmatpush.msra.mxu0 0.0
    %4813 = vmatpush.msra.mxu0 0.0
    %4814 = vmatpush.msra.mxu0 0.0
    %4815 = vmatpush.msra.mxu0 %v4802
    %4816 = vmatpush.msra.mxu0 %v4801
    %4817 = vmatpush.msra.mxu0 %v4800
    %4818 = vmatpush.msra.mxu0 %v4799
    %4819 = vmatpush.msra.mxu0 %v4798
    %4820 = vmatpush.msra.mxu0 %v4797
    %4821 = vmatpush.msra.mxu0 %v4796
    %4822 = vmatpush.msra.mxu0 %v4795
    %4823 = vmatmul.f32.gmra.mxu0 %v361
    %v4824 = vpop.f32.mrf.mxu0
    %v4825 = vadd.f32 0.0, %v4824
    %4826 = vdwg.mxu0
    %v4827 = vmul.f32 %v4825, 0.015625
    %v4828 = vmul.f32 %v4795, %v4795
    %v4829 = vmul.f32 %v4796, %v4796
    %v4830 = vmul.f32 %v4797, %v4797
    %v4831 = vmul.f32 %v4798, %v4798
    %v4832 = vmul.f32 %v4799, %v4799
    %v4833 = vmul.f32 %v4800, %v4800
    %v4834 = vmul.f32 %v4801, %v4801
    %v4835 = vmul.f32 %v4802, %v4802
    %4836 = vmatpush.msra.mxu0 0.0
    %4837 = vmatpush.msra.mxu0 0.0
    %4838 = vmatpush.msra.mxu0 0.0
    %4839 = vmatpush.msra.mxu0 0.0
    %4840 = vmatpush.msra.mxu0 0.0
    %4841 = vmatpush.msra.mxu0 0.0
    %4842 = vmatpush.msra.mxu0 0.0
    %4843 = vmatpush.msra.mxu0 0.0
    %4844 = vmatpush.msra.mxu0 %v4835
    %4845 = vmatpush.msra.mxu0 %v4834
    %4846 = vmatpush.msra.mxu0 %v4833
    %4847 = vmatpush.msra.mxu0 %v4832
    %4848 = vmatpush.msra.mxu0 %v4831
    %4849 = vmatpush.msra.mxu0 %v4830
    %4850 = vmatpush.msra.mxu0 %v4829
    %4851 = vmatpush.msra.mxu0 %v4828
    %4852 = vmatmul.f32.gmra.mxu0 %v361
    %v4853 = vpop.f32.mrf.mxu0
    %v4854 = vadd.f32 0.0, %v4853
    %4855 = vdwg.mxu0
    %v4856 = vmul.f32 %v4854, 0.015625
    %v4857 = vmul.f32 %v4827, %v4827
    %v4858 = vsub.f32 %v4856, %v4857
    %v4859 = vmax.f32 %v4858, 0.0
    %v4860 = vadd.f32 %v4859, 1e-05
    %v4861 = vrsqrt.pop %v4860
    %v4862 = vmul.f32 %v4861, %v4860
    %v4863 = vmul.f32 %v4862, %v4861
    %v4864 = vmul.f32 0.5, %v4863
    %v4865 = vsub.f32 1.5, %v4864
    %v4866 = vmul.f32 %v4861, %v4865
    %vm4867 = vweird.f32 %v4860
    %vm4868 = vweird.f32 %v4861
    %vm4869 = vmor %vm4867, %vm4868
    %v4870 = vsel %vm4869, %v4861, %v4866
    %v4871 = vmul.f32 %v4804, %v4870
    %v4873 = vperm.slane %v4871, 0
    %v4875 = vmul.f32 %v4795, %v4873
    %v4876 = vmul.f32 %v4796, %v4873
    %v4877 = vmul.f32 %v4797, %v4873
    %v4878 = vmul.f32 %v4798, %v4873
    %v4879 = vmul.f32 %v4799, %v4873
    %v4880 = vmul.f32 %v4800, %v4873
    %v4881 = vmul.f32 %v4801, %v4873
    %v4882 = vmul.f32 %v4802, %v4873
    %v4883 = vmul.f32 %v4827, %v4871
    %v4884 = vsub.f32 %v4806, %v4883
    %v4886 = vperm.slane %v4884, 0
    %v4888 = vadd.f32 %v4875, %v4886
    %v4889 = vadd.f32 %v4876, %v4886
    %v4890 = vadd.f32 %v4877, %v4886
    %v4891 = vadd.f32 %v4878, %v4886
    %v4892 = vadd.f32 %v4879, %v4886
    %v4893 = vadd.f32 %v4880, %v4886
    %v4894 = vadd.f32 %v4881, %v4886
    %v4895 = vadd.f32 %v4882, %v4886
    %v4896 = vadd.f32 %v4499, %v4888
    %v4897 = vadd.f32 %v4500, %v4889
    %v4898 = vadd.f32 %v4501, %v4890
    %v4899 = vadd.f32 %v4502, %v4891
    %v4900 = vadd.f32 %v4503, %v4892
    %v4901 = vadd.f32 %v4504, %v4893
    %v4902 = vadd.f32 %v4505, %v4894
    %v4903 = vadd.f32 %v4506, %v4895
    %v4904 = vmax.f32 %v4896, 0.0
    %v4905 = vmax.f32 %v4897, 0.0
    %v4906 = vmax.f32 %v4898, 0.0
    %v4907 = vmax.f32 %v4899, 0.0
    %v4908 = vmax.f32 %v4900, 0.0
    %v4909 = vmax.f32 %v4901, 0.0
    %v4910 = vmax.f32 %v4902, 0.0
    %v4911 = vmax.f32 %v4903, 0.0
    %s4912 = scalar_lea.vmem [#allocation2], 1056
    %v4913 = vld [vmem:[%s4912] sm:$0xff]
    %v4914 = vld [vmem:[%s4912 + $0x8] sm:$0xff]
    %v4915 = vld [vmem:[%s4912 + $0x10] sm:$0xff]
    %v4916 = vld [vmem:[%s4912 + $0x18] sm:$0xff]
    %v4917 = vld [vmem:[%s4912 + $0x20] sm:$0xff]
    %v4918 = vld [vmem:[%s4912 + $0x28] sm:$0xff]
    %v4919 = vld [vmem:[%s4912 + $0x30] sm:$0xff]
    %v4920 = vld [vmem:[%s4912 + $0x38] sm:$0xff]
    %v4921 = vld [vmem:[%s4912 + $0x40] sm:$0xff]
    %v4922 = vld [vmem:[%s4912 + $0x48] sm:$0xff]
    %v4923 = vld [vmem:[%s4912 + $0x50] sm:$0xff]
    %v4924 = vld [vmem:[%s4912 + $0x58] sm:$0xff]
    %v4926 = vsel %vm71, %v4904, 0
    %v4929 = vsel %vm71, %v4905, 0
    %v4932 = vsel %vm71, %v4906, 0
    %v4935 = vsel %vm71, %v4907, 0
    %v4938 = vsel %vm71, %v4908, 0
    %v4941 = vsel %vm71, %v4909, 0
    %v4944 = vsel %vm71, %v4910, 0
    %v4947 = vsel %vm71, %v4911, 0
    %4949 = vmatpush.msra.mxu0 0.0
    %4950 = vmatpush.msra.mxu0 0.0
    %4951 = vmatpush.msra.mxu0 0.0
    %4952 = vmatpush.msra.mxu0 0.0
    %4953 = vmatpush.msra.mxu0 0.0
    %4954 = vmatpush.msra.mxu0 0.0
    %4955 = vmatpush.msra.mxu0 0.0
    %4956 = vmatpush.msra.mxu0 0.0
    %4957 = vmatpush.msra.mxu0 0.0
    %4958 = vmatpush.msra.mxu0 0.0
    %4959 = vmatpush.msra.mxu0 0.0
    %4960 = vmatpush.msra.mxu0 0.0
    %4961 = vmatpush.msra.mxu0 %v4920
    %4962 = vmatpush.msra.mxu0 %v4919
    %4963 = vmatpush.msra.mxu0 %v4918
    %4964 = vmatpush.msra.mxu0 %v4917
    %4965 = vmatmul.f32.gmra.mxu0 %v4926
    %v4966 = vpop.f32.mrf.mxu0
    %v4967 = vadd.f32 0.0, %v4966
    %4968 = vmatmul.f32.gmra.mxu0 %v4929
    %v4969 = vpop.f32.mrf.mxu0
    %v4970 = vadd.f32 0.0, %v4969
    %4971 = vmatmul.f32.gmra.mxu0 %v4932
    %v4972 = vpop.f32.mrf.mxu0
    %v4973 = vadd.f32 0.0, %v4972
    %4974 = vmatmul.f32.gmra.mxu0 %v4935
    %v4975 = vpop.f32.mrf.mxu0
    %v4976 = vadd.f32 0.0, %v4975
    %4977 = vmatmul.f32.gmra.mxu0 %v4938
    %v4978 = vpop.f32.mrf.mxu0
    %v4979 = vadd.f32 0.0, %v4978
    %4980 = vmatmul.f32.gmra.mxu0 %v4941
    %v4981 = vpop.f32.mrf.mxu0
    %v4982 = vadd.f32 0.0, %v4981
    %4983 = vmatmul.f32.gmra.mxu0 %v4944
    %v4984 = vpop.f32.mrf.mxu0
    %v4985 = vadd.f32 0.0, %v4984
    %4986 = vmatmul.f32.gmra.mxu0 %v4947
    %v4987 = vpop.f32.mrf.mxu0
    %v4988 = vadd.f32 0.0, %v4987
    %4989 = vdwg.mxu0
    %4990 = vmatpush.msra.mxu0 0.0
    %4991 = vmatpush.msra.mxu0 0.0
    %4992 = vmatpush.msra.mxu0 0.0
    %4993 = vmatpush.msra.mxu0 0.0
    %4994 = vmatpush.msra.mxu0 0.0
    %4995 = vmatpush.msra.mxu0 0.0
    %4996 = vmatpush.msra.mxu0 0.0
    %4997 = vmatpush.msra.mxu0 0.0
    %4998 = vmatpush.msra.mxu0 0.0
    %4999 = vmatpush.msra.mxu0 0.0
    %5000 = vmatpush.msra.mxu0 0.0
    %5001 = vmatpush.msra.mxu0 0.0
    %5002 = vmatpush.msra.mxu0 %v4916
    %5003 = vmatpush.msra.mxu0 %v4915
    %5004 = vmatpush.msra.mxu0 %v4914
    %5005 = vmatpush.msra.mxu0 %v4913
    %5006 = vmatmul.f32.gmra.mxu0 %v4935
    %v5007 = vpop.f32.mrf.mxu0
    %v5008 = vadd.f32 %v4967, %v5007
    %5009 = vmatmul.f32.gmra.mxu0 %v4926
    %v5010 = vpop.f32.mrf.mxu0
    %v5011 = vadd.f32 %v4970, %v5010
    %5012 = vmatmul.f32.gmra.mxu0 %v4929
    %v5013 = vpop.f32.mrf.mxu0
    %v5014 = vadd.f32 %v4973, %v5013
    %5015 = vmatmul.f32.gmra.mxu0 %v4932
    %v5016 = vpop.f32.mrf.mxu0
    %v5017 = vadd.f32 %v4976, %v5016
    %5018 = vmatmul.f32.gmra.mxu0 %v4947
    %v5019 = vpop.f32.mrf.mxu0
    %v5020 = vadd.f32 %v4979, %v5019
    %5021 = vmatmul.f32.gmra.mxu0 %v4938
    %v5022 = vpop.f32.mrf.mxu0
    %v5023 = vadd.f32 %v4982, %v5022
    %5024 = vmatmul.f32.gmra.mxu0 %v4941
    %v5025 = vpop.f32.mrf.mxu0
    %v5026 = vadd.f32 %v4985, %v5025
    %5027 = vmatmul.f32.gmra.mxu0 %v4944
    %v5028 = vpop.f32.mrf.mxu0
    %v5029 = vadd.f32 %v4988, %v5028
    %5030 = vdwg.mxu0
    %5031 = vmatpush.msra.mxu0 0.0
    %5032 = vmatpush.msra.mxu0 0.0
    %5033 = vmatpush.msra.mxu0 0.0
    %5034 = vmatpush.msra.mxu0 0.0
    %5035 = vmatpush.msra.mxu0 0.0
    %5036 = vmatpush.msra.mxu0 0.0
    %5037 = vmatpush.msra.mxu0 0.0
    %5038 = vmatpush.msra.mxu0 0.0
    %5039 = vmatpush.msra.mxu0 0.0
    %5040 = vmatpush.msra.mxu0 0.0
    %5041 = vmatpush.msra.mxu0 0.0
    %5042 = vmatpush.msra.mxu0 0.0
    %5043 = vmatpush.msra.mxu0 %v4924
    %5044 = vmatpush.msra.mxu0 %v4923
    %5045 = vmatpush.msra.mxu0 %v4922
    %5046 = vmatpush.msra.mxu0 %v4921
    %5047 = vmatmul.f32.gmra.mxu0 %v4929
    %v5048 = vpop.f32.mrf.mxu0
    %v5049 = vadd.f32 0.0, %v5048
    %5050 = vmatmul.f32.gmra.mxu0 %v4932
    %v5051 = vpop.f32.mrf.mxu0
    %v5052 = vadd.f32 0.0, %v5051
    %5053 = vmatmul.f32.gmra.mxu0 %v4935
    %v5054 = vpop.f32.mrf.mxu0
    %v5055 = vadd.f32 0.0, %v5054
    %5056 = vmatmul.f32.gmra.mxu0 %v4926
    %v5057 = vpop.f32.mrf.mxu0
    %v5058 = vadd.f32 0.0, %v5057
    %5059 = vmatmul.f32.gmra.mxu0 %v4941
    %v5060 = vpop.f32.mrf.mxu0
    %v5061 = vadd.f32 0.0, %v5060
    %5062 = vmatmul.f32.gmra.mxu0 %v4944
    %v5063 = vpop.f32.mrf.mxu0
    %v5064 = vadd.f32 0.0, %v5063
    %5065 = vmatmul.f32.gmra.mxu0 %v4947
    %v5066 = vpop.f32.mrf.mxu0
    %v5067 = vadd.f32 0.0, %v5066
    %5068 = vmatmul.f32.gmra.mxu0 %v4938
    %v5069 = vpop.f32.mrf.mxu0
    %v5070 = vadd.f32 0.0, %v5069
    %5071 = vdwg.mxu0
    %v5072 = vadd.f32 %v5008, %v5049
    %v5073 = vadd.f32 %v5011, %v5052
    %v5074 = vadd.f32 %v5014, %v5055
    %v5075 = vadd.f32 %v5017, %v5058
    %v5076 = vadd.f32 %v5020, %v5061
    %v5077 = vadd.f32 %v5023, %v5064
    %v5078 = vadd.f32 %v5026, %v5067
    %v5079 = vadd.f32 %v5029, %v5070
    %v5088 = vrot.slane %v5072, 7
    %v5089 = vrot.slane %v5073, 7
    %v5090 = vrot.slane %v5074, 7
    %v5091 = vrot.slane %v5075, 7
    %v5092 = vrot.slane %v5076, 7
    %v5093 = vrot.slane %v5077, 7
    %v5094 = vrot.slane %v5078, 7
    %v5095 = vrot.slane %v5079, 7
    %v5104 = vsel %vm251, %v5088, %v5088
    %v5105 = vsel %vm251, %v5089, %v5089
    %v5106 = vsel %vm251, %v5090, %v5090
    %v5107 = vsel %vm251, %v5091, %v5091
    %v5108 = vsel %vm251, %v5092, %v5092
    %v5109 = vsel %vm251, %v5093, %v5093
    %v5110 = vsel %vm251, %v5094, %v5094
    %v5111 = vsel %vm251, %v5095, %v5095
    %5112 = vrot.lane.b32.xlu0 %v5072, 96
    %v5113 = vpop.permute.xlu0 %5112
    %5114 = vrot.lane.b32.xlu0 %v5073, 96
    %v5115 = vpop.permute.xlu0 %5114
    %5116 = vrot.lane.b32.xlu0 %v5074, 96
    %v5117 = vpop.permute.xlu0 %5116
    %5118 = vrot.lane.b32.xlu0 %v5075, 96
    %v5119 = vpop.permute.xlu0 %5118
    %5120 = vrot.lane.b32.xlu0 %v5076, 96
    %v5121 = vpop.permute.xlu0 %5120
    %5122 = vrot.lane.b32.xlu0 %v5077, 96
    %v5123 = vpop.permute.xlu0 %5122
    %5124 = vrot.lane.b32.xlu0 %v5078, 96
    %v5125 = vpop.permute.xlu0 %5124
    %5126 = vrot.lane.b32.xlu0 %v5079, 96
    %v5127 = vpop.permute.xlu0 %5126
    %v5136 = vadd.f32 %v5104, %v5113
    %v5137 = vadd.f32 %v5105, %v5115
    %v5138 = vadd.f32 %v5106, %v5117
    %v5139 = vadd.f32 %v5107, %v5119
    %v5140 = vadd.f32 %v5108, %v5121
    %v5141 = vadd.f32 %v5109, %v5123
    %v5142 = vadd.f32 %v5110, %v5125
    %v5143 = vadd.f32 %v5111, %v5127
    %v5144 = vrot.slane %v5072, 1
    %v5145 = vrot.slane %v5073, 1
    %v5146 = vrot.slane %v5074, 1
    %v5147 = vrot.slane %v5075, 1
    %v5148 = vrot.slane %v5076, 1
    %v5149 = vrot.slane %v5077, 1
    %v5150 = vrot.slane %v5078, 1
    %v5151 = vrot.slane %v5079, 1
    %v5160 = vsel %vm308, %v5144, %v5144
    %v5161 = vsel %vm308, %v5145, %v5145
    %v5162 = vsel %vm308, %v5146, %v5146
    %v5163 = vsel %vm308, %v5147, %v5147
    %v5164 = vsel %vm308, %v5148, %v5148
    %v5165 = vsel %vm308, %v5149, %v5149
    %v5166 = vsel %vm308, %v5150, %v5150
    %v5167 = vsel %vm308, %v5151, %v5151
    %5176 = vrot.lane.b32.xlu0 %v5160, 64
    %v5177 = vpop.permute.xlu0 %5176
    %5178 = vrot.lane.b32.xlu0 %v5161, 64
    %v5179 = vpop.permute.xlu0 %5178
    %5180 = vrot.lane.b32.xlu0 %v5162, 64
    %v5181 = vpop.permute.xlu0 %5180
    %5182 = vrot.lane.b32.xlu0 %v5163, 64
    %v5183 = vpop.permute.xlu0 %5182
    %5184 = vrot.lane.b32.xlu0 %v5164, 64
    %v5185 = vpop.permute.xlu0 %5184
    %5186 = vrot.lane.b32.xlu0 %v5165, 64
    %v5187 = vpop.permute.xlu0 %5186
    %5188 = vrot.lane.b32.xlu0 %v5166, 64
    %v5189 = vpop.permute.xlu0 %5188
    %5190 = vrot.lane.b32.xlu0 %v5167, 64
    %v5191 = vpop.permute.xlu0 %5190
    %v5200 = vadd.f32 %v5136, %v5177
    %v5201 = vadd.f32 %v5137, %v5179
    %v5202 = vadd.f32 %v5138, %v5181
    %v5203 = vadd.f32 %v5139, %v5183
    %v5204 = vadd.f32 %v5140, %v5185
    %v5205 = vadd.f32 %v5141, %v5187
    %v5206 = vadd.f32 %v5142, %v5189
    %v5207 = vadd.f32 %v5143, %v5191
    %s5208 = scalar_lea.vmem %s5, 11
    %v5209 = vld [vmem:[%s5208] sm:$0x1]
    %s5210 = scalar_lea.vmem %s6, 11
    %v5211 = vld [vmem:[%s5210] sm:$0x1]
    %5212 = vmatpush.msra.mxu0 0.0
    %5213 = vmatpush.msra.mxu0 0.0
    %5214 = vmatpush.msra.mxu0 0.0
    %5215 = vmatpush.msra.mxu0 0.0
    %5216 = vmatpush.msra.mxu0 0.0
    %5217 = vmatpush.msra.mxu0 0.0
    %5218 = vmatpush.msra.mxu0 0.0
    %5219 = vmatpush.msra.mxu0 0.0
    %5220 = vmatpush.msra.mxu0 %v5207
    %5221 = vmatpush.msra.mxu0 %v5206
    %5222 = vmatpush.msra.mxu0 %v5205
    %5223 = vmatpush.msra.mxu0 %v5204
    %5224 = vmatpush.msra.mxu0 %v5203
    %5225 = vmatpush.msra.mxu0 %v5202
    %5226 = vmatpush.msra.mxu0 %v5201
    %5227 = vmatpush.msra.mxu0 %v5200
    %5228 = vmatmul.f32.gmra.mxu0 %v361
    %v5229 = vpop.f32.mrf.mxu0
    %v5230 = vadd.f32 0.0, %v5229
    %5231 = vdwg.mxu0
    %v5232 = vmul.f32 %v5230, 0.015625
    %v5233 = vmul.f32 %v5200, %v5200
    %v5234 = vmul.f32 %v5201, %v5201
    %v5235 = vmul.f32 %v5202, %v5202
    %v5236 = vmul.f32 %v5203, %v5203
    %v5237 = vmul.f32 %v5204, %v5204
    %v5238 = vmul.f32 %v5205, %v5205
    %v5239 = vmul.f32 %v5206, %v5206
    %v5240 = vmul.f32 %v5207, %v5207
    %5241 = vmatpush.msra.mxu0 0.0
    %5242 = vmatpush.msra.mxu0 0.0
    %5243 = vmatpush.msra.mxu0 0.0
    %5244 = vmatpush.msra.mxu0 0.0
    %5245 = vmatpush.msra.mxu0 0.0
    %5246 = vmatpush.msra.mxu0 0.0
    %5247 = vmatpush.msra.mxu0 0.0
    %5248 = vmatpush.msra.mxu0 0.0
    %5249 = vmatpush.msra.mxu0 %v5240
    %5250 = vmatpush.msra.mxu0 %v5239
    %5251 = vmatpush.msra.mxu0 %v5238
    %5252 = vmatpush.msra.mxu0 %v5237
    %5253 = vmatpush.msra.mxu0 %v5236
    %5254 = vmatpush.msra.mxu0 %v5235
    %5255 = vmatpush.msra.mxu0 %v5234
    %5256 = vmatpush.msra.mxu0 %v5233
    %5257 = vmatmul.f32.gmra.mxu0 %v361
    %v5258 = vpop.f32.mrf.mxu0
    %v5259 = vadd.f32 0.0, %v5258
    %5260 = vdwg.mxu0
    %v5261 = vmul.f32 %v5259, 0.015625
    %v5262 = vmul.f32 %v5232, %v5232
    %v5263 = vsub.f32 %v5261, %v5262
    %v5264 = vmax.f32 %v5263, 0.0
    %v5265 = vadd.f32 %v5264, 1e-05
    %v5266 = vrsqrt.pop %v5265
    %v5267 = vmul.f32 %v5266, %v5265
    %v5268 = vmul.f32 %v5267, %v5266
    %v5269 = vmul.f32 0.5, %v5268
    %v5270 = vsub.f32 1.5, %v5269
    %v5271 = vmul.f32 %v5266, %v5270
    %vm5272 = vweird.f32 %v5265
    %vm5273 = vweird.f32 %v5266
    %vm5274 = vmor %vm5272, %vm5273
    %v5275 = vsel %vm5274, %v5266, %v5271
    %v5276 = vmul.f32 %v5209, %v5275
    %v5278 = vperm.slane %v5276, 0
    %v5280 = vmul.f32 %v5200, %v5278
    %v5281 = vmul.f32 %v5201, %v5278
    %v5282 = vmul.f32 %v5202, %v5278
    %v5283 = vmul.f32 %v5203, %v5278
    %v5284 = vmul.f32 %v5204, %v5278
    %v5285 = vmul.f32 %v5205, %v5278
    %v5286 = vmul.f32 %v5206, %v5278
    %v5287 = vmul.f32 %v5207, %v5278
    %v5288 = vmul.f32 %v5232, %v5276
    %v5289 = vsub.f32 %v5211, %v5288
    %v5291 = vperm.slane %v5289, 0
    %v5293 = vadd.f32 %v5280, %v5291
    %v5294 = vadd.f32 %v5281, %v5291
    %v5295 = vadd.f32 %v5282, %v5291
    %v5296 = vadd.f32 %v5283, %v5291
    %v5297 = vadd.f32 %v5284, %v5291
    %v5298 = vadd.f32 %v5285, %v5291
    %v5299 = vadd.f32 %v5286, %v5291
    %v5300 = vadd.f32 %v5287, %v5291
    %v5301 = vadd.f32 %v4904, %v5293
    %v5302 = vadd.f32 %v4905, %v5294
    %v5303 = vadd.f32 %v4906, %v5295
    %v5304 = vadd.f32 %v4907, %v5296
    %v5305 = vadd.f32 %v4908, %v5297
    %v5306 = vadd.f32 %v4909, %v5298
    %v5307 = vadd.f32 %v4910, %v5299
    %v5308 = vadd.f32 %v4911, %v5300
    %v5309 = vmax.f32 %v5301, 0.0
    %v5310 = vmax.f32 %v5302, 0.0
    %v5311 = vmax.f32 %v5303, 0.0
    %v5312 = vmax.f32 %v5304, 0.0
    %v5313 = vmax.f32 %v5305, 0.0
    %v5314 = vmax.f32 %v5306, 0.0
    %v5315 = vmax.f32 %v5307, 0.0
    %v5316 = vmax.f32 %v5308, 0.0
    %5317 = vset.pattern.permute.xlu0 0
    %5318 = vperm.xlu0 %5317, %v51
    %v5319 = vpop.permute.xlu0 %5318
    %5321 = vset.pattern.permute.xlu0 0
    %5322 = vperm.xlu0 %5321, %v52
    %v5323 = vpop.permute.xlu0 %5322
    %5325 = vset.pattern.permute.xlu0 0
    %5326 = vperm.xlu0 %5325, %v53
    %v5327 = vpop.permute.xlu0 %5326
    %5329 = vset.pattern.permute.xlu0 0
    %5330 = vperm.xlu0 %5329, %v54
    %v5331 = vpop.permute.xlu0 %5330
    %5333 = vset.pattern.permute.xlu0 0
    %5334 = vperm.xlu0 %5333, %v55
    %v5335 = vpop.permute.xlu0 %5334
    %5337 = vset.pattern.permute.xlu0 0
    %5338 = vperm.xlu0 %5337, %v56
    %v5339 = vpop.permute.xlu0 %5338
    %5341 = vset.pattern.permute.xlu0 0
    %5342 = vperm.xlu0 %5341, %v57
    %v5343 = vpop.permute.xlu0 %5342
    %5345 = vset.pattern.permute.xlu0 0
    %5346 = vperm.xlu0 %5345, %v58
    %v5347 = vpop.permute.xlu0 %5346
    %v5349 = vmul.f32 %v5309, %v5319
    %v5350 = vmul.f32 %v5310, %v5323
    %v5351 = vmul.f32 %v5311, %v5327
    %v5352 = vmul.f32 %v5312, %v5331
    %v5353 = vmul.f32 %v5313, %v5335
    %v5354 = vmul.f32 %v5314, %v5339
    %v5355 = vmul.f32 %v5315, %v5343
    %v5356 = vmul.f32 %v5316, %v5347
    %v5357 = vsel %vm71, %v5349, 0.0
    %v5358 = vsel %vm71, %v5350, 0.0
    %v5359 = vadd.f32 %v5357, %v5358
    %v5360 = vsel %vm71, %v5351, 0.0
    %v5361 = vadd.f32 %v5359, %v5360
    %v5362 = vsel %vm71, %v5352, 0.0
    %v5363 = vadd.f32 %v5361, %v5362
    %v5364 = vrot.slane %v5363, 4
    %v5365 = vadd.f32 %v5363, %v5364
    %v5366 = vrot.slane %v5365, 2
    %v5367 = vadd.f32 %v5365, %v5366
    %v5368 = vrot.slane %v5367, 1
    %v5369 = vadd.f32 %v5367, %v5368
    %v5370 = vsel %vm71, %v5353, 0.0
    %v5371 = vsel %vm71, %v5354, 0.0
    %v5372 = vadd.f32 %v5370, %v5371
    %v5373 = vsel %vm71, %v5355, 0.0
    %v5374 = vadd.f32 %v5372, %v5373
    %v5375 = vsel %vm71, %v5356, 0.0
    %v5376 = vadd.f32 %v5374, %v5375
    %v5377 = vrot.slane %v5376, 4
    %v5378 = vadd.f32 %v5376, %v5377
    %v5379 = vrot.slane %v5378, 2
    %v5380 = vadd.f32 %v5378, %v5379
    %v5381 = vrot.slane %v5380, 1
    %v5382 = vadd.f32 %v5380, %v5381
    %v5383 = vsel %vm71, %v5309, 0.0
    %v5384 = vsel %vm71, %v5310, 0.0
    %v5385 = vadd.f32 %v5383, %v5384
    %v5386 = vsel %vm71, %v5311, 0.0
    %v5387 = vadd.f32 %v5385, %v5386
    %v5388 = vsel %vm71, %v5312, 0.0
    %v5389 = vadd.f32 %v5387, %v5388
    %v5390 = vrot.slane %v5389, 4
    %v5391 = vadd.f32 %v5389, %v5390
    %v5392 = vrot.slane %v5391, 2
    %v5393 = vadd.f32 %v5391, %v5392
    %v5394 = vrot.slane %v5393, 1
    %v5395 = vadd.f32 %v5393, %v5394
    %v5396 = vsel %vm71, %v5313, 0.0
    %v5397 = vsel %vm71, %v5314, 0.0
    %v5398 = vadd.f32 %v5396, %v5397
    %v5399 = vsel %vm71, %v5315, 0.0
    %v5400 = vadd.f32 %v5398, %v5399
    %v5401 = vsel %vm71, %v5316, 0.0
    %v5402 = vadd.f32 %v5400, %v5401
    %v5403 = vrot.slane %v5402, 4
    %v5404 = vadd.f32 %v5402, %v5403
    %v5405 = vrot.slane %v5404, 2
    %v5406 = vadd.f32 %v5404, %v5405
    %v5407 = vrot.slane %v5406, 1
    %v5408 = vadd.f32 %v5406, %v5407
    %v5409 = vmul.f32 %v5395, 0.03125
    %v5410 = vmul.f32 %v5408, 0.03125
    %v5411 = vld [vmem:[%s7] sm:$0xff]
    %v5412 = vld [vmem:[%s7 + $0x8] sm:$0xff]
    %v5413 = vld [vmem:[%s7 + $0x10] sm:$0xff]
    %v5414 = vld [vmem:[%s7 + $0x18] sm:$0xff]
    %v5415 = vld [vmem:[%s8] sm:$0xff]
    %v5416 = vld [vmem:[%s8 + $0x8] sm:$0xff]
    %v5417 = vld [vmem:[%s8 + $0x10] sm:$0xff]
    %v5418 = vld [vmem:[%s8 + $0x18] sm:$0xff]
    %vm5421 = vcmask 1041409
    %v5422 = vsel %vm5421, %v5410, %v5409
    %v5423 = vsel %vm71, %v5422, 0
    %5425 = vmatpush.msra.mxu0 0.0
    %5426 = vmatpush.msra.mxu0 0.0
    %5427 = vmatpush.msra.mxu0 0.0
    %5428 = vmatpush.msra.mxu0 0.0
    %5429 = vmatpush.msra.mxu0 0.0
    %5430 = vmatpush.msra.mxu0 0.0
    %5431 = vmatpush.msra.mxu0 0.0
    %5432 = vmatpush.msra.mxu0 0.0
    %5433 = vmatpush.msra.mxu0 0.0
    %5434 = vmatpush.msra.mxu0 0.0
    %5435 = vmatpush.msra.mxu0 0.0
    %5436 = vmatpush.msra.mxu0 0.0
    %5437 = vmatpush.msra.mxu0 %v5418
    %5438 = vmatpush.msra.mxu0 %v5417
    %5439 = vmatpush.msra.mxu0 %v5416
    %5440 = vmatpush.msra.mxu0 %v5415
    %5441 = vmatmul.f32.gmra.mxu0 %v5423
    %v5442 = vpop.f32.mrf.mxu0
    %v5443 = vadd.f32 0.0, %v5442
    %5444 = vdwg.mxu0
    %v5447 = vsel %vm5421, %v5382, %v5369
    %v5448 = vsel %vm71, %v5447, 0
    %5450 = vmatpush.msra.mxu0 0.0
    %5451 = vmatpush.msra.mxu0 0.0
    %5452 = vmatpush.msra.mxu0 0.0
    %5453 = vmatpush.msra.mxu0 0.0
    %5454 = vmatpush.msra.mxu0 0.0
    %5455 = vmatpush.msra.mxu0 0.0
    %5456 = vmatpush.msra.mxu0 0.0
    %5457 = vmatpush.msra.mxu0 0.0
    %5458 = vmatpush.msra.mxu0 0.0
    %5459 = vmatpush.msra.mxu0 0.0
    %5460 = vmatpush.msra.mxu0 0.0
    %5461 = vmatpush.msra.mxu0 0.0
    %5462 = vmatpush.msra.mxu0 %v5414
    %5463 = vmatpush.msra.mxu0 %v5413
    %5464 = vmatpush.msra.mxu0 %v5412
    %5465 = vmatpush.msra.mxu0 %v5411
    %5466 = vmatmul.f32.gmra.mxu0 %v5448
    %v5467 = vpop.f32.mrf.mxu0
    %v5468 = vadd.f32 %v5443, %v5467
    %5469 = vdwg.mxu0
    %vm5470 = vcmask 25600
    %5471 = vst.msk [vmem:[#allocation5] sm:$0x3] %vm5470, %v5468
    %v5472 = vtanh.pop %v5468
    %5474 = vrot.lane.b32.xlu0 %v5472, 124
    %v5475 = vpop.permute.xlu0 %5474
    %vm5477 = vcmask 1024
    %5478 = vst.msk [vmem:[%s10] sm:$0x3] %vm5477, %v5475
    // Predicated region
    $region42: #{geese_net_pallas.1} parent=1 // pred_check
      _
    $region43: #{geese_net_pallas.1} parent=1 // pred_check_branch
      %5480 = sbr.rel (0) target = $region45
    $region44: #{geese_net_pallas.1} parent=1 // pred_region
      %5482 = vsyncadd [#allocation4], 0
      %s5484 = sshll.u32 [#allocation5], 4
      %s5485 = int_to_ptr.vmem [resolvable:$true] %s5484
      %s5486 = sshll.u32 %s9, 4
      %s5487 = int_to_ptr.hbm [resolvable:$true] %s5486
      %5489 = dma.vmem_to_hbm [thread:$0]  %s5485, 32, %s5487, [#allocation4]
    $region45: #{geese_net_pallas.1} parent=1 // pred_fallthru
      _
    // Predicated region
    $region46: #{geese_net_pallas.1} parent=1 // pred_check
      _
    $region47: #{geese_net_pallas.1} parent=1 // pred_check_branch
      %5491 = sbr.rel (0) target = $region49
    $region48: #{geese_net_pallas.1} parent=1 // pred_region
      _
    $region49: #{geese_net_pallas.1} parent=1 // pred_fallthru
      _
    // Predicated region
    $region50: #{geese_net_pallas.1} parent=1 // pred_check
      _
    $region51: #{geese_net_pallas.1} parent=1 // pred_check_branch
      %5493 = sbr.rel (0) target = $region53
    $region52: #{geese_net_pallas.1} parent=1 // pred_region
      %5495 = dma.done [#allocation4], 32
    $region53: #{geese_net_pallas.1} parent=1 // pred_fallthru
      _
    // Predicated region
    $region54: #{geese_net_pallas.1} parent=1 // pred_check
      _
    $region55: #{geese_net_pallas.1} parent=1 // pred_check_branch
      %5497 = sbr.rel (0) target = $region57
    $region56: #{geese_net_pallas.1} parent=1 // pred_region
      _
    $region57: #{geese_net_pallas.1} parent=1 // pred_fallthru
      _
    %5498 = vsyncpa [#allocation3], 1
    %5499 = vsyncpa [#allocation4], 1

</llo_original>
